<compile_context>
chip_gen: v7x
topology: tpu7x:2x2x1
jax: 0.10.0
libtpu: 0.0.40
codegen_flags: <defaults>
</compile_context>

<pallas_src>
import functools

import jax
import jax.numpy as jnp
from jax.experimental import pallas as pl
from jax.experimental.pallas import tpu as pltpu

EPS = 1e-5


# --------------------------- VMEM budgeting ---------------------------
def _vmem_limit_bytes():
    """Generation-aware scoped-VMEM limit (kept below physical VMEM)."""
    cap = 64 << 20
    try:
        info = pltpu.get_tpu_info()
        cap = int(getattr(info, "vmem_capacity_bytes", cap))
    except Exception:
        pass
    if cap >= (128 << 20):
        return 48 << 20                       # v5e / v6e (128 MiB physical)
    return min(40 << 20, (cap * 5) // 8)      # v7x (64 MiB physical) and smaller


def _pick_row_tile(H, W, C, itemsize, budget_bytes):
    """Largest row tile TH (divisor of H, multiple of 8 when possible) whose
    full per-grid-step working set fits in budget_bytes.

    Accounts for: double-buffered interior blocks of x / y_prev / y, the three
    (TH+2, W, C) scratch slabs, the f32 accumulator and a f32 recon temporary,
    plus the (small) resident weight block and halo rows.
    """
    cands = sorted({d for d in range(8, H + 1, 8) if H % d == 0} | {H})
    fixed = 2 * 9 * C * C * itemsize + 10 * W * C * itemsize
    per_row = W * C * (9 * itemsize + 8)
    best = cands[0]
    for th in cands:
        if th * per_row + fixed <= budget_bytes:
            best = th
    return best


def _pick_bn_tile(H, WC, target_bytes=4 * 1024 * 1024):
    """Row tile for the memory-bound final BN+ReLU pass (~4 MiB blocks)."""
    cands = sorted({d for d in range(8, H + 1, 8) if H % d == 0} | {H})
    best = cands[0]
    for th in cands:
        if th * WC * 4 <= target_bytes:
            best = th
    return best


# --------------------------- pass 1: conv + partial BN stats ---------------------------
def _conv_stats_kernel(*refs, residual):
    """3x3 same-conv of (x [+ relu(bn(y_prev))]) over one (TH, W) row tile.

    Inputs (VMEM blocks):
      xi/xt/xb    : (1,TH,W,C)/(1,1,W,C)/(1,1,W,C) interior rows + top/bottom
                    halo rows of the current conv input image (compute dtype)
      yi/yt/yb    : same blocks of the previous conv's pre-BN output [residual]
      scale/shift : (1, C) f32 BN scale/shift of y_prev                [residual]
      w_ref       : (9, C, C) conv weights, tap index = kh*3 + kw
    Outputs:
      y_ref       : (1, TH, W, C) pre-BN conv output (compute dtype)
      stats_ref   : (1, 1, 2, C)  f32 per-tile [sum, sum_of_squares]
    Scratch:
      xp, xl, xr  : (TH+2, W, C) center / left-shifted / right-shifted slabs
    """
    if residual:
        (xi_ref, xt_ref, xb_ref, yi_ref, yt_ref, yb_ref,
         scale_ref, shift_ref, w_ref, y_ref, stats_ref, xp, xl, xr) = refs
    else:
        (xi_ref, xt_ref, xb_ref, w_ref, y_ref, stats_ref, xp, xl, xr) = refs
        yi_ref = yt_ref = yb_ref = scale_ref = shift_ref = None

    TH = xp.shape[0] - 2
    W = xp.shape[1]
    C = xp.shape[2]
    cdt = xp.dtype

    h = pl.program_id(1)
    n_h = pl.num_programs(1)

    def recon(xv, ypv):
        # conv input = x (first conv) or x + ReLU(BN(previous conv output)),
        # with the intermediate BN+ReLU fused here (never materialized in HBM).
        if not residual:
            return xv
        v = xv.astype(jnp.float32) + jnp.maximum(
            ypv.astype(jnp.float32) * scale_ref[...] + shift_ref[...], 0.0)
        return v.astype(cdt)

    # Assemble the (TH+2, W, C) center slab: interior rows + up/down halo rows.
    xp[1:TH + 1] = recon(xi_ref[0], yi_ref[0] if residual else None)
    xp[0:1] = recon(xt_ref[0], yt_ref[0] if residual else None)
    xp[TH + 1:TH + 2] = recon(xb_ref[0], yb_ref[0] if residual else None)

    zrow = jnp.zeros((1, W, C), cdt)

    @pl.when(h == 0)
    def _():
        xp[0:1] = zrow            # zero padding above the image

    @pl.when(h == n_h - 1)
    def _():
        xp[TH + 1:TH + 2] = zrow  # zero padding below the image

    # dw = -1 / +1 taps as shifted slabs (zero columns at the image sides).
    zcol = jnp.zeros((TH + 2, 1, C), cdt)
    xl[:, 1:W, :] = xp[:, 0:W - 1, :]   # value at w-1
    xl[:, 0:1, :] = zcol
    xr[:, 0:W - 1, :] = xp[:, 1:W, :]   # value at w+1
    xr[:, W - 1:W, :] = zcol

    # 9 accumulating K=C matmuls into a f32 accumulator (no im2col concat).
    acc = None
    srcs = (xl, xp, xr)                 # kw = 0, 1, 2
    for kh in range(3):
        for kw in range(3):
            op = srcs[kw][kh:kh + TH].reshape(TH * W, C)
            contrib = jnp.dot(op, w_ref[kh * 3 + kw],
                              preferred_element_type=jnp.float32)
            acc = contrib if acc is None else acc + contrib

    # Per-tile partial BN statistics (finalized outside the kernel).
    s = jnp.sum(acc, axis=0, keepdims=True)
    ss = jnp.sum(acc * acc, axis=0, keepdims=True)
    stats_ref[...] = jnp.concatenate([s, ss], axis=0).reshape(1, 1, 2, C)

    y_ref[...] = acc.reshape(1, TH, W, C).astype(y_ref.dtype)


def _conv_pass1(x_nhwc, prev, w3, th, compute_dtype, vmem_limit):
    """One conv application (pre-BN). prev = None or (y_prev, scale, shift)."""
    N, H, W, C = x_nhwc.shape
    n_h = H // th

    int_spec = pl.BlockSpec((1, th, W, C), lambda n, h: (n, h, 0, 0))
    # Halo rows: element-level row index (block size 1), clamped at the edges;
    # the kernel zeroes them when the tile touches the image boundary.
    top_spec = pl.BlockSpec(
        (1, 1, W, C), lambda n, h: (n, jnp.maximum(h * th - 1, 0), 0, 0))
    bot_spec = pl.BlockSpec(
        (1, 1, W, C), lambda n, h: (n, jnp.minimum(h * th + th, H - 1), 0, 0))
    vec_spec = pl.BlockSpec((1, C), lambda n, h: (0, 0))
    w_spec = pl.BlockSpec((9, C, C), lambda n, h: (0, 0, 0))

    in_specs = [int_spec, top_spec, bot_spec]
    args = [x_nhwc, x_nhwc, x_nhwc]
    if prev is not None:
        y_prev, scale_c, shift_c = prev
        in_specs += [int_spec, top_spec, bot_spec, vec_spec, vec_spec]
        args += [y_prev, y_prev, y_prev, scale_c, shift_c]
    in_specs.append(w_spec)
    args.append(w3)

    kernel = functools.partial(_conv_stats_kernel, residual=prev is not None)
    y, part = pl.pallas_call(
        kernel,
        grid=(N, n_h),
        in_specs=in_specs,
        out_specs=[
            pl.BlockSpec((1, th, W, C), lambda n, h: (n, h, 0, 0)),
            pl.BlockSpec((1, 1, 2, C), lambda n, h: (n, h, 0, 0)),
        ],
        out_shape=[
            jax.ShapeDtypeStruct((N, H, W, C), compute_dtype),
            jax.ShapeDtypeStruct((N, n_h, 2, C), jnp.float32),
        ],
        scratch_shapes=[pltpu.VMEM((th + 2, W, C), compute_dtype)] * 3,
        compiler_params=pltpu.CompilerParams(
            dimension_semantics=("parallel", "parallel"),
            vmem_limit_bytes=vmem_limit),
    )(*args)
    return y, part


def _finalize_stats(part, gamma, beta, count):
    """Tiny XLA finalize of the per-tile partial sums -> per-channel scale/shift."""
    tot = jnp.sum(part, axis=(0, 1))                       # (2, C)
    mean = tot[0] / count
    # var = E[x^2] - mean^2 in f32; clamp tiny negatives from cancellation.
    var = jnp.maximum(tot[1] / count - mean * mean, 0.0)
    rstd = jax.lax.rsqrt(var + EPS)
    scale_c = gamma.astype(jnp.float32) * rstd
    shift_c = beta.astype(jnp.float32) - mean * scale_c
    return scale_c.reshape(1, -1), shift_c.reshape(1, -1)


# --------------------------- pass 2: final BN + ReLU (lane-dense) ---------------------------
def _bn_relu_kernel(y_ref, scale_ref, shift_ref, o_ref):
    z = y_ref[...].astype(jnp.float32) * scale_ref[...] + shift_ref[...]
    o_ref[...] = jnp.maximum(z, 0.0).astype(o_ref.dtype)


def _bn_relu(y_flat, scale_row, shift_row, th, out_dtype, vmem_limit):
    N, H, WC = y_flat.shape
    n_h = H // th
    row_spec = pl.BlockSpec((1, th, WC), lambda n, h: (n, h, 0))
    cvec_spec = pl.BlockSpec((1, 1, WC), lambda n, h: (0, 0, 0))
    return pl.pallas_call(
        _bn_relu_kernel,
        grid=(N, n_h),
        in_specs=[row_spec, cvec_spec, cvec_spec],
        out_specs=row_spec,
        out_shape=jax.ShapeDtypeStruct((N, H, WC), out_dtype),
        compiler_params=pltpu.CompilerParams(
            dimension_semantics=("parallel", "parallel"),
            vmem_limit_bytes=vmem_limit),
    )(y_flat, scale_row, shift_row)


# --------------------------- full forward ---------------------------
@functools.partial(jax.jit, static_argnames=("t", "use_bf16"))
def recurrent_block_forward(x_nchw, w_hwio, b, gamma, beta, *, t, use_bf16=False):
    """Full Recurrent_block forward. Input/output in PyTorch NCHW layout.

    `b` (conv bias) is accepted for interface parity but intentionally unused:
    training-mode BatchNorm subtracts the per-channel batch mean, so a
    per-channel bias has exactly zero effect on the output.
    """
    del b
    N, C, H, W = x_nchw.shape
    compute_dtype = jnp.bfloat16 if use_bf16 else x_nchw.dtype
    itemsize = jnp.dtype(compute_dtype).itemsize
    vmem_limit = _vmem_limit_bytes()
    th = _pick_row_tile(H, W, C, itemsize, budget_bytes=int(vmem_limit * 0.6))

    x = jnp.transpose(x_nchw, (0, 2, 3, 1)).astype(compute_dtype)   # NCHW -> NHWC
    w3 = w_hwio.reshape(9, C, C).astype(compute_dtype)              # (kh*3+kw, ci, co)
    count = N * H * W

    prev = None   # (y_prev pre-BN (N,H,W,C) compute dtype, scale (1,C), shift (1,C))
    for i in range(t):
        if i == 0:
            y, part = _conv_pass1(x, None, w3, th, compute_dtype, vmem_limit)
            s, sh = _finalize_stats(part, gamma, beta, count)
            prev = (y, s, sh)
        y, part = _conv_pass1(x, prev, w3, th, compute_dtype, vmem_limit)
        s, sh = _finalize_stats(part, gamma, beta, count)
        prev = (y, s, sh)

    if prev is None:
        # t == 0: the PyTorch module would raise UnboundLocalError; return input.
        return x_nchw

    y_last, s, sh = prev
    # Lane-dense final normalize+ReLU: flatten (W, C) -> W*C lanes; larger tile.
    scale_row = jnp.tile(s[0], W).reshape(1, 1, W * C)
    shift_row = jnp.tile(sh[0], W).reshape(1, 1, W * C)
    th2 = _pick_bn_tile(H, W * C)
    out = _bn_relu(y_last.reshape(N, H, W * C), scale_row, shift_row, th2,
                   x_nchw.dtype, vmem_limit)
    return jnp.transpose(out.reshape(N, H, W, C), (0, 3, 1, 2))   # NHWC -> NCHW


# ----------------------- pure-JAX reference (for validation) -----------------------
def _ref_conv_bn_relu(x_nhwc, w_hwio, b, gamma, beta):
    y = jax.lax.conv_general_dilated(
        x_nhwc, w_hwio, window_strides=(1, 1), padding="SAME",
        dimension_numbers=("NHWC", "HWIO", "NHWC"))
    y = y + b
    mean = jnp.mean(y, axis=(0, 1, 2), keepdims=True)
    var = jnp.mean((y - mean) ** 2, axis=(0, 1, 2), keepdims=True)
    y = gamma * (y - mean) * jax.lax.rsqrt(var + EPS) + beta
    return jnp.maximum(y, 0.0)


def _ref_forward(x_nchw, w_hwio, b, gamma, beta, t):
    x = jnp.transpose(x_nchw, (0, 2, 3, 1))
    x1 = x
    for i in range(t):
        if i == 0:
            x1 = _ref_conv_bn_relu(x, w_hwio, b, gamma, beta)
        x1 = _ref_conv_bn_relu(x + x1, w_hwio, b, gamma, beta)
    return jnp.transpose(x1, (0, 3, 1, 2))


if __name__ == "__main__":
    # Small shapes consistent with the module: batch=2, cout=4, spatial=16, t=2.
    N, C, H, W = 2, 4, 16, 16
    t = 2

    key = jax.random.PRNGKey(0)
    kx, kw, kb = jax.random.split(key, 3)

    x = jax.random.normal(kx, (N, C, H, W), dtype=jnp.float32)             # NCHW like PyTorch

    w_oihw = 0.1 * jax.random.normal(kw, (C, C, 3, 3), dtype=jnp.float32)  # PyTorch OIHW
    w_hwio = jnp.transpose(w_oihw, (2, 3, 1, 0))                           # -> HWIO
    b = 0.1 * jax.random.normal(kb, (C,), dtype=jnp.float32)
    gamma = jnp.ones((C,), dtype=jnp.float32)                              # BN default init
    beta = jnp.zeros((C,), dtype=jnp.float32)

    out = jax.block_until_ready(recurrent_block_forward(x, w_hwio, b, gamma, beta, t=t))
    ref = jax.block_until_ready(_ref_forward(x, w_hwio, b, gamma, beta, t))
    assert out.shape == (N, C, H, W)
    err = float(jnp.max(jnp.abs(out - ref)))
    assert jnp.allclose(out, ref, atol=1e-4, rtol=1e-4), err

    # Optional bf16-MXU path (f32 accumulation/stats, bf16 carry): loose sanity check.
    out_bf16 = jax.block_until_ready(
        recurrent_block_forward(x, w_hwio, b, gamma, beta, t=t, use_bf16=True))
    assert out_bf16.shape == (N, C, H, W)
    assert bool(jnp.all(jnp.isfinite(out_bf16)))
    assert float(jnp.max(jnp.abs(out_bf16 - ref))) < 0.5

    print("KERNEL_OK")
</pallas_src>

<mosaic_0001>
module attributes {stable_mosaic.version = 11 : i64} {
  func.func @_conv_stats_kernel(%arg0: i32, %arg1: i32, %arg2: memref<1x16x16x4xf32, #tpu.memory_space<vmem>>, %arg3: memref<1x1x16x4xf32, #tpu.memory_space<vmem>>, %arg4: memref<1x1x16x4xf32, #tpu.memory_space<vmem>>, %arg5: memref<9x4x4xf32, #tpu.memory_space<vmem>>, %arg6: memref<1x16x16x4xf32, #tpu.memory_space<vmem>>, %arg7: memref<1x1x2x4xf32, #tpu.memory_space<vmem>>, %arg8: memref<18x16x4xf32, #tpu.memory_space<vmem>>, %arg9: memref<18x16x4xf32, #tpu.memory_space<vmem>>, %arg10: memref<18x16x4xf32, #tpu.memory_space<vmem>>) attributes {dimension_semantics = [#tpu.dimension_semantics<parallel>, #tpu.dimension_semantics<parallel>], iteration_bounds = array<i64: 2, 1>, scalar_prefetch = 0 : i64, scratch_operands = 3 : i64, tpu.core_type = #tpu.core_type<tc>, window_params = [{transform_indices = @transform_0, window_bounds = array<i64: 1, 16, 16, 4>}, {transform_indices = @transform_1, window_bounds = array<i64: 1, 1, 16, 4>}, {transform_indices = @transform_2, window_bounds = array<i64: 1, 1, 16, 4>}, {pipeline_mode = #tpu.pipeline_mode<synchronous>, transform_indices = @transform_3, window_bounds = array<i64: 9, 4, 4>}, {transform_indices = @transform_4, window_bounds = array<i64: 1, 16, 16, 4>}, {transform_indices = @transform_5, window_bounds = array<i64: 1, 1, 2, 4>}]} {
    %c0 = arith.constant 0 : index
    %c0_0 = arith.constant 0 : index
    %c0_1 = arith.constant 0 : index
    %c0_2 = arith.constant 0 : index
    %0 = vector.load %arg2[%c0, %c0_0, %c0_1, %c0_2] : memref<1x16x16x4xf32, #tpu.memory_space<vmem>>, vector<1x16x16x4xf32>
    %1 = vector.shape_cast %0 : vector<1x16x16x4xf32> to vector<16x16x4xf32>
    %c1 = arith.constant 1 : index
    %c0_3 = arith.constant 0 : index
    %c0_4 = arith.constant 0 : index
    %2 = vector.load %arg8[%c1, %c0_3, %c0_4] : memref<18x16x4xf32, #tpu.memory_space<vmem>>, vector<16x16x4xf32>
    tpu.vector_store %arg8[%c1, %c0_3, %c0_4], %1 {strides = array<i32>} : memref<18x16x4xf32, #tpu.memory_space<vmem>>, vector<16x16x4xf32>,
    %c0_5 = arith.constant 0 : index
    %c0_6 = arith.constant 0 : index
    %c0_7 = arith.constant 0 : index
    %c0_8 = arith.constant 0 : index
    %3 = vector.load %arg3[%c0_5, %c0_6, %c0_7, %c0_8] : memref<1x1x16x4xf32, #tpu.memory_space<vmem>>, vector<1x1x16x4xf32>
    %4 = vector.shape_cast %3 : vector<1x1x16x4xf32> to vector<1x16x4xf32>
    %c0_9 = arith.constant 0 : index
    %c0_10 = arith.constant 0 : index
    %c0_11 = arith.constant 0 : index
    %5 = vector.load %arg8[%c0_9, %c0_10, %c0_11] : memref<18x16x4xf32, #tpu.memory_space<vmem>>, vector<1x16x4xf32>
    tpu.vector_store %arg8[%c0_9, %c0_10, %c0_11], %4 {strides = array<i32>} : memref<18x16x4xf32, #tpu.memory_space<vmem>>, vector<1x16x4xf32>,
    %c0_12 = arith.constant 0 : index
    %c0_13 = arith.constant 0 : index
    %c0_14 = arith.constant 0 : index
    %c0_15 = arith.constant 0 : index
    %6 = vector.load %arg4[%c0_12, %c0_13, %c0_14, %c0_15] : memref<1x1x16x4xf32, #tpu.memory_space<vmem>>, vector<1x1x16x4xf32>
    %7 = vector.shape_cast %6 : vector<1x1x16x4xf32> to vector<1x16x4xf32>
    %c17 = arith.constant 17 : index
    %c0_16 = arith.constant 0 : index
    %c0_17 = arith.constant 0 : index
    %8 = vector.load %arg8[%c17, %c0_16, %c0_17] : memref<18x16x4xf32, #tpu.memory_space<vmem>>, vector<1x16x4xf32>
    tpu.vector_store %arg8[%c17, %c0_16, %c0_17], %7 {strides = array<i32>} : memref<18x16x4xf32, #tpu.memory_space<vmem>>, vector<1x16x4xf32>,
    %cst = arith.constant 0.000000e+00 : f32
    %9 = vector.broadcast %cst : f32 to vector<1x16x4xf32>
    %c0_i32 = arith.constant 0 : i32
    %10 = arith.cmpi eq, %arg1, %c0_i32 : i32
    %11 = arith.extui %10 : i1 to i32
    %c0_i32_18 = arith.constant 0 : i32
    %12 = arith.cmpi ne, %11, %c0_i32_18 : i32
    scf.if %12 {
      %c0_105 = arith.constant 0 : index
      %c0_106 = arith.constant 0 : index
      %c0_107 = arith.constant 0 : index
      %86 = vector.load %arg8[%c0_105, %c0_106, %c0_107] : memref<18x16x4xf32, #tpu.memory_space<vmem>>, vector<1x16x4xf32>
      tpu.vector_store %arg8[%c0_105, %c0_106, %c0_107], %9 {strides = array<i32>} : memref<18x16x4xf32, #tpu.memory_space<vmem>>, vector<1x16x4xf32>,
    } else {
    }
    %c0_i32_19 = arith.constant 0 : i32
    %13 = arith.cmpi eq, %arg1, %c0_i32_19 : i32
    %14 = arith.extui %13 : i1 to i32
    %c0_i32_20 = arith.constant 0 : i32
    %15 = arith.cmpi ne, %14, %c0_i32_20 : i32
    scf.if %15 {
      %c17_105 = arith.constant 17 : index
      %c0_106 = arith.constant 0 : index
      %c0_107 = arith.constant 0 : index
      %86 = vector.load %arg8[%c17_105, %c0_106, %c0_107] : memref<18x16x4xf32, #tpu.memory_space<vmem>>, vector<1x16x4xf32>
      tpu.vector_store %arg8[%c17_105, %c0_106, %c0_107], %9 {strides = array<i32>} : memref<18x16x4xf32, #tpu.memory_space<vmem>>, vector<1x16x4xf32>,
    } else {
    }
    %cst_21 = arith.constant 0.000000e+00 : f32
    %16 = vector.broadcast %cst_21 : f32 to vector<18x1x4xf32>
    %c0_22 = arith.constant 0 : index
    %c0_23 = arith.constant 0 : index
    %c0_24 = arith.constant 0 : index
    %17 = vector.load %arg8[%c0_22, %c0_23, %c0_24] : memref<18x16x4xf32, #tpu.memory_space<vmem>>, vector<18x15x4xf32>
    %c0_25 = arith.constant 0 : index
    %c1_26 = arith.constant 1 : index
    %c0_27 = arith.constant 0 : index
    %18 = vector.load %arg9[%c0_25, %c1_26, %c0_27] : memref<18x16x4xf32, #tpu.memory_space<vmem>>, vector<18x15x4xf32>
    tpu.vector_store %arg9[%c0_25, %c1_26, %c0_27], %17 {strides = array<i32>} : memref<18x16x4xf32, #tpu.memory_space<vmem>>, vector<18x15x4xf32>,
    %c0_28 = arith.constant 0 : index
    %c0_29 = arith.constant 0 : index
    %c0_30 = arith.constant 0 : index
    %19 = vector.load %arg9[%c0_28, %c0_29, %c0_30] : memref<18x16x4xf32, #tpu.memory_space<vmem>>, vector<18x1x4xf32>
    tpu.vector_store %arg9[%c0_28, %c0_29, %c0_30], %16 {strides = array<i32>} : memref<18x16x4xf32, #tpu.memory_space<vmem>>, vector<18x1x4xf32>,
    %c0_31 = arith.constant 0 : index
    %c1_32 = arith.constant 1 : index
    %c0_33 = arith.constant 0 : index
    %20 = vector.load %arg8[%c0_31, %c1_32, %c0_33] : memref<18x16x4xf32, #tpu.memory_space<vmem>>, vector<18x15x4xf32>
    %c0_34 = arith.constant 0 : index
    %c0_35 = arith.constant 0 : index
    %c0_36 = arith.constant 0 : index
    %21 = vector.load %arg10[%c0_34, %c0_35, %c0_36] : memref<18x16x4xf32, #tpu.memory_space<vmem>>, vector<18x15x4xf32>
    tpu.vector_store %arg10[%c0_34, %c0_35, %c0_36], %20 {strides = array<i32>} : memref<18x16x4xf32, #tpu.memory_space<vmem>>, vector<18x15x4xf32>,
    %c0_37 = arith.constant 0 : index
    %c15 = arith.constant 15 : index
    %c0_38 = arith.constant 0 : index
    %22 = vector.load %arg10[%c0_37, %c15, %c0_38] : memref<18x16x4xf32, #tpu.memory_space<vmem>>, vector<18x1x4xf32>
    tpu.vector_store %arg10[%c0_37, %c15, %c0_38], %16 {strides = array<i32>} : memref<18x16x4xf32, #tpu.memory_space<vmem>>, vector<18x1x4xf32>,
    %c0_39 = arith.constant 0 : index
    %c0_40 = arith.constant 0 : index
    %c0_41 = arith.constant 0 : index
    %23 = vector.load %arg9[%c0_39, %c0_40, %c0_41] : memref<18x16x4xf32, #tpu.memory_space<vmem>>, vector<16x16x4xf32>
    %24 = vector.shape_cast %23 : vector<16x16x4xf32> to vector<256x4xf32>
    %c0_42 = arith.constant 0 : index
    %c0_43 = arith.constant 0 : index
    %c0_44 = arith.constant 0 : index
    %25 = vector.load %arg5[%c0_42, %c0_43, %c0_44] : memref<9x4x4xf32, #tpu.memory_space<vmem>>, vector<1x4x4xf32>
    %26 = vector.shape_cast %25 : vector<1x4x4xf32> to vector<4x4xf32>
    %cst_45 = arith.constant dense<0.000000e+00> : vector<256x4xf32>
    %27 = tpu.matmul %24, %26, %cst_45 {dimension_numbers = #tpu.dot_dimension_numbers<[1], [0], [0], [1], [0, 0, 1, 1], [], []>} : vector<256x4xf32>, vector<4x4xf32>, vector<256x4xf32> -> vector<256x4xf32>
    %c0_46 = arith.constant 0 : index
    %c0_47 = arith.constant 0 : index
    %c0_48 = arith.constant 0 : index
    %28 = vector.load %arg8[%c0_46, %c0_47, %c0_48] : memref<18x16x4xf32, #tpu.memory_space<vmem>>, vector<16x16x4xf32>
    %29 = vector.shape_cast %28 : vector<16x16x4xf32> to vector<256x4xf32>
    %c1_49 = arith.constant 1 : index
    %c0_50 = arith.constant 0 : index
    %c0_51 = arith.constant 0 : index
    %30 = vector.load %arg5[%c1_49, %c0_50, %c0_51] : memref<9x4x4xf32, #tpu.memory_space<vmem>>, vector<1x4x4xf32>
    %31 = vector.shape_cast %30 : vector<1x4x4xf32> to vector<4x4xf32>
    %cst_52 = arith.constant dense<0.000000e+00> : vector<256x4xf32>
    %32 = tpu.matmul %29, %31, %cst_52 {dimension_numbers = #tpu.dot_dimension_numbers<[1], [0], [0], [1], [0, 0, 1, 1], [], []>} : vector<256x4xf32>, vector<4x4xf32>, vector<256x4xf32> -> vector<256x4xf32>
    %33 = arith.addf %27, %32 : vector<256x4xf32>
    %c0_53 = arith.constant 0 : index
    %c0_54 = arith.constant 0 : index
    %c0_55 = arith.constant 0 : index
    %34 = vector.load %arg10[%c0_53, %c0_54, %c0_55] : memref<18x16x4xf32, #tpu.memory_space<vmem>>, vector<16x16x4xf32>
    %35 = vector.shape_cast %34 : vector<16x16x4xf32> to vector<256x4xf32>
    %c2 = arith.constant 2 : index
    %c0_56 = arith.constant 0 : index
    %c0_57 = arith.constant 0 : index
    %36 = vector.load %arg5[%c2, %c0_56, %c0_57] : memref<9x4x4xf32, #tpu.memory_space<vmem>>, vector<1x4x4xf32>
    %37 = vector.shape_cast %36 : vector<1x4x4xf32> to vector<4x4xf32>
    %cst_58 = arith.constant dense<0.000000e+00> : vector<256x4xf32>
    %38 = tpu.matmul %35, %37, %cst_58 {dimension_numbers = #tpu.dot_dimension_numbers<[1], [0], [0], [1], [0, 0, 1, 1], [], []>} : vector<256x4xf32>, vector<4x4xf32>, vector<256x4xf32> -> vector<256x4xf32>
    %39 = arith.addf %33, %38 : vector<256x4xf32>
    %c1_59 = arith.constant 1 : index
    %c0_60 = arith.constant 0 : index
    %c0_61 = arith.constant 0 : index
    %40 = vector.load %arg9[%c1_59, %c0_60, %c0_61] : memref<18x16x4xf32, #tpu.memory_space<vmem>>, vector<16x16x4xf32>
    %41 = vector.shape_cast %40 : vector<16x16x4xf32> to vector<256x4xf32>
    %c3 = arith.constant 3 : index
    %c0_62 = arith.constant 0 : index
    %c0_63 = arith.constant 0 : index
    %42 = vector.load %arg5[%c3, %c0_62, %c0_63] : memref<9x4x4xf32, #tpu.memory_space<vmem>>, vector<1x4x4xf32>
    %43 = vector.shape_cast %42 : vector<1x4x4xf32> to vector<4x4xf32>
    %cst_64 = arith.constant dense<0.000000e+00> : vector<256x4xf32>
    %44 = tpu.matmul %41, %43, %cst_64 {dimension_numbers = #tpu.dot_dimension_numbers<[1], [0], [0], [1], [0, 0, 1, 1], [], []>} : vector<256x4xf32>, vector<4x4xf32>, vector<256x4xf32> -> vector<256x4xf32>
    %45 = arith.addf %39, %44 : vector<256x4xf32>
    %c1_65 = arith.constant 1 : index
    %c0_66 = arith.constant 0 : index
    %c0_67 = arith.constant 0 : index
    %46 = vector.load %arg8[%c1_65, %c0_66, %c0_67] : memref<18x16x4xf32, #tpu.memory_space<vmem>>, vector<16x16x4xf32>
    %47 = vector.shape_cast %46 : vector<16x16x4xf32> to vector<256x4xf32>
    %c4 = arith.constant 4 : index
    %c0_68 = arith.constant 0 : index
    %c0_69 = arith.constant 0 : index
    %48 = vector.load %arg5[%c4, %c0_68, %c0_69] : memref<9x4x4xf32, #tpu.memory_space<vmem>>, vector<1x4x4xf32>
    %49 = vector.shape_cast %48 : vector<1x4x4xf32> to vector<4x4xf32>
    %cst_70 = arith.constant dense<0.000000e+00> : vector<256x4xf32>
    %50 = tpu.matmul %47, %49, %cst_70 {dimension_numbers = #tpu.dot_dimension_numbers<[1], [0], [0], [1], [0, 0, 1, 1], [], []>} : vector<256x4xf32>, vector<4x4xf32>, vector<256x4xf32> -> vector<256x4xf32>
    %51 = arith.addf %45, %50 : vector<256x4xf32>
    %c1_71 = arith.constant 1 : index
    %c0_72 = arith.constant 0 : index
    %c0_73 = arith.constant 0 : index
    %52 = vector.load %arg10[%c1_71, %c0_72, %c0_73] : memref<18x16x4xf32, #tpu.memory_space<vmem>>, vector<16x16x4xf32>
    %53 = vector.shape_cast %52 : vector<16x16x4xf32> to vector<256x4xf32>
    %c5 = arith.constant 5 : index
    %c0_74 = arith.constant 0 : index
    %c0_75 = arith.constant 0 : index
    %54 = vector.load %arg5[%c5, %c0_74, %c0_75] : memref<9x4x4xf32, #tpu.memory_space<vmem>>, vector<1x4x4xf32>
    %55 = vector.shape_cast %54 : vector<1x4x4xf32> to vector<4x4xf32>
    %cst_76 = arith.constant dense<0.000000e+00> : vector<256x4xf32>
    %56 = tpu.matmul %53, %55, %cst_76 {dimension_numbers = #tpu.dot_dimension_numbers<[1], [0], [0], [1], [0, 0, 1, 1], [], []>} : vector<256x4xf32>, vector<4x4xf32>, vector<256x4xf32> -> vector<256x4xf32>
    %57 = arith.addf %51, %56 : vector<256x4xf32>
    %c2_77 = arith.constant 2 : index
    %c0_78 = arith.constant 0 : index
    %c0_79 = arith.constant 0 : index
    %58 = vector.load %arg9[%c2_77, %c0_78, %c0_79] : memref<18x16x4xf32, #tpu.memory_space<vmem>>, vector<16x16x4xf32>
    %59 = vector.shape_cast %58 : vector<16x16x4xf32> to vector<256x4xf32>
    %c6 = arith.constant 6 : index
    %c0_80 = arith.constant 0 : index
    %c0_81 = arith.constant 0 : index
    %60 = vector.load %arg5[%c6, %c0_80, %c0_81] : memref<9x4x4xf32, #tpu.memory_space<vmem>>, vector<1x4x4xf32>
    %61 = vector.shape_cast %60 : vector<1x4x4xf32> to vector<4x4xf32>
    %cst_82 = arith.constant dense<0.000000e+00> : vector<256x4xf32>
    %62 = tpu.matmul %59, %61, %cst_82 {dimension_numbers = #tpu.dot_dimension_numbers<[1], [0], [0], [1], [0, 0, 1, 1], [], []>} : vector<256x4xf32>, vector<4x4xf32>, vector<256x4xf32> -> vector<256x4xf32>
    %63 = arith.addf %57, %62 : vector<256x4xf32>
    %c2_83 = arith.constant 2 : index
    %c0_84 = arith.constant 0 : index
    %c0_85 = arith.constant 0 : index
    %64 = vector.load %arg8[%c2_83, %c0_84, %c0_85] : memref<18x16x4xf32, #tpu.memory_space<vmem>>, vector<16x16x4xf32>
    %65 = vector.shape_cast %64 : vector<16x16x4xf32> to vector<256x4xf32>
    %c7 = arith.constant 7 : index
    %c0_86 = arith.constant 0 : index
    %c0_87 = arith.constant 0 : index
    %66 = vector.load %arg5[%c7, %c0_86, %c0_87] : memref<9x4x4xf32, #tpu.memory_space<vmem>>, vector<1x4x4xf32>
    %67 = vector.shape_cast %66 : vector<1x4x4xf32> to vector<4x4xf32>
    %cst_88 = arith.constant dense<0.000000e+00> : vector<256x4xf32>
    %68 = tpu.matmul %65, %67, %cst_88 {dimension_numbers = #tpu.dot_dimension_numbers<[1], [0], [0], [1], [0, 0, 1, 1], [], []>} : vector<256x4xf32>, vector<4x4xf32>, vector<256x4xf32> -> vector<256x4xf32>
    %69 = arith.addf %63, %68 : vector<256x4xf32>
    %c2_89 = arith.constant 2 : index
    %c0_90 = arith.constant 0 : index
    %c0_91 = arith.constant 0 : index
    %70 = vector.load %arg10[%c2_89, %c0_90, %c0_91] : memref<18x16x4xf32, #tpu.memory_space<vmem>>, vector<16x16x4xf32>
    %71 = vector.shape_cast %70 : vector<16x16x4xf32> to vector<256x4xf32>
    %c8 = arith.constant 8 : index
    %c0_92 = arith.constant 0 : index
    %c0_93 = arith.constant 0 : index
    %72 = vector.load %arg5[%c8, %c0_92, %c0_93] : memref<9x4x4xf32, #tpu.memory_space<vmem>>, vector<1x4x4xf32>
    %73 = vector.shape_cast %72 : vector<1x4x4xf32> to vector<4x4xf32>
    %cst_94 = arith.constant dense<0.000000e+00> : vector<256x4xf32>
    %74 = tpu.matmul %71, %73, %cst_94 {dimension_numbers = #tpu.dot_dimension_numbers<[1], [0], [0], [1], [0, 0, 1, 1], [], []>} : vector<256x4xf32>, vector<4x4xf32>, vector<256x4xf32> -> vector<256x4xf32>
    %75 = arith.addf %69, %74 : vector<256x4xf32>
    %cst_95 = arith.constant dense<0.000000e+00> : vector<4xf32>
    %76 = vector.multi_reduction <add>, %75, %cst_95 [0] : vector<256x4xf32> to vector<4xf32>
    %77 = vector.shape_cast %76 : vector<4xf32> to vector<1x4xf32>
    %78 = arith.mulf %75, %75 : vector<256x4xf32>
    %cst_96 = arith.constant dense<0.000000e+00> : vector<4xf32>
    %79 = vector.multi_reduction <add>, %78, %cst_96 [0] : vector<256x4xf32> to vector<4xf32>
    %80 = vector.shape_cast %79 : vector<4xf32> to vector<1x4xf32>
    %81 = tpu.concatenate %77, %80 in 0 : vector<1x4xf32>, vector<1x4xf32> -> vector<2x4xf32>
    %82 = vector.shape_cast %81 : vector<2x4xf32> to vector<1x1x2x4xf32>
    %c0_97 = arith.constant 0 : index
    %c0_98 = arith.constant 0 : index
    %c0_99 = arith.constant 0 : index
    %c0_100 = arith.constant 0 : index
    %83 = vector.load %arg7[%c0_97, %c0_98, %c0_99, %c0_100] : memref<1x1x2x4xf32, #tpu.memory_space<vmem>>, vector<1x1x2x4xf32>
    tpu.vector_store %arg7[%c0_97, %c0_98, %c0_99, %c0_100], %82 {strides = array<i32>} : memref<1x1x2x4xf32, #tpu.memory_space<vmem>>, vector<1x1x2x4xf32>,
    %84 = vector.shape_cast %75 : vector<256x4xf32> to vector<1x16x16x4xf32>
    %c0_101 = arith.constant 0 : index
    %c0_102 = arith.constant 0 : index
    %c0_103 = arith.constant 0 : index
    %c0_104 = arith.constant 0 : index
    %85 = vector.load %arg6[%c0_101, %c0_102, %c0_103, %c0_104] : memref<1x16x16x4xf32, #tpu.memory_space<vmem>>, vector<1x16x16x4xf32>
    tpu.vector_store %arg6[%c0_101, %c0_102, %c0_103, %c0_104], %84 {strides = array<i32>} : memref<1x16x16x4xf32, #tpu.memory_space<vmem>>, vector<1x16x16x4xf32>,
    return
  }
  func.func @transform_0(%arg0: i32, %arg1: i32) -> (i32, i32, i32, i32) {
    %c0_i32 = arith.constant 0 : i32
    %c0_i32_0 = arith.constant 0 : i32
    %c0_i32_1 = arith.constant 0 : i32
    return %arg0, %arg1, %c0_i32, %c0_i32_0 : i32, i32, i32, i32
  }
  func.func @transform_1(%arg0: i32, %arg1: i32) -> (i32, i32, i32, i32) {
    %c16_i32 = arith.constant 16 : i32
    %0 = arith.muli %arg1, %c16_i32 : i32
    %c1_i32 = arith.constant 1 : i32
    %1 = arith.subi %0, %c1_i32 : i32
    %c0_i32 = arith.constant 0 : i32
    %2 = arith.maxsi %1, %c0_i32 : i32
    %c0_i32_0 = arith.constant 0 : i32
    %c0_i32_1 = arith.constant 0 : i32
    %c0_i32_2 = arith.constant 0 : i32
    return %arg0, %2, %c0_i32_0, %c0_i32_1 : i32, i32, i32, i32
  }
  func.func @transform_2(%arg0: i32, %arg1: i32) -> (i32, i32, i32, i32) {
    %c16_i32 = arith.constant 16 : i32
    %0 = arith.muli %arg1, %c16_i32 : i32
    %c16_i32_0 = arith.constant 16 : i32
    %1 = arith.addi %0, %c16_i32_0 : i32
    %c15_i32 = arith.constant 15 : i32
    %2 = arith.minsi %1, %c15_i32 : i32
    %c0_i32 = arith.constant 0 : i32
    %c0_i32_1 = arith.constant 0 : i32
    %c0_i32_2 = arith.constant 0 : i32
    return %arg0, %2, %c0_i32, %c0_i32_1 : i32, i32, i32, i32
  }
  func.func @transform_3(%arg0: i32, %arg1: i32) -> (i32, i32, i32) {
    %c0_i32 = arith.constant 0 : i32
    %c0_i32_0 = arith.constant 0 : i32
    %c0_i32_1 = arith.constant 0 : i32
    %c0_i32_2 = arith.constant 0 : i32
    return %c0_i32, %c0_i32_0, %c0_i32_1 : i32, i32, i32
  }
  func.func @transform_4(%arg0: i32, %arg1: i32) -> (i32, i32, i32, i32) {
    %c0_i32 = arith.constant 0 : i32
    %c0_i32_0 = arith.constant 0 : i32
    %c0_i32_1 = arith.constant 0 : i32
    return %arg0, %arg1, %c0_i32, %c0_i32_0 : i32, i32, i32, i32
  }
  func.func @transform_5(%arg0: i32, %arg1: i32) -> (i32, i32, i32, i32) {
    %c0_i32 = arith.constant 0 : i32
    %c0_i32_0 = arith.constant 0 : i32
    %c0_i32_1 = arith.constant 0 : i32
    return %arg0, %arg1, %c0_i32, %c0_i32_0 : i32, i32, i32, i32
  }
}

module attributes {stable_mosaic.version = 11 : i64} {
  func.func @_conv_stats_kernel(%arg0: i32, %arg1: i32, %arg2: memref<1x16x16x4xf32, #tpu.memory_space<vmem>>, %arg3: memref<1x1x16x4xf32, #tpu.memory_space<vmem>>, %arg4: memref<1x1x16x4xf32, #tpu.memory_space<vmem>>, %arg5: memref<1x16x16x4xf32, #tpu.memory_space<vmem>>, %arg6: memref<1x1x16x4xf32, #tpu.memory_space<vmem>>, %arg7: memref<1x1x16x4xf32, #tpu.memory_space<vmem>>, %arg8: memref<1x4xf32, #tpu.memory_space<vmem>>, %arg9: memref<1x4xf32, #tpu.memory_space<vmem>>, %arg10: memref<9x4x4xf32, #tpu.memory_space<vmem>>, %arg11: memref<1x16x16x4xf32, #tpu.memory_space<vmem>>, %arg12: memref<1x1x2x4xf32, #tpu.memory_space<vmem>>, %arg13: memref<18x16x4xf32, #tpu.memory_space<vmem>>, %arg14: memref<18x16x4xf32, #tpu.memory_space<vmem>>, %arg15: memref<18x16x4xf32, #tpu.memory_space<vmem>>) attributes {dimension_semantics = [#tpu.dimension_semantics<parallel>, #tpu.dimension_semantics<parallel>], iteration_bounds = array<i64: 2, 1>, scalar_prefetch = 0 : i64, scratch_operands = 3 : i64, tpu.core_type = #tpu.core_type<tc>, window_params = [{transform_indices = @transform_0, window_bounds = array<i64: 1, 16, 16, 4>}, {transform_indices = @transform_1, window_bounds = array<i64: 1, 1, 16, 4>}, {transform_indices = @transform_2, window_bounds = array<i64: 1, 1, 16, 4>}, {transform_indices = @transform_3, window_bounds = array<i64: 1, 16, 16, 4>}, {transform_indices = @transform_4, window_bounds = array<i64: 1, 1, 16, 4>}, {transform_indices = @transform_5, window_bounds = array<i64: 1, 1, 16, 4>}, {pipeline_mode = #tpu.pipeline_mode<synchronous>, transform_indices = @transform_6, window_bounds = array<i64: 1, 4>}, {pipeline_mode = #tpu.pipeline_mode<synchronous>, transform_indices = @transform_7, window_bounds = array<i64: 1, 4>}, {pipeline_mode = #tpu.pipeline_mode<synchronous>, transform_indices = @transform_8, window_bounds = array<i64: 9, 4, 4>}, {transform_indices = @transform_9, window_bounds = array<i64: 1, 16, 16, 4>}, {transform_indices = @transform_10, window_bounds = array<i64: 1, 1, 2, 4>}]} {
    %c0 = arith.constant 0 : index
    %c0_0 = arith.constant 0 : index
    %c0_1 = arith.constant 0 : index
    %c0_2 = arith.constant 0 : index
    %0 = vector.load %arg2[%c0, %c0_0, %c0_1, %c0_2] : memref<1x16x16x4xf32, #tpu.memory_space<vmem>>, vector<1x16x16x4xf32>
    %1 = vector.shape_cast %0 : vector<1x16x16x4xf32> to vector<16x16x4xf32>
    %c0_3 = arith.constant 0 : index
    %c0_4 = arith.constant 0 : index
    %c0_5 = arith.constant 0 : index
    %c0_6 = arith.constant 0 : index
    %2 = vector.load %arg5[%c0_3, %c0_4, %c0_5, %c0_6] : memref<1x16x16x4xf32, #tpu.memory_space<vmem>>, vector<1x16x16x4xf32>
    %3 = vector.shape_cast %2 : vector<1x16x16x4xf32> to vector<16x16x4xf32>
    %c0_7 = arith.constant 0 : index
    %c0_8 = arith.constant 0 : index
    %4 = vector.load %arg8[%c0_7, %c0_8] : memref<1x4xf32, #tpu.memory_space<vmem>>, vector<1x4xf32>
    %5 = vector.shape_cast %4 : vector<1x4xf32> to vector<1x1x4xf32>
    %6 = vector.broadcast %5 : vector<1x1x4xf32> to vector<16x16x4xf32>
    %7 = arith.mulf %3, %6 : vector<16x16x4xf32>
    %c0_9 = arith.constant 0 : index
    %c0_10 = arith.constant 0 : index
    %8 = vector.load %arg9[%c0_9, %c0_10] : memref<1x4xf32, #tpu.memory_space<vmem>>, vector<1x4xf32>
    %9 = vector.shape_cast %8 : vector<1x4xf32> to vector<1x1x4xf32>
    %10 = vector.broadcast %9 : vector<1x1x4xf32> to vector<16x16x4xf32>
    %11 = arith.addf %7, %10 : vector<16x16x4xf32>
    %cst = arith.constant 0.000000e+00 : f32
    %12 = vector.broadcast %cst : f32 to vector<16x16x4xf32>
    %13 = arith.maximumf %11, %12 : vector<16x16x4xf32>
    %14 = arith.addf %1, %13 : vector<16x16x4xf32>
    %c1 = arith.constant 1 : index
    %c0_11 = arith.constant 0 : index
    %c0_12 = arith.constant 0 : index
    %15 = vector.load %arg13[%c1, %c0_11, %c0_12] : memref<18x16x4xf32, #tpu.memory_space<vmem>>, vector<16x16x4xf32>
    tpu.vector_store %arg13[%c1, %c0_11, %c0_12], %14 {strides = array<i32>} : memref<18x16x4xf32, #tpu.memory_space<vmem>>, vector<16x16x4xf32>,
    %c0_13 = arith.constant 0 : index
    %c0_14 = arith.constant 0 : index
    %c0_15 = arith.constant 0 : index
    %c0_16 = arith.constant 0 : index
    %16 = vector.load %arg3[%c0_13, %c0_14, %c0_15, %c0_16] : memref<1x1x16x4xf32, #tpu.memory_space<vmem>>, vector<1x1x16x4xf32>
    %17 = vector.shape_cast %16 : vector<1x1x16x4xf32> to vector<1x16x4xf32>
    %c0_17 = arith.constant 0 : index
    %c0_18 = arith.constant 0 : index
    %c0_19 = arith.constant 0 : index
    %c0_20 = arith.constant 0 : index
    %18 = vector.load %arg6[%c0_17, %c0_18, %c0_19, %c0_20] : memref<1x1x16x4xf32, #tpu.memory_space<vmem>>, vector<1x1x16x4xf32>
    %19 = vector.shape_cast %18 : vector<1x1x16x4xf32> to vector<1x16x4xf32>
    %c0_21 = arith.constant 0 : index
    %c0_22 = arith.constant 0 : index
    %20 = vector.load %arg8[%c0_21, %c0_22] : memref<1x4xf32, #tpu.memory_space<vmem>>, vector<1x4xf32>
    %21 = vector.shape_cast %20 : vector<1x4xf32> to vector<1x1x4xf32>
    %22 = vector.broadcast %21 : vector<1x1x4xf32> to vector<1x16x4xf32>
    %23 = arith.mulf %19, %22 : vector<1x16x4xf32>
    %c0_23 = arith.constant 0 : index
    %c0_24 = arith.constant 0 : index
    %24 = vector.load %arg9[%c0_23, %c0_24] : memref<1x4xf32, #tpu.memory_space<vmem>>, vector<1x4xf32>
    %25 = vector.shape_cast %24 : vector<1x4xf32> to vector<1x1x4xf32>
    %26 = vector.broadcast %25 : vector<1x1x4xf32> to vector<1x16x4xf32>
    %27 = arith.addf %23, %26 : vector<1x16x4xf32>
    %cst_25 = arith.constant 0.000000e+00 : f32
    %28 = vector.broadcast %cst_25 : f32 to vector<1x16x4xf32>
    %29 = arith.maximumf %27, %28 : vector<1x16x4xf32>
    %30 = arith.addf %17, %29 : vector<1x16x4xf32>
    %c0_26 = arith.constant 0 : index
    %c0_27 = arith.constant 0 : index
    %c0_28 = arith.constant 0 : index
    %31 = vector.load %arg13[%c0_26, %c0_27, %c0_28] : memref<18x16x4xf32, #tpu.memory_space<vmem>>, vector<1x16x4xf32>
    tpu.vector_store %arg13[%c0_26, %c0_27, %c0_28], %30 {strides = array<i32>} : memref<18x16x4xf32, #tpu.memory_space<vmem>>, vector<1x16x4xf32>,
    %c0_29 = arith.constant 0 : index
    %c0_30 = arith.constant 0 : index
    %c0_31 = arith.constant 0 : index
    %c0_32 = arith.constant 0 : index
    %32 = vector.load %arg4[%c0_29, %c0_30, %c0_31, %c0_32] : memref<1x1x16x4xf32, #tpu.memory_space<vmem>>, vector<1x1x16x4xf32>
    %33 = vector.shape_cast %32 : vector<1x1x16x4xf32> to vector<1x16x4xf32>
    %c0_33 = arith.constant 0 : index
    %c0_34 = arith.constant 0 : index
    %c0_35 = arith.constant 0 : index
    %c0_36 = arith.constant 0 : index
    %34 = vector.load %arg7[%c0_33, %c0_34, %c0_35, %c0_36] : memref<1x1x16x4xf32, #tpu.memory_space<vmem>>, vector<1x1x16x4xf32>
    %35 = vector.shape_cast %34 : vector<1x1x16x4xf32> to vector<1x16x4xf32>
    %c0_37 = arith.constant 0 : index
    %c0_38 = arith.constant 0 : index
    %36 = vector.load %arg8[%c0_37, %c0_38] : memref<1x4xf32, #tpu.memory_space<vmem>>, vector<1x4xf32>
    %37 = vector.shape_cast %36 : vector<1x4xf32> to vector<1x1x4xf32>
    %38 = vector.broadcast %37 : vector<1x1x4xf32> to vector<1x16x4xf32>
    %39 = arith.mulf %35, %38 : vector<1x16x4xf32>
    %c0_39 = arith.constant 0 : index
    %c0_40 = arith.constant 0 : index
    %40 = vector.load %arg9[%c0_39, %c0_40] : memref<1x4xf32, #tpu.memory_space<vmem>>, vector<1x4xf32>
    %41 = vector.shape_cast %40 : vector<1x4xf32> to vector<1x1x4xf32>
    %42 = vector.broadcast %41 : vector<1x1x4xf32> to vector<1x16x4xf32>
    %43 = arith.addf %39, %42 : vector<1x16x4xf32>
    %cst_41 = arith.constant 0.000000e+00 : f32
    %44 = vector.broadcast %cst_41 : f32 to vector<1x16x4xf32>
    %45 = arith.maximumf %43, %44 : vector<1x16x4xf32>
    %46 = arith.addf %33, %45 : vector<1x16x4xf32>
    %c17 = arith.constant 17 : index
    %c0_42 = arith.constant 0 : index
    %c0_43 = arith.constant 0 : index
    %47 = vector.load %arg13[%c17, %c0_42, %c0_43] : memref<18x16x4xf32, #tpu.memory_space<vmem>>, vector<1x16x4xf32>
    tpu.vector_store %arg13[%c17, %c0_42, %c0_43], %46 {strides = array<i32>} : memref<18x16x4xf32, #tpu.memory_space<vmem>>, vector<1x16x4xf32>,
    %cst_44 = arith.constant 0.000000e+00 : f32
    %48 = vector.broadcast %cst_44 : f32 to vector<1x16x4xf32>
    %c0_i32 = arith.constant 0 : i32
    %49 = arith.cmpi eq, %arg1, %c0_i32 : i32
    %50 = arith.extui %49 : i1 to i32
    %c0_i32_45 = arith.constant 0 : i32
    %51 = arith.cmpi ne, %50, %c0_i32_45 : i32
    scf.if %51 {
      %c0_132 = arith.constant 0 : index
      %c0_133 = arith.constant 0 : index
      %c0_134 = arith.constant 0 : index
      %125 = vector.load %arg13[%c0_132, %c0_133, %c0_134] : memref<18x16x4xf32, #tpu.memory_space<vmem>>, vector<1x16x4xf32>
      tpu.vector_store %arg13[%c0_132, %c0_133, %c0_134], %48 {strides = array<i32>} : memref<18x16x4xf32, #tpu.memory_space<vmem>>, vector<1x16x4xf32>,
    } else {
    }
    %c0_i32_46 = arith.constant 0 : i32
    %52 = arith.cmpi eq, %arg1, %c0_i32_46 : i32
    %53 = arith.extui %52 : i1 to i32
    %c0_i32_47 = arith.constant 0 : i32
    %54 = arith.cmpi ne, %53, %c0_i32_47 : i32
    scf.if %54 {
      %c17_132 = arith.constant 17 : index
      %c0_133 = arith.constant 0 : index
      %c0_134 = arith.constant 0 : index
      %125 = vector.load %arg13[%c17_132, %c0_133, %c0_134] : memref<18x16x4xf32, #tpu.memory_space<vmem>>, vector<1x16x4xf32>
      tpu.vector_store %arg13[%c17_132, %c0_133, %c0_134], %48 {strides = array<i32>} : memref<18x16x4xf32, #tpu.memory_space<vmem>>, vector<1x16x4xf32>,
    } else {
    }
    %cst_48 = arith.constant 0.000000e+00 : f32
    %55 = vector.broadcast %cst_48 : f32 to vector<18x1x4xf32>
    %c0_49 = arith.constant 0 : index
    %c0_50 = arith.constant 0 : index
    %c0_51 = arith.constant 0 : index
    %56 = vector.load %arg13[%c0_49, %c0_50, %c0_51] : memref<18x16x4xf32, #tpu.memory_space<vmem>>, vector<18x15x4xf32>
    %c0_52 = arith.constant 0 : index
    %c1_53 = arith.constant 1 : index
    %c0_54 = arith.constant 0 : index
    %57 = vector.load %arg14[%c0_52, %c1_53, %c0_54] : memref<18x16x4xf32, #tpu.memory_space<vmem>>, vector<18x15x4xf32>
    tpu.vector_store %arg14[%c0_52, %c1_53, %c0_54], %56 {strides = array<i32>} : memref<18x16x4xf32, #tpu.memory_space<vmem>>, vector<18x15x4xf32>,
    %c0_55 = arith.constant 0 : index
    %c0_56 = arith.constant 0 : index
    %c0_57 = arith.constant 0 : index
    %58 = vector.load %arg14[%c0_55, %c0_56, %c0_57] : memref<18x16x4xf32, #tpu.memory_space<vmem>>, vector<18x1x4xf32>
    tpu.vector_store %arg14[%c0_55, %c0_56, %c0_57], %55 {strides = array<i32>} : memref<18x16x4xf32, #tpu.memory_space<vmem>>, vector<18x1x4xf32>,
    %c0_58 = arith.constant 0 : index
    %c1_59 = arith.constant 1 : index
    %c0_60 = arith.constant 0 : index
    %59 = vector.load %arg13[%c0_58, %c1_59, %c0_60] : memref<18x16x4xf32, #tpu.memory_space<vmem>>, vector<18x15x4xf32>
    %c0_61 = arith.constant 0 : index
    %c0_62 = arith.constant 0 : index
    %c0_63 = arith.constant 0 : index
    %60 = vector.load %arg15[%c0_61, %c0_62, %c0_63] : memref<18x16x4xf32, #tpu.memory_space<vmem>>, vector<18x15x4xf32>
    tpu.vector_store %arg15[%c0_61, %c0_62, %c0_63], %59 {strides = array<i32>} : memref<18x16x4xf32, #tpu.memory_space<vmem>>, vector<18x15x4xf32>,
    %c0_64 = arith.constant 0 : index
    %c15 = arith.constant 15 : index
    %c0_65 = arith.constant 0 : index
    %61 = vector.load %arg15[%c0_64, %c15, %c0_65] : memref<18x16x4xf32, #tpu.memory_space<vmem>>, vector<18x1x4xf32>
    tpu.vector_store %arg15[%c0_64, %c15, %c0_65], %55 {strides = array<i32>} : memref<18x16x4xf32, #tpu.memory_space<vmem>>, vector<18x1x4xf32>,
    %c0_66 = arith.constant 0 : index
    %c0_67 = arith.constant 0 : index
    %c0_68 = arith.constant 0 : index
    %62 = vector.load %arg14[%c0_66, %c0_67, %c0_68] : memref<18x16x4xf32, #tpu.memory_space<vmem>>, vector<16x16x4xf32>
    %63 = vector.shape_cast %62 : vector<16x16x4xf32> to vector<256x4xf32>
    %c0_69 = arith.constant 0 : index
    %c0_70 = arith.constant 0 : index
    %c0_71 = arith.constant 0 : index
    %64 = vector.load %arg10[%c0_69, %c0_70, %c0_71] : memref<9x4x4xf32, #tpu.memory_space<vmem>>, vector<1x4x4xf32>
    %65 = vector.shape_cast %64 : vector<1x4x4xf32> to vector<4x4xf32>
    %cst_72 = arith.constant dense<0.000000e+00> : vector<256x4xf32>
    %66 = tpu.matmul %63, %65, %cst_72 {dimension_numbers = #tpu.dot_dimension_numbers<[1], [0], [0], [1], [0, 0, 1, 1], [], []>} : vector<256x4xf32>, vector<4x4xf32>, vector<256x4xf32> -> vector<256x4xf32>
    %c0_73 = arith.constant 0 : index
    %c0_74 = arith.constant 0 : index
    %c0_75 = arith.constant 0 : index
    %67 = vector.load %arg13[%c0_73, %c0_74, %c0_75] : memref<18x16x4xf32, #tpu.memory_space<vmem>>, vector<16x16x4xf32>
    %68 = vector.shape_cast %67 : vector<16x16x4xf32> to vector<256x4xf32>
    %c1_76 = arith.constant 1 : index
    %c0_77 = arith.constant 0 : index
    %c0_78 = arith.constant 0 : index
    %69 = vector.load %arg10[%c1_76, %c0_77, %c0_78] : memref<9x4x4xf32, #tpu.memory_space<vmem>>, vector<1x4x4xf32>
    %70 = vector.shape_cast %69 : vector<1x4x4xf32> to vector<4x4xf32>
    %cst_79 = arith.constant dense<0.000000e+00> : vector<256x4xf32>
    %71 = tpu.matmul %68, %70, %cst_79 {dimension_numbers = #tpu.dot_dimension_numbers<[1], [0], [0], [1], [0, 0, 1, 1], [], []>} : vector<256x4xf32>, vector<4x4xf32>, vector<256x4xf32> -> vector<256x4xf32>
    %72 = arith.addf %66, %71 : vector<256x4xf32>
    %c0_80 = arith.constant 0 : index
    %c0_81 = arith.constant 0 : index
    %c0_82 = arith.constant 0 : index
    %73 = vector.load %arg15[%c0_80, %c0_81, %c0_82] : memref<18x16x4xf32, #tpu.memory_space<vmem>>, vector<16x16x4xf32>
    %74 = vector.shape_cast %73 : vector<16x16x4xf32> to vector<256x4xf32>
    %c2 = arith.constant 2 : index
    %c0_83 = arith.constant 0 : index
    %c0_84 = arith.constant 0 : index
    %75 = vector.load %arg10[%c2, %c0_83, %c0_84] : memref<9x4x4xf32, #tpu.memory_space<vmem>>, vector<1x4x4xf32>
    %76 = vector.shape_cast %75 : vector<1x4x4xf32> to vector<4x4xf32>
    %cst_85 = arith.constant dense<0.000000e+00> : vector<256x4xf32>
    %77 = tpu.matmul %74, %76, %cst_85 {dimension_numbers = #tpu.dot_dimension_numbers<[1], [0], [0], [1], [0, 0, 1, 1], [], []>} : vector<256x4xf32>, vector<4x4xf32>, vector<256x4xf32> -> vector<256x4xf32>
    %78 = arith.addf %72, %77 : vector<256x4xf32>
    %c1_86 = arith.constant 1 : index
    %c0_87 = arith.constant 0 : index
    %c0_88 = arith.constant 0 : index
    %79 = vector.load %arg14[%c1_86, %c0_87, %c0_88] : memref<18x16x4xf32, #tpu.memory_space<vmem>>, vector<16x16x4xf32>
    %80 = vector.shape_cast %79 : vector<16x16x4xf32> to vector<256x4xf32>
    %c3 = arith.constant 3 : index
    %c0_89 = arith.constant 0 : index
    %c0_90 = arith.constant 0 : index
    %81 = vector.load %arg10[%c3, %c0_89, %c0_90] : memref<9x4x4xf32, #tpu.memory_space<vmem>>, vector<1x4x4xf32>
    %82 = vector.shape_cast %81 : vector<1x4x4xf32> to vector<4x4xf32>
    %cst_91 = arith.constant dense<0.000000e+00> : vector<256x4xf32>
    %83 = tpu.matmul %80, %82, %cst_91 {dimension_numbers = #tpu.dot_dimension_numbers<[1], [0], [0], [1], [0, 0, 1, 1], [], []>} : vector<256x4xf32>, vector<4x4xf32>, vector<256x4xf32> -> vector<256x4xf32>
    %84 = arith.addf %78, %83 : vector<256x4xf32>
    %c1_92 = arith.constant 1 : index
    %c0_93 = arith.constant 0 : index
    %c0_94 = arith.constant 0 : index
    %85 = vector.load %arg13[%c1_92, %c0_93, %c0_94] : memref<18x16x4xf32, #tpu.memory_space<vmem>>, vector<16x16x4xf32>
    %86 = vector.shape_cast %85 : vector<16x16x4xf32> to vector<256x4xf32>
    %c4 = arith.constant 4 : index
    %c0_95 = arith.constant 0 : index
    %c0_96 = arith.constant 0 : index
    %87 = vector.load %arg10[%c4, %c0_95, %c0_96] : memref<9x4x4xf32, #tpu.memory_space<vmem>>, vector<1x4x4xf32>
    %88 = vector.shape_cast %87 : vector<1x4x4xf32> to vector<4x4xf32>
    %cst_97 = arith.constant dense<0.000000e+00> : vector<256x4xf32>
    %89 = tpu.matmul %86, %88, %cst_97 {dimension_numbers = #tpu.dot_dimension_numbers<[1], [0], [0], [1], [0, 0, 1, 1], [], []>} : vector<256x4xf32>, vector<4x4xf32>, vector<256x4xf32> -> vector<256x4xf32>
    %90 = arith.addf %84, %89 : vector<256x4xf32>
    %c1_98 = arith.constant 1 : index
    %c0_99 = arith.constant 0 : index
    %c0_100 = arith.constant 0 : index
    %91 = vector.load %arg15[%c1_98, %c0_99, %c0_100] : memref<18x16x4xf32, #tpu.memory_space<vmem>>, vector<16x16x4xf32>
    %92 = vector.shape_cast %91 : vector<16x16x4xf32> to vector<256x4xf32>
    %c5 = arith.constant 5 : index
    %c0_101 = arith.constant 0 : index
    %c0_102 = arith.constant 0 : index
    %93 = vector.load %arg10[%c5, %c0_101, %c0_102] : memref<9x4x4xf32, #tpu.memory_space<vmem>>, vector<1x4x4xf32>
    %94 = vector.shape_cast %93 : vector<1x4x4xf32> to vector<4x4xf32>
    %cst_103 = arith.constant dense<0.000000e+00> : vector<256x4xf32>
    %95 = tpu.matmul %92, %94, %cst_103 {dimension_numbers = #tpu.dot_dimension_numbers<[1], [0], [0], [1], [0, 0, 1, 1], [], []>} : vector<256x4xf32>, vector<4x4xf32>, vector<256x4xf32> -> vector<256x4xf32>
    %96 = arith.addf %90, %95 : vector<256x4xf32>
    %c2_104 = arith.constant 2 : index
    %c0_105 = arith.constant 0 : index
    %c0_106 = arith.constant 0 : index
    %97 = vector.load %arg14[%c2_104, %c0_105, %c0_106] : memref<18x16x4xf32, #tpu.memory_space<vmem>>, vector<16x16x4xf32>
    %98 = vector.shape_cast %97 : vector<16x16x4xf32> to vector<256x4xf32>
    %c6 = arith.constant 6 : index
    %c0_107 = arith.constant 0 : index
    %c0_108 = arith.constant 0 : index
    %99 = vector.load %arg10[%c6, %c0_107, %c0_108] : memref<9x4x4xf32, #tpu.memory_space<vmem>>, vector<1x4x4xf32>
    %100 = vector.shape_cast %99 : vector<1x4x4xf32> to vector<4x4xf32>
    %cst_109 = arith.constant dense<0.000000e+00> : vector<256x4xf32>
    %101 = tpu.matmul %98, %100, %cst_109 {dimension_numbers = #tpu.dot_dimension_numbers<[1], [0], [0], [1], [0, 0, 1, 1], [], []>} : vector<256x4xf32>, vector<4x4xf32>, vector<256x4xf32> -> vector<256x4xf32>
    %102 = arith.addf %96, %101 : vector<256x4xf32>
    %c2_110 = arith.constant 2 : index
    %c0_111 = arith.constant 0 : index
    %c0_112 = arith.constant 0 : index
    %103 = vector.load %arg13[%c2_110, %c0_111, %c0_112] : memref<18x16x4xf32, #tpu.memory_space<vmem>>, vector<16x16x4xf32>
    %104 = vector.shape_cast %103 : vector<16x16x4xf32> to vector<256x4xf32>
    %c7 = arith.constant 7 : index
    %c0_113 = arith.constant 0 : index
    %c0_114 = arith.constant 0 : index
    %105 = vector.load %arg10[%c7, %c0_113, %c0_114] : memref<9x4x4xf32, #tpu.memory_space<vmem>>, vector<1x4x4xf32>
    %106 = vector.shape_cast %105 : vector<1x4x4xf32> to vector<4x4xf32>
    %cst_115 = arith.constant dense<0.000000e+00> : vector<256x4xf32>
    %107 = tpu.matmul %104, %106, %cst_115 {dimension_numbers = #tpu.dot_dimension_numbers<[1], [0], [0], [1], [0, 0, 1, 1], [], []>} : vector<256x4xf32>, vector<4x4xf32>, vector<256x4xf32> -> vector<256x4xf32>
    %108 = arith.addf %102, %107 : vector<256x4xf32>
    %c2_116 = arith.constant 2 : index
    %c0_117 = arith.constant 0 : index
    %c0_118 = arith.constant 0 : index
    %109 = vector.load %arg15[%c2_116, %c0_117, %c0_118] : memref<18x16x4xf32, #tpu.memory_space<vmem>>, vector<16x16x4xf32>
    %110 = vector.shape_cast %109 : vector<16x16x4xf32> to vector<256x4xf32>
    %c8 = arith.constant 8 : index
    %c0_119 = arith.constant 0 : index
    %c0_120 = arith.constant 0 : index
    %111 = vector.load %arg10[%c8, %c0_119, %c0_120] : memref<9x4x4xf32, #tpu.memory_space<vmem>>, vector<1x4x4xf32>
    %112 = vector.shape_cast %111 : vector<1x4x4xf32> to vector<4x4xf32>
    %cst_121 = arith.constant dense<0.000000e+00> : vector<256x4xf32>
    %113 = tpu.matmul %110, %112, %cst_121 {dimension_numbers = #tpu.dot_dimension_numbers<[1], [0], [0], [1], [0, 0, 1, 1], [], []>} : vector<256x4xf32>, vector<4x4xf32>, vector<256x4xf32> -> vector<256x4xf32>
    %114 = arith.addf %108, %113 : vector<256x4xf32>
    %cst_122 = arith.constant dense<0.000000e+00> : vector<4xf32>
    %115 = vector.multi_reduction <add>, %114, %cst_122 [0] : vector<256x4xf32> to vector<4xf32>
    %116 = vector.shape_cast %115 : vector<4xf32> to vector<1x4xf32>
    %117 = arith.mulf %114, %114 : vector<256x4xf32>
    %cst_123 = arith.constant dense<0.000000e+00> : vector<4xf32>
    %118 = vector.multi_reduction <add>, %117, %cst_123 [0] : vector<256x4xf32> to vector<4xf32>
    %119 = vector.shape_cast %118 : vector<4xf32> to vector<1x4xf32>
    %120 = tpu.concatenate %116, %119 in 0 : vector<1x4xf32>, vector<1x4xf32> -> vector<2x4xf32>
    %121 = vector.shape_cast %120 : vector<2x4xf32> to vector<1x1x2x4xf32>
    %c0_124 = arith.constant 0 : index
    %c0_125 = arith.constant 0 : index
    %c0_126 = arith.constant 0 : index
    %c0_127 = arith.constant 0 : index
    %122 = vector.load %arg12[%c0_124, %c0_125, %c0_126, %c0_127] : memref<1x1x2x4xf32, #tpu.memory_space<vmem>>, vector<1x1x2x4xf32>
    tpu.vector_store %arg12[%c0_124, %c0_125, %c0_126, %c0_127], %121 {strides = array<i32>} : memref<1x1x2x4xf32, #tpu.memory_space<vmem>>, vector<1x1x2x4xf32>,
    %123 = vector.shape_cast %114 : vector<256x4xf32> to vector<1x16x16x4xf32>
    %c0_128 = arith.constant 0 : index
    %c0_129 = arith.constant 0 : index
    %c0_130 = arith.constant 0 : index
    %c0_131 = arith.constant 0 : index
    %124 = vector.load %arg11[%c0_128, %c0_129, %c0_130, %c0_131] : memref<1x16x16x4xf32, #tpu.memory_space<vmem>>, vector<1x16x16x4xf32>
    tpu.vector_store %arg11[%c0_128, %c0_129, %c0_130, %c0_131], %123 {strides = array<i32>} : memref<1x16x16x4xf32, #tpu.memory_space<vmem>>, vector<1x16x16x4xf32>,
    return
  }
  func.func @transform_0(%arg0: i32, %arg1: i32) -> (i32, i32, i32, i32) {
    %c0_i32 = arith.constant 0 : i32
    %c0_i32_0 = arith.constant 0 : i32
    %c0_i32_1 = arith.constant 0 : i32
    return %arg0, %arg1, %c0_i32, %c0_i32_0 : i32, i32, i32, i32
  }
  func.func @transform_1(%arg0: i32, %arg1: i32) -> (i32, i32, i32, i32) {
    %c16_i32 = arith.constant 16 : i32
    %0 = arith.muli %arg1, %c16_i32 : i32
    %c1_i32 = arith.constant 1 : i32
    %1 = arith.subi %0, %c1_i32 : i32
    %c0_i32 = arith.constant 0 : i32
    %2 = arith.maxsi %1, %c0_i32 : i32
    %c0_i32_0 = arith.constant 0 : i32
    %c0_i32_1 = arith.constant 0 : i32
    %c0_i32_2 = arith.constant 0 : i32
    return %arg0, %2, %c0_i32_0, %c0_i32_1 : i32, i32, i32, i32
  }
  func.func @transform_2(%arg0: i32, %arg1: i32) -> (i32, i32, i32, i32) {
    %c16_i32 = arith.constant 16 : i32
    %0 = arith.muli %arg1, %c16_i32 : i32
    %c16_i32_0 = arith.constant 16 : i32
    %1 = arith.addi %0, %c16_i32_0 : i32
    %c15_i32 = arith.constant 15 : i32
    %2 = arith.minsi %1, %c15_i32 : i32
    %c0_i32 = arith.constant 0 : i32
    %c0_i32_1 = arith.constant 0 : i32
    %c0_i32_2 = arith.constant 0 : i32
    return %arg0, %2, %c0_i32, %c0_i32_1 : i32, i32, i32, i32
  }
  func.func @transform_3(%arg0: i32, %arg1: i32) -> (i32, i32, i32, i32) {
    %c0_i32 = arith.constant 0 : i32
    %c0_i32_0 = arith.constant 0 : i32
    %c0_i32_1 = arith.constant 0 : i32
    return %arg0, %arg1, %c0_i32, %c0_i32_0 : i32, i32, i32, i32
  }
  func.func @transform_4(%arg0: i32, %arg1: i32) -> (i32, i32, i32, i32) {
    %c16_i32 = arith.constant 16 : i32
    %0 = arith.muli %arg1, %c16_i32 : i32
    %c1_i32 = arith.constant 1 : i32
    %1 = arith.subi %0, %c1_i32 : i32
    %c0_i32 = arith.constant 0 : i32
    %2 = arith.maxsi %1, %c0_i32 : i32
    %c0_i32_0 = arith.constant 0 : i32
    %c0_i32_1 = arith.constant 0 : i32
    %c0_i32_2 = arith.constant 0 : i32
    return %arg0, %2, %c0_i32_0, %c0_i32_1 : i32, i32, i32, i32
  }
  func.func @transform_5(%arg0: i32, %arg1: i32) -> (i32, i32, i32, i32) {
    %c16_i32 = arith.constant 16 : i32
    %0 = arith.muli %arg1, %c16_i32 : i32
    %c16_i32_0 = arith.constant 16 : i32
    %1 = arith.addi %0, %c16_i32_0 : i32
    %c15_i32 = arith.constant 15 : i32
    %2 = arith.minsi %1, %c15_i32 : i32
    %c0_i32 = arith.constant 0 : i32
    %c0_i32_1 = arith.constant 0 : i32
    %c0_i32_2 = arith.constant 0 : i32
    return %arg0, %2, %c0_i32, %c0_i32_1 : i32, i32, i32, i32
  }
  func.func @transform_6(%arg0: i32, %arg1: i32) -> (i32, i32) {
    %c0_i32 = arith.constant 0 : i32
    %c0_i32_0 = arith.constant 0 : i32
    %c0_i32_1 = arith.constant 0 : i32
    return %c0_i32, %c0_i32_0 : i32, i32
  }
  func.func @transform_7(%arg0: i32, %arg1: i32) -> (i32, i32) {
    %c0_i32 = arith.constant 0 : i32
    %c0_i32_0 = arith.constant 0 : i32
    %c0_i32_1 = arith.constant 0 : i32
    return %c0_i32, %c0_i32_0 : i32, i32
  }
  func.func @transform_8(%arg0: i32, %arg1: i32) -> (i32, i32, i32) {
    %c0_i32 = arith.constant 0 : i32
    %c0_i32_0 = arith.constant 0 : i32
    %c0_i32_1 = arith.constant 0 : i32
    %c0_i32_2 = arith.constant 0 : i32
    return %c0_i32, %c0_i32_0, %c0_i32_1 : i32, i32, i32
  }
  func.func @transform_9(%arg0: i32, %arg1: i32) -> (i32, i32, i32, i32) {
    %c0_i32 = arith.constant 0 : i32
    %c0_i32_0 = arith.constant 0 : i32
    %c0_i32_1 = arith.constant 0 : i32
    return %arg0, %arg1, %c0_i32, %c0_i32_0 : i32, i32, i32, i32
  }
  func.func @transform_10(%arg0: i32, %arg1: i32) -> (i32, i32, i32, i32) {
    %c0_i32 = arith.constant 0 : i32
    %c0_i32_0 = arith.constant 0 : i32
    %c0_i32_1 = arith.constant 0 : i32
    return %arg0, %arg1, %c0_i32, %c0_i32_0 : i32, i32, i32, i32
  }
}

module attributes {stable_mosaic.version = 11 : i64} {
  func.func @_bn_relu_kernel(%arg0: i32, %arg1: i32, %arg2: memref<1x16x64xf32, #tpu.memory_space<vmem>>, %arg3: memref<1x1x64xf32, #tpu.memory_space<vmem>>, %arg4: memref<1x1x64xf32, #tpu.memory_space<vmem>>, %arg5: memref<1x16x64xf32, #tpu.memory_space<vmem>>) attributes {dimension_semantics = [#tpu.dimension_semantics<parallel>, #tpu.dimension_semantics<parallel>], iteration_bounds = array<i64: 2, 1>, scalar_prefetch = 0 : i64, scratch_operands = 0 : i64, tpu.core_type = #tpu.core_type<tc>, window_params = [{transform_indices = @transform_0, window_bounds = array<i64: 1, 16, 64>}, {pipeline_mode = #tpu.pipeline_mode<synchronous>, transform_indices = @transform_1, window_bounds = array<i64: 1, 1, 64>}, {pipeline_mode = #tpu.pipeline_mode<synchronous>, transform_indices = @transform_2, window_bounds = array<i64: 1, 1, 64>}, {transform_indices = @transform_3, window_bounds = array<i64: 1, 16, 64>}]} {
    %c0 = arith.constant 0 : index
    %c0_0 = arith.constant 0 : index
    %c0_1 = arith.constant 0 : index
    %0 = vector.load %arg2[%c0, %c0_0, %c0_1] : memref<1x16x64xf32, #tpu.memory_space<vmem>>, vector<1x16x64xf32>
    %c0_2 = arith.constant 0 : index
    %c0_3 = arith.constant 0 : index
    %c0_4 = arith.constant 0 : index
    %1 = vector.load %arg3[%c0_2, %c0_3, %c0_4] : memref<1x1x64xf32, #tpu.memory_space<vmem>>, vector<1x1x64xf32>
    %2 = vector.broadcast %1 : vector<1x1x64xf32> to vector<1x16x64xf32>
    %3 = arith.mulf %0, %2 : vector<1x16x64xf32>
    %c0_5 = arith.constant 0 : index
    %c0_6 = arith.constant 0 : index
    %c0_7 = arith.constant 0 : index
    %4 = vector.load %arg4[%c0_5, %c0_6, %c0_7] : memref<1x1x64xf32, #tpu.memory_space<vmem>>, vector<1x1x64xf32>
    %5 = vector.broadcast %4 : vector<1x1x64xf32> to vector<1x16x64xf32>
    %6 = arith.addf %3, %5 : vector<1x16x64xf32>
    %cst = arith.constant 0.000000e+00 : f32
    %7 = vector.broadcast %cst : f32 to vector<1x16x64xf32>
    %8 = arith.maximumf %6, %7 : vector<1x16x64xf32>
    %c0_8 = arith.constant 0 : index
    %c0_9 = arith.constant 0 : index
    %c0_10 = arith.constant 0 : index
    %9 = vector.load %arg5[%c0_8, %c0_9, %c0_10] : memref<1x16x64xf32, #tpu.memory_space<vmem>>, vector<1x16x64xf32>
    tpu.vector_store %arg5[%c0_8, %c0_9, %c0_10], %8 {strides = array<i32>} : memref<1x16x64xf32, #tpu.memory_space<vmem>>, vector<1x16x64xf32>,
    return
  }
  func.func @transform_0(%arg0: i32, %arg1: i32) -> (i32, i32, i32) {
    %c0_i32 = arith.constant 0 : i32
    %c0_i32_0 = arith.constant 0 : i32
    return %arg0, %arg1, %c0_i32 : i32, i32, i32
  }
  func.func @transform_1(%arg0: i32, %arg1: i32) -> (i32, i32, i32) {
    %c0_i32 = arith.constant 0 : i32
    %c0_i32_0 = arith.constant 0 : i32
    %c0_i32_1 = arith.constant 0 : i32
    %c0_i32_2 = arith.constant 0 : i32
    return %c0_i32, %c0_i32_0, %c0_i32_1 : i32, i32, i32
  }
  func.func @transform_2(%arg0: i32, %arg1: i32) -> (i32, i32, i32) {
    %c0_i32 = arith.constant 0 : i32
    %c0_i32_0 = arith.constant 0 : i32
    %c0_i32_1 = arith.constant 0 : i32
    %c0_i32_2 = arith.constant 0 : i32
    return %c0_i32, %c0_i32_0, %c0_i32_1 : i32, i32, i32
  }
  func.func @transform_3(%arg0: i32, %arg1: i32) -> (i32, i32, i32) {
    %c0_i32 = arith.constant 0 : i32
    %c0_i32_0 = arith.constant 0 : i32
    return %arg0, %arg1, %c0_i32 : i32, i32, i32
  }
}

</mosaic_0001>

<llo_original>
// kernel: tile.14
$region0: #{tile.14}
  #allocation0 [shape = 's32[1]{0}', space=sflag, size = 0x4, scoped, tag = 'scoped memory for tile.14']
  %s0 = inlined_call_operand.vmem [shape: f32[4], index: 0, kind: input, shape index: {}]
  %s1 = inlined_call_operand.vmem [shape: f32[16,4], index: 1, kind: output, shape index: {}]
  // Predicated region
  $region2: #{tile.14} parent=0 // pred_check
    _
  $region3: #{tile.14} parent=0 // pred_check_branch
    %3 = sbr.rel (0) target = $region5
  $region4: #{tile.14} parent=0 // pred_region
    _
  $region5: #{tile.14} parent=0 // pred_fallthru
    _
  %v4 = vld [vmem:[%s0] ss:$0 sm:$0xff]
  %5 = vst [vmem:[%s1] sm:$0xff] %v4
  %s6 = scalar_lea.vmem %s1, 8
  %7 = vst [vmem:[%s6] sm:$0xff] %v4

// kernel: tile.15
$region0: #{tile.15}
  %s0 = inlined_call_operand.vmem [shape: f32[16,4], index: 0, kind: input, shape index: {}]
  %s1 = inlined_call_operand.vmem [shape: f32[1,1,64], index: 1, kind: output, shape index: {}]
  $region1: #{tile.15} parent=0
    #allocation0 [shape = 'u8[4096]{0}', space=vmem, size = 0x1000, scoped, tag = 'scoped mem for output reshape']
    %v2 = vld [vmem:[%s0] sm:$0x1]
    %vm3 = vcmask 31744
    %4 = vst.msk [vmem:[#allocation0] sm:$0x1] %vm3, %v2
    %s5 = scalar_lea.vmem %s0, 15
    %v6 = vld [vmem:[%s5] sm:$0x1]
    %7 = vrot.lane.b32.xlu0 %v6, 60
    %v8 = vpop.permute.xlu0 %7
    %vm9 = vcmask 523744
    %10 = vst.msk [vmem:[#allocation0] sm:$0x1] %vm9, %v8
    %s11 = scalar_lea.vmem %s0, 14
    %v12 = vld [vmem:[%s11] sm:$0x1]
    %13 = vrot.lane.b32.xlu0 %v12, 56
    %v14 = vpop.permute.xlu0 %13
    %vm15 = vcmask 490944
    %16 = vst.msk [vmem:[#allocation0] sm:$0x1] %vm15, %v14
    %s17 = scalar_lea.vmem %s0, 13
    %v18 = vld [vmem:[%s17] sm:$0x1]
    %19 = vrot.lane.b32.xlu0 %v18, 52
    %v20 = vpop.permute.xlu0 %19
    %vm21 = vcmask 458144
    %22 = vst.msk [vmem:[#allocation0] sm:$0x1] %vm21, %v20
    %s23 = scalar_lea.vmem %s0, 12
    %v24 = vld [vmem:[%s23] sm:$0x1]
    %25 = vrot.lane.b32.xlu0 %v24, 48
    %v26 = vpop.permute.xlu0 %25
    %vm27 = vcmask 425344
    %28 = vst.msk [vmem:[#allocation0] sm:$0x1] %vm27, %v26
    %s29 = scalar_lea.vmem %s0, 11
    %v30 = vld [vmem:[%s29] sm:$0x1]
    %31 = vrot.lane.b32.xlu0 %v30, 44
    %v32 = vpop.permute.xlu0 %31
    %vm33 = vcmask 392544
    %34 = vst.msk [vmem:[#allocation0] sm:$0x1] %vm33, %v32
    %s35 = scalar_lea.vmem %s0, 10
    %v36 = vld [vmem:[%s35] sm:$0x1]
    %37 = vrot.lane.b32.xlu0 %v36, 40
    %v38 = vpop.permute.xlu0 %37
    %vm39 = vcmask 359744
    %40 = vst.msk [vmem:[#allocation0] sm:$0x1] %vm39, %v38
    %s41 = scalar_lea.vmem %s0, 9
    %v42 = vld [vmem:[%s41] sm:$0x1]
    %43 = vrot.lane.b32.xlu0 %v42, 36
    %v44 = vpop.permute.xlu0 %43
    %vm45 = vcmask 326944
    %46 = vst.msk [vmem:[#allocation0] sm:$0x1] %vm45, %v44
    %s47 = scalar_lea.vmem %s0, 8
    %v48 = vld [vmem:[%s47] sm:$0x1]
    %49 = vrot.lane.b32.xlu0 %v48, 32
    %v50 = vpop.permute.xlu0 %49
    %vm51 = vcmask 294144
    %52 = vst.msk [vmem:[#allocation0] sm:$0x1] %vm51, %v50
    %s53 = scalar_lea.vmem %s0, 7
    %v54 = vld [vmem:[%s53] sm:$0x1]
    %55 = vrot.lane.b32.xlu0 %v54, 28
    %v56 = vpop.permute.xlu0 %55
    %vm57 = vcmask 261344
    %58 = vst.msk [vmem:[#allocation0] sm:$0x1] %vm57, %v56
    %s59 = scalar_lea.vmem %s0, 6
    %v60 = vld [vmem:[%s59] sm:$0x1]
    %61 = vrot.lane.b32.xlu0 %v60, 24
    %v62 = vpop.permute.xlu0 %61
    %vm63 = vcmask 228544
    %64 = vst.msk [vmem:[#allocation0] sm:$0x1] %vm63, %v62
    %s65 = scalar_lea.vmem %s0, 5
    %v66 = vld [vmem:[%s65] sm:$0x1]
    %67 = vrot.lane.b32.xlu0 %v66, 20
    %v68 = vpop.permute.xlu0 %67
    %vm69 = vcmask 195744
    %70 = vst.msk [vmem:[#allocation0] sm:$0x1] %vm69, %v68
    %s71 = scalar_lea.vmem %s0, 4
    %v72 = vld [vmem:[%s71] sm:$0x1]
    %73 = vrot.lane.b32.xlu0 %v72, 16
    %v74 = vpop.permute.xlu0 %73
    %vm75 = vcmask 162944
    %76 = vst.msk [vmem:[#allocation0] sm:$0x1] %vm75, %v74
    %s77 = scalar_lea.vmem %s0, 3
    %v78 = vld [vmem:[%s77] sm:$0x1]
    %79 = vrot.lane.b32.xlu0 %v78, 12
    %v80 = vpop.permute.xlu0 %79
    %vm81 = vcmask 130144
    %82 = vst.msk [vmem:[#allocation0] sm:$0x1] %vm81, %v80
    %s83 = scalar_lea.vmem %s0, 2
    %v84 = vld [vmem:[%s83] sm:$0x1]
    %85 = vrot.lane.b32.xlu0 %v84, 8
    %v86 = vpop.permute.xlu0 %85
    %vm87 = vcmask 97344
    %88 = vst.msk [vmem:[#allocation0] sm:$0x1] %vm87, %v86
    %s89 = scalar_lea.vmem %s0, 1
    %v90 = vld [vmem:[%s89] sm:$0x1]
    %91 = vrot.lane.b32.xlu0 %v90, 4
    %v92 = vpop.permute.xlu0 %91
    %vm93 = vcmask 64544
    %94 = vst.msk [vmem:[#allocation0] sm:$0x1] %vm93, %v92
    %s96 = sshllo.u32 0, 1
    %v98 = vld [vmem:[#allocation0] sm:%s96]
    %s99 = sshllo.u32 0, 1
    %100 = vst [vmem:[%s1] sm:%s99] %v98

// kernel: recurrent_block_forward.7
$region0: #{recurrent_block_forward.7}
  #allocation0 [shape = 'u32[]', space=smem, size = 0x4, offset = 0x4, fixed_abs, tag = 'smem constant byte address 0x4 - core index']
  #allocation1 [shape = 'u32[144,128]{1,0:T(1,128)}', space=vmem, size = 0x12000, scoped, tag = 'internal scratch']
  %s0 = inlined_call_operand.vmem [shape: f32[2,16,64], index: 0, kind: input, shape index: {}]
  %s1 = inlined_call_operand.vmem [shape: f32[1,1,64], index: 1, kind: input, shape index: {}]
  %s2 = inlined_call_operand.vmem [shape: f32[1,1,64], index: 2, kind: input, shape index: {}]
  %s3 = inlined_call_operand.vmem [shape: f32[2,16,64], index: 3, kind: output, shape index: {}]
  %s4 = sld [smem:[#allocation0]]
  $region45: #{recurrent_block_forward.7} parent=0
    _
  %s6 = ssub.s32 1, %s4
  %s7 = scalar_select 0, %s6, %s4
  loop: start=0, step=1, limit=4
  $region2: #{recurrent_block_forward.7} parent=0 // loop_pre_header
    _
  $region3: #{recurrent_block_forward.7} parent=0 // loop_header
    %s9 = sphi 0, %s13
    %p10 = scmp.ge.s32.totalorder %s9, 4
    %s16 = sphi 0, %s28
    %s17 = sphi 0, %s24
    %s18 = sphi 0, %s16
    %s19 = sphi 0, %s17
    %s20 = sphi 0, %s18
    %s21 = sphi 0, %s19
    %s33 = sphi 0, %s35
    %s36 = sphi 0, %s33
    %s37 = sphi 0, %s36
    %s53 = sphi 0, %s37
    %s57 = sphi 0, %s57
    %s59 = sphi 0, %s57
    %s60 = sphi 0, %s59
    %s74 = sphi 0, %s60
    %s78 = sphi 0, %s78
    %s80 = sphi 0, %s78
    %s81 = sphi 0, %s80
    %s95 = sphi 0, %s81
    %s103 = sphi 0, %s105
    %s106 = sphi 0, %s103
    %s107 = sphi 0, %s106
    %s123 = sphi 0, %s107
  $region4: #{recurrent_block_forward.7} parent=0 // loop_header_branch
    %12 = sbr.rel (%p10) target = $region8
  $region5: #{recurrent_block_forward.7} parent=0 // loop_body
    %s14 = ssub.s32 %s9, 1
    %s15 = ssub.s32 %s9, 2
    %s22 = sadd.s32 1, %s17
    %p23 = scmp.ge.s32.totalorder %s22, 1
    %s24 = scalar_select %p23, 0, %s22
    %s25 = sadd.s32 1, %s16
    %s26 = scalar_select %p23, %s25, %s16
    %p27 = scmp.ge.s32.totalorder %s26, 2
    %s28 = scalar_select %p27, 0, %s26
    %s29 = ssub.s32 %s16, %s28
    %s30 = ssub.s32 %s17, %s24
    %s31 = sor.u32 %s29, %s30
    %p32 = scmp.eq.s32.totalorder %s31, 0
    %s34 = sadd.s32 %s33, 1
    %s35 = scalar_select %p32, %s33, %s34
    %p38 = pneg %p32
    %p39 = scmp.eq.s32.totalorder %s9, 1
    %p40 = por %p38, %p39
    %p41 = scmp.ne.s32.totalorder %s33, %s36
    %p42 = scmp.eq.s32.totalorder %s9, 0
    %p43 = por %p41, %p42
    %p44 = scmp.ne.s32.totalorder %s33, %s36
    %p45 = scmp.eq.s32.totalorder %s14, 1
    %p46 = por %p44, %p45
    %p47 = scmp.ne.s32.totalorder %s36, %s37
    %p48 = scmp.eq.s32.totalorder %s14, 0
    %p49 = por %p47, %p48
    %p50 = scmp.ne.s32.totalorder %s36, %s37
    %p51 = scmp.eq.s32.totalorder %s15, 1
    %p52 = por %p50, %p51
    %p54 = scmp.ne.s32.totalorder %s37, %s53
    %p55 = scmp.eq.s32.totalorder %s15, 0
    %p56 = por %p54, %p55
    %s58 = sadd.s32 %s57, 1
    %p61 = scmp.eq.s32.totalorder %s9, 1
    %p62 = scmp.ne.s32.totalorder %s57, %s59
    %p63 = scmp.eq.s32.totalorder %s9, 0
    %p64 = por %p62, %p63
    %p65 = scmp.ne.s32.totalorder %s57, %s59
    %p66 = scmp.eq.s32.totalorder %s14, 1
    %p67 = por %p65, %p66
    %p68 = scmp.ne.s32.totalorder %s59, %s60
    %p69 = scmp.eq.s32.totalorder %s14, 0
    %p70 = por %p68, %p69
    %p71 = scmp.ne.s32.totalorder %s59, %s60
    %p72 = scmp.eq.s32.totalorder %s15, 1
    %p73 = por %p71, %p72
    %p75 = scmp.ne.s32.totalorder %s60, %s74
    %p76 = scmp.eq.s32.totalorder %s15, 0
    %p77 = por %p75, %p76
    %s79 = sadd.s32 %s78, 1
    %p82 = scmp.eq.s32.totalorder %s9, 1
    %p83 = scmp.ne.s32.totalorder %s78, %s80
    %p84 = scmp.eq.s32.totalorder %s9, 0
    %p85 = por %p83, %p84
    %p86 = scmp.ne.s32.totalorder %s78, %s80
    %p87 = scmp.eq.s32.totalorder %s14, 1
    %p88 = por %p86, %p87
    %p89 = scmp.ne.s32.totalorder %s80, %s81
    %p90 = scmp.eq.s32.totalorder %s14, 0
    %p91 = por %p89, %p90
    %p92 = scmp.ne.s32.totalorder %s80, %s81
    %p93 = scmp.eq.s32.totalorder %s15, 1
    %p94 = por %p92, %p93
    %p96 = scmp.ne.s32.totalorder %s81, %s95
    %p97 = scmp.eq.s32.totalorder %s15, 0
    %p98 = por %p96, %p97
    %s99 = ssub.s32 %s16, %s28
    %s100 = ssub.s32 %s17, %s24
    %s101 = sor.u32 %s99, %s100
    %p102 = scmp.eq.s32.totalorder %s101, 0
    %s104 = sadd.s32 %s103, 1
    %s105 = scalar_select %p102, %s103, %s104
    %p108 = pneg %p102
    %p109 = scmp.eq.s32.totalorder %s9, 1
    %p110 = por %p108, %p109
    %p111 = scmp.ne.s32.totalorder %s103, %s106
    %p112 = scmp.eq.s32.totalorder %s9, 0
    %p113 = por %p111, %p112
    %p114 = scmp.ne.s32.totalorder %s103, %s106
    %p115 = scmp.eq.s32.totalorder %s14, 1
    %p116 = por %p114, %p115
    %p117 = scmp.ne.s32.totalorder %s106, %s107
    %p118 = scmp.eq.s32.totalorder %s14, 0
    %p119 = por %p117, %p118
    %p120 = scmp.ne.s32.totalorder %s106, %s107
    %p121 = scmp.eq.s32.totalorder %s15, 1
    %p122 = por %p120, %p121
    %p124 = scmp.ne.s32.totalorder %s107, %s123
    %p125 = scmp.eq.s32.totalorder %s15, 0
    %p126 = por %p124, %p125
    %p127 = scmp.le.s32.totalorder 1, %s9
    %p128 = scmp.lt.s32.totalorder %s9, 3
    %p129 = pnand %p127, %p128
    %p130 = pneg %p129
    // Predicated region
    $region9: #{recurrent_block_forward.7} parent=5 // pred_check
      _
    $region10: #{recurrent_block_forward.7} parent=5 // pred_check_branch
      %132 = sbr.rel (%p129) target = $region12
    $region11: #{recurrent_block_forward.7} parent=5 // pred_region
      %s133 = ssub.s32 %s9, 1
      // Predicated region
      $region13: #{recurrent_block_forward.7} parent=11 // pred_check
        %p134 = pneg %p70
      $region14: #{recurrent_block_forward.7} parent=11 // pred_check_branch
        %136 = sbr.rel (%p134) target = $region16
      $region15: #{recurrent_block_forward.7} parent=11 // pred_region
        _
      $region16: #{recurrent_block_forward.7} parent=11 // pred_fallthru
        _
      // Predicated region
      $region17: #{recurrent_block_forward.7} parent=11 // pred_check
        %p137 = pneg %p91
      $region18: #{recurrent_block_forward.7} parent=11 // pred_check_branch
        %139 = sbr.rel (%p137) target = $region20
      $region19: #{recurrent_block_forward.7} parent=11 // pred_region
        _
      $region20: #{recurrent_block_forward.7} parent=11 // pred_fallthru
        _
    $region12: #{recurrent_block_forward.7} parent=5 // pred_fallthru
      _
    %p140 = scmp.lt.s32.totalorder %s9, 2
    // Predicated region
    $region21: #{recurrent_block_forward.7} parent=5 // pred_check
      %p141 = pneg %p140
    $region22: #{recurrent_block_forward.7} parent=5 // pred_check_branch
      %143 = sbr.rel (%p141) target = $region24
    $region23: #{recurrent_block_forward.7} parent=5 // pred_region
      // Predicated region
      $region25: #{recurrent_block_forward.7} parent=23 // pred_check
        %p144 = pneg %p43
      $region26: #{recurrent_block_forward.7} parent=23 // pred_check_branch
        %146 = sbr.rel (%p144) target = $region28
      $region27: #{recurrent_block_forward.7} parent=23 // pred_region
        %s147 = smul.u32 2, %s17
        %p148 = scmp.lt.s32.totalorder %s16, 1
        %s149 = scalar_select %p148, %s16, 1
        %p150 = scmp.lt.s32.totalorder %s147, 1
        %s151 = scalar_select %p150, %s147, 1
        %s152 = smul.addr %s149, 2
        %s153 = sadd.s32 %s151, %s152
        %s154 = smul.addr %s153, 8
        %s155 = scalar_lea.vmem %s0, %s154
        %s156 = smul.u32 2, %s17
      $region28: #{recurrent_block_forward.7} parent=23 // pred_fallthru
        _
    $region24: #{recurrent_block_forward.7} parent=5 // pred_fallthru
      _
    %p157 = scmp.le.s32.totalorder 1, %s9
    %p158 = scmp.lt.s32.totalorder %s9, 3
    %p159 = pnand %p157, %p158
    %p160 = pneg %p159
    // Predicated region
    $region29: #{recurrent_block_forward.7} parent=5 // pred_check
      _
    $region30: #{recurrent_block_forward.7} parent=5 // pred_check_branch
      %162 = sbr.rel (%p159) target = $region32
    $region31: #{recurrent_block_forward.7} parent=5 // pred_region
      %s163 = ssub.s32 %s9, 1
      %s164 = smul.u32 2, %s19
      %p165 = scmp.lt.s32.totalorder %s18, 1
      %s166 = scalar_select %p165, %s18, 1
      %p167 = scmp.lt.s32.totalorder %s164, 1
      %s168 = scalar_select %p167, %s164, 1
      %s169 = smul.addr %s166, 2
      %s170 = sadd.s32 %s168, %s169
      %s171 = smul.addr %s170, 8
      %s172 = scalar_lea.vmem %s0, %s171
      %p173 = pneg %p49
      %p174 = pneg %p46
      %p175 = pneg %p70
      %p176 = pneg %p67
      %p177 = pneg %p91
      %p178 = pneg %p88
      %p179 = pneg %p119
      %p180 = pneg %p116
      %s181 = smul.u32 2, %s19
      %p182 = scmp.lt.s32.totalorder %s18, 1
      %s183 = scalar_select %p182, %s18, 1
      %p184 = scmp.lt.s32.totalorder %s181, 1
      %s185 = scalar_select %p184, %s181, 1
      %s186 = smul.addr %s183, 2
      %s187 = sadd.s32 %s185, %s186
      %s188 = smul.addr %s187, 8
      %s189 = scalar_lea.vmem %s3, %s188
      %s190 = smul.u32 2, %s19
      %p191 = scmp.lt.s32.totalorder %s18, 1
      %s192 = scalar_select %p191, %s18, 1
      %p193 = scmp.lt.s32.totalorder %s190, 1
      %s194 = scalar_select %p193, %s190, 1
      %s195 = smul.addr %s192, 2
      %s196 = sadd.s32 %s194, %s195
      %s197 = smul.addr %s196, 8
      %s198 = scalar_lea.vmem %s0, %s197
      %s199 = smul.u32 2, %s19
      %s200 = smul.u32 2, %s19
      %p201 = scmp.lt.s32.totalorder %s18, 1
      %s202 = scalar_select %p201, %s18, 1
      %p203 = scmp.lt.s32.totalorder %s200, 1
      %s204 = scalar_select %p203, %s200, 1
      %s205 = smul.addr %s202, 2
      %s206 = sadd.s32 %s204, %s205
      %s207 = smul.addr %s206, 8
      %s208 = scalar_lea.vmem %s3, %s207
      %s209 = smul.u32 2, %s19
      %v210 = vld [vmem:[%s198] sm:$0xff]
      %v211 = vld [vmem:[%s198 + $0x8] sm:$0xff]
      %v212 = vld [vmem:[%s1] sm:$0x1]
      %v214 = vlaneseq
      %v215 = vshrl.u32 %v214, 7
      %v216 = vsub.s32 0, %v215
      %v217 = vrot.slane %v212, %v216
      %v219 = vmul.f32 %v210, %v217
      %v220 = vmul.f32 %v211, %v217
      %v221 = vld [vmem:[%s2] sm:$0x1]
      %v223 = vlaneseq
      %v224 = vshrl.u32 %v223, 7
      %v225 = vsub.s32 0, %v224
      %v226 = vrot.slane %v221, %v225
      %v228 = vadd.f32 %v219, %v226
      %v229 = vadd.f32 %v220, %v226
      %v230 = vmax.f32 %v228, 0.0
      %v231 = vmax.f32 %v229, 0.0
      %vm232 = vcmask 523264
      %233 = vst.msk [vmem:[%s208] sm:$0xff] %vm232, %v230
      %234 = vst.msk [vmem:[%s208 + $0x8] sm:$0xff] %vm232, %v231
      %s235 = smul.u32 2, %s19
      %p236 = scmp.lt.s32.totalorder %s18, 1
      %s237 = scalar_select %p236, %s18, 1
      %p238 = scmp.lt.s32.totalorder %s235, 1
      %s239 = scalar_select %p238, %s235, 1
      %s240 = smul.addr %s237, 2
      %s241 = sadd.s32 %s239, %s240
      %s242 = smul.addr %s241, 8
      %s243 = scalar_lea.vmem %s3, %s242
      // Predicated region
      $region33: #{recurrent_block_forward.7} parent=31 // pred_check
        %p244 = pneg %p116
      $region34: #{recurrent_block_forward.7} parent=31 // pred_check_branch
        %246 = sbr.rel (%p244) target = $region36
      $region35: #{recurrent_block_forward.7} parent=31 // pred_region
        %s247 = smul.u32 2, %s19
      $region36: #{recurrent_block_forward.7} parent=31 // pred_fallthru
        _
    $region32: #{recurrent_block_forward.7} parent=5 // pred_fallthru
      _
    %p248 = scmp.le.s32.totalorder 2, %s9
    // Predicated region
    $region37: #{recurrent_block_forward.7} parent=5 // pred_check
      %p249 = pneg %p248
    $region38: #{recurrent_block_forward.7} parent=5 // pred_check_branch
      %251 = sbr.rel (%p249) target = $region40
    $region39: #{recurrent_block_forward.7} parent=5 // pred_region
      %s252 = ssub.s32 %s9, 2
      // Predicated region
      $region41: #{recurrent_block_forward.7} parent=39 // pred_check
        %p253 = pneg %p122
      $region42: #{recurrent_block_forward.7} parent=39 // pred_check_branch
        %255 = sbr.rel (%p253) target = $region44
      $region43: #{recurrent_block_forward.7} parent=39 // pred_region
        %s256 = smul.u32 2, %s21
        %p257 = scmp.lt.s32.totalorder %s20, 1
        %s258 = scalar_select %p257, %s20, 1
        %p259 = scmp.lt.s32.totalorder %s256, 1
        %s260 = scalar_select %p259, %s256, 1
        %s261 = smul.addr %s258, 2
        %s262 = sadd.s32 %s260, %s261
        %s263 = smul.addr %s262, 8
        %s264 = scalar_lea.vmem %s3, %s263
      $region44: #{recurrent_block_forward.7} parent=39 // pred_fallthru
        _
    $region40: #{recurrent_block_forward.7} parent=5 // pred_fallthru
      _
  $region6: #{recurrent_block_forward.7} parent=0 // loop_footer
    %s13 = sadd.s32 1, %s9
  $region7: #{recurrent_block_forward.7} parent=0 // loop_footer_branch
    %8 = sbr.rel target = $region3
  $region8: #{recurrent_block_forward.7} parent=0 // loop_exit
    _

// kernel: recurrent_block_forward.4
$region0: #{recurrent_block_forward.4}
  #allocation0 [shape = 'u32[]', space=smem, size = 0x4, offset = 0x4, fixed_abs, tag = 'smem constant byte address 0x4 - core index']
  #allocation1 [shape = 'u32[144,128]{1,0:T(1,128)}', space=vmem, size = 0x12000, scoped, tag = 'internal scratch']
  #allocation2 [shape = 'f32[18,16,4]{2,1,0:T(8,128)}', space=vmem, size = 0x24000, scoped, tag = 'scratch operand']
  #allocation3 [shape = 'f32[18,16,4]{2,1,0:T(8,128)}', space=vmem, size = 0x24000, scoped, tag = 'scratch operand']
  #allocation4 [shape = 'f32[18,16,4]{2,1,0:T(8,128)}', space=vmem, size = 0x24000, scoped, tag = 'scratch operand']
  %s0 = inlined_call_operand.vmem [shape: f32[2,16,16,4], index: 0, kind: input, shape index: {}, may-alias: {0,1,2}]
  %s1 = inlined_call_operand.vmem [shape: f32[2,16,16,4], index: 1, kind: input, shape index: {}, may-alias: {0,1,2}]
  %s2 = inlined_call_operand.vmem [shape: f32[2,16,16,4], index: 2, kind: input, shape index: {}, may-alias: {0,1,2}]
  %s3 = inlined_call_operand.vmem [shape: f32[9,4,4], index: 3, kind: input, shape index: {}]
  %s4 = inlined_call_operand.vmem [shape: f32[2,16,16,4], index: 4, kind: output, shape index: {0}]
  %s5 = inlined_call_operand.vmem [shape: f32[2,1,2,4], index: 5, kind: output, shape index: {1}]
  %6 = xla_tuple %s4, %s5
  %s7 = sld [smem:[#allocation0]]
  $region61: #{recurrent_block_forward.4} parent=0
    _
  %s9 = ssub.s32 1, %s7
  %s10 = scalar_select 0, %s9, %s7
  loop: start=0, step=1, limit=4
  $region2: #{recurrent_block_forward.4} parent=0 // loop_pre_header
    _
  $region3: #{recurrent_block_forward.4} parent=0 // loop_header
    %s12 = sphi 0, %s16
    %p13 = scmp.ge.s32.totalorder %s12, 4
    %s19 = sphi 0, %s31
    %s20 = sphi 0, %s27
    %s21 = sphi 0, %s19
    %s22 = sphi 0, %s20
    %s23 = sphi 0, %s21
    %s24 = sphi 0, %s22
    %s36 = sphi 0, %s38
    %s39 = sphi 0, %s36
    %s40 = sphi 0, %s39
    %s56 = sphi 0, %s40
    %s72 = sphi 0, %s74
    %s75 = sphi 0, %s72
    %s76 = sphi 0, %s75
    %s92 = sphi 0, %s76
    %s108 = sphi 0, %s110
    %s111 = sphi 0, %s108
    %s112 = sphi 0, %s111
    %s128 = sphi 0, %s112
    %s132 = sphi 0, %s132
    %s134 = sphi 0, %s132
    %s135 = sphi 0, %s134
    %s149 = sphi 0, %s135
    %s157 = sphi 0, %s159
    %s160 = sphi 0, %s157
    %s161 = sphi 0, %s160
    %s177 = sphi 0, %s161
    %s185 = sphi 0, %s187
    %s188 = sphi 0, %s185
    %s189 = sphi 0, %s188
    %s205 = sphi 0, %s189
  $region4: #{recurrent_block_forward.4} parent=0 // loop_header_branch
    %15 = sbr.rel (%p13) target = $region8
  $region5: #{recurrent_block_forward.4} parent=0 // loop_body
    %s17 = ssub.s32 %s12, 1
    %s18 = ssub.s32 %s12, 2
    %s25 = sadd.s32 1, %s20
    %p26 = scmp.ge.s32.totalorder %s25, 1
    %s27 = scalar_select %p26, 0, %s25
    %s28 = sadd.s32 1, %s19
    %s29 = scalar_select %p26, %s28, %s19
    %p30 = scmp.ge.s32.totalorder %s29, 2
    %s31 = scalar_select %p30, 0, %s29
    %s32 = ssub.s32 %s19, %s31
    %s33 = ssub.s32 %s20, %s27
    %s34 = sor.u32 %s32, %s33
    %p35 = scmp.eq.s32.totalorder %s34, 0
    %s37 = sadd.s32 %s36, 1
    %s38 = scalar_select %p35, %s36, %s37
    %p41 = pneg %p35
    %p42 = scmp.eq.s32.totalorder %s12, 1
    %p43 = por %p41, %p42
    %p44 = scmp.ne.s32.totalorder %s36, %s39
    %p45 = scmp.eq.s32.totalorder %s12, 0
    %p46 = por %p44, %p45
    %p47 = scmp.ne.s32.totalorder %s36, %s39
    %p48 = scmp.eq.s32.totalorder %s17, 1
    %p49 = por %p47, %p48
    %p50 = scmp.ne.s32.totalorder %s39, %s40
    %p51 = scmp.eq.s32.totalorder %s17, 0
    %p52 = por %p50, %p51
    %p53 = scmp.ne.s32.totalorder %s39, %s40
    %p54 = scmp.eq.s32.totalorder %s18, 1
    %p55 = por %p53, %p54
    %p57 = scmp.ne.s32.totalorder %s40, %s56
    %p58 = scmp.eq.s32.totalorder %s18, 0
    %p59 = por %p57, %p58
    %s60 = smul.u32 %s20, 16
    %s61 = ssub.s32 %s60, 1
    %p62 = scmp.gt.s32.totalorder %s61, 0
    %s63 = scalar_select %p62, %s61, 0
    %s64 = smul.u32 %s27, 16
    %s65 = ssub.s32 %s64, 1
    %p66 = scmp.gt.s32.totalorder %s65, 0
    %s67 = scalar_select %p66, %s65, 0
    %s68 = ssub.s32 %s19, %s31
    %s69 = ssub.s32 %s63, %s67
    %s70 = sor.u32 %s68, %s69
    %p71 = scmp.eq.s32.totalorder %s70, 0
    %s73 = sadd.s32 %s72, 1
    %s74 = scalar_select %p71, %s72, %s73
    %p77 = pneg %p71
    %p78 = scmp.eq.s32.totalorder %s12, 1
    %p79 = por %p77, %p78
    %p80 = scmp.ne.s32.totalorder %s72, %s75
    %p81 = scmp.eq.s32.totalorder %s12, 0
    %p82 = por %p80, %p81
    %p83 = scmp.ne.s32.totalorder %s72, %s75
    %p84 = scmp.eq.s32.totalorder %s17, 1
    %p85 = por %p83, %p84
    %p86 = scmp.ne.s32.totalorder %s75, %s76
    %p87 = scmp.eq.s32.totalorder %s17, 0
    %p88 = por %p86, %p87
    %p89 = scmp.ne.s32.totalorder %s75, %s76
    %p90 = scmp.eq.s32.totalorder %s18, 1
    %p91 = por %p89, %p90
    %p93 = scmp.ne.s32.totalorder %s76, %s92
    %p94 = scmp.eq.s32.totalorder %s18, 0
    %p95 = por %p93, %p94
    %s96 = smul.u32 %s20, 16
    %s97 = sadd.s32 %s96, 16
    %p98 = scmp.lt.s32.totalorder %s97, 15
    %s99 = scalar_select %p98, %s97, 15
    %s100 = smul.u32 %s27, 16
    %s101 = sadd.s32 %s100, 16
    %p102 = scmp.lt.s32.totalorder %s101, 15
    %s103 = scalar_select %p102, %s101, 15
    %s104 = ssub.s32 %s19, %s31
    %s105 = ssub.s32 %s99, %s103
    %s106 = sor.u32 %s104, %s105
    %p107 = scmp.eq.s32.totalorder %s106, 0
    %s109 = sadd.s32 %s108, 1
    %s110 = scalar_select %p107, %s108, %s109
    %p113 = pneg %p107
    %p114 = scmp.eq.s32.totalorder %s12, 1
    %p115 = por %p113, %p114
    %p116 = scmp.ne.s32.totalorder %s108, %s111
    %p117 = scmp.eq.s32.totalorder %s12, 0
    %p118 = por %p116, %p117
    %p119 = scmp.ne.s32.totalorder %s108, %s111
    %p120 = scmp.eq.s32.totalorder %s17, 1
    %p121 = por %p119, %p120
    %p122 = scmp.ne.s32.totalorder %s111, %s112
    %p123 = scmp.eq.s32.totalorder %s17, 0
    %p124 = por %p122, %p123
    %p125 = scmp.ne.s32.totalorder %s111, %s112
    %p126 = scmp.eq.s32.totalorder %s18, 1
    %p127 = por %p125, %p126
    %p129 = scmp.ne.s32.totalorder %s112, %s128
    %p130 = scmp.eq.s32.totalorder %s18, 0
    %p131 = por %p129, %p130
    %s133 = sadd.s32 %s132, 1
    %p136 = scmp.eq.s32.totalorder %s12, 1
    %p137 = scmp.ne.s32.totalorder %s132, %s134
    %p138 = scmp.eq.s32.totalorder %s12, 0
    %p139 = por %p137, %p138
    %p140 = scmp.ne.s32.totalorder %s132, %s134
    %p141 = scmp.eq.s32.totalorder %s17, 1
    %p142 = por %p140, %p141
    %p143 = scmp.ne.s32.totalorder %s134, %s135
    %p144 = scmp.eq.s32.totalorder %s17, 0
    %p145 = por %p143, %p144
    %p146 = scmp.ne.s32.totalorder %s134, %s135
    %p147 = scmp.eq.s32.totalorder %s18, 1
    %p148 = por %p146, %p147
    %p150 = scmp.ne.s32.totalorder %s135, %s149
    %p151 = scmp.eq.s32.totalorder %s18, 0
    %p152 = por %p150, %p151
    %s153 = ssub.s32 %s19, %s31
    %s154 = ssub.s32 %s20, %s27
    %s155 = sor.u32 %s153, %s154
    %p156 = scmp.eq.s32.totalorder %s155, 0
    %s158 = sadd.s32 %s157, 1
    %s159 = scalar_select %p156, %s157, %s158
    %p162 = pneg %p156
    %p163 = scmp.eq.s32.totalorder %s12, 1
    %p164 = por %p162, %p163
    %p165 = scmp.ne.s32.totalorder %s157, %s160
    %p166 = scmp.eq.s32.totalorder %s12, 0
    %p167 = por %p165, %p166
    %p168 = scmp.ne.s32.totalorder %s157, %s160
    %p169 = scmp.eq.s32.totalorder %s17, 1
    %p170 = por %p168, %p169
    %p171 = scmp.ne.s32.totalorder %s160, %s161
    %p172 = scmp.eq.s32.totalorder %s17, 0
    %p173 = por %p171, %p172
    %p174 = scmp.ne.s32.totalorder %s160, %s161
    %p175 = scmp.eq.s32.totalorder %s18, 1
    %p176 = por %p174, %p175
    %p178 = scmp.ne.s32.totalorder %s161, %s177
    %p179 = scmp.eq.s32.totalorder %s18, 0
    %p180 = por %p178, %p179
    %s181 = ssub.s32 %s19, %s31
    %s182 = ssub.s32 %s20, %s27
    %s183 = sor.u32 %s181, %s182
    %p184 = scmp.eq.s32.totalorder %s183, 0
    %s186 = sadd.s32 %s185, 1
    %s187 = scalar_select %p184, %s185, %s186
    %p190 = pneg %p184
    %p191 = scmp.eq.s32.totalorder %s12, 1
    %p192 = por %p190, %p191
    %p193 = scmp.ne.s32.totalorder %s185, %s188
    %p194 = scmp.eq.s32.totalorder %s12, 0
    %p195 = por %p193, %p194
    %p196 = scmp.ne.s32.totalorder %s185, %s188
    %p197 = scmp.eq.s32.totalorder %s17, 1
    %p198 = por %p196, %p197
    %p199 = scmp.ne.s32.totalorder %s188, %s189
    %p200 = scmp.eq.s32.totalorder %s17, 0
    %p201 = por %p199, %p200
    %p202 = scmp.ne.s32.totalorder %s188, %s189
    %p203 = scmp.eq.s32.totalorder %s18, 1
    %p204 = por %p202, %p203
    %p206 = scmp.ne.s32.totalorder %s189, %s205
    %p207 = scmp.eq.s32.totalorder %s18, 0
    %p208 = por %p206, %p207
    %p209 = scmp.le.s32.totalorder 1, %s12
    %p210 = scmp.lt.s32.totalorder %s12, 3
    %p211 = pnand %p209, %p210
    %p212 = pneg %p211
    // Predicated region
    $region9: #{recurrent_block_forward.4} parent=5 // pred_check
      _
    $region10: #{recurrent_block_forward.4} parent=5 // pred_check_branch
      %214 = sbr.rel (%p211) target = $region12
    $region11: #{recurrent_block_forward.4} parent=5 // pred_region
      %s215 = ssub.s32 %s12, 1
      // Predicated region
      $region13: #{recurrent_block_forward.4} parent=11 // pred_check
        %p216 = pneg %p145
      $region14: #{recurrent_block_forward.4} parent=11 // pred_check_branch
        %218 = sbr.rel (%p216) target = $region16
      $region15: #{recurrent_block_forward.4} parent=11 // pred_region
        _
      $region16: #{recurrent_block_forward.4} parent=11 // pred_fallthru
        _
    $region12: #{recurrent_block_forward.4} parent=5 // pred_fallthru
      _
    %p219 = scmp.lt.s32.totalorder %s12, 2
    // Predicated region
    $region17: #{recurrent_block_forward.4} parent=5 // pred_check
      %p220 = pneg %p219
    $region18: #{recurrent_block_forward.4} parent=5 // pred_check_branch
      %222 = sbr.rel (%p220) target = $region20
    $region19: #{recurrent_block_forward.4} parent=5 // pred_region
      // Predicated region
      $region21: #{recurrent_block_forward.4} parent=19 // pred_check
        %p223 = pneg %p46
      $region22: #{recurrent_block_forward.4} parent=19 // pred_check_branch
        %225 = sbr.rel (%p223) target = $region24
      $region23: #{recurrent_block_forward.4} parent=19 // pred_region
        %s226 = smul.u32 16, %s20
        %p227 = scmp.lt.s32.totalorder %s19, 1
        %s228 = scalar_select %p227, %s19, 1
        %p229 = scmp.lt.s32.totalorder %s226, 15
        %s230 = scalar_select %p229, %s226, 15
        %s231 = smul.addr %s230, 2
        %s232 = smul.addr %s228, 32
        %s233 = sadd.s32 %s231, %s232
        %s234 = smul.addr %s233, 8
        %s235 = scalar_lea.vmem %s0, %s234
        %s236 = smul.u32 16, %s20
      $region24: #{recurrent_block_forward.4} parent=19 // pred_fallthru
        _
      // Predicated region
      $region25: #{recurrent_block_forward.4} parent=19 // pred_check
        %p237 = pneg %p82
      $region26: #{recurrent_block_forward.4} parent=19 // pred_check_branch
        %239 = sbr.rel (%p237) target = $region28
      $region27: #{recurrent_block_forward.4} parent=19 // pred_region
        %s240 = smul.u32 %s20, 16
        %s241 = ssub.s32 %s240, 1
        %p242 = scmp.gt.s32.totalorder %s241, 0
        %s243 = scalar_select %p242, %s241, 0
        %p244 = scmp.lt.s32.totalorder %s19, 1
        %s245 = scalar_select %p244, %s19, 1
        %p246 = scmp.lt.s32.totalorder %s243, 15
        %s247 = scalar_select %p246, %s243, 15
        %s248 = smul.addr %s247, 2
        %s249 = smul.addr %s245, 32
        %s250 = sadd.s32 %s248, %s249
        %s251 = smul.addr %s250, 8
        %s252 = scalar_lea.vmem %s1, %s251
        %s253 = smul.u32 %s20, 16
        %s254 = ssub.s32 %s253, 1
        %p255 = scmp.gt.s32.totalorder %s254, 0
        %s256 = scalar_select %p255, %s254, 0
      $region28: #{recurrent_block_forward.4} parent=19 // pred_fallthru
        _
      // Predicated region
      $region29: #{recurrent_block_forward.4} parent=19 // pred_check
        %p257 = pneg %p118
      $region30: #{recurrent_block_forward.4} parent=19 // pred_check_branch
        %259 = sbr.rel (%p257) target = $region32
      $region31: #{recurrent_block_forward.4} parent=19 // pred_region
        %s260 = smul.u32 %s20, 16
        %s261 = sadd.s32 %s260, 16
        %p262 = scmp.lt.s32.totalorder %s261, 15
        %s263 = scalar_select %p262, %s261, 15
        %p264 = scmp.lt.s32.totalorder %s19, 1
        %s265 = scalar_select %p264, %s19, 1
        %p266 = scmp.lt.s32.totalorder %s263, 15
        %s267 = scalar_select %p266, %s263, 15
        %s268 = smul.addr %s267, 2
        %s269 = smul.addr %s265, 32
        %s270 = sadd.s32 %s268, %s269
        %s271 = smul.addr %s270, 8
        %s272 = scalar_lea.vmem %s2, %s271
        %s273 = smul.u32 %s20, 16
        %s274 = sadd.s32 %s273, 16
        %p275 = scmp.lt.s32.totalorder %s274, 15
        %s276 = scalar_select %p275, %s274, 15
      $region32: #{recurrent_block_forward.4} parent=19 // pred_fallthru
        _
    $region20: #{recurrent_block_forward.4} parent=5 // pred_fallthru
      _
    %p277 = scmp.le.s32.totalorder 1, %s12
    %p278 = scmp.lt.s32.totalorder %s12, 3
    %p279 = pnand %p277, %p278
    %p280 = pneg %p279
    // Predicated region
    $region33: #{recurrent_block_forward.4} parent=5 // pred_check
      _
    $region34: #{recurrent_block_forward.4} parent=5 // pred_check_branch
      %282 = sbr.rel (%p279) target = $region36
    $region35: #{recurrent_block_forward.4} parent=5 // pred_region
      %s283 = ssub.s32 %s12, 1
      %s284 = smul.u32 16, %s22
      %p285 = scmp.lt.s32.totalorder %s21, 1
      %s286 = scalar_select %p285, %s21, 1
      %p287 = scmp.lt.s32.totalorder %s284, 15
      %s288 = scalar_select %p287, %s284, 15
      %s289 = smul.addr %s288, 2
      %s290 = smul.addr %s286, 32
      %s291 = sadd.s32 %s289, %s290
      %s292 = smul.addr %s291, 8
      %s293 = scalar_lea.vmem %s0, %s292
      %p294 = pneg %p52
      %p295 = pneg %p49
      %s296 = smul.u32 %s22, 16
      %s297 = ssub.s32 %s296, 1
      %p298 = scmp.gt.s32.totalorder %s297, 0
      %s299 = scalar_select %p298, %s297, 0
      %p300 = scmp.lt.s32.totalorder %s21, 1
      %s301 = scalar_select %p300, %s21, 1
      %p302 = scmp.lt.s32.totalorder %s299, 15
      %s303 = scalar_select %p302, %s299, 15
      %s304 = smul.addr %s303, 2
      %s305 = smul.addr %s301, 32
      %s306 = sadd.s32 %s304, %s305
      %s307 = smul.addr %s306, 8
      %s308 = scalar_lea.vmem %s1, %s307
      %p309 = pneg %p88
      %p310 = pneg %p85
      %s311 = smul.u32 %s22, 16
      %s312 = sadd.s32 %s311, 16
      %p313 = scmp.lt.s32.totalorder %s312, 15
      %s314 = scalar_select %p313, %s312, 15
      %p315 = scmp.lt.s32.totalorder %s21, 1
      %s316 = scalar_select %p315, %s21, 1
      %p317 = scmp.lt.s32.totalorder %s314, 15
      %s318 = scalar_select %p317, %s314, 15
      %s319 = smul.addr %s318, 2
      %s320 = smul.addr %s316, 32
      %s321 = sadd.s32 %s319, %s320
      %s322 = smul.addr %s321, 8
      %s323 = scalar_lea.vmem %s2, %s322
      %p324 = pneg %p124
      %p325 = pneg %p121
      %p326 = pneg %p145
      %p327 = pneg %p142
      %p328 = pneg %p173
      %p329 = pneg %p170
      %s330 = smul.u32 16, %s22
      %p331 = scmp.lt.s32.totalorder %s21, 1
      %s332 = scalar_select %p331, %s21, 1
      %p333 = scmp.lt.s32.totalorder %s330, 15
      %s334 = scalar_select %p333, %s330, 15
      %s335 = smul.addr %s334, 2
      %s336 = smul.addr %s332, 32
      %s337 = sadd.s32 %s335, %s336
      %s338 = smul.addr %s337, 8
      %s339 = scalar_lea.vmem %s4, %s338
      %p340 = pneg %p201
      %p341 = pneg %p198
      %p342 = scmp.lt.s32.totalorder %s21, 1
      %s343 = scalar_select %p342, %s21, 1
      %p344 = scmp.lt.s32.totalorder %s22, 0
      %s345 = scalar_select %p344, %s22, 0
      %s346 = sadd.s32 %s345, %s343
      %s347 = smul.addr %s346, 2
      %s348 = scalar_lea.vmem %s5, %s347
      %s349 = smul.u32 16, %s22
      %p350 = scmp.lt.s32.totalorder %s21, 1
      %s351 = scalar_select %p350, %s21, 1
      %p352 = scmp.lt.s32.totalorder %s349, 15
      %s353 = scalar_select %p352, %s349, 15
      %s354 = smul.addr %s353, 2
      %s355 = smul.addr %s351, 32
      %s356 = sadd.s32 %s354, %s355
      %s357 = smul.addr %s356, 8
      %s358 = scalar_lea.vmem %s0, %s357
      %s359 = smul.u32 16, %s22
      %s360 = smul.u32 %s22, 16
      %s361 = ssub.s32 %s360, 1
      %p362 = scmp.gt.s32.totalorder %s361, 0
      %s363 = scalar_select %p362, %s361, 0
      %p364 = scmp.lt.s32.totalorder %s21, 1
      %s365 = scalar_select %p364, %s21, 1
      %p366 = scmp.lt.s32.totalorder %s363, 15
      %s367 = scalar_select %p366, %s363, 15
      %s368 = smul.addr %s367, 2
      %s369 = smul.addr %s365, 32
      %s370 = sadd.s32 %s368, %s369
      %s371 = smul.addr %s370, 8
      %s372 = scalar_lea.vmem %s1, %s371
      %s373 = smul.u32 %s22, 16
      %s374 = ssub.s32 %s373, 1
      %p375 = scmp.gt.s32.totalorder %s374, 0
      %s376 = scalar_select %p375, %s374, 0
      %s377 = smul.u32 %s22, 16
      %s378 = sadd.s32 %s377, 16
      %p379 = scmp.lt.s32.totalorder %s378, 15
      %s380 = scalar_select %p379, %s378, 15
      %p381 = scmp.lt.s32.totalorder %s21, 1
      %s382 = scalar_select %p381, %s21, 1
      %p383 = scmp.lt.s32.totalorder %s380, 15
      %s384 = scalar_select %p383, %s380, 15
      %s385 = smul.addr %s384, 2
      %s386 = smul.addr %s382, 32
      %s387 = sadd.s32 %s385, %s386
      %s388 = smul.addr %s387, 8
      %s389 = scalar_lea.vmem %s2, %s388
      %s390 = smul.u32 %s22, 16
      %s391 = sadd.s32 %s390, 16
      %p392 = scmp.lt.s32.totalorder %s391, 15
      %s393 = scalar_select %p392, %s391, 15
      %s394 = smul.u32 16, %s22
      %p395 = scmp.lt.s32.totalorder %s21, 1
      %s396 = scalar_select %p395, %s21, 1
      %p397 = scmp.lt.s32.totalorder %s394, 15
      %s398 = scalar_select %p397, %s394, 15
      %s399 = smul.addr %s398, 2
      %s400 = smul.addr %s396, 32
      %s401 = sadd.s32 %s399, %s400
      %s402 = smul.addr %s401, 8
      %s403 = scalar_lea.vmem %s4, %s402
      %s404 = smul.u32 16, %s22
      %p405 = scmp.lt.s32.totalorder %s21, 1
      %s406 = scalar_select %p405, %s21, 1
      %p407 = scmp.lt.s32.totalorder %s22, 0
      %s408 = scalar_select %p407, %s22, 0
      %s409 = sadd.s32 %s408, %s406
      %s410 = smul.addr %s409, 2
      %s411 = scalar_lea.vmem %s5, %s410
      %v412 = vld [vmem:[%s358] sm:$0xff]
      %v413 = vld [vmem:[%s358 + $0x8] sm:$0xff]
      %v414 = vld [vmem:[%s358 + $0x10] sm:$0xff]
      %v415 = vld [vmem:[%s358 + $0x18] sm:$0xff]
      %v416 = vld [vmem:[%s358 + $0x20] sm:$0xff]
      %v417 = vld [vmem:[%s358 + $0x28] sm:$0xff]
      %v418 = vld [vmem:[%s358 + $0x30] sm:$0xff]
      %v419 = vld [vmem:[%s358 + $0x38] sm:$0xff]
      %v420 = vld [vmem:[%s358 + $0x40] sm:$0xff]
      %v421 = vld [vmem:[%s358 + $0x48] sm:$0xff]
      %v422 = vld [vmem:[%s358 + $0x50] sm:$0xff]
      %v423 = vld [vmem:[%s358 + $0x58] sm:$0xff]
      %v424 = vld [vmem:[%s358 + $0x60] sm:$0xff]
      %v425 = vld [vmem:[%s358 + $0x68] sm:$0xff]
      %v426 = vld [vmem:[%s358 + $0x70] sm:$0xff]
      %v427 = vld [vmem:[%s358 + $0x78] sm:$0xff]
      %v428 = vld [vmem:[%s358 + $0x80] sm:$0xff]
      %v429 = vld [vmem:[%s358 + $0x88] sm:$0xff]
      %v430 = vld [vmem:[%s358 + $0x90] sm:$0xff]
      %v431 = vld [vmem:[%s358 + $0x98] sm:$0xff]
      %v432 = vld [vmem:[%s358 + $0xa0] sm:$0xff]
      %v433 = vld [vmem:[%s358 + $0xa8] sm:$0xff]
      %v434 = vld [vmem:[%s358 + $0xb0] sm:$0xff]
      %v435 = vld [vmem:[%s358 + $0xb8] sm:$0xff]
      %v436 = vld [vmem:[%s358 + $0xc0] sm:$0xff]
      %v437 = vld [vmem:[%s358 + $0xc8] sm:$0xff]
      %v438 = vld [vmem:[%s358 + $0xd0] sm:$0xff]
      %v439 = vld [vmem:[%s358 + $0xd8] sm:$0xff]
      %v440 = vld [vmem:[%s358 + $0xe0] sm:$0xff]
      %v441 = vld [vmem:[%s358 + $0xe8] sm:$0xff]
      %v442 = vld [vmem:[%s358 + $0xf0] sm:$0xff]
      %v443 = vld [vmem:[%s358 + $0xf8] sm:$0xff]
      %s444 = scalar_lea.vmem [#allocation2], 16
      %vm445 = vcmask 31744
      %446 = vst.msk [vmem:[%s444] sm:$0xff] %vm445, %v412
      %447 = vst.msk [vmem:[%s444 + $0x8] sm:$0xff] %vm445, %v413
      %448 = vst.msk [vmem:[%s444 + $0x10] sm:$0xff] %vm445, %v414
      %449 = vst.msk [vmem:[%s444 + $0x18] sm:$0xff] %vm445, %v415
      %450 = vst.msk [vmem:[%s444 + $0x20] sm:$0xff] %vm445, %v416
      %451 = vst.msk [vmem:[%s444 + $0x28] sm:$0xff] %vm445, %v417
      %452 = vst.msk [vmem:[%s444 + $0x30] sm:$0xff] %vm445, %v418
      %453 = vst.msk [vmem:[%s444 + $0x38] sm:$0xff] %vm445, %v419
      %454 = vst.msk [vmem:[%s444 + $0x40] sm:$0xff] %vm445, %v420
      %455 = vst.msk [vmem:[%s444 + $0x48] sm:$0xff] %vm445, %v421
      %456 = vst.msk [vmem:[%s444 + $0x50] sm:$0xff] %vm445, %v422
      %457 = vst.msk [vmem:[%s444 + $0x58] sm:$0xff] %vm445, %v423
      %458 = vst.msk [vmem:[%s444 + $0x60] sm:$0xff] %vm445, %v424
      %459 = vst.msk [vmem:[%s444 + $0x68] sm:$0xff] %vm445, %v425
      %460 = vst.msk [vmem:[%s444 + $0x70] sm:$0xff] %vm445, %v426
      %461 = vst.msk [vmem:[%s444 + $0x78] sm:$0xff] %vm445, %v427
      %462 = vst.msk [vmem:[%s444 + $0x80] sm:$0xff] %vm445, %v428
      %463 = vst.msk [vmem:[%s444 + $0x88] sm:$0xff] %vm445, %v429
      %464 = vst.msk [vmem:[%s444 + $0x90] sm:$0xff] %vm445, %v430
      %465 = vst.msk [vmem:[%s444 + $0x98] sm:$0xff] %vm445, %v431
      %466 = vst.msk [vmem:[%s444 + $0xa0] sm:$0xff] %vm445, %v432
      %467 = vst.msk [vmem:[%s444 + $0xa8] sm:$0xff] %vm445, %v433
      %468 = vst.msk [vmem:[%s444 + $0xb0] sm:$0xff] %vm445, %v434
      %469 = vst.msk [vmem:[%s444 + $0xb8] sm:$0xff] %vm445, %v435
      %470 = vst.msk [vmem:[%s444 + $0xc0] sm:$0xff] %vm445, %v436
      %471 = vst.msk [vmem:[%s444 + $0xc8] sm:$0xff] %vm445, %v437
      %472 = vst.msk [vmem:[%s444 + $0xd0] sm:$0xff] %vm445, %v438
      %473 = vst.msk [vmem:[%s444 + $0xd8] sm:$0xff] %vm445, %v439
      %474 = vst.msk [vmem:[%s444 + $0xe0] sm:$0xff] %vm445, %v440
      %475 = vst.msk [vmem:[%s444 + $0xe8] sm:$0xff] %vm445, %v441
      %476 = vst.msk [vmem:[%s444 + $0xf0] sm:$0xff] %vm445, %v442
      %477 = vst.msk [vmem:[%s444 + $0xf8] sm:$0xff] %vm445, %v443
      %v478 = vld [vmem:[%s372] sm:$0xff]
      %v479 = vld [vmem:[%s372 + $0x8] sm:$0xff]
      %480 = vst.msk [vmem:[#allocation2] sm:$0xff] %vm445, %v478
      %481 = vst.msk [vmem:[#allocation2 + $0x8] sm:$0xff] %vm445, %v479
      %v482 = vld [vmem:[%s389] sm:$0xff]
      %v483 = vld [vmem:[%s389 + $0x8] sm:$0xff]
      %s484 = scalar_lea.vmem [#allocation2], 272
      %485 = vst.msk [vmem:[%s484] sm:$0xff] %vm445, %v482
      %486 = vst.msk [vmem:[%s484 + $0x8] sm:$0xff] %vm445, %v483
      %p487 = scmp.eq.s32.totalorder %s22, 0
      // Predicated region
      $region37: #{recurrent_block_forward.4} parent=35 // pred_check
        %p488 = pneg %p487
      $region38: #{recurrent_block_forward.4} parent=35 // pred_check_branch
        %490 = sbr.rel (%p488) target = $region40
      $region39: #{recurrent_block_forward.4} parent=35 // pred_region
        %491 = vst.msk [vmem:[#allocation2] sm:$0xff] %vm445, 0.0
        %492 = vst.msk [vmem:[#allocation2 + $0x8] sm:$0xff] %vm445, 0.0
        %493 = vst.msk [vmem:[%s484] sm:$0xff] %vm445, 0.0
        %494 = vst.msk [vmem:[%s484 + $0x8] sm:$0xff] %vm445, 0.0
      $region40: #{recurrent_block_forward.4} parent=35 // pred_fallthru
        _
      %v495 = vld [vmem:[#allocation2] sm:$0xff]
      %v496 = vld [vmem:[#allocation2 + $0x8] sm:$0x7f]
      %v497 = vld [vmem:[#allocation2 + $0x10] sm:$0xff]
      %v498 = vld [vmem:[#allocation2 + $0x18] sm:$0x7f]
      %v499 = vld [vmem:[#allocation2 + $0x20] sm:$0xff]
      %v500 = vld [vmem:[#allocation2 + $0x28] sm:$0x7f]
      %v501 = vld [vmem:[#allocation2 + $0x30] sm:$0xff]
      %v502 = vld [vmem:[#allocation2 + $0x38] sm:$0x7f]
      %v503 = vld [vmem:[#allocation2 + $0x40] sm:$0xff]
      %v504 = vld [vmem:[#allocation2 + $0x48] sm:$0x7f]
      %v505 = vld [vmem:[#allocation2 + $0x50] sm:$0xff]
      %v506 = vld [vmem:[#allocation2 + $0x58] sm:$0x7f]
      %v507 = vld [vmem:[#allocation2 + $0x60] sm:$0xff]
      %v508 = vld [vmem:[#allocation2 + $0x68] sm:$0x7f]
      %v509 = vld [vmem:[#allocation2 + $0x70] sm:$0xff]
      %v510 = vld [vmem:[#allocation2 + $0x78] sm:$0x7f]
      %v511 = vld [vmem:[#allocation2 + $0x80] sm:$0xff]
      %v512 = vld [vmem:[#allocation2 + $0x88] sm:$0x7f]
      %v513 = vld [vmem:[#allocation2 + $0x90] sm:$0xff]
      %v514 = vld [vmem:[#allocation2 + $0x98] sm:$0x7f]
      %v515 = vld [vmem:[#allocation2 + $0xa0] sm:$0xff]
      %v516 = vld [vmem:[#allocation2 + $0xa8] sm:$0x7f]
      %v517 = vld [vmem:[#allocation2 + $0xb0] sm:$0xff]
      %v518 = vld [vmem:[#allocation2 + $0xb8] sm:$0x7f]
      %v519 = vld [vmem:[#allocation2 + $0xc0] sm:$0xff]
      %v520 = vld [vmem:[#allocation2 + $0xc8] sm:$0x7f]
      %v521 = vld [vmem:[#allocation2 + $0xd0] sm:$0xff]
      %v522 = vld [vmem:[#allocation2 + $0xd8] sm:$0x7f]
      %v523 = vld [vmem:[#allocation2 + $0xe0] sm:$0xff]
      %v524 = vld [vmem:[#allocation2 + $0xe8] sm:$0x7f]
      %v525 = vld [vmem:[#allocation2 + $0xf0] sm:$0xff]
      %v526 = vld [vmem:[#allocation2 + $0xf8] sm:$0x7f]
      %v527 = vld [vmem:[#allocation2 + $0x100] sm:$0xff]
      %v528 = vld [vmem:[#allocation2 + $0x108] sm:$0x7f]
      %v529 = vld [vmem:[#allocation2 + $0x110] sm:$0xff]
      %v530 = vld [vmem:[#allocation2 + $0x118] sm:$0x7f]
      %531 = vst.msk [vmem:[#allocation3 + $0x1] sm:$0xff] %vm445, %v495
      %vm532 = vcmask 30720
      %533 = vst.msk [vmem:[#allocation3 + $0x9] sm:$0x7f] %vm532, %v496
      %534 = vst.msk [vmem:[#allocation3 + $0x11] sm:$0xff] %vm445, %v497
      %535 = vst.msk [vmem:[#allocation3 + $0x19] sm:$0x7f] %vm532, %v498
      %536 = vst.msk [vmem:[#allocation3 + $0x21] sm:$0xff] %vm445, %v499
      %537 = vst.msk [vmem:[#allocation3 + $0x29] sm:$0x7f] %vm532, %v500
      %538 = vst.msk [vmem:[#allocation3 + $0x31] sm:$0xff] %vm445, %v501
      %539 = vst.msk [vmem:[#allocation3 + $0x39] sm:$0x7f] %vm532, %v502
      %540 = vst.msk [vmem:[#allocation3 + $0x41] sm:$0xff] %vm445, %v503
      %541 = vst.msk [vmem:[#allocation3 + $0x49] sm:$0x7f] %vm532, %v504
      %542 = vst.msk [vmem:[#allocation3 + $0x51] sm:$0xff] %vm445, %v505
      %543 = vst.msk [vmem:[#allocation3 + $0x59] sm:$0x7f] %vm532, %v506
      %544 = vst.msk [vmem:[#allocation3 + $0x61] sm:$0xff] %vm445, %v507
      %545 = vst.msk [vmem:[#allocation3 + $0x69] sm:$0x7f] %vm532, %v508
      %546 = vst.msk [vmem:[#allocation3 + $0x71] sm:$0xff] %vm445, %v509
      %547 = vst.msk [vmem:[#allocation3 + $0x79] sm:$0x7f] %vm532, %v510
      %548 = vst.msk [vmem:[#allocation3 + $0x81] sm:$0xff] %vm445, %v511
      %549 = vst.msk [vmem:[#allocation3 + $0x89] sm:$0x7f] %vm532, %v512
      %550 = vst.msk [vmem:[#allocation3 + $0x91] sm:$0xff] %vm445, %v513
      %551 = vst.msk [vmem:[#allocation3 + $0x99] sm:$0x7f] %vm532, %v514
      %552 = vst.msk [vmem:[#allocation3 + $0xa1] sm:$0xff] %vm445, %v515
      %553 = vst.msk [vmem:[#allocation3 + $0xa9] sm:$0x7f] %vm532, %v516
      %554 = vst.msk [vmem:[#allocation3 + $0xb1] sm:$0xff] %vm445, %v517
      %555 = vst.msk [vmem:[#allocation3 + $0xb9] sm:$0x7f] %vm532, %v518
      %556 = vst.msk [vmem:[#allocation3 + $0xc1] sm:$0xff] %vm445, %v519
      %557 = vst.msk [vmem:[#allocation3 + $0xc9] sm:$0x7f] %vm532, %v520
      %558 = vst.msk [vmem:[#allocation3 + $0xd1] sm:$0xff] %vm445, %v521
      %559 = vst.msk [vmem:[#allocation3 + $0xd9] sm:$0x7f] %vm532, %v522
      %560 = vst.msk [vmem:[#allocation3 + $0xe1] sm:$0xff] %vm445, %v523
      %561 = vst.msk [vmem:[#allocation3 + $0xe9] sm:$0x7f] %vm532, %v524
      %562 = vst.msk [vmem:[#allocation3 + $0xf1] sm:$0xff] %vm445, %v525
      %563 = vst.msk [vmem:[#allocation3 + $0xf9] sm:$0x7f] %vm532, %v526
      %564 = vst.msk [vmem:[#allocation3 + $0x101] sm:$0xff] %vm445, %v527
      %565 = vst.msk [vmem:[#allocation3 + $0x109] sm:$0x7f] %vm532, %v528
      %566 = vst.msk [vmem:[#allocation3 + $0x111] sm:$0xff] %vm445, %v529
      %567 = vst.msk [vmem:[#allocation3 + $0x119] sm:$0x7f] %vm532, %v530
      %vm568 = vcmask 24576
      %569 = vst.msk [vmem:[#allocation3] sm:$0x1] %vm568, 0.0
      %570 = vst.msk [vmem:[#allocation3 + $0x10] sm:$0x1] %vm568, 0.0
      %571 = vst.msk [vmem:[#allocation3 + $0x20] sm:$0x1] %vm568, 0.0
      %572 = vst.msk [vmem:[#allocation3 + $0x30] sm:$0x1] %vm568, 0.0
      %573 = vst.msk [vmem:[#allocation3 + $0x40] sm:$0x1] %vm568, 0.0
      %574 = vst.msk [vmem:[#allocation3 + $0x50] sm:$0x1] %vm568, 0.0
      %575 = vst.msk [vmem:[#allocation3 + $0x60] sm:$0x1] %vm568, 0.0
      %576 = vst.msk [vmem:[#allocation3 + $0x70] sm:$0x1] %vm568, 0.0
      %577 = vst.msk [vmem:[#allocation3 + $0x80] sm:$0x1] %vm568, 0.0
      %578 = vst.msk [vmem:[#allocation3 + $0x90] sm:$0x1] %vm568, 0.0
      %579 = vst.msk [vmem:[#allocation3 + $0xa0] sm:$0x1] %vm568, 0.0
      %580 = vst.msk [vmem:[#allocation3 + $0xb0] sm:$0x1] %vm568, 0.0
      %581 = vst.msk [vmem:[#allocation3 + $0xc0] sm:$0x1] %vm568, 0.0
      %582 = vst.msk [vmem:[#allocation3 + $0xd0] sm:$0x1] %vm568, 0.0
      %583 = vst.msk [vmem:[#allocation3 + $0xe0] sm:$0x1] %vm568, 0.0
      %584 = vst.msk [vmem:[#allocation3 + $0xf0] sm:$0x1] %vm568, 0.0
      %585 = vst.msk [vmem:[#allocation3 + $0x100] sm:$0x1] %vm568, 0.0
      %586 = vst.msk [vmem:[#allocation3 + $0x110] sm:$0x1] %vm568, 0.0
      %v587 = vld [vmem:[#allocation2 + $0x1] sm:$0xff]
      %v588 = vld [vmem:[#allocation2 + $0x9] sm:$0x7f]
      %v589 = vld [vmem:[#allocation2 + $0x11] sm:$0xff]
      %v590 = vld [vmem:[#allocation2 + $0x19] sm:$0x7f]
      %v591 = vld [vmem:[#allocation2 + $0x21] sm:$0xff]
      %v592 = vld [vmem:[#allocation2 + $0x29] sm:$0x7f]
      %v593 = vld [vmem:[#allocation2 + $0x31] sm:$0xff]
      %v594 = vld [vmem:[#allocation2 + $0x39] sm:$0x7f]
      %v595 = vld [vmem:[#allocation2 + $0x41] sm:$0xff]
      %v596 = vld [vmem:[#allocation2 + $0x49] sm:$0x7f]
      %v597 = vld [vmem:[#allocation2 + $0x51] sm:$0xff]
      %v598 = vld [vmem:[#allocation2 + $0x59] sm:$0x7f]
      %v599 = vld [vmem:[#allocation2 + $0x61] sm:$0xff]
      %v600 = vld [vmem:[#allocation2 + $0x69] sm:$0x7f]
      %v601 = vld [vmem:[#allocation2 + $0x71] sm:$0xff]
      %v602 = vld [vmem:[#allocation2 + $0x79] sm:$0x7f]
      %v603 = vld [vmem:[#allocation2 + $0x81] sm:$0xff]
      %v604 = vld [vmem:[#allocation2 + $0x89] sm:$0x7f]
      %v605 = vld [vmem:[#allocation2 + $0x91] sm:$0xff]
      %v606 = vld [vmem:[#allocation2 + $0x99] sm:$0x7f]
      %v607 = vld [vmem:[#allocation2 + $0xa1] sm:$0xff]
      %v608 = vld [vmem:[#allocation2 + $0xa9] sm:$0x7f]
      %v609 = vld [vmem:[#allocation2 + $0xb1] sm:$0xff]
      %v610 = vld [vmem:[#allocation2 + $0xb9] sm:$0x7f]
      %v611 = vld [vmem:[#allocation2 + $0xc1] sm:$0xff]
      %v612 = vld [vmem:[#allocation2 + $0xc9] sm:$0x7f]
      %v613 = vld [vmem:[#allocation2 + $0xd1] sm:$0xff]
      %v614 = vld [vmem:[#allocation2 + $0xd9] sm:$0x7f]
      %v615 = vld [vmem:[#allocation2 + $0xe1] sm:$0xff]
      %v616 = vld [vmem:[#allocation2 + $0xe9] sm:$0x7f]
      %v617 = vld [vmem:[#allocation2 + $0xf1] sm:$0xff]
      %v618 = vld [vmem:[#allocation2 + $0xf9] sm:$0x7f]
      %v619 = vld [vmem:[#allocation2 + $0x101] sm:$0xff]
      %v620 = vld [vmem:[#allocation2 + $0x109] sm:$0x7f]
      %v621 = vld [vmem:[#allocation2 + $0x111] sm:$0xff]
      %v622 = vld [vmem:[#allocation2 + $0x119] sm:$0x7f]
      %623 = vst.msk [vmem:[#allocation4] sm:$0xff] %vm445, %v587
      %624 = vst.msk [vmem:[#allocation4 + $0x8] sm:$0x7f] %vm532, %v588
      %625 = vst.msk [vmem:[#allocation4 + $0x10] sm:$0xff] %vm445, %v589
      %626 = vst.msk [vmem:[#allocation4 + $0x18] sm:$0x7f] %vm532, %v590
      %627 = vst.msk [vmem:[#allocation4 + $0x20] sm:$0xff] %vm445, %v591
      %628 = vst.msk [vmem:[#allocation4 + $0x28] sm:$0x7f] %vm532, %v592
      %629 = vst.msk [vmem:[#allocation4 + $0x30] sm:$0xff] %vm445, %v593
      %630 = vst.msk [vmem:[#allocation4 + $0x38] sm:$0x7f] %vm532, %v594
      %631 = vst.msk [vmem:[#allocation4 + $0x40] sm:$0xff] %vm445, %v595
      %632 = vst.msk [vmem:[#allocation4 + $0x48] sm:$0x7f] %vm532, %v596
      %633 = vst.msk [vmem:[#allocation4 + $0x50] sm:$0xff] %vm445, %v597
      %634 = vst.msk [vmem:[#allocation4 + $0x58] sm:$0x7f] %vm532, %v598
      %635 = vst.msk [vmem:[#allocation4 + $0x60] sm:$0xff] %vm445, %v599
      %636 = vst.msk [vmem:[#allocation4 + $0x68] sm:$0x7f] %vm532, %v600
      %637 = vst.msk [vmem:[#allocation4 + $0x70] sm:$0xff] %vm445, %v601
      %638 = vst.msk [vmem:[#allocation4 + $0x78] sm:$0x7f] %vm532, %v602
      %639 = vst.msk [vmem:[#allocation4 + $0x80] sm:$0xff] %vm445, %v603
      %640 = vst.msk [vmem:[#allocation4 + $0x88] sm:$0x7f] %vm532, %v604
      %641 = vst.msk [vmem:[#allocation4 + $0x90] sm:$0xff] %vm445, %v605
      %642 = vst.msk [vmem:[#allocation4 + $0x98] sm:$0x7f] %vm532, %v606
      %643 = vst.msk [vmem:[#allocation4 + $0xa0] sm:$0xff] %vm445, %v607
      %644 = vst.msk [vmem:[#allocation4 + $0xa8] sm:$0x7f] %vm532, %v608
      %645 = vst.msk [vmem:[#allocation4 + $0xb0] sm:$0xff] %vm445, %v609
      %646 = vst.msk [vmem:[#allocation4 + $0xb8] sm:$0x7f] %vm532, %v610
      %647 = vst.msk [vmem:[#allocation4 + $0xc0] sm:$0xff] %vm445, %v611
      %648 = vst.msk [vmem:[#allocation4 + $0xc8] sm:$0x7f] %vm532, %v612
      %649 = vst.msk [vmem:[#allocation4 + $0xd0] sm:$0xff] %vm445, %v613
      %650 = vst.msk [vmem:[#allocation4 + $0xd8] sm:$0x7f] %vm532, %v614
      %651 = vst.msk [vmem:[#allocation4 + $0xe0] sm:$0xff] %vm445, %v615
      %652 = vst.msk [vmem:[#allocation4 + $0xe8] sm:$0x7f] %vm532, %v616
      %653 = vst.msk [vmem:[#allocation4 + $0xf0] sm:$0xff] %vm445, %v617
      %654 = vst.msk [vmem:[#allocation4 + $0xf8] sm:$0x7f] %vm532, %v618
      %655 = vst.msk [vmem:[#allocation4 + $0x100] sm:$0xff] %vm445, %v619
      %656 = vst.msk [vmem:[#allocation4 + $0x108] sm:$0x7f] %vm532, %v620
      %657 = vst.msk [vmem:[#allocation4 + $0x110] sm:$0xff] %vm445, %v621
      %658 = vst.msk [vmem:[#allocation4 + $0x118] sm:$0x7f] %vm532, %v622
      %659 = vst.msk [vmem:[#allocation4 + $0xf] sm:$0x1] %vm568, 0.0
      %660 = vst.msk [vmem:[#allocation4 + $0x1f] sm:$0x1] %vm568, 0.0
      %661 = vst.msk [vmem:[#allocation4 + $0x2f] sm:$0x1] %vm568, 0.0
      %662 = vst.msk [vmem:[#allocation4 + $0x3f] sm:$0x1] %vm568, 0.0
      %663 = vst.msk [vmem:[#allocation4 + $0x4f] sm:$0x1] %vm568, 0.0
      %664 = vst.msk [vmem:[#allocation4 + $0x5f] sm:$0x1] %vm568, 0.0
      %665 = vst.msk [vmem:[#allocation4 + $0x6f] sm:$0x1] %vm568, 0.0
      %666 = vst.msk [vmem:[#allocation4 + $0x7f] sm:$0x1] %vm568, 0.0
      %667 = vst.msk [vmem:[#allocation4 + $0x8f] sm:$0x1] %vm568, 0.0
      %668 = vst.msk [vmem:[#allocation4 + $0x9f] sm:$0x1] %vm568, 0.0
      %669 = vst.msk [vmem:[#allocation4 + $0xaf] sm:$0x1] %vm568, 0.0
      %670 = vst.msk [vmem:[#allocation4 + $0xbf] sm:$0x1] %vm568, 0.0
      %671 = vst.msk [vmem:[#allocation4 + $0xcf] sm:$0x1] %vm568, 0.0
      %672 = vst.msk [vmem:[#allocation4 + $0xdf] sm:$0x1] %vm568, 0.0
      %673 = vst.msk [vmem:[#allocation4 + $0xef] sm:$0x1] %vm568, 0.0
      %674 = vst.msk [vmem:[#allocation4 + $0xff] sm:$0x1] %vm568, 0.0
      %675 = vst.msk [vmem:[#allocation4 + $0x10f] sm:$0x1] %vm568, 0.0
      %676 = vst.msk [vmem:[#allocation4 + $0x11f] sm:$0x1] %vm568, 0.0
      %v677 = vld [vmem:[#allocation3] sm:$0xff]
      %v678 = vld [vmem:[#allocation3 + $0x8] sm:$0xff]
      %v679 = vld [vmem:[#allocation3 + $0x10] sm:$0xff]
      %v680 = vld [vmem:[#allocation3 + $0x18] sm:$0xff]
      %v681 = vld [vmem:[#allocation3 + $0x20] sm:$0xff]
      %v682 = vld [vmem:[#allocation3 + $0x28] sm:$0xff]
      %v683 = vld [vmem:[#allocation3 + $0x30] sm:$0xff]
      %v684 = vld [vmem:[#allocation3 + $0x38] sm:$0xff]
      %v685 = vld [vmem:[#allocation3 + $0x40] sm:$0xff]
      %v686 = vld [vmem:[#allocation3 + $0x48] sm:$0xff]
      %v687 = vld [vmem:[#allocation3 + $0x50] sm:$0xff]
      %v688 = vld [vmem:[#allocation3 + $0x58] sm:$0xff]
      %v689 = vld [vmem:[#allocation3 + $0x60] sm:$0xff]
      %v690 = vld [vmem:[#allocation3 + $0x68] sm:$0xff]
      %v691 = vld [vmem:[#allocation3 + $0x70] sm:$0xff]
      %v692 = vld [vmem:[#allocation3 + $0x78] sm:$0xff]
      %v693 = vld [vmem:[#allocation3 + $0x80] sm:$0xff]
      %v694 = vld [vmem:[#allocation3 + $0x88] sm:$0xff]
      %v695 = vld [vmem:[#allocation3 + $0x90] sm:$0xff]
      %v696 = vld [vmem:[#allocation3 + $0x98] sm:$0xff]
      %v697 = vld [vmem:[#allocation3 + $0xa0] sm:$0xff]
      %v698 = vld [vmem:[#allocation3 + $0xa8] sm:$0xff]
      %v699 = vld [vmem:[#allocation3 + $0xb0] sm:$0xff]
      %v700 = vld [vmem:[#allocation3 + $0xb8] sm:$0xff]
      %v701 = vld [vmem:[#allocation3 + $0xc0] sm:$0xff]
      %v702 = vld [vmem:[#allocation3 + $0xc8] sm:$0xff]
      %v703 = vld [vmem:[#allocation3 + $0xd0] sm:$0xff]
      %v704 = vld [vmem:[#allocation3 + $0xd8] sm:$0xff]
      %v705 = vld [vmem:[#allocation3 + $0xe0] sm:$0xff]
      %v706 = vld [vmem:[#allocation3 + $0xe8] sm:$0xff]
      %v707 = vld [vmem:[#allocation3 + $0xf0] sm:$0xff]
      %v708 = vld [vmem:[#allocation3 + $0xf8] sm:$0xff]
      %v709 = vld [vmem:[%s3] sm:$0xf]
      %v710 = vld [vmem:[#allocation2] sm:$0xff]
      %v711 = vld [vmem:[#allocation2 + $0x8] sm:$0xff]
      %v712 = vld [vmem:[#allocation2 + $0x10] sm:$0xff]
      %v713 = vld [vmem:[#allocation2 + $0x18] sm:$0xff]
      %v714 = vld [vmem:[#allocation2 + $0x20] sm:$0xff]
      %v715 = vld [vmem:[#allocation2 + $0x28] sm:$0xff]
      %v716 = vld [vmem:[#allocation2 + $0x30] sm:$0xff]
      %v717 = vld [vmem:[#allocation2 + $0x38] sm:$0xff]
      %v718 = vld [vmem:[#allocation2 + $0x40] sm:$0xff]
      %v719 = vld [vmem:[#allocation2 + $0x48] sm:$0xff]
      %v720 = vld [vmem:[#allocation2 + $0x50] sm:$0xff]
      %v721 = vld [vmem:[#allocation2 + $0x58] sm:$0xff]
      %v722 = vld [vmem:[#allocation2 + $0x60] sm:$0xff]
      %v723 = vld [vmem:[#allocation2 + $0x68] sm:$0xff]
      %v724 = vld [vmem:[#allocation2 + $0x70] sm:$0xff]
      %v725 = vld [vmem:[#allocation2 + $0x78] sm:$0xff]
      %v726 = vld [vmem:[#allocation2 + $0x80] sm:$0xff]
      %v727 = vld [vmem:[#allocation2 + $0x88] sm:$0xff]
      %v728 = vld [vmem:[#allocation2 + $0x90] sm:$0xff]
      %v729 = vld [vmem:[#allocation2 + $0x98] sm:$0xff]
      %v730 = vld [vmem:[#allocation2 + $0xa0] sm:$0xff]
      %v731 = vld [vmem:[#allocation2 + $0xa8] sm:$0xff]
      %v732 = vld [vmem:[#allocation2 + $0xb0] sm:$0xff]
      %v733 = vld [vmem:[#allocation2 + $0xb8] sm:$0xff]
      %v734 = vld [vmem:[#allocation2 + $0xc0] sm:$0xff]
      %v735 = vld [vmem:[#allocation2 + $0xc8] sm:$0xff]
      %v736 = vld [vmem:[#allocation2 + $0xd0] sm:$0xff]
      %v737 = vld [vmem:[#allocation2 + $0xd8] sm:$0xff]
      %v738 = vld [vmem:[#allocation2 + $0xe0] sm:$0xff]
      %v739 = vld [vmem:[#allocation2 + $0xe8] sm:$0xff]
      %v740 = vld [vmem:[#allocation2 + $0xf0] sm:$0xff]
      %v741 = vld [vmem:[#allocation2 + $0xf8] sm:$0xff]
      %s742 = scalar_lea.vmem %s3, 4
      %v743 = vld [vmem:[%s742] sm:$0xf]
      %v745 = vsel %vm445, %v710, 0
      %v748 = vsel %vm445, %v711, 0
      %v751 = vsel %vm445, %v712, 0
      %v754 = vsel %vm445, %v713, 0
      %v757 = vsel %vm445, %v714, 0
      %v760 = vsel %vm445, %v715, 0
      %v763 = vsel %vm445, %v716, 0
      %v766 = vsel %vm445, %v717, 0
      %v769 = vsel %vm445, %v718, 0
      %v772 = vsel %vm445, %v719, 0
      %v775 = vsel %vm445, %v720, 0
      %v778 = vsel %vm445, %v721, 0
      %v781 = vsel %vm445, %v722, 0
      %v784 = vsel %vm445, %v723, 0
      %v787 = vsel %vm445, %v724, 0
      %v790 = vsel %vm445, %v725, 0
      %v793 = vsel %vm445, %v726, 0
      %v796 = vsel %vm445, %v727, 0
      %v799 = vsel %vm445, %v728, 0
      %v802 = vsel %vm445, %v729, 0
      %v805 = vsel %vm445, %v730, 0
      %v808 = vsel %vm445, %v731, 0
      %v811 = vsel %vm445, %v732, 0
      %v814 = vsel %vm445, %v733, 0
      %v817 = vsel %vm445, %v734, 0
      %v820 = vsel %vm445, %v735, 0
      %v823 = vsel %vm445, %v736, 0
      %v826 = vsel %vm445, %v737, 0
      %v829 = vsel %vm445, %v738, 0
      %v832 = vsel %vm445, %v739, 0
      %v835 = vsel %vm445, %v740, 0
      %v838 = vsel %vm445, %v741, 0
      %vm840 = vcmask 1043456
      %v842 = vsel %vm840, %v743, 0
      %844 = vmatprep.subr.mxu0 0.0
      %845 = vmatpush1.msra.mxu0 %v842
      %846 = vmatprep.subr.mxu0 0.0
      %847 = vmatpush1.msra.mxu0 0.0
      %848 = vmatprep.subr.mxu0 0.0
      %849 = vmatpush1.msra.mxu0 0.0
      %850 = vmatprep.subr.mxu0 0.0
      %851 = vmatpush1.msra.mxu0 0.0
      %852 = vmatprep.subr.mxu0 0.0
      %853 = vmatpush1.msra.mxu0 0.0
      %854 = vmatprep.subr.mxu0 0.0
      %855 = vmatpush1.msra.mxu0 0.0
      %856 = vmatprep.subr.mxu0 0.0
      %857 = vmatpush1.msra.mxu0 0.0
      %858 = vmatprep.subr.mxu0 0.0
      %859 = vmatpush1.msra.mxu0 0.0
      %860 = vmatprep.subr.mxu0 0.0
      %861 = vmatpush1.msra.mxu0 0.0
      %862 = vmatprep.subr.mxu0 0.0
      %863 = vmatpush1.msra.mxu0 0.0
      %864 = vmatprep.subr.mxu0 0.0
      %865 = vmatpush1.msra.mxu0 0.0
      %866 = vmatprep.subr.mxu0 0.0
      %867 = vmatpush1.msra.mxu0 0.0
      %868 = vmatprep.subr.mxu0 0.0
      %869 = vmatpush1.msra.mxu0 0.0
      %870 = vmatprep.subr.mxu0 0.0
      %871 = vmatpush1.msra.mxu0 0.0
      %872 = vmatprep.subr.mxu0 0.0
      %873 = vmatpush1.msra.mxu0 0.0
      %874 = vmatprep.subr.mxu0 0.0
      %875 = vmatpush1.msra.mxu0 0.0
      %876 = vmatprep.subr.mxu0 0.0
      %877 = vmatpush1.msra.mxu0 0.0
      %878 = vmatprep.subr.mxu0 0.0
      %879 = vmatpush1.msra.mxu0 0.0
      %880 = vmatprep.subr.mxu0 0.0
      %881 = vmatpush1.msra.mxu0 0.0
      %882 = vmatprep.subr.mxu0 0.0
      %883 = vmatpush1.msra.mxu0 0.0
      %884 = vmatprep.subr.mxu0 0.0
      %885 = vmatpush1.msra.mxu0 0.0
      %886 = vmatprep.subr.mxu0 0.0
      %887 = vmatpush1.msra.mxu0 0.0
      %888 = vmatprep.subr.mxu0 0.0
      %889 = vmatpush1.msra.mxu0 0.0
      %890 = vmatprep.subr.mxu0 0.0
      %891 = vmatpush1.msra.mxu0 0.0
      %892 = vmatprep.subr.mxu0 0.0
      %893 = vmatpush1.msra.mxu0 0.0
      %894 = vmatprep.subr.mxu0 0.0
      %895 = vmatpush1.msra.mxu0 0.0
      %896 = vmatprep.subr.mxu0 0.0
      %897 = vmatpush1.msra.mxu0 0.0
      %898 = vmatprep.subr.mxu0 0.0
      %899 = vmatpush1.msra.mxu0 0.0
      %900 = vmatprep.subr.mxu0 0.0
      %901 = vmatpush1.msra.mxu0 0.0
      %902 = vmatprep.subr.mxu0 0.0
      %903 = vmatpush1.msra.mxu0 0.0
      %904 = vmatprep.subr.mxu0 0.0
      %905 = vmatpush1.msra.mxu0 0.0
      %906 = vmatprep.subr.mxu0 0.0
      %907 = vmatpush1.msra.mxu0 0.0
      %908 = vmatprep.mubr.f32.mxu0 0.0
      %909 = vmatmul.mubr.f32.gmra.mrb[0].mxu0 %v745
      %v910 = vpop.f32.mrb[0].mxu0
      %v911 = vadd.f32 0.0, %v910
      %v912 = vpop.f32.mrb[0].mxu0
      %913 = vmatprep.mubr.f32.mxu0 0.0
      %914 = vmatmul.mubr.f32.gmra.mrb[0].mxu0 %v748
      %v915 = vpop.f32.mrb[0].mxu0
      %v916 = vadd.f32 0.0, %v915
      %v917 = vpop.f32.mrb[0].mxu0
      %918 = vmatprep.mubr.f32.mxu0 0.0
      %919 = vmatmul.mubr.f32.gmra.mrb[0].mxu0 %v751
      %v920 = vpop.f32.mrb[0].mxu0
      %v921 = vadd.f32 0.0, %v920
      %v922 = vpop.f32.mrb[0].mxu0
      %923 = vmatprep.mubr.f32.mxu0 0.0
      %924 = vmatmul.mubr.f32.gmra.mrb[0].mxu0 %v754
      %v925 = vpop.f32.mrb[0].mxu0
      %v926 = vadd.f32 0.0, %v925
      %v927 = vpop.f32.mrb[0].mxu0
      %928 = vmatprep.mubr.f32.mxu0 0.0
      %929 = vmatmul.mubr.f32.gmra.mrb[0].mxu0 %v757
      %v930 = vpop.f32.mrb[0].mxu0
      %v931 = vadd.f32 0.0, %v930
      %v932 = vpop.f32.mrb[0].mxu0
      %933 = vmatprep.mubr.f32.mxu0 0.0
      %934 = vmatmul.mubr.f32.gmra.mrb[0].mxu0 %v760
      %v935 = vpop.f32.mrb[0].mxu0
      %v936 = vadd.f32 0.0, %v935
      %v937 = vpop.f32.mrb[0].mxu0
      %938 = vmatprep.mubr.f32.mxu0 0.0
      %939 = vmatmul.mubr.f32.gmra.mrb[0].mxu0 %v763
      %v940 = vpop.f32.mrb[0].mxu0
      %v941 = vadd.f32 0.0, %v940
      %v942 = vpop.f32.mrb[0].mxu0
      %943 = vmatprep.mubr.f32.mxu0 0.0
      %944 = vmatmul.mubr.f32.gmra.mrb[0].mxu0 %v766
      %v945 = vpop.f32.mrb[0].mxu0
      %v946 = vadd.f32 0.0, %v945
      %v947 = vpop.f32.mrb[0].mxu0
      %948 = vmatprep.mubr.f32.mxu0 0.0
      %949 = vmatmul.mubr.f32.gmra.mrb[0].mxu0 %v769
      %v950 = vpop.f32.mrb[0].mxu0
      %v951 = vadd.f32 0.0, %v950
      %v952 = vpop.f32.mrb[0].mxu0
      %953 = vmatprep.mubr.f32.mxu0 0.0
      %954 = vmatmul.mubr.f32.gmra.mrb[0].mxu0 %v772
      %v955 = vpop.f32.mrb[0].mxu0
      %v956 = vadd.f32 0.0, %v955
      %v957 = vpop.f32.mrb[0].mxu0
      %958 = vmatprep.mubr.f32.mxu0 0.0
      %959 = vmatmul.mubr.f32.gmra.mrb[0].mxu0 %v775
      %v960 = vpop.f32.mrb[0].mxu0
      %v961 = vadd.f32 0.0, %v960
      %v962 = vpop.f32.mrb[0].mxu0
      %963 = vmatprep.mubr.f32.mxu0 0.0
      %964 = vmatmul.mubr.f32.gmra.mrb[0].mxu0 %v778
      %v965 = vpop.f32.mrb[0].mxu0
      %v966 = vadd.f32 0.0, %v965
      %v967 = vpop.f32.mrb[0].mxu0
      %968 = vmatprep.mubr.f32.mxu0 0.0
      %969 = vmatmul.mubr.f32.gmra.mrb[0].mxu0 %v781
      %v970 = vpop.f32.mrb[0].mxu0
      %v971 = vadd.f32 0.0, %v970
      %v972 = vpop.f32.mrb[0].mxu0
      %973 = vmatprep.mubr.f32.mxu0 0.0
      %974 = vmatmul.mubr.f32.gmra.mrb[0].mxu0 %v784
      %v975 = vpop.f32.mrb[0].mxu0
      %v976 = vadd.f32 0.0, %v975
      %v977 = vpop.f32.mrb[0].mxu0
      %978 = vmatprep.mubr.f32.mxu0 0.0
      %979 = vmatmul.mubr.f32.gmra.mrb[0].mxu0 %v787
      %v980 = vpop.f32.mrb[0].mxu0
      %v981 = vadd.f32 0.0, %v980
      %v982 = vpop.f32.mrb[0].mxu0
      %983 = vmatprep.mubr.f32.mxu0 0.0
      %984 = vmatmul.mubr.f32.gmra.mrb[0].mxu0 %v790
      %v985 = vpop.f32.mrb[0].mxu0
      %v986 = vadd.f32 0.0, %v985
      %v987 = vpop.f32.mrb[0].mxu0
      %988 = vmatprep.mubr.f32.mxu0 0.0
      %989 = vmatmul.mubr.f32.gmra.mrb[0].mxu0 %v793
      %v990 = vpop.f32.mrb[0].mxu0
      %v991 = vadd.f32 0.0, %v990
      %v992 = vpop.f32.mrb[0].mxu0
      %993 = vmatprep.mubr.f32.mxu0 0.0
      %994 = vmatmul.mubr.f32.gmra.mrb[0].mxu0 %v796
      %v995 = vpop.f32.mrb[0].mxu0
      %v996 = vadd.f32 0.0, %v995
      %v997 = vpop.f32.mrb[0].mxu0
      %998 = vmatprep.mubr.f32.mxu0 0.0
      %999 = vmatmul.mubr.f32.gmra.mrb[0].mxu0 %v799
      %v1000 = vpop.f32.mrb[0].mxu0
      %v1001 = vadd.f32 0.0, %v1000
      %v1002 = vpop.f32.mrb[0].mxu0
      %1003 = vmatprep.mubr.f32.mxu0 0.0
      %1004 = vmatmul.mubr.f32.gmra.mrb[0].mxu0 %v802
      %v1005 = vpop.f32.mrb[0].mxu0
      %v1006 = vadd.f32 0.0, %v1005
      %v1007 = vpop.f32.mrb[0].mxu0
      %1008 = vmatprep.mubr.f32.mxu0 0.0
      %1009 = vmatmul.mubr.f32.gmra.mrb[0].mxu0 %v805
      %v1010 = vpop.f32.mrb[0].mxu0
      %v1011 = vadd.f32 0.0, %v1010
      %v1012 = vpop.f32.mrb[0].mxu0
      %1013 = vmatprep.mubr.f32.mxu0 0.0
      %1014 = vmatmul.mubr.f32.gmra.mrb[0].mxu0 %v808
      %v1015 = vpop.f32.mrb[0].mxu0
      %v1016 = vadd.f32 0.0, %v1015
      %v1017 = vpop.f32.mrb[0].mxu0
      %1018 = vmatprep.mubr.f32.mxu0 0.0
      %1019 = vmatmul.mubr.f32.gmra.mrb[0].mxu0 %v811
      %v1020 = vpop.f32.mrb[0].mxu0
      %v1021 = vadd.f32 0.0, %v1020
      %v1022 = vpop.f32.mrb[0].mxu0
      %1023 = vmatprep.mubr.f32.mxu0 0.0
      %1024 = vmatmul.mubr.f32.gmra.mrb[0].mxu0 %v814
      %v1025 = vpop.f32.mrb[0].mxu0
      %v1026 = vadd.f32 0.0, %v1025
      %v1027 = vpop.f32.mrb[0].mxu0
      %1028 = vmatprep.mubr.f32.mxu0 0.0
      %1029 = vmatmul.mubr.f32.gmra.mrb[0].mxu0 %v817
      %v1030 = vpop.f32.mrb[0].mxu0
      %v1031 = vadd.f32 0.0, %v1030
      %v1032 = vpop.f32.mrb[0].mxu0
      %1033 = vmatprep.mubr.f32.mxu0 0.0
      %1034 = vmatmul.mubr.f32.gmra.mrb[0].mxu0 %v820
      %v1035 = vpop.f32.mrb[0].mxu0
      %v1036 = vadd.f32 0.0, %v1035
      %v1037 = vpop.f32.mrb[0].mxu0
      %1038 = vmatprep.mubr.f32.mxu0 0.0
      %1039 = vmatmul.mubr.f32.gmra.mrb[0].mxu0 %v823
      %v1040 = vpop.f32.mrb[0].mxu0
      %v1041 = vadd.f32 0.0, %v1040
      %v1042 = vpop.f32.mrb[0].mxu0
      %1043 = vmatprep.mubr.f32.mxu0 0.0
      %1044 = vmatmul.mubr.f32.gmra.mrb[0].mxu0 %v826
      %v1045 = vpop.f32.mrb[0].mxu0
      %v1046 = vadd.f32 0.0, %v1045
      %v1047 = vpop.f32.mrb[0].mxu0
      %1048 = vmatprep.mubr.f32.mxu0 0.0
      %1049 = vmatmul.mubr.f32.gmra.mrb[0].mxu0 %v829
      %v1050 = vpop.f32.mrb[0].mxu0
      %v1051 = vadd.f32 0.0, %v1050
      %v1052 = vpop.f32.mrb[0].mxu0
      %1053 = vmatprep.mubr.f32.mxu0 0.0
      %1054 = vmatmul.mubr.f32.gmra.mrb[0].mxu0 %v832
      %v1055 = vpop.f32.mrb[0].mxu0
      %v1056 = vadd.f32 0.0, %v1055
      %v1057 = vpop.f32.mrb[0].mxu0
      %1058 = vmatprep.mubr.f32.mxu0 0.0
      %1059 = vmatmul.mubr.f32.gmra.mrb[0].mxu0 %v835
      %v1060 = vpop.f32.mrb[0].mxu0
      %v1061 = vadd.f32 0.0, %v1060
      %v1062 = vpop.f32.mrb[0].mxu0
      %1063 = vmatprep.mubr.f32.mxu0 0.0
      %1064 = vmatmul.mubr.f32.gmra.mrb[0].mxu0 %v838
      %v1065 = vpop.f32.mrb[0].mxu0
      %v1066 = vadd.f32 0.0, %v1065
      %v1067 = vpop.f32.mrb[0].mxu0
      %1068 = vdwg.mxu0
      %v1070 = vsel %vm445, %v677, 0
      %v1073 = vsel %vm445, %v678, 0
      %v1076 = vsel %vm445, %v679, 0
      %v1079 = vsel %vm445, %v680, 0
      %v1082 = vsel %vm445, %v681, 0
      %v1085 = vsel %vm445, %v682, 0
      %v1088 = vsel %vm445, %v683, 0
      %v1091 = vsel %vm445, %v684, 0
      %v1094 = vsel %vm445, %v685, 0
      %v1097 = vsel %vm445, %v686, 0
      %v1100 = vsel %vm445, %v687, 0
      %v1103 = vsel %vm445, %v688, 0
      %v1106 = vsel %vm445, %v689, 0
      %v1109 = vsel %vm445, %v690, 0
      %v1112 = vsel %vm445, %v691, 0
      %v1115 = vsel %vm445, %v692, 0
      %v1118 = vsel %vm445, %v693, 0
      %v1121 = vsel %vm445, %v694, 0
      %v1124 = vsel %vm445, %v695, 0
      %v1127 = vsel %vm445, %v696, 0
      %v1130 = vsel %vm445, %v697, 0
      %v1133 = vsel %vm445, %v698, 0
      %v1136 = vsel %vm445, %v699, 0
      %v1139 = vsel %vm445, %v700, 0
      %v1142 = vsel %vm445, %v701, 0
      %v1145 = vsel %vm445, %v702, 0
      %v1148 = vsel %vm445, %v703, 0
      %v1151 = vsel %vm445, %v704, 0
      %v1154 = vsel %vm445, %v705, 0
      %v1157 = vsel %vm445, %v706, 0
      %v1160 = vsel %vm445, %v707, 0
      %v1163 = vsel %vm445, %v708, 0
      %v1166 = vsel %vm840, %v709, 0
      %1168 = vmatprep.subr.mxu0 0.0
      %1169 = vmatpush1.msra.mxu0 %v1166
      %1170 = vmatprep.subr.mxu0 0.0
      %1171 = vmatpush1.msra.mxu0 0.0
      %1172 = vmatprep.subr.mxu0 0.0
      %1173 = vmatpush1.msra.mxu0 0.0
      %1174 = vmatprep.subr.mxu0 0.0
      %1175 = vmatpush1.msra.mxu0 0.0
      %1176 = vmatprep.subr.mxu0 0.0
      %1177 = vmatpush1.msra.mxu0 0.0
      %1178 = vmatprep.subr.mxu0 0.0
      %1179 = vmatpush1.msra.mxu0 0.0
      %1180 = vmatprep.subr.mxu0 0.0
      %1181 = vmatpush1.msra.mxu0 0.0
      %1182 = vmatprep.subr.mxu0 0.0
      %1183 = vmatpush1.msra.mxu0 0.0
      %1184 = vmatprep.subr.mxu0 0.0
      %1185 = vmatpush1.msra.mxu0 0.0
      %1186 = vmatprep.subr.mxu0 0.0
      %1187 = vmatpush1.msra.mxu0 0.0
      %1188 = vmatprep.subr.mxu0 0.0
      %1189 = vmatpush1.msra.mxu0 0.0
      %1190 = vmatprep.subr.mxu0 0.0
      %1191 = vmatpush1.msra.mxu0 0.0
      %1192 = vmatprep.subr.mxu0 0.0
      %1193 = vmatpush1.msra.mxu0 0.0
      %1194 = vmatprep.subr.mxu0 0.0
      %1195 = vmatpush1.msra.mxu0 0.0
      %1196 = vmatprep.subr.mxu0 0.0
      %1197 = vmatpush1.msra.mxu0 0.0
      %1198 = vmatprep.subr.mxu0 0.0
      %1199 = vmatpush1.msra.mxu0 0.0
      %1200 = vmatprep.subr.mxu0 0.0
      %1201 = vmatpush1.msra.mxu0 0.0
      %1202 = vmatprep.subr.mxu0 0.0
      %1203 = vmatpush1.msra.mxu0 0.0
      %1204 = vmatprep.subr.mxu0 0.0
      %1205 = vmatpush1.msra.mxu0 0.0
      %1206 = vmatprep.subr.mxu0 0.0
      %1207 = vmatpush1.msra.mxu0 0.0
      %1208 = vmatprep.subr.mxu0 0.0
      %1209 = vmatpush1.msra.mxu0 0.0
      %1210 = vmatprep.subr.mxu0 0.0
      %1211 = vmatpush1.msra.mxu0 0.0
      %1212 = vmatprep.subr.mxu0 0.0
      %1213 = vmatpush1.msra.mxu0 0.0
      %1214 = vmatprep.subr.mxu0 0.0
      %1215 = vmatpush1.msra.mxu0 0.0
      %1216 = vmatprep.subr.mxu0 0.0
      %1217 = vmatpush1.msra.mxu0 0.0
      %1218 = vmatprep.subr.mxu0 0.0
      %1219 = vmatpush1.msra.mxu0 0.0
      %1220 = vmatprep.subr.mxu0 0.0
      %1221 = vmatpush1.msra.mxu0 0.0
      %1222 = vmatprep.subr.mxu0 0.0
      %1223 = vmatpush1.msra.mxu0 0.0
      %1224 = vmatprep.subr.mxu0 0.0
      %1225 = vmatpush1.msra.mxu0 0.0
      %1226 = vmatprep.subr.mxu0 0.0
      %1227 = vmatpush1.msra.mxu0 0.0
      %1228 = vmatprep.subr.mxu0 0.0
      %1229 = vmatpush1.msra.mxu0 0.0
      %1230 = vmatprep.subr.mxu0 0.0
      %1231 = vmatpush1.msra.mxu0 0.0
      %1232 = vmatprep.mubr.f32.mxu0 0.0
      %1233 = vmatmul.mubr.f32.gmra.mrb[0].mxu0 %v1070
      %v1234 = vpop.f32.mrb[0].mxu0
      %v1235 = vadd.f32 %v911, %v1234
      %v1236 = vpop.f32.mrb[0].mxu0
      %1237 = vmatprep.mubr.f32.mxu0 0.0
      %1238 = vmatmul.mubr.f32.gmra.mrb[0].mxu0 %v1073
      %v1239 = vpop.f32.mrb[0].mxu0
      %v1240 = vadd.f32 %v916, %v1239
      %v1241 = vpop.f32.mrb[0].mxu0
      %1242 = vmatprep.mubr.f32.mxu0 0.0
      %1243 = vmatmul.mubr.f32.gmra.mrb[0].mxu0 %v1076
      %v1244 = vpop.f32.mrb[0].mxu0
      %v1245 = vadd.f32 %v921, %v1244
      %v1246 = vpop.f32.mrb[0].mxu0
      %1247 = vmatprep.mubr.f32.mxu0 0.0
      %1248 = vmatmul.mubr.f32.gmra.mrb[0].mxu0 %v1079
      %v1249 = vpop.f32.mrb[0].mxu0
      %v1250 = vadd.f32 %v926, %v1249
      %v1251 = vpop.f32.mrb[0].mxu0
      %1252 = vmatprep.mubr.f32.mxu0 0.0
      %1253 = vmatmul.mubr.f32.gmra.mrb[0].mxu0 %v1082
      %v1254 = vpop.f32.mrb[0].mxu0
      %v1255 = vadd.f32 %v931, %v1254
      %v1256 = vpop.f32.mrb[0].mxu0
      %1257 = vmatprep.mubr.f32.mxu0 0.0
      %1258 = vmatmul.mubr.f32.gmra.mrb[0].mxu0 %v1085
      %v1259 = vpop.f32.mrb[0].mxu0
      %v1260 = vadd.f32 %v936, %v1259
      %v1261 = vpop.f32.mrb[0].mxu0
      %1262 = vmatprep.mubr.f32.mxu0 0.0
      %1263 = vmatmul.mubr.f32.gmra.mrb[0].mxu0 %v1088
      %v1264 = vpop.f32.mrb[0].mxu0
      %v1265 = vadd.f32 %v941, %v1264
      %v1266 = vpop.f32.mrb[0].mxu0
      %1267 = vmatprep.mubr.f32.mxu0 0.0
      %1268 = vmatmul.mubr.f32.gmra.mrb[0].mxu0 %v1091
      %v1269 = vpop.f32.mrb[0].mxu0
      %v1270 = vadd.f32 %v946, %v1269
      %v1271 = vpop.f32.mrb[0].mxu0
      %1272 = vmatprep.mubr.f32.mxu0 0.0
      %1273 = vmatmul.mubr.f32.gmra.mrb[0].mxu0 %v1094
      %v1274 = vpop.f32.mrb[0].mxu0
      %v1275 = vadd.f32 %v951, %v1274
      %v1276 = vpop.f32.mrb[0].mxu0
      %1277 = vmatprep.mubr.f32.mxu0 0.0
      %1278 = vmatmul.mubr.f32.gmra.mrb[0].mxu0 %v1097
      %v1279 = vpop.f32.mrb[0].mxu0
      %v1280 = vadd.f32 %v956, %v1279
      %v1281 = vpop.f32.mrb[0].mxu0
      %1282 = vmatprep.mubr.f32.mxu0 0.0
      %1283 = vmatmul.mubr.f32.gmra.mrb[0].mxu0 %v1100
      %v1284 = vpop.f32.mrb[0].mxu0
      %v1285 = vadd.f32 %v961, %v1284
      %v1286 = vpop.f32.mrb[0].mxu0
      %1287 = vmatprep.mubr.f32.mxu0 0.0
      %1288 = vmatmul.mubr.f32.gmra.mrb[0].mxu0 %v1103
      %v1289 = vpop.f32.mrb[0].mxu0
      %v1290 = vadd.f32 %v966, %v1289
      %v1291 = vpop.f32.mrb[0].mxu0
      %1292 = vmatprep.mubr.f32.mxu0 0.0
      %1293 = vmatmul.mubr.f32.gmra.mrb[0].mxu0 %v1106
      %v1294 = vpop.f32.mrb[0].mxu0
      %v1295 = vadd.f32 %v971, %v1294
      %v1296 = vpop.f32.mrb[0].mxu0
      %1297 = vmatprep.mubr.f32.mxu0 0.0
      %1298 = vmatmul.mubr.f32.gmra.mrb[0].mxu0 %v1109
      %v1299 = vpop.f32.mrb[0].mxu0
      %v1300 = vadd.f32 %v976, %v1299
      %v1301 = vpop.f32.mrb[0].mxu0
      %1302 = vmatprep.mubr.f32.mxu0 0.0
      %1303 = vmatmul.mubr.f32.gmra.mrb[0].mxu0 %v1112
      %v1304 = vpop.f32.mrb[0].mxu0
      %v1305 = vadd.f32 %v981, %v1304
      %v1306 = vpop.f32.mrb[0].mxu0
      %1307 = vmatprep.mubr.f32.mxu0 0.0
      %1308 = vmatmul.mubr.f32.gmra.mrb[0].mxu0 %v1115
      %v1309 = vpop.f32.mrb[0].mxu0
      %v1310 = vadd.f32 %v986, %v1309
      %v1311 = vpop.f32.mrb[0].mxu0
      %1312 = vmatprep.mubr.f32.mxu0 0.0
      %1313 = vmatmul.mubr.f32.gmra.mrb[0].mxu0 %v1118
      %v1314 = vpop.f32.mrb[0].mxu0
      %v1315 = vadd.f32 %v991, %v1314
      %v1316 = vpop.f32.mrb[0].mxu0
      %1317 = vmatprep.mubr.f32.mxu0 0.0
      %1318 = vmatmul.mubr.f32.gmra.mrb[0].mxu0 %v1121
      %v1319 = vpop.f32.mrb[0].mxu0
      %v1320 = vadd.f32 %v996, %v1319
      %v1321 = vpop.f32.mrb[0].mxu0
      %1322 = vmatprep.mubr.f32.mxu0 0.0
      %1323 = vmatmul.mubr.f32.gmra.mrb[0].mxu0 %v1124
      %v1324 = vpop.f32.mrb[0].mxu0
      %v1325 = vadd.f32 %v1001, %v1324
      %v1326 = vpop.f32.mrb[0].mxu0
      %1327 = vmatprep.mubr.f32.mxu0 0.0
      %1328 = vmatmul.mubr.f32.gmra.mrb[0].mxu0 %v1127
      %v1329 = vpop.f32.mrb[0].mxu0
      %v1330 = vadd.f32 %v1006, %v1329
      %v1331 = vpop.f32.mrb[0].mxu0
      %1332 = vmatprep.mubr.f32.mxu0 0.0
      %1333 = vmatmul.mubr.f32.gmra.mrb[0].mxu0 %v1130
      %v1334 = vpop.f32.mrb[0].mxu0
      %v1335 = vadd.f32 %v1011, %v1334
      %v1336 = vpop.f32.mrb[0].mxu0
      %1337 = vmatprep.mubr.f32.mxu0 0.0
      %1338 = vmatmul.mubr.f32.gmra.mrb[0].mxu0 %v1133
      %v1339 = vpop.f32.mrb[0].mxu0
      %v1340 = vadd.f32 %v1016, %v1339
      %v1341 = vpop.f32.mrb[0].mxu0
      %1342 = vmatprep.mubr.f32.mxu0 0.0
      %1343 = vmatmul.mubr.f32.gmra.mrb[0].mxu0 %v1136
      %v1344 = vpop.f32.mrb[0].mxu0
      %v1345 = vadd.f32 %v1021, %v1344
      %v1346 = vpop.f32.mrb[0].mxu0
      %1347 = vmatprep.mubr.f32.mxu0 0.0
      %1348 = vmatmul.mubr.f32.gmra.mrb[0].mxu0 %v1139
      %v1349 = vpop.f32.mrb[0].mxu0
      %v1350 = vadd.f32 %v1026, %v1349
      %v1351 = vpop.f32.mrb[0].mxu0
      %1352 = vmatprep.mubr.f32.mxu0 0.0
      %1353 = vmatmul.mubr.f32.gmra.mrb[0].mxu0 %v1142
      %v1354 = vpop.f32.mrb[0].mxu0
      %v1355 = vadd.f32 %v1031, %v1354
      %v1356 = vpop.f32.mrb[0].mxu0
      %1357 = vmatprep.mubr.f32.mxu0 0.0
      %1358 = vmatmul.mubr.f32.gmra.mrb[0].mxu0 %v1145
      %v1359 = vpop.f32.mrb[0].mxu0
      %v1360 = vadd.f32 %v1036, %v1359
      %v1361 = vpop.f32.mrb[0].mxu0
      %1362 = vmatprep.mubr.f32.mxu0 0.0
      %1363 = vmatmul.mubr.f32.gmra.mrb[0].mxu0 %v1148
      %v1364 = vpop.f32.mrb[0].mxu0
      %v1365 = vadd.f32 %v1041, %v1364
      %v1366 = vpop.f32.mrb[0].mxu0
      %1367 = vmatprep.mubr.f32.mxu0 0.0
      %1368 = vmatmul.mubr.f32.gmra.mrb[0].mxu0 %v1151
      %v1369 = vpop.f32.mrb[0].mxu0
      %v1370 = vadd.f32 %v1046, %v1369
      %v1371 = vpop.f32.mrb[0].mxu0
      %1372 = vmatprep.mubr.f32.mxu0 0.0
      %1373 = vmatmul.mubr.f32.gmra.mrb[0].mxu0 %v1154
      %v1374 = vpop.f32.mrb[0].mxu0
      %v1375 = vadd.f32 %v1051, %v1374
      %v1376 = vpop.f32.mrb[0].mxu0
      %1377 = vmatprep.mubr.f32.mxu0 0.0
      %1378 = vmatmul.mubr.f32.gmra.mrb[0].mxu0 %v1157
      %v1379 = vpop.f32.mrb[0].mxu0
      %v1380 = vadd.f32 %v1056, %v1379
      %v1381 = vpop.f32.mrb[0].mxu0
      %1382 = vmatprep.mubr.f32.mxu0 0.0
      %1383 = vmatmul.mubr.f32.gmra.mrb[0].mxu0 %v1160
      %v1384 = vpop.f32.mrb[0].mxu0
      %v1385 = vadd.f32 %v1061, %v1384
      %v1386 = vpop.f32.mrb[0].mxu0
      %1387 = vmatprep.mubr.f32.mxu0 0.0
      %1388 = vmatmul.mubr.f32.gmra.mrb[0].mxu0 %v1163
      %v1389 = vpop.f32.mrb[0].mxu0
      %v1390 = vadd.f32 %v1066, %v1389
      %v1391 = vpop.f32.mrb[0].mxu0
      %1392 = vdwg.mxu0
      %v1393 = vld [vmem:[#allocation4] sm:$0xff]
      %v1394 = vld [vmem:[#allocation4 + $0x8] sm:$0xff]
      %v1395 = vld [vmem:[#allocation4 + $0x10] sm:$0xff]
      %v1396 = vld [vmem:[#allocation4 + $0x18] sm:$0xff]
      %v1397 = vld [vmem:[#allocation4 + $0x20] sm:$0xff]
      %v1398 = vld [vmem:[#allocation4 + $0x28] sm:$0xff]
      %v1399 = vld [vmem:[#allocation4 + $0x30] sm:$0xff]
      %v1400 = vld [vmem:[#allocation4 + $0x38] sm:$0xff]
      %v1401 = vld [vmem:[#allocation4 + $0x40] sm:$0xff]
      %v1402 = vld [vmem:[#allocation4 + $0x48] sm:$0xff]
      %v1403 = vld [vmem:[#allocation4 + $0x50] sm:$0xff]
      %v1404 = vld [vmem:[#allocation4 + $0x58] sm:$0xff]
      %v1405 = vld [vmem:[#allocation4 + $0x60] sm:$0xff]
      %v1406 = vld [vmem:[#allocation4 + $0x68] sm:$0xff]
      %v1407 = vld [vmem:[#allocation4 + $0x70] sm:$0xff]
      %v1408 = vld [vmem:[#allocation4 + $0x78] sm:$0xff]
      %v1409 = vld [vmem:[#allocation4 + $0x80] sm:$0xff]
      %v1410 = vld [vmem:[#allocation4 + $0x88] sm:$0xff]
      %v1411 = vld [vmem:[#allocation4 + $0x90] sm:$0xff]
      %v1412 = vld [vmem:[#allocation4 + $0x98] sm:$0xff]
      %v1413 = vld [vmem:[#allocation4 + $0xa0] sm:$0xff]
      %v1414 = vld [vmem:[#allocation4 + $0xa8] sm:$0xff]
      %v1415 = vld [vmem:[#allocation4 + $0xb0] sm:$0xff]
      %v1416 = vld [vmem:[#allocation4 + $0xb8] sm:$0xff]
      %v1417 = vld [vmem:[#allocation4 + $0xc0] sm:$0xff]
      %v1418 = vld [vmem:[#allocation4 + $0xc8] sm:$0xff]
      %v1419 = vld [vmem:[#allocation4 + $0xd0] sm:$0xff]
      %v1420 = vld [vmem:[#allocation4 + $0xd8] sm:$0xff]
      %v1421 = vld [vmem:[#allocation4 + $0xe0] sm:$0xff]
      %v1422 = vld [vmem:[#allocation4 + $0xe8] sm:$0xff]
      %v1423 = vld [vmem:[#allocation4 + $0xf0] sm:$0xff]
      %v1424 = vld [vmem:[#allocation4 + $0xf8] sm:$0xff]
      %s1425 = scalar_lea.vmem %s3, 8
      %v1426 = vld [vmem:[%s1425] sm:$0xf]
      %v1428 = vsel %vm445, %v1393, 0
      %v1431 = vsel %vm445, %v1394, 0
      %v1434 = vsel %vm445, %v1395, 0
      %v1437 = vsel %vm445, %v1396, 0
      %v1440 = vsel %vm445, %v1397, 0
      %v1443 = vsel %vm445, %v1398, 0
      %v1446 = vsel %vm445, %v1399, 0
      %v1449 = vsel %vm445, %v1400, 0
      %v1452 = vsel %vm445, %v1401, 0
      %v1455 = vsel %vm445, %v1402, 0
      %v1458 = vsel %vm445, %v1403, 0
      %v1461 = vsel %vm445, %v1404, 0
      %v1464 = vsel %vm445, %v1405, 0
      %v1467 = vsel %vm445, %v1406, 0
      %v1470 = vsel %vm445, %v1407, 0
      %v1473 = vsel %vm445, %v1408, 0
      %v1476 = vsel %vm445, %v1409, 0
      %v1479 = vsel %vm445, %v1410, 0
      %v1482 = vsel %vm445, %v1411, 0
      %v1485 = vsel %vm445, %v1412, 0
      %v1488 = vsel %vm445, %v1413, 0
      %v1491 = vsel %vm445, %v1414, 0
      %v1494 = vsel %vm445, %v1415, 0
      %v1497 = vsel %vm445, %v1416, 0
      %v1500 = vsel %vm445, %v1417, 0
      %v1503 = vsel %vm445, %v1418, 0
      %v1506 = vsel %vm445, %v1419, 0
      %v1509 = vsel %vm445, %v1420, 0
      %v1512 = vsel %vm445, %v1421, 0
      %v1515 = vsel %vm445, %v1422, 0
      %v1518 = vsel %vm445, %v1423, 0
      %v1521 = vsel %vm445, %v1424, 0
      %v1524 = vsel %vm840, %v1426, 0
      %1526 = vmatprep.subr.mxu0 0.0
      %1527 = vmatpush1.msra.mxu0 %v1524
      %1528 = vmatprep.subr.mxu0 0.0
      %1529 = vmatpush1.msra.mxu0 0.0
      %1530 = vmatprep.subr.mxu0 0.0
      %1531 = vmatpush1.msra.mxu0 0.0
      %1532 = vmatprep.subr.mxu0 0.0
      %1533 = vmatpush1.msra.mxu0 0.0
      %1534 = vmatprep.subr.mxu0 0.0
      %1535 = vmatpush1.msra.mxu0 0.0
      %1536 = vmatprep.subr.mxu0 0.0
      %1537 = vmatpush1.msra.mxu0 0.0
      %1538 = vmatprep.subr.mxu0 0.0
      %1539 = vmatpush1.msra.mxu0 0.0
      %1540 = vmatprep.subr.mxu0 0.0
      %1541 = vmatpush1.msra.mxu0 0.0
      %1542 = vmatprep.subr.mxu0 0.0
      %1543 = vmatpush1.msra.mxu0 0.0
      %1544 = vmatprep.subr.mxu0 0.0
      %1545 = vmatpush1.msra.mxu0 0.0
      %1546 = vmatprep.subr.mxu0 0.0
      %1547 = vmatpush1.msra.mxu0 0.0
      %1548 = vmatprep.subr.mxu0 0.0
      %1549 = vmatpush1.msra.mxu0 0.0
      %1550 = vmatprep.subr.mxu0 0.0
      %1551 = vmatpush1.msra.mxu0 0.0
      %1552 = vmatprep.subr.mxu0 0.0
      %1553 = vmatpush1.msra.mxu0 0.0
      %1554 = vmatprep.subr.mxu0 0.0
      %1555 = vmatpush1.msra.mxu0 0.0
      %1556 = vmatprep.subr.mxu0 0.0
      %1557 = vmatpush1.msra.mxu0 0.0
      %1558 = vmatprep.subr.mxu0 0.0
      %1559 = vmatpush1.msra.mxu0 0.0
      %1560 = vmatprep.subr.mxu0 0.0
      %1561 = vmatpush1.msra.mxu0 0.0
      %1562 = vmatprep.subr.mxu0 0.0
      %1563 = vmatpush1.msra.mxu0 0.0
      %1564 = vmatprep.subr.mxu0 0.0
      %1565 = vmatpush1.msra.mxu0 0.0
      %1566 = vmatprep.subr.mxu0 0.0
      %1567 = vmatpush1.msra.mxu0 0.0
      %1568 = vmatprep.subr.mxu0 0.0
      %1569 = vmatpush1.msra.mxu0 0.0
      %1570 = vmatprep.subr.mxu0 0.0
      %1571 = vmatpush1.msra.mxu0 0.0
      %1572 = vmatprep.subr.mxu0 0.0
      %1573 = vmatpush1.msra.mxu0 0.0
      %1574 = vmatprep.subr.mxu0 0.0
      %1575 = vmatpush1.msra.mxu0 0.0
      %1576 = vmatprep.subr.mxu0 0.0
      %1577 = vmatpush1.msra.mxu0 0.0
      %1578 = vmatprep.subr.mxu0 0.0
      %1579 = vmatpush1.msra.mxu0 0.0
      %1580 = vmatprep.subr.mxu0 0.0
      %1581 = vmatpush1.msra.mxu0 0.0
      %1582 = vmatprep.subr.mxu0 0.0
      %1583 = vmatpush1.msra.mxu0 0.0
      %1584 = vmatprep.subr.mxu0 0.0
      %1585 = vmatpush1.msra.mxu0 0.0
      %1586 = vmatprep.subr.mxu0 0.0
      %1587 = vmatpush1.msra.mxu0 0.0
      %1588 = vmatprep.subr.mxu0 0.0
      %1589 = vmatpush1.msra.mxu0 0.0
      %1590 = vmatprep.mubr.f32.mxu0 0.0
      %1591 = vmatmul.mubr.f32.gmra.mrb[0].mxu0 %v1428
      %v1592 = vpop.f32.mrb[0].mxu0
      %v1593 = vadd.f32 0.0, %v1592
      %v1594 = vpop.f32.mrb[0].mxu0
      %1595 = vmatprep.mubr.f32.mxu0 0.0
      %1596 = vmatmul.mubr.f32.gmra.mrb[0].mxu0 %v1431
      %v1597 = vpop.f32.mrb[0].mxu0
      %v1598 = vadd.f32 0.0, %v1597
      %v1599 = vpop.f32.mrb[0].mxu0
      %1600 = vmatprep.mubr.f32.mxu0 0.0
      %1601 = vmatmul.mubr.f32.gmra.mrb[0].mxu0 %v1434
      %v1602 = vpop.f32.mrb[0].mxu0
      %v1603 = vadd.f32 0.0, %v1602
      %v1604 = vpop.f32.mrb[0].mxu0
      %1605 = vmatprep.mubr.f32.mxu0 0.0
      %1606 = vmatmul.mubr.f32.gmra.mrb[0].mxu0 %v1437
      %v1607 = vpop.f32.mrb[0].mxu0
      %v1608 = vadd.f32 0.0, %v1607
      %v1609 = vpop.f32.mrb[0].mxu0
      %1610 = vmatprep.mubr.f32.mxu0 0.0
      %1611 = vmatmul.mubr.f32.gmra.mrb[0].mxu0 %v1440
      %v1612 = vpop.f32.mrb[0].mxu0
      %v1613 = vadd.f32 0.0, %v1612
      %v1614 = vpop.f32.mrb[0].mxu0
      %1615 = vmatprep.mubr.f32.mxu0 0.0
      %1616 = vmatmul.mubr.f32.gmra.mrb[0].mxu0 %v1443
      %v1617 = vpop.f32.mrb[0].mxu0
      %v1618 = vadd.f32 0.0, %v1617
      %v1619 = vpop.f32.mrb[0].mxu0
      %1620 = vmatprep.mubr.f32.mxu0 0.0
      %1621 = vmatmul.mubr.f32.gmra.mrb[0].mxu0 %v1446
      %v1622 = vpop.f32.mrb[0].mxu0
      %v1623 = vadd.f32 0.0, %v1622
      %v1624 = vpop.f32.mrb[0].mxu0
      %1625 = vmatprep.mubr.f32.mxu0 0.0
      %1626 = vmatmul.mubr.f32.gmra.mrb[0].mxu0 %v1449
      %v1627 = vpop.f32.mrb[0].mxu0
      %v1628 = vadd.f32 0.0, %v1627
      %v1629 = vpop.f32.mrb[0].mxu0
      %1630 = vmatprep.mubr.f32.mxu0 0.0
      %1631 = vmatmul.mubr.f32.gmra.mrb[0].mxu0 %v1452
      %v1632 = vpop.f32.mrb[0].mxu0
      %v1633 = vadd.f32 0.0, %v1632
      %v1634 = vpop.f32.mrb[0].mxu0
      %1635 = vmatprep.mubr.f32.mxu0 0.0
      %1636 = vmatmul.mubr.f32.gmra.mrb[0].mxu0 %v1455
      %v1637 = vpop.f32.mrb[0].mxu0
      %v1638 = vadd.f32 0.0, %v1637
      %v1639 = vpop.f32.mrb[0].mxu0
      %1640 = vmatprep.mubr.f32.mxu0 0.0
      %1641 = vmatmul.mubr.f32.gmra.mrb[0].mxu0 %v1458
      %v1642 = vpop.f32.mrb[0].mxu0
      %v1643 = vadd.f32 0.0, %v1642
      %v1644 = vpop.f32.mrb[0].mxu0
      %1645 = vmatprep.mubr.f32.mxu0 0.0
      %1646 = vmatmul.mubr.f32.gmra.mrb[0].mxu0 %v1461
      %v1647 = vpop.f32.mrb[0].mxu0
      %v1648 = vadd.f32 0.0, %v1647
      %v1649 = vpop.f32.mrb[0].mxu0
      %1650 = vmatprep.mubr.f32.mxu0 0.0
      %1651 = vmatmul.mubr.f32.gmra.mrb[0].mxu0 %v1464
      %v1652 = vpop.f32.mrb[0].mxu0
      %v1653 = vadd.f32 0.0, %v1652
      %v1654 = vpop.f32.mrb[0].mxu0
      %1655 = vmatprep.mubr.f32.mxu0 0.0
      %1656 = vmatmul.mubr.f32.gmra.mrb[0].mxu0 %v1467
      %v1657 = vpop.f32.mrb[0].mxu0
      %v1658 = vadd.f32 0.0, %v1657
      %v1659 = vpop.f32.mrb[0].mxu0
      %1660 = vmatprep.mubr.f32.mxu0 0.0
      %1661 = vmatmul.mubr.f32.gmra.mrb[0].mxu0 %v1470
      %v1662 = vpop.f32.mrb[0].mxu0
      %v1663 = vadd.f32 0.0, %v1662
      %v1664 = vpop.f32.mrb[0].mxu0
      %1665 = vmatprep.mubr.f32.mxu0 0.0
      %1666 = vmatmul.mubr.f32.gmra.mrb[0].mxu0 %v1473
      %v1667 = vpop.f32.mrb[0].mxu0
      %v1668 = vadd.f32 0.0, %v1667
      %v1669 = vpop.f32.mrb[0].mxu0
      %1670 = vmatprep.mubr.f32.mxu0 0.0
      %1671 = vmatmul.mubr.f32.gmra.mrb[0].mxu0 %v1476
      %v1672 = vpop.f32.mrb[0].mxu0
      %v1673 = vadd.f32 0.0, %v1672
      %v1674 = vpop.f32.mrb[0].mxu0
      %1675 = vmatprep.mubr.f32.mxu0 0.0
      %1676 = vmatmul.mubr.f32.gmra.mrb[0].mxu0 %v1479
      %v1677 = vpop.f32.mrb[0].mxu0
      %v1678 = vadd.f32 0.0, %v1677
      %v1679 = vpop.f32.mrb[0].mxu0
      %1680 = vmatprep.mubr.f32.mxu0 0.0
      %1681 = vmatmul.mubr.f32.gmra.mrb[0].mxu0 %v1482
      %v1682 = vpop.f32.mrb[0].mxu0
      %v1683 = vadd.f32 0.0, %v1682
      %v1684 = vpop.f32.mrb[0].mxu0
      %1685 = vmatprep.mubr.f32.mxu0 0.0
      %1686 = vmatmul.mubr.f32.gmra.mrb[0].mxu0 %v1485
      %v1687 = vpop.f32.mrb[0].mxu0
      %v1688 = vadd.f32 0.0, %v1687
      %v1689 = vpop.f32.mrb[0].mxu0
      %1690 = vmatprep.mubr.f32.mxu0 0.0
      %1691 = vmatmul.mubr.f32.gmra.mrb[0].mxu0 %v1488
      %v1692 = vpop.f32.mrb[0].mxu0
      %v1693 = vadd.f32 0.0, %v1692
      %v1694 = vpop.f32.mrb[0].mxu0
      %1695 = vmatprep.mubr.f32.mxu0 0.0
      %1696 = vmatmul.mubr.f32.gmra.mrb[0].mxu0 %v1491
      %v1697 = vpop.f32.mrb[0].mxu0
      %v1698 = vadd.f32 0.0, %v1697
      %v1699 = vpop.f32.mrb[0].mxu0
      %1700 = vmatprep.mubr.f32.mxu0 0.0
      %1701 = vmatmul.mubr.f32.gmra.mrb[0].mxu0 %v1494
      %v1702 = vpop.f32.mrb[0].mxu0
      %v1703 = vadd.f32 0.0, %v1702
      %v1704 = vpop.f32.mrb[0].mxu0
      %1705 = vmatprep.mubr.f32.mxu0 0.0
      %1706 = vmatmul.mubr.f32.gmra.mrb[0].mxu0 %v1497
      %v1707 = vpop.f32.mrb[0].mxu0
      %v1708 = vadd.f32 0.0, %v1707
      %v1709 = vpop.f32.mrb[0].mxu0
      %1710 = vmatprep.mubr.f32.mxu0 0.0
      %1711 = vmatmul.mubr.f32.gmra.mrb[0].mxu0 %v1500
      %v1712 = vpop.f32.mrb[0].mxu0
      %v1713 = vadd.f32 0.0, %v1712
      %v1714 = vpop.f32.mrb[0].mxu0
      %1715 = vmatprep.mubr.f32.mxu0 0.0
      %1716 = vmatmul.mubr.f32.gmra.mrb[0].mxu0 %v1503
      %v1717 = vpop.f32.mrb[0].mxu0
      %v1718 = vadd.f32 0.0, %v1717
      %v1719 = vpop.f32.mrb[0].mxu0
      %1720 = vmatprep.mubr.f32.mxu0 0.0
      %1721 = vmatmul.mubr.f32.gmra.mrb[0].mxu0 %v1506
      %v1722 = vpop.f32.mrb[0].mxu0
      %v1723 = vadd.f32 0.0, %v1722
      %v1724 = vpop.f32.mrb[0].mxu0
      %1725 = vmatprep.mubr.f32.mxu0 0.0
      %1726 = vmatmul.mubr.f32.gmra.mrb[0].mxu0 %v1509
      %v1727 = vpop.f32.mrb[0].mxu0
      %v1728 = vadd.f32 0.0, %v1727
      %v1729 = vpop.f32.mrb[0].mxu0
      %1730 = vmatprep.mubr.f32.mxu0 0.0
      %1731 = vmatmul.mubr.f32.gmra.mrb[0].mxu0 %v1512
      %v1732 = vpop.f32.mrb[0].mxu0
      %v1733 = vadd.f32 0.0, %v1732
      %v1734 = vpop.f32.mrb[0].mxu0
      %1735 = vmatprep.mubr.f32.mxu0 0.0
      %1736 = vmatmul.mubr.f32.gmra.mrb[0].mxu0 %v1515
      %v1737 = vpop.f32.mrb[0].mxu0
      %v1738 = vadd.f32 0.0, %v1737
      %v1739 = vpop.f32.mrb[0].mxu0
      %1740 = vmatprep.mubr.f32.mxu0 0.0
      %1741 = vmatmul.mubr.f32.gmra.mrb[0].mxu0 %v1518
      %v1742 = vpop.f32.mrb[0].mxu0
      %v1743 = vadd.f32 0.0, %v1742
      %v1744 = vpop.f32.mrb[0].mxu0
      %1745 = vmatprep.mubr.f32.mxu0 0.0
      %1746 = vmatmul.mubr.f32.gmra.mrb[0].mxu0 %v1521
      %v1747 = vpop.f32.mrb[0].mxu0
      %v1748 = vadd.f32 0.0, %v1747
      %v1749 = vpop.f32.mrb[0].mxu0
      %1750 = vdwg.mxu0
      %v1751 = vadd.f32 %v1235, %v1593
      %v1752 = vadd.f32 %v1240, %v1598
      %v1753 = vadd.f32 %v1245, %v1603
      %v1754 = vadd.f32 %v1250, %v1608
      %v1755 = vadd.f32 %v1255, %v1613
      %v1756 = vadd.f32 %v1260, %v1618
      %v1757 = vadd.f32 %v1265, %v1623
      %v1758 = vadd.f32 %v1270, %v1628
      %v1759 = vadd.f32 %v1275, %v1633
      %v1760 = vadd.f32 %v1280, %v1638
      %v1761 = vadd.f32 %v1285, %v1643
      %v1762 = vadd.f32 %v1290, %v1648
      %v1763 = vadd.f32 %v1295, %v1653
      %v1764 = vadd.f32 %v1300, %v1658
      %v1765 = vadd.f32 %v1305, %v1663
      %v1766 = vadd.f32 %v1310, %v1668
      %v1767 = vadd.f32 %v1315, %v1673
      %v1768 = vadd.f32 %v1320, %v1678
      %v1769 = vadd.f32 %v1325, %v1683
      %v1770 = vadd.f32 %v1330, %v1688
      %v1771 = vadd.f32 %v1335, %v1693
      %v1772 = vadd.f32 %v1340, %v1698
      %v1773 = vadd.f32 %v1345, %v1703
      %v1774 = vadd.f32 %v1350, %v1708
      %v1775 = vadd.f32 %v1355, %v1713
      %v1776 = vadd.f32 %v1360, %v1718
      %v1777 = vadd.f32 %v1365, %v1723
      %v1778 = vadd.f32 %v1370, %v1728
      %v1779 = vadd.f32 %v1375, %v1733
      %v1780 = vadd.f32 %v1380, %v1738
      %v1781 = vadd.f32 %v1385, %v1743
      %v1782 = vadd.f32 %v1390, %v1748
      %s1783 = scalar_lea.vmem [#allocation3], 16
      %v1784 = vld [vmem:[%s1783] sm:$0xff]
      %v1785 = vld [vmem:[%s1783 + $0x8] sm:$0xff]
      %v1786 = vld [vmem:[%s1783 + $0x10] sm:$0xff]
      %v1787 = vld [vmem:[%s1783 + $0x18] sm:$0xff]
      %v1788 = vld [vmem:[%s1783 + $0x20] sm:$0xff]
      %v1789 = vld [vmem:[%s1783 + $0x28] sm:$0xff]
      %v1790 = vld [vmem:[%s1783 + $0x30] sm:$0xff]
      %v1791 = vld [vmem:[%s1783 + $0x38] sm:$0xff]
      %v1792 = vld [vmem:[%s1783 + $0x40] sm:$0xff]
      %v1793 = vld [vmem:[%s1783 + $0x48] sm:$0xff]
      %v1794 = vld [vmem:[%s1783 + $0x50] sm:$0xff]
      %v1795 = vld [vmem:[%s1783 + $0x58] sm:$0xff]
      %v1796 = vld [vmem:[%s1783 + $0x60] sm:$0xff]
      %v1797 = vld [vmem:[%s1783 + $0x68] sm:$0xff]
      %v1798 = vld [vmem:[%s1783 + $0x70] sm:$0xff]
      %v1799 = vld [vmem:[%s1783 + $0x78] sm:$0xff]
      %v1800 = vld [vmem:[%s1783 + $0x80] sm:$0xff]
      %v1801 = vld [vmem:[%s1783 + $0x88] sm:$0xff]
      %v1802 = vld [vmem:[%s1783 + $0x90] sm:$0xff]
      %v1803 = vld [vmem:[%s1783 + $0x98] sm:$0xff]
      %v1804 = vld [vmem:[%s1783 + $0xa0] sm:$0xff]
      %v1805 = vld [vmem:[%s1783 + $0xa8] sm:$0xff]
      %v1806 = vld [vmem:[%s1783 + $0xb0] sm:$0xff]
      %v1807 = vld [vmem:[%s1783 + $0xb8] sm:$0xff]
      %v1808 = vld [vmem:[%s1783 + $0xc0] sm:$0xff]
      %v1809 = vld [vmem:[%s1783 + $0xc8] sm:$0xff]
      %v1810 = vld [vmem:[%s1783 + $0xd0] sm:$0xff]
      %v1811 = vld [vmem:[%s1783 + $0xd8] sm:$0xff]
      %v1812 = vld [vmem:[%s1783 + $0xe0] sm:$0xff]
      %v1813 = vld [vmem:[%s1783 + $0xe8] sm:$0xff]
      %v1814 = vld [vmem:[%s1783 + $0xf0] sm:$0xff]
      %v1815 = vld [vmem:[%s1783 + $0xf8] sm:$0xff]
      %s1816 = scalar_lea.vmem %s3, 12
      %v1817 = vld [vmem:[%s1816] sm:$0xf]
      %v1819 = vsel %vm445, %v1784, 0
      %v1822 = vsel %vm445, %v1785, 0
      %v1825 = vsel %vm445, %v1786, 0
      %v1828 = vsel %vm445, %v1787, 0
      %v1831 = vsel %vm445, %v1788, 0
      %v1834 = vsel %vm445, %v1789, 0
      %v1837 = vsel %vm445, %v1790, 0
      %v1840 = vsel %vm445, %v1791, 0
      %v1843 = vsel %vm445, %v1792, 0
      %v1846 = vsel %vm445, %v1793, 0
      %v1849 = vsel %vm445, %v1794, 0
      %v1852 = vsel %vm445, %v1795, 0
      %v1855 = vsel %vm445, %v1796, 0
      %v1858 = vsel %vm445, %v1797, 0
      %v1861 = vsel %vm445, %v1798, 0
      %v1864 = vsel %vm445, %v1799, 0
      %v1867 = vsel %vm445, %v1800, 0
      %v1870 = vsel %vm445, %v1801, 0
      %v1873 = vsel %vm445, %v1802, 0
      %v1876 = vsel %vm445, %v1803, 0
      %v1879 = vsel %vm445, %v1804, 0
      %v1882 = vsel %vm445, %v1805, 0
      %v1885 = vsel %vm445, %v1806, 0
      %v1888 = vsel %vm445, %v1807, 0
      %v1891 = vsel %vm445, %v1808, 0
      %v1894 = vsel %vm445, %v1809, 0
      %v1897 = vsel %vm445, %v1810, 0
      %v1900 = vsel %vm445, %v1811, 0
      %v1903 = vsel %vm445, %v1812, 0
      %v1906 = vsel %vm445, %v1813, 0
      %v1909 = vsel %vm445, %v1814, 0
      %v1912 = vsel %vm445, %v1815, 0
      %v1915 = vsel %vm840, %v1817, 0
      %1917 = vmatprep.subr.mxu0 0.0
      %1918 = vmatpush1.msra.mxu0 %v1915
      %1919 = vmatprep.subr.mxu0 0.0
      %1920 = vmatpush1.msra.mxu0 0.0
      %1921 = vmatprep.subr.mxu0 0.0
      %1922 = vmatpush1.msra.mxu0 0.0
      %1923 = vmatprep.subr.mxu0 0.0
      %1924 = vmatpush1.msra.mxu0 0.0
      %1925 = vmatprep.subr.mxu0 0.0
      %1926 = vmatpush1.msra.mxu0 0.0
      %1927 = vmatprep.subr.mxu0 0.0
      %1928 = vmatpush1.msra.mxu0 0.0
      %1929 = vmatprep.subr.mxu0 0.0
      %1930 = vmatpush1.msra.mxu0 0.0
      %1931 = vmatprep.subr.mxu0 0.0
      %1932 = vmatpush1.msra.mxu0 0.0
      %1933 = vmatprep.subr.mxu0 0.0
      %1934 = vmatpush1.msra.mxu0 0.0
      %1935 = vmatprep.subr.mxu0 0.0
      %1936 = vmatpush1.msra.mxu0 0.0
      %1937 = vmatprep.subr.mxu0 0.0
      %1938 = vmatpush1.msra.mxu0 0.0
      %1939 = vmatprep.subr.mxu0 0.0
      %1940 = vmatpush1.msra.mxu0 0.0
      %1941 = vmatprep.subr.mxu0 0.0
      %1942 = vmatpush1.msra.mxu0 0.0
      %1943 = vmatprep.subr.mxu0 0.0
      %1944 = vmatpush1.msra.mxu0 0.0
      %1945 = vmatprep.subr.mxu0 0.0
      %1946 = vmatpush1.msra.mxu0 0.0
      %1947 = vmatprep.subr.mxu0 0.0
      %1948 = vmatpush1.msra.mxu0 0.0
      %1949 = vmatprep.subr.mxu0 0.0
      %1950 = vmatpush1.msra.mxu0 0.0
      %1951 = vmatprep.subr.mxu0 0.0
      %1952 = vmatpush1.msra.mxu0 0.0
      %1953 = vmatprep.subr.mxu0 0.0
      %1954 = vmatpush1.msra.mxu0 0.0
      %1955 = vmatprep.subr.mxu0 0.0
      %1956 = vmatpush1.msra.mxu0 0.0
      %1957 = vmatprep.subr.mxu0 0.0
      %1958 = vmatpush1.msra.mxu0 0.0
      %1959 = vmatprep.subr.mxu0 0.0
      %1960 = vmatpush1.msra.mxu0 0.0
      %1961 = vmatprep.subr.mxu0 0.0
      %1962 = vmatpush1.msra.mxu0 0.0
      %1963 = vmatprep.subr.mxu0 0.0
      %1964 = vmatpush1.msra.mxu0 0.0
      %1965 = vmatprep.subr.mxu0 0.0
      %1966 = vmatpush1.msra.mxu0 0.0
      %1967 = vmatprep.subr.mxu0 0.0
      %1968 = vmatpush1.msra.mxu0 0.0
      %1969 = vmatprep.subr.mxu0 0.0
      %1970 = vmatpush1.msra.mxu0 0.0
      %1971 = vmatprep.subr.mxu0 0.0
      %1972 = vmatpush1.msra.mxu0 0.0
      %1973 = vmatprep.subr.mxu0 0.0
      %1974 = vmatpush1.msra.mxu0 0.0
      %1975 = vmatprep.subr.mxu0 0.0
      %1976 = vmatpush1.msra.mxu0 0.0
      %1977 = vmatprep.subr.mxu0 0.0
      %1978 = vmatpush1.msra.mxu0 0.0
      %1979 = vmatprep.subr.mxu0 0.0
      %1980 = vmatpush1.msra.mxu0 0.0
      %1981 = vmatprep.mubr.f32.mxu0 0.0
      %1982 = vmatmul.mubr.f32.gmra.mrb[0].mxu0 %v1819
      %v1983 = vpop.f32.mrb[0].mxu0
      %v1984 = vadd.f32 0.0, %v1983
      %v1985 = vpop.f32.mrb[0].mxu0
      %1986 = vmatprep.mubr.f32.mxu0 0.0
      %1987 = vmatmul.mubr.f32.gmra.mrb[0].mxu0 %v1822
      %v1988 = vpop.f32.mrb[0].mxu0
      %v1989 = vadd.f32 0.0, %v1988
      %v1990 = vpop.f32.mrb[0].mxu0
      %1991 = vmatprep.mubr.f32.mxu0 0.0
      %1992 = vmatmul.mubr.f32.gmra.mrb[0].mxu0 %v1825
      %v1993 = vpop.f32.mrb[0].mxu0
      %v1994 = vadd.f32 0.0, %v1993
      %v1995 = vpop.f32.mrb[0].mxu0
      %1996 = vmatprep.mubr.f32.mxu0 0.0
      %1997 = vmatmul.mubr.f32.gmra.mrb[0].mxu0 %v1828
      %v1998 = vpop.f32.mrb[0].mxu0
      %v1999 = vadd.f32 0.0, %v1998
      %v2000 = vpop.f32.mrb[0].mxu0
      %2001 = vmatprep.mubr.f32.mxu0 0.0
      %2002 = vmatmul.mubr.f32.gmra.mrb[0].mxu0 %v1831
      %v2003 = vpop.f32.mrb[0].mxu0
      %v2004 = vadd.f32 0.0, %v2003
      %v2005 = vpop.f32.mrb[0].mxu0
      %2006 = vmatprep.mubr.f32.mxu0 0.0
      %2007 = vmatmul.mubr.f32.gmra.mrb[0].mxu0 %v1834
      %v2008 = vpop.f32.mrb[0].mxu0
      %v2009 = vadd.f32 0.0, %v2008
      %v2010 = vpop.f32.mrb[0].mxu0
      %2011 = vmatprep.mubr.f32.mxu0 0.0
      %2012 = vmatmul.mubr.f32.gmra.mrb[0].mxu0 %v1837
      %v2013 = vpop.f32.mrb[0].mxu0
      %v2014 = vadd.f32 0.0, %v2013
      %v2015 = vpop.f32.mrb[0].mxu0
      %2016 = vmatprep.mubr.f32.mxu0 0.0
      %2017 = vmatmul.mubr.f32.gmra.mrb[0].mxu0 %v1840
      %v2018 = vpop.f32.mrb[0].mxu0
      %v2019 = vadd.f32 0.0, %v2018
      %v2020 = vpop.f32.mrb[0].mxu0
      %2021 = vmatprep.mubr.f32.mxu0 0.0
      %2022 = vmatmul.mubr.f32.gmra.mrb[0].mxu0 %v1843
      %v2023 = vpop.f32.mrb[0].mxu0
      %v2024 = vadd.f32 0.0, %v2023
      %v2025 = vpop.f32.mrb[0].mxu0
      %2026 = vmatprep.mubr.f32.mxu0 0.0
      %2027 = vmatmul.mubr.f32.gmra.mrb[0].mxu0 %v1846
      %v2028 = vpop.f32.mrb[0].mxu0
      %v2029 = vadd.f32 0.0, %v2028
      %v2030 = vpop.f32.mrb[0].mxu0
      %2031 = vmatprep.mubr.f32.mxu0 0.0
      %2032 = vmatmul.mubr.f32.gmra.mrb[0].mxu0 %v1849
      %v2033 = vpop.f32.mrb[0].mxu0
      %v2034 = vadd.f32 0.0, %v2033
      %v2035 = vpop.f32.mrb[0].mxu0
      %2036 = vmatprep.mubr.f32.mxu0 0.0
      %2037 = vmatmul.mubr.f32.gmra.mrb[0].mxu0 %v1852
      %v2038 = vpop.f32.mrb[0].mxu0
      %v2039 = vadd.f32 0.0, %v2038
      %v2040 = vpop.f32.mrb[0].mxu0
      %2041 = vmatprep.mubr.f32.mxu0 0.0
      %2042 = vmatmul.mubr.f32.gmra.mrb[0].mxu0 %v1855
      %v2043 = vpop.f32.mrb[0].mxu0
      %v2044 = vadd.f32 0.0, %v2043
      %v2045 = vpop.f32.mrb[0].mxu0
      %2046 = vmatprep.mubr.f32.mxu0 0.0
      %2047 = vmatmul.mubr.f32.gmra.mrb[0].mxu0 %v1858
      %v2048 = vpop.f32.mrb[0].mxu0
      %v2049 = vadd.f32 0.0, %v2048
      %v2050 = vpop.f32.mrb[0].mxu0
      %2051 = vmatprep.mubr.f32.mxu0 0.0
      %2052 = vmatmul.mubr.f32.gmra.mrb[0].mxu0 %v1861
      %v2053 = vpop.f32.mrb[0].mxu0
      %v2054 = vadd.f32 0.0, %v2053
      %v2055 = vpop.f32.mrb[0].mxu0
      %2056 = vmatprep.mubr.f32.mxu0 0.0
      %2057 = vmatmul.mubr.f32.gmra.mrb[0].mxu0 %v1864
      %v2058 = vpop.f32.mrb[0].mxu0
      %v2059 = vadd.f32 0.0, %v2058
      %v2060 = vpop.f32.mrb[0].mxu0
      %2061 = vmatprep.mubr.f32.mxu0 0.0
      %2062 = vmatmul.mubr.f32.gmra.mrb[0].mxu0 %v1867
      %v2063 = vpop.f32.mrb[0].mxu0
      %v2064 = vadd.f32 0.0, %v2063
      %v2065 = vpop.f32.mrb[0].mxu0
      %2066 = vmatprep.mubr.f32.mxu0 0.0
      %2067 = vmatmul.mubr.f32.gmra.mrb[0].mxu0 %v1870
      %v2068 = vpop.f32.mrb[0].mxu0
      %v2069 = vadd.f32 0.0, %v2068
      %v2070 = vpop.f32.mrb[0].mxu0
      %2071 = vmatprep.mubr.f32.mxu0 0.0
      %2072 = vmatmul.mubr.f32.gmra.mrb[0].mxu0 %v1873
      %v2073 = vpop.f32.mrb[0].mxu0
      %v2074 = vadd.f32 0.0, %v2073
      %v2075 = vpop.f32.mrb[0].mxu0
      %2076 = vmatprep.mubr.f32.mxu0 0.0
      %2077 = vmatmul.mubr.f32.gmra.mrb[0].mxu0 %v1876
      %v2078 = vpop.f32.mrb[0].mxu0
      %v2079 = vadd.f32 0.0, %v2078
      %v2080 = vpop.f32.mrb[0].mxu0
      %2081 = vmatprep.mubr.f32.mxu0 0.0
      %2082 = vmatmul.mubr.f32.gmra.mrb[0].mxu0 %v1879
      %v2083 = vpop.f32.mrb[0].mxu0
      %v2084 = vadd.f32 0.0, %v2083
      %v2085 = vpop.f32.mrb[0].mxu0
      %2086 = vmatprep.mubr.f32.mxu0 0.0
      %2087 = vmatmul.mubr.f32.gmra.mrb[0].mxu0 %v1882
      %v2088 = vpop.f32.mrb[0].mxu0
      %v2089 = vadd.f32 0.0, %v2088
      %v2090 = vpop.f32.mrb[0].mxu0
      %2091 = vmatprep.mubr.f32.mxu0 0.0
      %2092 = vmatmul.mubr.f32.gmra.mrb[0].mxu0 %v1885
      %v2093 = vpop.f32.mrb[0].mxu0
      %v2094 = vadd.f32 0.0, %v2093
      %v2095 = vpop.f32.mrb[0].mxu0
      %2096 = vmatprep.mubr.f32.mxu0 0.0
      %2097 = vmatmul.mubr.f32.gmra.mrb[0].mxu0 %v1888
      %v2098 = vpop.f32.mrb[0].mxu0
      %v2099 = vadd.f32 0.0, %v2098
      %v2100 = vpop.f32.mrb[0].mxu0
      %2101 = vmatprep.mubr.f32.mxu0 0.0
      %2102 = vmatmul.mubr.f32.gmra.mrb[0].mxu0 %v1891
      %v2103 = vpop.f32.mrb[0].mxu0
      %v2104 = vadd.f32 0.0, %v2103
      %v2105 = vpop.f32.mrb[0].mxu0
      %2106 = vmatprep.mubr.f32.mxu0 0.0
      %2107 = vmatmul.mubr.f32.gmra.mrb[0].mxu0 %v1894
      %v2108 = vpop.f32.mrb[0].mxu0
      %v2109 = vadd.f32 0.0, %v2108
      %v2110 = vpop.f32.mrb[0].mxu0
      %2111 = vmatprep.mubr.f32.mxu0 0.0
      %2112 = vmatmul.mubr.f32.gmra.mrb[0].mxu0 %v1897
      %v2113 = vpop.f32.mrb[0].mxu0
      %v2114 = vadd.f32 0.0, %v2113
      %v2115 = vpop.f32.mrb[0].mxu0
      %2116 = vmatprep.mubr.f32.mxu0 0.0
      %2117 = vmatmul.mubr.f32.gmra.mrb[0].mxu0 %v1900
      %v2118 = vpop.f32.mrb[0].mxu0
      %v2119 = vadd.f32 0.0, %v2118
      %v2120 = vpop.f32.mrb[0].mxu0
      %2121 = vmatprep.mubr.f32.mxu0 0.0
      %2122 = vmatmul.mubr.f32.gmra.mrb[0].mxu0 %v1903
      %v2123 = vpop.f32.mrb[0].mxu0
      %v2124 = vadd.f32 0.0, %v2123
      %v2125 = vpop.f32.mrb[0].mxu0
      %2126 = vmatprep.mubr.f32.mxu0 0.0
      %2127 = vmatmul.mubr.f32.gmra.mrb[0].mxu0 %v1906
      %v2128 = vpop.f32.mrb[0].mxu0
      %v2129 = vadd.f32 0.0, %v2128
      %v2130 = vpop.f32.mrb[0].mxu0
      %2131 = vmatprep.mubr.f32.mxu0 0.0
      %2132 = vmatmul.mubr.f32.gmra.mrb[0].mxu0 %v1909
      %v2133 = vpop.f32.mrb[0].mxu0
      %v2134 = vadd.f32 0.0, %v2133
      %v2135 = vpop.f32.mrb[0].mxu0
      %2136 = vmatprep.mubr.f32.mxu0 0.0
      %2137 = vmatmul.mubr.f32.gmra.mrb[0].mxu0 %v1912
      %v2138 = vpop.f32.mrb[0].mxu0
      %v2139 = vadd.f32 0.0, %v2138
      %v2140 = vpop.f32.mrb[0].mxu0
      %2141 = vdwg.mxu0
      %v2142 = vadd.f32 %v1751, %v1984
      %v2143 = vadd.f32 %v1752, %v1989
      %v2144 = vadd.f32 %v1753, %v1994
      %v2145 = vadd.f32 %v1754, %v1999
      %v2146 = vadd.f32 %v1755, %v2004
      %v2147 = vadd.f32 %v1756, %v2009
      %v2148 = vadd.f32 %v1757, %v2014
      %v2149 = vadd.f32 %v1758, %v2019
      %v2150 = vadd.f32 %v1759, %v2024
      %v2151 = vadd.f32 %v1760, %v2029
      %v2152 = vadd.f32 %v1761, %v2034
      %v2153 = vadd.f32 %v1762, %v2039
      %v2154 = vadd.f32 %v1763, %v2044
      %v2155 = vadd.f32 %v1764, %v2049
      %v2156 = vadd.f32 %v1765, %v2054
      %v2157 = vadd.f32 %v1766, %v2059
      %v2158 = vadd.f32 %v1767, %v2064
      %v2159 = vadd.f32 %v1768, %v2069
      %v2160 = vadd.f32 %v1769, %v2074
      %v2161 = vadd.f32 %v1770, %v2079
      %v2162 = vadd.f32 %v1771, %v2084
      %v2163 = vadd.f32 %v1772, %v2089
      %v2164 = vadd.f32 %v1773, %v2094
      %v2165 = vadd.f32 %v1774, %v2099
      %v2166 = vadd.f32 %v1775, %v2104
      %v2167 = vadd.f32 %v1776, %v2109
      %v2168 = vadd.f32 %v1777, %v2114
      %v2169 = vadd.f32 %v1778, %v2119
      %v2170 = vadd.f32 %v1779, %v2124
      %v2171 = vadd.f32 %v1780, %v2129
      %v2172 = vadd.f32 %v1781, %v2134
      %v2173 = vadd.f32 %v1782, %v2139
      %v2174 = vld [vmem:[%s444] sm:$0xff]
      %v2175 = vld [vmem:[%s444 + $0x8] sm:$0xff]
      %v2176 = vld [vmem:[%s444 + $0x10] sm:$0xff]
      %v2177 = vld [vmem:[%s444 + $0x18] sm:$0xff]
      %v2178 = vld [vmem:[%s444 + $0x20] sm:$0xff]
      %v2179 = vld [vmem:[%s444 + $0x28] sm:$0xff]
      %v2180 = vld [vmem:[%s444 + $0x30] sm:$0xff]
      %v2181 = vld [vmem:[%s444 + $0x38] sm:$0xff]
      %v2182 = vld [vmem:[%s444 + $0x40] sm:$0xff]
      %v2183 = vld [vmem:[%s444 + $0x48] sm:$0xff]
      %v2184 = vld [vmem:[%s444 + $0x50] sm:$0xff]
      %v2185 = vld [vmem:[%s444 + $0x58] sm:$0xff]
      %v2186 = vld [vmem:[%s444 + $0x60] sm:$0xff]
      %v2187 = vld [vmem:[%s444 + $0x68] sm:$0xff]
      %v2188 = vld [vmem:[%s444 + $0x70] sm:$0xff]
      %v2189 = vld [vmem:[%s444 + $0x78] sm:$0xff]
      %v2190 = vld [vmem:[%s444 + $0x80] sm:$0xff]
      %v2191 = vld [vmem:[%s444 + $0x88] sm:$0xff]
      %v2192 = vld [vmem:[%s444 + $0x90] sm:$0xff]
      %v2193 = vld [vmem:[%s444 + $0x98] sm:$0xff]
      %v2194 = vld [vmem:[%s444 + $0xa0] sm:$0xff]
      %v2195 = vld [vmem:[%s444 + $0xa8] sm:$0xff]
      %v2196 = vld [vmem:[%s444 + $0xb0] sm:$0xff]
      %v2197 = vld [vmem:[%s444 + $0xb8] sm:$0xff]
      %v2198 = vld [vmem:[%s444 + $0xc0] sm:$0xff]
      %v2199 = vld [vmem:[%s444 + $0xc8] sm:$0xff]
      %v2200 = vld [vmem:[%s444 + $0xd0] sm:$0xff]
      %v2201 = vld [vmem:[%s444 + $0xd8] sm:$0xff]
      %v2202 = vld [vmem:[%s444 + $0xe0] sm:$0xff]
      %v2203 = vld [vmem:[%s444 + $0xe8] sm:$0xff]
      %v2204 = vld [vmem:[%s444 + $0xf0] sm:$0xff]
      %v2205 = vld [vmem:[%s444 + $0xf8] sm:$0xff]
      %s2206 = scalar_lea.vmem %s3, 16
      %v2207 = vld [vmem:[%s2206] sm:$0xf]
      %v2209 = vsel %vm445, %v2174, 0
      %v2212 = vsel %vm445, %v2175, 0
      %v2215 = vsel %vm445, %v2176, 0
      %v2218 = vsel %vm445, %v2177, 0
      %v2221 = vsel %vm445, %v2178, 0
      %v2224 = vsel %vm445, %v2179, 0
      %v2227 = vsel %vm445, %v2180, 0
      %v2230 = vsel %vm445, %v2181, 0
      %v2233 = vsel %vm445, %v2182, 0
      %v2236 = vsel %vm445, %v2183, 0
      %v2239 = vsel %vm445, %v2184, 0
      %v2242 = vsel %vm445, %v2185, 0
      %v2245 = vsel %vm445, %v2186, 0
      %v2248 = vsel %vm445, %v2187, 0
      %v2251 = vsel %vm445, %v2188, 0
      %v2254 = vsel %vm445, %v2189, 0
      %v2257 = vsel %vm445, %v2190, 0
      %v2260 = vsel %vm445, %v2191, 0
      %v2263 = vsel %vm445, %v2192, 0
      %v2266 = vsel %vm445, %v2193, 0
      %v2269 = vsel %vm445, %v2194, 0
      %v2272 = vsel %vm445, %v2195, 0
      %v2275 = vsel %vm445, %v2196, 0
      %v2278 = vsel %vm445, %v2197, 0
      %v2281 = vsel %vm445, %v2198, 0
      %v2284 = vsel %vm445, %v2199, 0
      %v2287 = vsel %vm445, %v2200, 0
      %v2290 = vsel %vm445, %v2201, 0
      %v2293 = vsel %vm445, %v2202, 0
      %v2296 = vsel %vm445, %v2203, 0
      %v2299 = vsel %vm445, %v2204, 0
      %v2302 = vsel %vm445, %v2205, 0
      %v2305 = vsel %vm840, %v2207, 0
      %2307 = vmatprep.subr.mxu0 0.0
      %2308 = vmatpush1.msra.mxu0 %v2305
      %2309 = vmatprep.subr.mxu0 0.0
      %2310 = vmatpush1.msra.mxu0 0.0
      %2311 = vmatprep.subr.mxu0 0.0
      %2312 = vmatpush1.msra.mxu0 0.0
      %2313 = vmatprep.subr.mxu0 0.0
      %2314 = vmatpush1.msra.mxu0 0.0
      %2315 = vmatprep.subr.mxu0 0.0
      %2316 = vmatpush1.msra.mxu0 0.0
      %2317 = vmatprep.subr.mxu0 0.0
      %2318 = vmatpush1.msra.mxu0 0.0
      %2319 = vmatprep.subr.mxu0 0.0
      %2320 = vmatpush1.msra.mxu0 0.0
      %2321 = vmatprep.subr.mxu0 0.0
      %2322 = vmatpush1.msra.mxu0 0.0
      %2323 = vmatprep.subr.mxu0 0.0
      %2324 = vmatpush1.msra.mxu0 0.0
      %2325 = vmatprep.subr.mxu0 0.0
      %2326 = vmatpush1.msra.mxu0 0.0
      %2327 = vmatprep.subr.mxu0 0.0
      %2328 = vmatpush1.msra.mxu0 0.0
      %2329 = vmatprep.subr.mxu0 0.0
      %2330 = vmatpush1.msra.mxu0 0.0
      %2331 = vmatprep.subr.mxu0 0.0
      %2332 = vmatpush1.msra.mxu0 0.0
      %2333 = vmatprep.subr.mxu0 0.0
      %2334 = vmatpush1.msra.mxu0 0.0
      %2335 = vmatprep.subr.mxu0 0.0
      %2336 = vmatpush1.msra.mxu0 0.0
      %2337 = vmatprep.subr.mxu0 0.0
      %2338 = vmatpush1.msra.mxu0 0.0
      %2339 = vmatprep.subr.mxu0 0.0
      %2340 = vmatpush1.msra.mxu0 0.0
      %2341 = vmatprep.subr.mxu0 0.0
      %2342 = vmatpush1.msra.mxu0 0.0
      %2343 = vmatprep.subr.mxu0 0.0
      %2344 = vmatpush1.msra.mxu0 0.0
      %2345 = vmatprep.subr.mxu0 0.0
      %2346 = vmatpush1.msra.mxu0 0.0
      %2347 = vmatprep.subr.mxu0 0.0
      %2348 = vmatpush1.msra.mxu0 0.0
      %2349 = vmatprep.subr.mxu0 0.0
      %2350 = vmatpush1.msra.mxu0 0.0
      %2351 = vmatprep.subr.mxu0 0.0
      %2352 = vmatpush1.msra.mxu0 0.0
      %2353 = vmatprep.subr.mxu0 0.0
      %2354 = vmatpush1.msra.mxu0 0.0
      %2355 = vmatprep.subr.mxu0 0.0
      %2356 = vmatpush1.msra.mxu0 0.0
      %2357 = vmatprep.subr.mxu0 0.0
      %2358 = vmatpush1.msra.mxu0 0.0
      %2359 = vmatprep.subr.mxu0 0.0
      %2360 = vmatpush1.msra.mxu0 0.0
      %2361 = vmatprep.subr.mxu0 0.0
      %2362 = vmatpush1.msra.mxu0 0.0
      %2363 = vmatprep.subr.mxu0 0.0
      %2364 = vmatpush1.msra.mxu0 0.0
      %2365 = vmatprep.subr.mxu0 0.0
      %2366 = vmatpush1.msra.mxu0 0.0
      %2367 = vmatprep.subr.mxu0 0.0
      %2368 = vmatpush1.msra.mxu0 0.0
      %2369 = vmatprep.subr.mxu0 0.0
      %2370 = vmatpush1.msra.mxu0 0.0
      %2371 = vmatprep.mubr.f32.mxu0 0.0
      %2372 = vmatmul.mubr.f32.gmra.mrb[0].mxu0 %v2209
      %v2373 = vpop.f32.mrb[0].mxu0
      %v2374 = vadd.f32 0.0, %v2373
      %v2375 = vpop.f32.mrb[0].mxu0
      %2376 = vmatprep.mubr.f32.mxu0 0.0
      %2377 = vmatmul.mubr.f32.gmra.mrb[0].mxu0 %v2212
      %v2378 = vpop.f32.mrb[0].mxu0
      %v2379 = vadd.f32 0.0, %v2378
      %v2380 = vpop.f32.mrb[0].mxu0
      %2381 = vmatprep.mubr.f32.mxu0 0.0
      %2382 = vmatmul.mubr.f32.gmra.mrb[0].mxu0 %v2215
      %v2383 = vpop.f32.mrb[0].mxu0
      %v2384 = vadd.f32 0.0, %v2383
      %v2385 = vpop.f32.mrb[0].mxu0
      %2386 = vmatprep.mubr.f32.mxu0 0.0
      %2387 = vmatmul.mubr.f32.gmra.mrb[0].mxu0 %v2218
      %v2388 = vpop.f32.mrb[0].mxu0
      %v2389 = vadd.f32 0.0, %v2388
      %v2390 = vpop.f32.mrb[0].mxu0
      %2391 = vmatprep.mubr.f32.mxu0 0.0
      %2392 = vmatmul.mubr.f32.gmra.mrb[0].mxu0 %v2221
      %v2393 = vpop.f32.mrb[0].mxu0
      %v2394 = vadd.f32 0.0, %v2393
      %v2395 = vpop.f32.mrb[0].mxu0
      %2396 = vmatprep.mubr.f32.mxu0 0.0
      %2397 = vmatmul.mubr.f32.gmra.mrb[0].mxu0 %v2224
      %v2398 = vpop.f32.mrb[0].mxu0
      %v2399 = vadd.f32 0.0, %v2398
      %v2400 = vpop.f32.mrb[0].mxu0
      %2401 = vmatprep.mubr.f32.mxu0 0.0
      %2402 = vmatmul.mubr.f32.gmra.mrb[0].mxu0 %v2227
      %v2403 = vpop.f32.mrb[0].mxu0
      %v2404 = vadd.f32 0.0, %v2403
      %v2405 = vpop.f32.mrb[0].mxu0
      %2406 = vmatprep.mubr.f32.mxu0 0.0
      %2407 = vmatmul.mubr.f32.gmra.mrb[0].mxu0 %v2230
      %v2408 = vpop.f32.mrb[0].mxu0
      %v2409 = vadd.f32 0.0, %v2408
      %v2410 = vpop.f32.mrb[0].mxu0
      %2411 = vmatprep.mubr.f32.mxu0 0.0
      %2412 = vmatmul.mubr.f32.gmra.mrb[0].mxu0 %v2233
      %v2413 = vpop.f32.mrb[0].mxu0
      %v2414 = vadd.f32 0.0, %v2413
      %v2415 = vpop.f32.mrb[0].mxu0
      %2416 = vmatprep.mubr.f32.mxu0 0.0
      %2417 = vmatmul.mubr.f32.gmra.mrb[0].mxu0 %v2236
      %v2418 = vpop.f32.mrb[0].mxu0
      %v2419 = vadd.f32 0.0, %v2418
      %v2420 = vpop.f32.mrb[0].mxu0
      %2421 = vmatprep.mubr.f32.mxu0 0.0
      %2422 = vmatmul.mubr.f32.gmra.mrb[0].mxu0 %v2239
      %v2423 = vpop.f32.mrb[0].mxu0
      %v2424 = vadd.f32 0.0, %v2423
      %v2425 = vpop.f32.mrb[0].mxu0
      %2426 = vmatprep.mubr.f32.mxu0 0.0
      %2427 = vmatmul.mubr.f32.gmra.mrb[0].mxu0 %v2242
      %v2428 = vpop.f32.mrb[0].mxu0
      %v2429 = vadd.f32 0.0, %v2428
      %v2430 = vpop.f32.mrb[0].mxu0
      %2431 = vmatprep.mubr.f32.mxu0 0.0
      %2432 = vmatmul.mubr.f32.gmra.mrb[0].mxu0 %v2245
      %v2433 = vpop.f32.mrb[0].mxu0
      %v2434 = vadd.f32 0.0, %v2433
      %v2435 = vpop.f32.mrb[0].mxu0
      %2436 = vmatprep.mubr.f32.mxu0 0.0
      %2437 = vmatmul.mubr.f32.gmra.mrb[0].mxu0 %v2248
      %v2438 = vpop.f32.mrb[0].mxu0
      %v2439 = vadd.f32 0.0, %v2438
      %v2440 = vpop.f32.mrb[0].mxu0
      %2441 = vmatprep.mubr.f32.mxu0 0.0
      %2442 = vmatmul.mubr.f32.gmra.mrb[0].mxu0 %v2251
      %v2443 = vpop.f32.mrb[0].mxu0
      %v2444 = vadd.f32 0.0, %v2443
      %v2445 = vpop.f32.mrb[0].mxu0
      %2446 = vmatprep.mubr.f32.mxu0 0.0
      %2447 = vmatmul.mubr.f32.gmra.mrb[0].mxu0 %v2254
      %v2448 = vpop.f32.mrb[0].mxu0
      %v2449 = vadd.f32 0.0, %v2448
      %v2450 = vpop.f32.mrb[0].mxu0
      %2451 = vmatprep.mubr.f32.mxu0 0.0
      %2452 = vmatmul.mubr.f32.gmra.mrb[0].mxu0 %v2257
      %v2453 = vpop.f32.mrb[0].mxu0
      %v2454 = vadd.f32 0.0, %v2453
      %v2455 = vpop.f32.mrb[0].mxu0
      %2456 = vmatprep.mubr.f32.mxu0 0.0
      %2457 = vmatmul.mubr.f32.gmra.mrb[0].mxu0 %v2260
      %v2458 = vpop.f32.mrb[0].mxu0
      %v2459 = vadd.f32 0.0, %v2458
      %v2460 = vpop.f32.mrb[0].mxu0
      %2461 = vmatprep.mubr.f32.mxu0 0.0
      %2462 = vmatmul.mubr.f32.gmra.mrb[0].mxu0 %v2263
      %v2463 = vpop.f32.mrb[0].mxu0
      %v2464 = vadd.f32 0.0, %v2463
      %v2465 = vpop.f32.mrb[0].mxu0
      %2466 = vmatprep.mubr.f32.mxu0 0.0
      %2467 = vmatmul.mubr.f32.gmra.mrb[0].mxu0 %v2266
      %v2468 = vpop.f32.mrb[0].mxu0
      %v2469 = vadd.f32 0.0, %v2468
      %v2470 = vpop.f32.mrb[0].mxu0
      %2471 = vmatprep.mubr.f32.mxu0 0.0
      %2472 = vmatmul.mubr.f32.gmra.mrb[0].mxu0 %v2269
      %v2473 = vpop.f32.mrb[0].mxu0
      %v2474 = vadd.f32 0.0, %v2473
      %v2475 = vpop.f32.mrb[0].mxu0
      %2476 = vmatprep.mubr.f32.mxu0 0.0
      %2477 = vmatmul.mubr.f32.gmra.mrb[0].mxu0 %v2272
      %v2478 = vpop.f32.mrb[0].mxu0
      %v2479 = vadd.f32 0.0, %v2478
      %v2480 = vpop.f32.mrb[0].mxu0
      %2481 = vmatprep.mubr.f32.mxu0 0.0
      %2482 = vmatmul.mubr.f32.gmra.mrb[0].mxu0 %v2275
      %v2483 = vpop.f32.mrb[0].mxu0
      %v2484 = vadd.f32 0.0, %v2483
      %v2485 = vpop.f32.mrb[0].mxu0
      %2486 = vmatprep.mubr.f32.mxu0 0.0
      %2487 = vmatmul.mubr.f32.gmra.mrb[0].mxu0 %v2278
      %v2488 = vpop.f32.mrb[0].mxu0
      %v2489 = vadd.f32 0.0, %v2488
      %v2490 = vpop.f32.mrb[0].mxu0
      %2491 = vmatprep.mubr.f32.mxu0 0.0
      %2492 = vmatmul.mubr.f32.gmra.mrb[0].mxu0 %v2281
      %v2493 = vpop.f32.mrb[0].mxu0
      %v2494 = vadd.f32 0.0, %v2493
      %v2495 = vpop.f32.mrb[0].mxu0
      %2496 = vmatprep.mubr.f32.mxu0 0.0
      %2497 = vmatmul.mubr.f32.gmra.mrb[0].mxu0 %v2284
      %v2498 = vpop.f32.mrb[0].mxu0
      %v2499 = vadd.f32 0.0, %v2498
      %v2500 = vpop.f32.mrb[0].mxu0
      %2501 = vmatprep.mubr.f32.mxu0 0.0
      %2502 = vmatmul.mubr.f32.gmra.mrb[0].mxu0 %v2287
      %v2503 = vpop.f32.mrb[0].mxu0
      %v2504 = vadd.f32 0.0, %v2503
      %v2505 = vpop.f32.mrb[0].mxu0
      %2506 = vmatprep.mubr.f32.mxu0 0.0
      %2507 = vmatmul.mubr.f32.gmra.mrb[0].mxu0 %v2290
      %v2508 = vpop.f32.mrb[0].mxu0
      %v2509 = vadd.f32 0.0, %v2508
      %v2510 = vpop.f32.mrb[0].mxu0
      %2511 = vmatprep.mubr.f32.mxu0 0.0
      %2512 = vmatmul.mubr.f32.gmra.mrb[0].mxu0 %v2293
      %v2513 = vpop.f32.mrb[0].mxu0
      %v2514 = vadd.f32 0.0, %v2513
      %v2515 = vpop.f32.mrb[0].mxu0
      %2516 = vmatprep.mubr.f32.mxu0 0.0
      %2517 = vmatmul.mubr.f32.gmra.mrb[0].mxu0 %v2296
      %v2518 = vpop.f32.mrb[0].mxu0
      %v2519 = vadd.f32 0.0, %v2518
      %v2520 = vpop.f32.mrb[0].mxu0
      %2521 = vmatprep.mubr.f32.mxu0 0.0
      %2522 = vmatmul.mubr.f32.gmra.mrb[0].mxu0 %v2299
      %v2523 = vpop.f32.mrb[0].mxu0
      %v2524 = vadd.f32 0.0, %v2523
      %v2525 = vpop.f32.mrb[0].mxu0
      %2526 = vmatprep.mubr.f32.mxu0 0.0
      %2527 = vmatmul.mubr.f32.gmra.mrb[0].mxu0 %v2302
      %v2528 = vpop.f32.mrb[0].mxu0
      %v2529 = vadd.f32 0.0, %v2528
      %v2530 = vpop.f32.mrb[0].mxu0
      %2531 = vdwg.mxu0
      %v2532 = vadd.f32 %v2142, %v2374
      %v2533 = vadd.f32 %v2143, %v2379
      %v2534 = vadd.f32 %v2144, %v2384
      %v2535 = vadd.f32 %v2145, %v2389
      %v2536 = vadd.f32 %v2146, %v2394
      %v2537 = vadd.f32 %v2147, %v2399
      %v2538 = vadd.f32 %v2148, %v2404
      %v2539 = vadd.f32 %v2149, %v2409
      %v2540 = vadd.f32 %v2150, %v2414
      %v2541 = vadd.f32 %v2151, %v2419
      %v2542 = vadd.f32 %v2152, %v2424
      %v2543 = vadd.f32 %v2153, %v2429
      %v2544 = vadd.f32 %v2154, %v2434
      %v2545 = vadd.f32 %v2155, %v2439
      %v2546 = vadd.f32 %v2156, %v2444
      %v2547 = vadd.f32 %v2157, %v2449
      %v2548 = vadd.f32 %v2158, %v2454
      %v2549 = vadd.f32 %v2159, %v2459
      %v2550 = vadd.f32 %v2160, %v2464
      %v2551 = vadd.f32 %v2161, %v2469
      %v2552 = vadd.f32 %v2162, %v2474
      %v2553 = vadd.f32 %v2163, %v2479
      %v2554 = vadd.f32 %v2164, %v2484
      %v2555 = vadd.f32 %v2165, %v2489
      %v2556 = vadd.f32 %v2166, %v2494
      %v2557 = vadd.f32 %v2167, %v2499
      %v2558 = vadd.f32 %v2168, %v2504
      %v2559 = vadd.f32 %v2169, %v2509
      %v2560 = vadd.f32 %v2170, %v2514
      %v2561 = vadd.f32 %v2171, %v2519
      %v2562 = vadd.f32 %v2172, %v2524
      %v2563 = vadd.f32 %v2173, %v2529
      %s2564 = scalar_lea.vmem [#allocation4], 16
      %v2565 = vld [vmem:[%s2564] sm:$0xff]
      %v2566 = vld [vmem:[%s2564 + $0x8] sm:$0xff]
      %v2567 = vld [vmem:[%s2564 + $0x10] sm:$0xff]
      %v2568 = vld [vmem:[%s2564 + $0x18] sm:$0xff]
      %v2569 = vld [vmem:[%s2564 + $0x20] sm:$0xff]
      %v2570 = vld [vmem:[%s2564 + $0x28] sm:$0xff]
      %v2571 = vld [vmem:[%s2564 + $0x30] sm:$0xff]
      %v2572 = vld [vmem:[%s2564 + $0x38] sm:$0xff]
      %v2573 = vld [vmem:[%s2564 + $0x40] sm:$0xff]
      %v2574 = vld [vmem:[%s2564 + $0x48] sm:$0xff]
      %v2575 = vld [vmem:[%s2564 + $0x50] sm:$0xff]
      %v2576 = vld [vmem:[%s2564 + $0x58] sm:$0xff]
      %v2577 = vld [vmem:[%s2564 + $0x60] sm:$0xff]
      %v2578 = vld [vmem:[%s2564 + $0x68] sm:$0xff]
      %v2579 = vld [vmem:[%s2564 + $0x70] sm:$0xff]
      %v2580 = vld [vmem:[%s2564 + $0x78] sm:$0xff]
      %v2581 = vld [vmem:[%s2564 + $0x80] sm:$0xff]
      %v2582 = vld [vmem:[%s2564 + $0x88] sm:$0xff]
      %v2583 = vld [vmem:[%s2564 + $0x90] sm:$0xff]
      %v2584 = vld [vmem:[%s2564 + $0x98] sm:$0xff]
      %v2585 = vld [vmem:[%s2564 + $0xa0] sm:$0xff]
      %v2586 = vld [vmem:[%s2564 + $0xa8] sm:$0xff]
      %v2587 = vld [vmem:[%s2564 + $0xb0] sm:$0xff]
      %v2588 = vld [vmem:[%s2564 + $0xb8] sm:$0xff]
      %v2589 = vld [vmem:[%s2564 + $0xc0] sm:$0xff]
      %v2590 = vld [vmem:[%s2564 + $0xc8] sm:$0xff]
      %v2591 = vld [vmem:[%s2564 + $0xd0] sm:$0xff]
      %v2592 = vld [vmem:[%s2564 + $0xd8] sm:$0xff]
      %v2593 = vld [vmem:[%s2564 + $0xe0] sm:$0xff]
      %v2594 = vld [vmem:[%s2564 + $0xe8] sm:$0xff]
      %v2595 = vld [vmem:[%s2564 + $0xf0] sm:$0xff]
      %v2596 = vld [vmem:[%s2564 + $0xf8] sm:$0xff]
      %s2597 = scalar_lea.vmem %s3, 20
      %v2598 = vld [vmem:[%s2597] sm:$0xf]
      %v2600 = vsel %vm445, %v2565, 0
      %v2603 = vsel %vm445, %v2566, 0
      %v2606 = vsel %vm445, %v2567, 0
      %v2609 = vsel %vm445, %v2568, 0
      %v2612 = vsel %vm445, %v2569, 0
      %v2615 = vsel %vm445, %v2570, 0
      %v2618 = vsel %vm445, %v2571, 0
      %v2621 = vsel %vm445, %v2572, 0
      %v2624 = vsel %vm445, %v2573, 0
      %v2627 = vsel %vm445, %v2574, 0
      %v2630 = vsel %vm445, %v2575, 0
      %v2633 = vsel %vm445, %v2576, 0
      %v2636 = vsel %vm445, %v2577, 0
      %v2639 = vsel %vm445, %v2578, 0
      %v2642 = vsel %vm445, %v2579, 0
      %v2645 = vsel %vm445, %v2580, 0
      %v2648 = vsel %vm445, %v2581, 0
      %v2651 = vsel %vm445, %v2582, 0
      %v2654 = vsel %vm445, %v2583, 0
      %v2657 = vsel %vm445, %v2584, 0
      %v2660 = vsel %vm445, %v2585, 0
      %v2663 = vsel %vm445, %v2586, 0
      %v2666 = vsel %vm445, %v2587, 0
      %v2669 = vsel %vm445, %v2588, 0
      %v2672 = vsel %vm445, %v2589, 0
      %v2675 = vsel %vm445, %v2590, 0
      %v2678 = vsel %vm445, %v2591, 0
      %v2681 = vsel %vm445, %v2592, 0
      %v2684 = vsel %vm445, %v2593, 0
      %v2687 = vsel %vm445, %v2594, 0
      %v2690 = vsel %vm445, %v2595, 0
      %v2693 = vsel %vm445, %v2596, 0
      %v2696 = vsel %vm840, %v2598, 0
      %2698 = vmatprep.subr.mxu0 0.0
      %2699 = vmatpush1.msra.mxu0 %v2696
      %2700 = vmatprep.subr.mxu0 0.0
      %2701 = vmatpush1.msra.mxu0 0.0
      %2702 = vmatprep.subr.mxu0 0.0
      %2703 = vmatpush1.msra.mxu0 0.0
      %2704 = vmatprep.subr.mxu0 0.0
      %2705 = vmatpush1.msra.mxu0 0.0
      %2706 = vmatprep.subr.mxu0 0.0
      %2707 = vmatpush1.msra.mxu0 0.0
      %2708 = vmatprep.subr.mxu0 0.0
      %2709 = vmatpush1.msra.mxu0 0.0
      %2710 = vmatprep.subr.mxu0 0.0
      %2711 = vmatpush1.msra.mxu0 0.0
      %2712 = vmatprep.subr.mxu0 0.0
      %2713 = vmatpush1.msra.mxu0 0.0
      %2714 = vmatprep.subr.mxu0 0.0
      %2715 = vmatpush1.msra.mxu0 0.0
      %2716 = vmatprep.subr.mxu0 0.0
      %2717 = vmatpush1.msra.mxu0 0.0
      %2718 = vmatprep.subr.mxu0 0.0
      %2719 = vmatpush1.msra.mxu0 0.0
      %2720 = vmatprep.subr.mxu0 0.0
      %2721 = vmatpush1.msra.mxu0 0.0
      %2722 = vmatprep.subr.mxu0 0.0
      %2723 = vmatpush1.msra.mxu0 0.0
      %2724 = vmatprep.subr.mxu0 0.0
      %2725 = vmatpush1.msra.mxu0 0.0
      %2726 = vmatprep.subr.mxu0 0.0
      %2727 = vmatpush1.msra.mxu0 0.0
      %2728 = vmatprep.subr.mxu0 0.0
      %2729 = vmatpush1.msra.mxu0 0.0
      %2730 = vmatprep.subr.mxu0 0.0
      %2731 = vmatpush1.msra.mxu0 0.0
      %2732 = vmatprep.subr.mxu0 0.0
      %2733 = vmatpush1.msra.mxu0 0.0
      %2734 = vmatprep.subr.mxu0 0.0
      %2735 = vmatpush1.msra.mxu0 0.0
      %2736 = vmatprep.subr.mxu0 0.0
      %2737 = vmatpush1.msra.mxu0 0.0
      %2738 = vmatprep.subr.mxu0 0.0
      %2739 = vmatpush1.msra.mxu0 0.0
      %2740 = vmatprep.subr.mxu0 0.0
      %2741 = vmatpush1.msra.mxu0 0.0
      %2742 = vmatprep.subr.mxu0 0.0
      %2743 = vmatpush1.msra.mxu0 0.0
      %2744 = vmatprep.subr.mxu0 0.0
      %2745 = vmatpush1.msra.mxu0 0.0
      %2746 = vmatprep.subr.mxu0 0.0
      %2747 = vmatpush1.msra.mxu0 0.0
      %2748 = vmatprep.subr.mxu0 0.0
      %2749 = vmatpush1.msra.mxu0 0.0
      %2750 = vmatprep.subr.mxu0 0.0
      %2751 = vmatpush1.msra.mxu0 0.0
      %2752 = vmatprep.subr.mxu0 0.0
      %2753 = vmatpush1.msra.mxu0 0.0
      %2754 = vmatprep.subr.mxu0 0.0
      %2755 = vmatpush1.msra.mxu0 0.0
      %2756 = vmatprep.subr.mxu0 0.0
      %2757 = vmatpush1.msra.mxu0 0.0
      %2758 = vmatprep.subr.mxu0 0.0
      %2759 = vmatpush1.msra.mxu0 0.0
      %2760 = vmatprep.subr.mxu0 0.0
      %2761 = vmatpush1.msra.mxu0 0.0
      %2762 = vmatprep.mubr.f32.mxu0 0.0
      %2763 = vmatmul.mubr.f32.gmra.mrb[0].mxu0 %v2600
      %v2764 = vpop.f32.mrb[0].mxu0
      %v2765 = vadd.f32 0.0, %v2764
      %v2766 = vpop.f32.mrb[0].mxu0
      %2767 = vmatprep.mubr.f32.mxu0 0.0
      %2768 = vmatmul.mubr.f32.gmra.mrb[0].mxu0 %v2603
      %v2769 = vpop.f32.mrb[0].mxu0
      %v2770 = vadd.f32 0.0, %v2769
      %v2771 = vpop.f32.mrb[0].mxu0
      %2772 = vmatprep.mubr.f32.mxu0 0.0
      %2773 = vmatmul.mubr.f32.gmra.mrb[0].mxu0 %v2606
      %v2774 = vpop.f32.mrb[0].mxu0
      %v2775 = vadd.f32 0.0, %v2774
      %v2776 = vpop.f32.mrb[0].mxu0
      %2777 = vmatprep.mubr.f32.mxu0 0.0
      %2778 = vmatmul.mubr.f32.gmra.mrb[0].mxu0 %v2609
      %v2779 = vpop.f32.mrb[0].mxu0
      %v2780 = vadd.f32 0.0, %v2779
      %v2781 = vpop.f32.mrb[0].mxu0
      %2782 = vmatprep.mubr.f32.mxu0 0.0
      %2783 = vmatmul.mubr.f32.gmra.mrb[0].mxu0 %v2612
      %v2784 = vpop.f32.mrb[0].mxu0
      %v2785 = vadd.f32 0.0, %v2784
      %v2786 = vpop.f32.mrb[0].mxu0
      %2787 = vmatprep.mubr.f32.mxu0 0.0
      %2788 = vmatmul.mubr.f32.gmra.mrb[0].mxu0 %v2615
      %v2789 = vpop.f32.mrb[0].mxu0
      %v2790 = vadd.f32 0.0, %v2789
      %v2791 = vpop.f32.mrb[0].mxu0
      %2792 = vmatprep.mubr.f32.mxu0 0.0
      %2793 = vmatmul.mubr.f32.gmra.mrb[0].mxu0 %v2618
      %v2794 = vpop.f32.mrb[0].mxu0
      %v2795 = vadd.f32 0.0, %v2794
      %v2796 = vpop.f32.mrb[0].mxu0
      %2797 = vmatprep.mubr.f32.mxu0 0.0
      %2798 = vmatmul.mubr.f32.gmra.mrb[0].mxu0 %v2621
      %v2799 = vpop.f32.mrb[0].mxu0
      %v2800 = vadd.f32 0.0, %v2799
      %v2801 = vpop.f32.mrb[0].mxu0
      %2802 = vmatprep.mubr.f32.mxu0 0.0
      %2803 = vmatmul.mubr.f32.gmra.mrb[0].mxu0 %v2624
      %v2804 = vpop.f32.mrb[0].mxu0
      %v2805 = vadd.f32 0.0, %v2804
      %v2806 = vpop.f32.mrb[0].mxu0
      %2807 = vmatprep.mubr.f32.mxu0 0.0
      %2808 = vmatmul.mubr.f32.gmra.mrb[0].mxu0 %v2627
      %v2809 = vpop.f32.mrb[0].mxu0
      %v2810 = vadd.f32 0.0, %v2809
      %v2811 = vpop.f32.mrb[0].mxu0
      %2812 = vmatprep.mubr.f32.mxu0 0.0
      %2813 = vmatmul.mubr.f32.gmra.mrb[0].mxu0 %v2630
      %v2814 = vpop.f32.mrb[0].mxu0
      %v2815 = vadd.f32 0.0, %v2814
      %v2816 = vpop.f32.mrb[0].mxu0
      %2817 = vmatprep.mubr.f32.mxu0 0.0
      %2818 = vmatmul.mubr.f32.gmra.mrb[0].mxu0 %v2633
      %v2819 = vpop.f32.mrb[0].mxu0
      %v2820 = vadd.f32 0.0, %v2819
      %v2821 = vpop.f32.mrb[0].mxu0
      %2822 = vmatprep.mubr.f32.mxu0 0.0
      %2823 = vmatmul.mubr.f32.gmra.mrb[0].mxu0 %v2636
      %v2824 = vpop.f32.mrb[0].mxu0
      %v2825 = vadd.f32 0.0, %v2824
      %v2826 = vpop.f32.mrb[0].mxu0
      %2827 = vmatprep.mubr.f32.mxu0 0.0
      %2828 = vmatmul.mubr.f32.gmra.mrb[0].mxu0 %v2639
      %v2829 = vpop.f32.mrb[0].mxu0
      %v2830 = vadd.f32 0.0, %v2829
      %v2831 = vpop.f32.mrb[0].mxu0
      %2832 = vmatprep.mubr.f32.mxu0 0.0
      %2833 = vmatmul.mubr.f32.gmra.mrb[0].mxu0 %v2642
      %v2834 = vpop.f32.mrb[0].mxu0
      %v2835 = vadd.f32 0.0, %v2834
      %v2836 = vpop.f32.mrb[0].mxu0
      %2837 = vmatprep.mubr.f32.mxu0 0.0
      %2838 = vmatmul.mubr.f32.gmra.mrb[0].mxu0 %v2645
      %v2839 = vpop.f32.mrb[0].mxu0
      %v2840 = vadd.f32 0.0, %v2839
      %v2841 = vpop.f32.mrb[0].mxu0
      %2842 = vmatprep.mubr.f32.mxu0 0.0
      %2843 = vmatmul.mubr.f32.gmra.mrb[0].mxu0 %v2648
      %v2844 = vpop.f32.mrb[0].mxu0
      %v2845 = vadd.f32 0.0, %v2844
      %v2846 = vpop.f32.mrb[0].mxu0
      %2847 = vmatprep.mubr.f32.mxu0 0.0
      %2848 = vmatmul.mubr.f32.gmra.mrb[0].mxu0 %v2651
      %v2849 = vpop.f32.mrb[0].mxu0
      %v2850 = vadd.f32 0.0, %v2849
      %v2851 = vpop.f32.mrb[0].mxu0
      %2852 = vmatprep.mubr.f32.mxu0 0.0
      %2853 = vmatmul.mubr.f32.gmra.mrb[0].mxu0 %v2654
      %v2854 = vpop.f32.mrb[0].mxu0
      %v2855 = vadd.f32 0.0, %v2854
      %v2856 = vpop.f32.mrb[0].mxu0
      %2857 = vmatprep.mubr.f32.mxu0 0.0
      %2858 = vmatmul.mubr.f32.gmra.mrb[0].mxu0 %v2657
      %v2859 = vpop.f32.mrb[0].mxu0
      %v2860 = vadd.f32 0.0, %v2859
      %v2861 = vpop.f32.mrb[0].mxu0
      %2862 = vmatprep.mubr.f32.mxu0 0.0
      %2863 = vmatmul.mubr.f32.gmra.mrb[0].mxu0 %v2660
      %v2864 = vpop.f32.mrb[0].mxu0
      %v2865 = vadd.f32 0.0, %v2864
      %v2866 = vpop.f32.mrb[0].mxu0
      %2867 = vmatprep.mubr.f32.mxu0 0.0
      %2868 = vmatmul.mubr.f32.gmra.mrb[0].mxu0 %v2663
      %v2869 = vpop.f32.mrb[0].mxu0
      %v2870 = vadd.f32 0.0, %v2869
      %v2871 = vpop.f32.mrb[0].mxu0
      %2872 = vmatprep.mubr.f32.mxu0 0.0
      %2873 = vmatmul.mubr.f32.gmra.mrb[0].mxu0 %v2666
      %v2874 = vpop.f32.mrb[0].mxu0
      %v2875 = vadd.f32 0.0, %v2874
      %v2876 = vpop.f32.mrb[0].mxu0
      %2877 = vmatprep.mubr.f32.mxu0 0.0
      %2878 = vmatmul.mubr.f32.gmra.mrb[0].mxu0 %v2669
      %v2879 = vpop.f32.mrb[0].mxu0
      %v2880 = vadd.f32 0.0, %v2879
      %v2881 = vpop.f32.mrb[0].mxu0
      %2882 = vmatprep.mubr.f32.mxu0 0.0
      %2883 = vmatmul.mubr.f32.gmra.mrb[0].mxu0 %v2672
      %v2884 = vpop.f32.mrb[0].mxu0
      %v2885 = vadd.f32 0.0, %v2884
      %v2886 = vpop.f32.mrb[0].mxu0
      %2887 = vmatprep.mubr.f32.mxu0 0.0
      %2888 = vmatmul.mubr.f32.gmra.mrb[0].mxu0 %v2675
      %v2889 = vpop.f32.mrb[0].mxu0
      %v2890 = vadd.f32 0.0, %v2889
      %v2891 = vpop.f32.mrb[0].mxu0
      %2892 = vmatprep.mubr.f32.mxu0 0.0
      %2893 = vmatmul.mubr.f32.gmra.mrb[0].mxu0 %v2678
      %v2894 = vpop.f32.mrb[0].mxu0
      %v2895 = vadd.f32 0.0, %v2894
      %v2896 = vpop.f32.mrb[0].mxu0
      %2897 = vmatprep.mubr.f32.mxu0 0.0
      %2898 = vmatmul.mubr.f32.gmra.mrb[0].mxu0 %v2681
      %v2899 = vpop.f32.mrb[0].mxu0
      %v2900 = vadd.f32 0.0, %v2899
      %v2901 = vpop.f32.mrb[0].mxu0
      %2902 = vmatprep.mubr.f32.mxu0 0.0
      %2903 = vmatmul.mubr.f32.gmra.mrb[0].mxu0 %v2684
      %v2904 = vpop.f32.mrb[0].mxu0
      %v2905 = vadd.f32 0.0, %v2904
      %v2906 = vpop.f32.mrb[0].mxu0
      %2907 = vmatprep.mubr.f32.mxu0 0.0
      %2908 = vmatmul.mubr.f32.gmra.mrb[0].mxu0 %v2687
      %v2909 = vpop.f32.mrb[0].mxu0
      %v2910 = vadd.f32 0.0, %v2909
      %v2911 = vpop.f32.mrb[0].mxu0
      %2912 = vmatprep.mubr.f32.mxu0 0.0
      %2913 = vmatmul.mubr.f32.gmra.mrb[0].mxu0 %v2690
      %v2914 = vpop.f32.mrb[0].mxu0
      %v2915 = vadd.f32 0.0, %v2914
      %v2916 = vpop.f32.mrb[0].mxu0
      %2917 = vmatprep.mubr.f32.mxu0 0.0
      %2918 = vmatmul.mubr.f32.gmra.mrb[0].mxu0 %v2693
      %v2919 = vpop.f32.mrb[0].mxu0
      %v2920 = vadd.f32 0.0, %v2919
      %v2921 = vpop.f32.mrb[0].mxu0
      %2922 = vdwg.mxu0
      %v2923 = vadd.f32 %v2532, %v2765
      %v2924 = vadd.f32 %v2533, %v2770
      %v2925 = vadd.f32 %v2534, %v2775
      %v2926 = vadd.f32 %v2535, %v2780
      %v2927 = vadd.f32 %v2536, %v2785
      %v2928 = vadd.f32 %v2537, %v2790
      %v2929 = vadd.f32 %v2538, %v2795
      %v2930 = vadd.f32 %v2539, %v2800
      %v2931 = vadd.f32 %v2540, %v2805
      %v2932 = vadd.f32 %v2541, %v2810
      %v2933 = vadd.f32 %v2542, %v2815
      %v2934 = vadd.f32 %v2543, %v2820
      %v2935 = vadd.f32 %v2544, %v2825
      %v2936 = vadd.f32 %v2545, %v2830
      %v2937 = vadd.f32 %v2546, %v2835
      %v2938 = vadd.f32 %v2547, %v2840
      %v2939 = vadd.f32 %v2548, %v2845
      %v2940 = vadd.f32 %v2549, %v2850
      %v2941 = vadd.f32 %v2550, %v2855
      %v2942 = vadd.f32 %v2551, %v2860
      %v2943 = vadd.f32 %v2552, %v2865
      %v2944 = vadd.f32 %v2553, %v2870
      %v2945 = vadd.f32 %v2554, %v2875
      %v2946 = vadd.f32 %v2555, %v2880
      %v2947 = vadd.f32 %v2556, %v2885
      %v2948 = vadd.f32 %v2557, %v2890
      %v2949 = vadd.f32 %v2558, %v2895
      %v2950 = vadd.f32 %v2559, %v2900
      %v2951 = vadd.f32 %v2560, %v2905
      %v2952 = vadd.f32 %v2561, %v2910
      %v2953 = vadd.f32 %v2562, %v2915
      %v2954 = vadd.f32 %v2563, %v2920
      %s2955 = scalar_lea.vmem [#allocation3], 32
      %v2956 = vld [vmem:[%s2955] sm:$0xff]
      %v2957 = vld [vmem:[%s2955 + $0x8] sm:$0xff]
      %v2958 = vld [vmem:[%s2955 + $0x10] sm:$0xff]
      %v2959 = vld [vmem:[%s2955 + $0x18] sm:$0xff]
      %v2960 = vld [vmem:[%s2955 + $0x20] sm:$0xff]
      %v2961 = vld [vmem:[%s2955 + $0x28] sm:$0xff]
      %v2962 = vld [vmem:[%s2955 + $0x30] sm:$0xff]
      %v2963 = vld [vmem:[%s2955 + $0x38] sm:$0xff]
      %v2964 = vld [vmem:[%s2955 + $0x40] sm:$0xff]
      %v2965 = vld [vmem:[%s2955 + $0x48] sm:$0xff]
      %v2966 = vld [vmem:[%s2955 + $0x50] sm:$0xff]
      %v2967 = vld [vmem:[%s2955 + $0x58] sm:$0xff]
      %v2968 = vld [vmem:[%s2955 + $0x60] sm:$0xff]
      %v2969 = vld [vmem:[%s2955 + $0x68] sm:$0xff]
      %v2970 = vld [vmem:[%s2955 + $0x70] sm:$0xff]
      %v2971 = vld [vmem:[%s2955 + $0x78] sm:$0xff]
      %v2972 = vld [vmem:[%s2955 + $0x80] sm:$0xff]
      %v2973 = vld [vmem:[%s2955 + $0x88] sm:$0xff]
      %v2974 = vld [vmem:[%s2955 + $0x90] sm:$0xff]
      %v2975 = vld [vmem:[%s2955 + $0x98] sm:$0xff]
      %v2976 = vld [vmem:[%s2955 + $0xa0] sm:$0xff]
      %v2977 = vld [vmem:[%s2955 + $0xa8] sm:$0xff]
      %v2978 = vld [vmem:[%s2955 + $0xb0] sm:$0xff]
      %v2979 = vld [vmem:[%s2955 + $0xb8] sm:$0xff]
      %v2980 = vld [vmem:[%s2955 + $0xc0] sm:$0xff]
      %v2981 = vld [vmem:[%s2955 + $0xc8] sm:$0xff]
      %v2982 = vld [vmem:[%s2955 + $0xd0] sm:$0xff]
      %v2983 = vld [vmem:[%s2955 + $0xd8] sm:$0xff]
      %v2984 = vld [vmem:[%s2955 + $0xe0] sm:$0xff]
      %v2985 = vld [vmem:[%s2955 + $0xe8] sm:$0xff]
      %v2986 = vld [vmem:[%s2955 + $0xf0] sm:$0xff]
      %v2987 = vld [vmem:[%s2955 + $0xf8] sm:$0xff]
      %s2988 = scalar_lea.vmem %s3, 24
      %v2989 = vld [vmem:[%s2988] sm:$0xf]
      %v2991 = vsel %vm445, %v2956, 0
      %v2994 = vsel %vm445, %v2957, 0
      %v2997 = vsel %vm445, %v2958, 0
      %v3000 = vsel %vm445, %v2959, 0
      %v3003 = vsel %vm445, %v2960, 0
      %v3006 = vsel %vm445, %v2961, 0
      %v3009 = vsel %vm445, %v2962, 0
      %v3012 = vsel %vm445, %v2963, 0
      %v3015 = vsel %vm445, %v2964, 0
      %v3018 = vsel %vm445, %v2965, 0
      %v3021 = vsel %vm445, %v2966, 0
      %v3024 = vsel %vm445, %v2967, 0
      %v3027 = vsel %vm445, %v2968, 0
      %v3030 = vsel %vm445, %v2969, 0
      %v3033 = vsel %vm445, %v2970, 0
      %v3036 = vsel %vm445, %v2971, 0
      %v3039 = vsel %vm445, %v2972, 0
      %v3042 = vsel %vm445, %v2973, 0
      %v3045 = vsel %vm445, %v2974, 0
      %v3048 = vsel %vm445, %v2975, 0
      %v3051 = vsel %vm445, %v2976, 0
      %v3054 = vsel %vm445, %v2977, 0
      %v3057 = vsel %vm445, %v2978, 0
      %v3060 = vsel %vm445, %v2979, 0
      %v3063 = vsel %vm445, %v2980, 0
      %v3066 = vsel %vm445, %v2981, 0
      %v3069 = vsel %vm445, %v2982, 0
      %v3072 = vsel %vm445, %v2983, 0
      %v3075 = vsel %vm445, %v2984, 0
      %v3078 = vsel %vm445, %v2985, 0
      %v3081 = vsel %vm445, %v2986, 0
      %v3084 = vsel %vm445, %v2987, 0
      %v3087 = vsel %vm840, %v2989, 0
      %3089 = vmatprep.subr.mxu0 0.0
      %3090 = vmatpush1.msra.mxu0 %v3087
      %3091 = vmatprep.subr.mxu0 0.0
      %3092 = vmatpush1.msra.mxu0 0.0
      %3093 = vmatprep.subr.mxu0 0.0
      %3094 = vmatpush1.msra.mxu0 0.0
      %3095 = vmatprep.subr.mxu0 0.0
      %3096 = vmatpush1.msra.mxu0 0.0
      %3097 = vmatprep.subr.mxu0 0.0
      %3098 = vmatpush1.msra.mxu0 0.0
      %3099 = vmatprep.subr.mxu0 0.0
      %3100 = vmatpush1.msra.mxu0 0.0
      %3101 = vmatprep.subr.mxu0 0.0
      %3102 = vmatpush1.msra.mxu0 0.0
      %3103 = vmatprep.subr.mxu0 0.0
      %3104 = vmatpush1.msra.mxu0 0.0
      %3105 = vmatprep.subr.mxu0 0.0
      %3106 = vmatpush1.msra.mxu0 0.0
      %3107 = vmatprep.subr.mxu0 0.0
      %3108 = vmatpush1.msra.mxu0 0.0
      %3109 = vmatprep.subr.mxu0 0.0
      %3110 = vmatpush1.msra.mxu0 0.0
      %3111 = vmatprep.subr.mxu0 0.0
      %3112 = vmatpush1.msra.mxu0 0.0
      %3113 = vmatprep.subr.mxu0 0.0
      %3114 = vmatpush1.msra.mxu0 0.0
      %3115 = vmatprep.subr.mxu0 0.0
      %3116 = vmatpush1.msra.mxu0 0.0
      %3117 = vmatprep.subr.mxu0 0.0
      %3118 = vmatpush1.msra.mxu0 0.0
      %3119 = vmatprep.subr.mxu0 0.0
      %3120 = vmatpush1.msra.mxu0 0.0
      %3121 = vmatprep.subr.mxu0 0.0
      %3122 = vmatpush1.msra.mxu0 0.0
      %3123 = vmatprep.subr.mxu0 0.0
      %3124 = vmatpush1.msra.mxu0 0.0
      %3125 = vmatprep.subr.mxu0 0.0
      %3126 = vmatpush1.msra.mxu0 0.0
      %3127 = vmatprep.subr.mxu0 0.0
      %3128 = vmatpush1.msra.mxu0 0.0
      %3129 = vmatprep.subr.mxu0 0.0
      %3130 = vmatpush1.msra.mxu0 0.0
      %3131 = vmatprep.subr.mxu0 0.0
      %3132 = vmatpush1.msra.mxu0 0.0
      %3133 = vmatprep.subr.mxu0 0.0
      %3134 = vmatpush1.msra.mxu0 0.0
      %3135 = vmatprep.subr.mxu0 0.0
      %3136 = vmatpush1.msra.mxu0 0.0
      %3137 = vmatprep.subr.mxu0 0.0
      %3138 = vmatpush1.msra.mxu0 0.0
      %3139 = vmatprep.subr.mxu0 0.0
      %3140 = vmatpush1.msra.mxu0 0.0
      %3141 = vmatprep.subr.mxu0 0.0
      %3142 = vmatpush1.msra.mxu0 0.0
      %3143 = vmatprep.subr.mxu0 0.0
      %3144 = vmatpush1.msra.mxu0 0.0
      %3145 = vmatprep.subr.mxu0 0.0
      %3146 = vmatpush1.msra.mxu0 0.0
      %3147 = vmatprep.subr.mxu0 0.0
      %3148 = vmatpush1.msra.mxu0 0.0
      %3149 = vmatprep.subr.mxu0 0.0
      %3150 = vmatpush1.msra.mxu0 0.0
      %3151 = vmatprep.subr.mxu0 0.0
      %3152 = vmatpush1.msra.mxu0 0.0
      %3153 = vmatprep.mubr.f32.mxu0 0.0
      %3154 = vmatmul.mubr.f32.gmra.mrb[0].mxu0 %v2991
      %v3155 = vpop.f32.mrb[0].mxu0
      %v3156 = vadd.f32 0.0, %v3155
      %v3157 = vpop.f32.mrb[0].mxu0
      %3158 = vmatprep.mubr.f32.mxu0 0.0
      %3159 = vmatmul.mubr.f32.gmra.mrb[0].mxu0 %v2994
      %v3160 = vpop.f32.mrb[0].mxu0
      %v3161 = vadd.f32 0.0, %v3160
      %v3162 = vpop.f32.mrb[0].mxu0
      %3163 = vmatprep.mubr.f32.mxu0 0.0
      %3164 = vmatmul.mubr.f32.gmra.mrb[0].mxu0 %v2997
      %v3165 = vpop.f32.mrb[0].mxu0
      %v3166 = vadd.f32 0.0, %v3165
      %v3167 = vpop.f32.mrb[0].mxu0
      %3168 = vmatprep.mubr.f32.mxu0 0.0
      %3169 = vmatmul.mubr.f32.gmra.mrb[0].mxu0 %v3000
      %v3170 = vpop.f32.mrb[0].mxu0
      %v3171 = vadd.f32 0.0, %v3170
      %v3172 = vpop.f32.mrb[0].mxu0
      %3173 = vmatprep.mubr.f32.mxu0 0.0
      %3174 = vmatmul.mubr.f32.gmra.mrb[0].mxu0 %v3003
      %v3175 = vpop.f32.mrb[0].mxu0
      %v3176 = vadd.f32 0.0, %v3175
      %v3177 = vpop.f32.mrb[0].mxu0
      %3178 = vmatprep.mubr.f32.mxu0 0.0
      %3179 = vmatmul.mubr.f32.gmra.mrb[0].mxu0 %v3006
      %v3180 = vpop.f32.mrb[0].mxu0
      %v3181 = vadd.f32 0.0, %v3180
      %v3182 = vpop.f32.mrb[0].mxu0
      %3183 = vmatprep.mubr.f32.mxu0 0.0
      %3184 = vmatmul.mubr.f32.gmra.mrb[0].mxu0 %v3009
      %v3185 = vpop.f32.mrb[0].mxu0
      %v3186 = vadd.f32 0.0, %v3185
      %v3187 = vpop.f32.mrb[0].mxu0
      %3188 = vmatprep.mubr.f32.mxu0 0.0
      %3189 = vmatmul.mubr.f32.gmra.mrb[0].mxu0 %v3012
      %v3190 = vpop.f32.mrb[0].mxu0
      %v3191 = vadd.f32 0.0, %v3190
      %v3192 = vpop.f32.mrb[0].mxu0
      %3193 = vmatprep.mubr.f32.mxu0 0.0
      %3194 = vmatmul.mubr.f32.gmra.mrb[0].mxu0 %v3015
      %v3195 = vpop.f32.mrb[0].mxu0
      %v3196 = vadd.f32 0.0, %v3195
      %v3197 = vpop.f32.mrb[0].mxu0
      %3198 = vmatprep.mubr.f32.mxu0 0.0
      %3199 = vmatmul.mubr.f32.gmra.mrb[0].mxu0 %v3018
      %v3200 = vpop.f32.mrb[0].mxu0
      %v3201 = vadd.f32 0.0, %v3200
      %v3202 = vpop.f32.mrb[0].mxu0
      %3203 = vmatprep.mubr.f32.mxu0 0.0
      %3204 = vmatmul.mubr.f32.gmra.mrb[0].mxu0 %v3021
      %v3205 = vpop.f32.mrb[0].mxu0
      %v3206 = vadd.f32 0.0, %v3205
      %v3207 = vpop.f32.mrb[0].mxu0
      %3208 = vmatprep.mubr.f32.mxu0 0.0
      %3209 = vmatmul.mubr.f32.gmra.mrb[0].mxu0 %v3024
      %v3210 = vpop.f32.mrb[0].mxu0
      %v3211 = vadd.f32 0.0, %v3210
      %v3212 = vpop.f32.mrb[0].mxu0
      %3213 = vmatprep.mubr.f32.mxu0 0.0
      %3214 = vmatmul.mubr.f32.gmra.mrb[0].mxu0 %v3027
      %v3215 = vpop.f32.mrb[0].mxu0
      %v3216 = vadd.f32 0.0, %v3215
      %v3217 = vpop.f32.mrb[0].mxu0
      %3218 = vmatprep.mubr.f32.mxu0 0.0
      %3219 = vmatmul.mubr.f32.gmra.mrb[0].mxu0 %v3030
      %v3220 = vpop.f32.mrb[0].mxu0
      %v3221 = vadd.f32 0.0, %v3220
      %v3222 = vpop.f32.mrb[0].mxu0
      %3223 = vmatprep.mubr.f32.mxu0 0.0
      %3224 = vmatmul.mubr.f32.gmra.mrb[0].mxu0 %v3033
      %v3225 = vpop.f32.mrb[0].mxu0
      %v3226 = vadd.f32 0.0, %v3225
      %v3227 = vpop.f32.mrb[0].mxu0
      %3228 = vmatprep.mubr.f32.mxu0 0.0
      %3229 = vmatmul.mubr.f32.gmra.mrb[0].mxu0 %v3036
      %v3230 = vpop.f32.mrb[0].mxu0
      %v3231 = vadd.f32 0.0, %v3230
      %v3232 = vpop.f32.mrb[0].mxu0
      %3233 = vmatprep.mubr.f32.mxu0 0.0
      %3234 = vmatmul.mubr.f32.gmra.mrb[0].mxu0 %v3039
      %v3235 = vpop.f32.mrb[0].mxu0
      %v3236 = vadd.f32 0.0, %v3235
      %v3237 = vpop.f32.mrb[0].mxu0
      %3238 = vmatprep.mubr.f32.mxu0 0.0
      %3239 = vmatmul.mubr.f32.gmra.mrb[0].mxu0 %v3042
      %v3240 = vpop.f32.mrb[0].mxu0
      %v3241 = vadd.f32 0.0, %v3240
      %v3242 = vpop.f32.mrb[0].mxu0
      %3243 = vmatprep.mubr.f32.mxu0 0.0
      %3244 = vmatmul.mubr.f32.gmra.mrb[0].mxu0 %v3045
      %v3245 = vpop.f32.mrb[0].mxu0
      %v3246 = vadd.f32 0.0, %v3245
      %v3247 = vpop.f32.mrb[0].mxu0
      %3248 = vmatprep.mubr.f32.mxu0 0.0
      %3249 = vmatmul.mubr.f32.gmra.mrb[0].mxu0 %v3048
      %v3250 = vpop.f32.mrb[0].mxu0
      %v3251 = vadd.f32 0.0, %v3250
      %v3252 = vpop.f32.mrb[0].mxu0
      %3253 = vmatprep.mubr.f32.mxu0 0.0
      %3254 = vmatmul.mubr.f32.gmra.mrb[0].mxu0 %v3051
      %v3255 = vpop.f32.mrb[0].mxu0
      %v3256 = vadd.f32 0.0, %v3255
      %v3257 = vpop.f32.mrb[0].mxu0
      %3258 = vmatprep.mubr.f32.mxu0 0.0
      %3259 = vmatmul.mubr.f32.gmra.mrb[0].mxu0 %v3054
      %v3260 = vpop.f32.mrb[0].mxu0
      %v3261 = vadd.f32 0.0, %v3260
      %v3262 = vpop.f32.mrb[0].mxu0
      %3263 = vmatprep.mubr.f32.mxu0 0.0
      %3264 = vmatmul.mubr.f32.gmra.mrb[0].mxu0 %v3057
      %v3265 = vpop.f32.mrb[0].mxu0
      %v3266 = vadd.f32 0.0, %v3265
      %v3267 = vpop.f32.mrb[0].mxu0
      %3268 = vmatprep.mubr.f32.mxu0 0.0
      %3269 = vmatmul.mubr.f32.gmra.mrb[0].mxu0 %v3060
      %v3270 = vpop.f32.mrb[0].mxu0
      %v3271 = vadd.f32 0.0, %v3270
      %v3272 = vpop.f32.mrb[0].mxu0
      %3273 = vmatprep.mubr.f32.mxu0 0.0
      %3274 = vmatmul.mubr.f32.gmra.mrb[0].mxu0 %v3063
      %v3275 = vpop.f32.mrb[0].mxu0
      %v3276 = vadd.f32 0.0, %v3275
      %v3277 = vpop.f32.mrb[0].mxu0
      %3278 = vmatprep.mubr.f32.mxu0 0.0
      %3279 = vmatmul.mubr.f32.gmra.mrb[0].mxu0 %v3066
      %v3280 = vpop.f32.mrb[0].mxu0
      %v3281 = vadd.f32 0.0, %v3280
      %v3282 = vpop.f32.mrb[0].mxu0
      %3283 = vmatprep.mubr.f32.mxu0 0.0
      %3284 = vmatmul.mubr.f32.gmra.mrb[0].mxu0 %v3069
      %v3285 = vpop.f32.mrb[0].mxu0
      %v3286 = vadd.f32 0.0, %v3285
      %v3287 = vpop.f32.mrb[0].mxu0
      %3288 = vmatprep.mubr.f32.mxu0 0.0
      %3289 = vmatmul.mubr.f32.gmra.mrb[0].mxu0 %v3072
      %v3290 = vpop.f32.mrb[0].mxu0
      %v3291 = vadd.f32 0.0, %v3290
      %v3292 = vpop.f32.mrb[0].mxu0
      %3293 = vmatprep.mubr.f32.mxu0 0.0
      %3294 = vmatmul.mubr.f32.gmra.mrb[0].mxu0 %v3075
      %v3295 = vpop.f32.mrb[0].mxu0
      %v3296 = vadd.f32 0.0, %v3295
      %v3297 = vpop.f32.mrb[0].mxu0
      %3298 = vmatprep.mubr.f32.mxu0 0.0
      %3299 = vmatmul.mubr.f32.gmra.mrb[0].mxu0 %v3078
      %v3300 = vpop.f32.mrb[0].mxu0
      %v3301 = vadd.f32 0.0, %v3300
      %v3302 = vpop.f32.mrb[0].mxu0
      %3303 = vmatprep.mubr.f32.mxu0 0.0
      %3304 = vmatmul.mubr.f32.gmra.mrb[0].mxu0 %v3081
      %v3305 = vpop.f32.mrb[0].mxu0
      %v3306 = vadd.f32 0.0, %v3305
      %v3307 = vpop.f32.mrb[0].mxu0
      %3308 = vmatprep.mubr.f32.mxu0 0.0
      %3309 = vmatmul.mubr.f32.gmra.mrb[0].mxu0 %v3084
      %v3310 = vpop.f32.mrb[0].mxu0
      %v3311 = vadd.f32 0.0, %v3310
      %v3312 = vpop.f32.mrb[0].mxu0
      %3313 = vdwg.mxu0
      %v3314 = vadd.f32 %v2923, %v3156
      %v3315 = vadd.f32 %v2924, %v3161
      %v3316 = vadd.f32 %v2925, %v3166
      %v3317 = vadd.f32 %v2926, %v3171
      %v3318 = vadd.f32 %v2927, %v3176
      %v3319 = vadd.f32 %v2928, %v3181
      %v3320 = vadd.f32 %v2929, %v3186
      %v3321 = vadd.f32 %v2930, %v3191
      %v3322 = vadd.f32 %v2931, %v3196
      %v3323 = vadd.f32 %v2932, %v3201
      %v3324 = vadd.f32 %v2933, %v3206
      %v3325 = vadd.f32 %v2934, %v3211
      %v3326 = vadd.f32 %v2935, %v3216
      %v3327 = vadd.f32 %v2936, %v3221
      %v3328 = vadd.f32 %v2937, %v3226
      %v3329 = vadd.f32 %v2938, %v3231
      %v3330 = vadd.f32 %v2939, %v3236
      %v3331 = vadd.f32 %v2940, %v3241
      %v3332 = vadd.f32 %v2941, %v3246
      %v3333 = vadd.f32 %v2942, %v3251
      %v3334 = vadd.f32 %v2943, %v3256
      %v3335 = vadd.f32 %v2944, %v3261
      %v3336 = vadd.f32 %v2945, %v3266
      %v3337 = vadd.f32 %v2946, %v3271
      %v3338 = vadd.f32 %v2947, %v3276
      %v3339 = vadd.f32 %v2948, %v3281
      %v3340 = vadd.f32 %v2949, %v3286
      %v3341 = vadd.f32 %v2950, %v3291
      %v3342 = vadd.f32 %v2951, %v3296
      %v3343 = vadd.f32 %v2952, %v3301
      %v3344 = vadd.f32 %v2953, %v3306
      %v3345 = vadd.f32 %v2954, %v3311
      %s3346 = scalar_lea.vmem [#allocation2], 32
      %v3347 = vld [vmem:[%s3346] sm:$0xff]
      %v3348 = vld [vmem:[%s3346 + $0x8] sm:$0xff]
      %v3349 = vld [vmem:[%s3346 + $0x10] sm:$0xff]
      %v3350 = vld [vmem:[%s3346 + $0x18] sm:$0xff]
      %v3351 = vld [vmem:[%s3346 + $0x20] sm:$0xff]
      %v3352 = vld [vmem:[%s3346 + $0x28] sm:$0xff]
      %v3353 = vld [vmem:[%s3346 + $0x30] sm:$0xff]
      %v3354 = vld [vmem:[%s3346 + $0x38] sm:$0xff]
      %v3355 = vld [vmem:[%s3346 + $0x40] sm:$0xff]
      %v3356 = vld [vmem:[%s3346 + $0x48] sm:$0xff]
      %v3357 = vld [vmem:[%s3346 + $0x50] sm:$0xff]
      %v3358 = vld [vmem:[%s3346 + $0x58] sm:$0xff]
      %v3359 = vld [vmem:[%s3346 + $0x60] sm:$0xff]
      %v3360 = vld [vmem:[%s3346 + $0x68] sm:$0xff]
      %v3361 = vld [vmem:[%s3346 + $0x70] sm:$0xff]
      %v3362 = vld [vmem:[%s3346 + $0x78] sm:$0xff]
      %v3363 = vld [vmem:[%s3346 + $0x80] sm:$0xff]
      %v3364 = vld [vmem:[%s3346 + $0x88] sm:$0xff]
      %v3365 = vld [vmem:[%s3346 + $0x90] sm:$0xff]
      %v3366 = vld [vmem:[%s3346 + $0x98] sm:$0xff]
      %v3367 = vld [vmem:[%s3346 + $0xa0] sm:$0xff]
      %v3368 = vld [vmem:[%s3346 + $0xa8] sm:$0xff]
      %v3369 = vld [vmem:[%s3346 + $0xb0] sm:$0xff]
      %v3370 = vld [vmem:[%s3346 + $0xb8] sm:$0xff]
      %v3371 = vld [vmem:[%s3346 + $0xc0] sm:$0xff]
      %v3372 = vld [vmem:[%s3346 + $0xc8] sm:$0xff]
      %v3373 = vld [vmem:[%s3346 + $0xd0] sm:$0xff]
      %v3374 = vld [vmem:[%s3346 + $0xd8] sm:$0xff]
      %v3375 = vld [vmem:[%s3346 + $0xe0] sm:$0xff]
      %v3376 = vld [vmem:[%s3346 + $0xe8] sm:$0xff]
      %v3377 = vld [vmem:[%s3346 + $0xf0] sm:$0xff]
      %v3378 = vld [vmem:[%s3346 + $0xf8] sm:$0xff]
      %s3379 = scalar_lea.vmem %s3, 28
      %v3380 = vld [vmem:[%s3379] sm:$0xf]
      %v3382 = vsel %vm445, %v3347, 0
      %v3385 = vsel %vm445, %v3348, 0
      %v3388 = vsel %vm445, %v3349, 0
      %v3391 = vsel %vm445, %v3350, 0
      %v3394 = vsel %vm445, %v3351, 0
      %v3397 = vsel %vm445, %v3352, 0
      %v3400 = vsel %vm445, %v3353, 0
      %v3403 = vsel %vm445, %v3354, 0
      %v3406 = vsel %vm445, %v3355, 0
      %v3409 = vsel %vm445, %v3356, 0
      %v3412 = vsel %vm445, %v3357, 0
      %v3415 = vsel %vm445, %v3358, 0
      %v3418 = vsel %vm445, %v3359, 0
      %v3421 = vsel %vm445, %v3360, 0
      %v3424 = vsel %vm445, %v3361, 0
      %v3427 = vsel %vm445, %v3362, 0
      %v3430 = vsel %vm445, %v3363, 0
      %v3433 = vsel %vm445, %v3364, 0
      %v3436 = vsel %vm445, %v3365, 0
      %v3439 = vsel %vm445, %v3366, 0
      %v3442 = vsel %vm445, %v3367, 0
      %v3445 = vsel %vm445, %v3368, 0
      %v3448 = vsel %vm445, %v3369, 0
      %v3451 = vsel %vm445, %v3370, 0
      %v3454 = vsel %vm445, %v3371, 0
      %v3457 = vsel %vm445, %v3372, 0
      %v3460 = vsel %vm445, %v3373, 0
      %v3463 = vsel %vm445, %v3374, 0
      %v3466 = vsel %vm445, %v3375, 0
      %v3469 = vsel %vm445, %v3376, 0
      %v3472 = vsel %vm445, %v3377, 0
      %v3475 = vsel %vm445, %v3378, 0
      %v3478 = vsel %vm840, %v3380, 0
      %3480 = vmatprep.subr.mxu0 0.0
      %3481 = vmatpush1.msra.mxu0 %v3478
      %3482 = vmatprep.subr.mxu0 0.0
      %3483 = vmatpush1.msra.mxu0 0.0
      %3484 = vmatprep.subr.mxu0 0.0
      %3485 = vmatpush1.msra.mxu0 0.0
      %3486 = vmatprep.subr.mxu0 0.0
      %3487 = vmatpush1.msra.mxu0 0.0
      %3488 = vmatprep.subr.mxu0 0.0
      %3489 = vmatpush1.msra.mxu0 0.0
      %3490 = vmatprep.subr.mxu0 0.0
      %3491 = vmatpush1.msra.mxu0 0.0
      %3492 = vmatprep.subr.mxu0 0.0
      %3493 = vmatpush1.msra.mxu0 0.0
      %3494 = vmatprep.subr.mxu0 0.0
      %3495 = vmatpush1.msra.mxu0 0.0
      %3496 = vmatprep.subr.mxu0 0.0
      %3497 = vmatpush1.msra.mxu0 0.0
      %3498 = vmatprep.subr.mxu0 0.0
      %3499 = vmatpush1.msra.mxu0 0.0
      %3500 = vmatprep.subr.mxu0 0.0
      %3501 = vmatpush1.msra.mxu0 0.0
      %3502 = vmatprep.subr.mxu0 0.0
      %3503 = vmatpush1.msra.mxu0 0.0
      %3504 = vmatprep.subr.mxu0 0.0
      %3505 = vmatpush1.msra.mxu0 0.0
      %3506 = vmatprep.subr.mxu0 0.0
      %3507 = vmatpush1.msra.mxu0 0.0
      %3508 = vmatprep.subr.mxu0 0.0
      %3509 = vmatpush1.msra.mxu0 0.0
      %3510 = vmatprep.subr.mxu0 0.0
      %3511 = vmatpush1.msra.mxu0 0.0
      %3512 = vmatprep.subr.mxu0 0.0
      %3513 = vmatpush1.msra.mxu0 0.0
      %3514 = vmatprep.subr.mxu0 0.0
      %3515 = vmatpush1.msra.mxu0 0.0
      %3516 = vmatprep.subr.mxu0 0.0
      %3517 = vmatpush1.msra.mxu0 0.0
      %3518 = vmatprep.subr.mxu0 0.0
      %3519 = vmatpush1.msra.mxu0 0.0
      %3520 = vmatprep.subr.mxu0 0.0
      %3521 = vmatpush1.msra.mxu0 0.0
      %3522 = vmatprep.subr.mxu0 0.0
      %3523 = vmatpush1.msra.mxu0 0.0
      %3524 = vmatprep.subr.mxu0 0.0
      %3525 = vmatpush1.msra.mxu0 0.0
      %3526 = vmatprep.subr.mxu0 0.0
      %3527 = vmatpush1.msra.mxu0 0.0
      %3528 = vmatprep.subr.mxu0 0.0
      %3529 = vmatpush1.msra.mxu0 0.0
      %3530 = vmatprep.subr.mxu0 0.0
      %3531 = vmatpush1.msra.mxu0 0.0
      %3532 = vmatprep.subr.mxu0 0.0
      %3533 = vmatpush1.msra.mxu0 0.0
      %3534 = vmatprep.subr.mxu0 0.0
      %3535 = vmatpush1.msra.mxu0 0.0
      %3536 = vmatprep.subr.mxu0 0.0
      %3537 = vmatpush1.msra.mxu0 0.0
      %3538 = vmatprep.subr.mxu0 0.0
      %3539 = vmatpush1.msra.mxu0 0.0
      %3540 = vmatprep.subr.mxu0 0.0
      %3541 = vmatpush1.msra.mxu0 0.0
      %3542 = vmatprep.subr.mxu0 0.0
      %3543 = vmatpush1.msra.mxu0 0.0
      %3544 = vmatprep.mubr.f32.mxu0 0.0
      %3545 = vmatmul.mubr.f32.gmra.mrb[0].mxu0 %v3382
      %v3546 = vpop.f32.mrb[0].mxu0
      %v3547 = vadd.f32 0.0, %v3546
      %v3548 = vpop.f32.mrb[0].mxu0
      %3549 = vmatprep.mubr.f32.mxu0 0.0
      %3550 = vmatmul.mubr.f32.gmra.mrb[0].mxu0 %v3385
      %v3551 = vpop.f32.mrb[0].mxu0
      %v3552 = vadd.f32 0.0, %v3551
      %v3553 = vpop.f32.mrb[0].mxu0
      %3554 = vmatprep.mubr.f32.mxu0 0.0
      %3555 = vmatmul.mubr.f32.gmra.mrb[0].mxu0 %v3388
      %v3556 = vpop.f32.mrb[0].mxu0
      %v3557 = vadd.f32 0.0, %v3556
      %v3558 = vpop.f32.mrb[0].mxu0
      %3559 = vmatprep.mubr.f32.mxu0 0.0
      %3560 = vmatmul.mubr.f32.gmra.mrb[0].mxu0 %v3391
      %v3561 = vpop.f32.mrb[0].mxu0
      %v3562 = vadd.f32 0.0, %v3561
      %v3563 = vpop.f32.mrb[0].mxu0
      %3564 = vmatprep.mubr.f32.mxu0 0.0
      %3565 = vmatmul.mubr.f32.gmra.mrb[0].mxu0 %v3394
      %v3566 = vpop.f32.mrb[0].mxu0
      %v3567 = vadd.f32 0.0, %v3566
      %v3568 = vpop.f32.mrb[0].mxu0
      %3569 = vmatprep.mubr.f32.mxu0 0.0
      %3570 = vmatmul.mubr.f32.gmra.mrb[0].mxu0 %v3397
      %v3571 = vpop.f32.mrb[0].mxu0
      %v3572 = vadd.f32 0.0, %v3571
      %v3573 = vpop.f32.mrb[0].mxu0
      %3574 = vmatprep.mubr.f32.mxu0 0.0
      %3575 = vmatmul.mubr.f32.gmra.mrb[0].mxu0 %v3400
      %v3576 = vpop.f32.mrb[0].mxu0
      %v3577 = vadd.f32 0.0, %v3576
      %v3578 = vpop.f32.mrb[0].mxu0
      %3579 = vmatprep.mubr.f32.mxu0 0.0
      %3580 = vmatmul.mubr.f32.gmra.mrb[0].mxu0 %v3403
      %v3581 = vpop.f32.mrb[0].mxu0
      %v3582 = vadd.f32 0.0, %v3581
      %v3583 = vpop.f32.mrb[0].mxu0
      %3584 = vmatprep.mubr.f32.mxu0 0.0
      %3585 = vmatmul.mubr.f32.gmra.mrb[0].mxu0 %v3406
      %v3586 = vpop.f32.mrb[0].mxu0
      %v3587 = vadd.f32 0.0, %v3586
      %v3588 = vpop.f32.mrb[0].mxu0
      %3589 = vmatprep.mubr.f32.mxu0 0.0
      %3590 = vmatmul.mubr.f32.gmra.mrb[0].mxu0 %v3409
      %v3591 = vpop.f32.mrb[0].mxu0
      %v3592 = vadd.f32 0.0, %v3591
      %v3593 = vpop.f32.mrb[0].mxu0
      %3594 = vmatprep.mubr.f32.mxu0 0.0
      %3595 = vmatmul.mubr.f32.gmra.mrb[0].mxu0 %v3412
      %v3596 = vpop.f32.mrb[0].mxu0
      %v3597 = vadd.f32 0.0, %v3596
      %v3598 = vpop.f32.mrb[0].mxu0
      %3599 = vmatprep.mubr.f32.mxu0 0.0
      %3600 = vmatmul.mubr.f32.gmra.mrb[0].mxu0 %v3415
      %v3601 = vpop.f32.mrb[0].mxu0
      %v3602 = vadd.f32 0.0, %v3601
      %v3603 = vpop.f32.mrb[0].mxu0
      %3604 = vmatprep.mubr.f32.mxu0 0.0
      %3605 = vmatmul.mubr.f32.gmra.mrb[0].mxu0 %v3418
      %v3606 = vpop.f32.mrb[0].mxu0
      %v3607 = vadd.f32 0.0, %v3606
      %v3608 = vpop.f32.mrb[0].mxu0
      %3609 = vmatprep.mubr.f32.mxu0 0.0
      %3610 = vmatmul.mubr.f32.gmra.mrb[0].mxu0 %v3421
      %v3611 = vpop.f32.mrb[0].mxu0
      %v3612 = vadd.f32 0.0, %v3611
      %v3613 = vpop.f32.mrb[0].mxu0
      %3614 = vmatprep.mubr.f32.mxu0 0.0
      %3615 = vmatmul.mubr.f32.gmra.mrb[0].mxu0 %v3424
      %v3616 = vpop.f32.mrb[0].mxu0
      %v3617 = vadd.f32 0.0, %v3616
      %v3618 = vpop.f32.mrb[0].mxu0
      %3619 = vmatprep.mubr.f32.mxu0 0.0
      %3620 = vmatmul.mubr.f32.gmra.mrb[0].mxu0 %v3427
      %v3621 = vpop.f32.mrb[0].mxu0
      %v3622 = vadd.f32 0.0, %v3621
      %v3623 = vpop.f32.mrb[0].mxu0
      %3624 = vmatprep.mubr.f32.mxu0 0.0
      %3625 = vmatmul.mubr.f32.gmra.mrb[0].mxu0 %v3430
      %v3626 = vpop.f32.mrb[0].mxu0
      %v3627 = vadd.f32 0.0, %v3626
      %v3628 = vpop.f32.mrb[0].mxu0
      %3629 = vmatprep.mubr.f32.mxu0 0.0
      %3630 = vmatmul.mubr.f32.gmra.mrb[0].mxu0 %v3433
      %v3631 = vpop.f32.mrb[0].mxu0
      %v3632 = vadd.f32 0.0, %v3631
      %v3633 = vpop.f32.mrb[0].mxu0
      %3634 = vmatprep.mubr.f32.mxu0 0.0
      %3635 = vmatmul.mubr.f32.gmra.mrb[0].mxu0 %v3436
      %v3636 = vpop.f32.mrb[0].mxu0
      %v3637 = vadd.f32 0.0, %v3636
      %v3638 = vpop.f32.mrb[0].mxu0
      %3639 = vmatprep.mubr.f32.mxu0 0.0
      %3640 = vmatmul.mubr.f32.gmra.mrb[0].mxu0 %v3439
      %v3641 = vpop.f32.mrb[0].mxu0
      %v3642 = vadd.f32 0.0, %v3641
      %v3643 = vpop.f32.mrb[0].mxu0
      %3644 = vmatprep.mubr.f32.mxu0 0.0
      %3645 = vmatmul.mubr.f32.gmra.mrb[0].mxu0 %v3442
      %v3646 = vpop.f32.mrb[0].mxu0
      %v3647 = vadd.f32 0.0, %v3646
      %v3648 = vpop.f32.mrb[0].mxu0
      %3649 = vmatprep.mubr.f32.mxu0 0.0
      %3650 = vmatmul.mubr.f32.gmra.mrb[0].mxu0 %v3445
      %v3651 = vpop.f32.mrb[0].mxu0
      %v3652 = vadd.f32 0.0, %v3651
      %v3653 = vpop.f32.mrb[0].mxu0
      %3654 = vmatprep.mubr.f32.mxu0 0.0
      %3655 = vmatmul.mubr.f32.gmra.mrb[0].mxu0 %v3448
      %v3656 = vpop.f32.mrb[0].mxu0
      %v3657 = vadd.f32 0.0, %v3656
      %v3658 = vpop.f32.mrb[0].mxu0
      %3659 = vmatprep.mubr.f32.mxu0 0.0
      %3660 = vmatmul.mubr.f32.gmra.mrb[0].mxu0 %v3451
      %v3661 = vpop.f32.mrb[0].mxu0
      %v3662 = vadd.f32 0.0, %v3661
      %v3663 = vpop.f32.mrb[0].mxu0
      %3664 = vmatprep.mubr.f32.mxu0 0.0
      %3665 = vmatmul.mubr.f32.gmra.mrb[0].mxu0 %v3454
      %v3666 = vpop.f32.mrb[0].mxu0
      %v3667 = vadd.f32 0.0, %v3666
      %v3668 = vpop.f32.mrb[0].mxu0
      %3669 = vmatprep.mubr.f32.mxu0 0.0
      %3670 = vmatmul.mubr.f32.gmra.mrb[0].mxu0 %v3457
      %v3671 = vpop.f32.mrb[0].mxu0
      %v3672 = vadd.f32 0.0, %v3671
      %v3673 = vpop.f32.mrb[0].mxu0
      %3674 = vmatprep.mubr.f32.mxu0 0.0
      %3675 = vmatmul.mubr.f32.gmra.mrb[0].mxu0 %v3460
      %v3676 = vpop.f32.mrb[0].mxu0
      %v3677 = vadd.f32 0.0, %v3676
      %v3678 = vpop.f32.mrb[0].mxu0
      %3679 = vmatprep.mubr.f32.mxu0 0.0
      %3680 = vmatmul.mubr.f32.gmra.mrb[0].mxu0 %v3463
      %v3681 = vpop.f32.mrb[0].mxu0
      %v3682 = vadd.f32 0.0, %v3681
      %v3683 = vpop.f32.mrb[0].mxu0
      %3684 = vmatprep.mubr.f32.mxu0 0.0
      %3685 = vmatmul.mubr.f32.gmra.mrb[0].mxu0 %v3466
      %v3686 = vpop.f32.mrb[0].mxu0
      %v3687 = vadd.f32 0.0, %v3686
      %v3688 = vpop.f32.mrb[0].mxu0
      %3689 = vmatprep.mubr.f32.mxu0 0.0
      %3690 = vmatmul.mubr.f32.gmra.mrb[0].mxu0 %v3469
      %v3691 = vpop.f32.mrb[0].mxu0
      %v3692 = vadd.f32 0.0, %v3691
      %v3693 = vpop.f32.mrb[0].mxu0
      %3694 = vmatprep.mubr.f32.mxu0 0.0
      %3695 = vmatmul.mubr.f32.gmra.mrb[0].mxu0 %v3472
      %v3696 = vpop.f32.mrb[0].mxu0
      %v3697 = vadd.f32 0.0, %v3696
      %v3698 = vpop.f32.mrb[0].mxu0
      %3699 = vmatprep.mubr.f32.mxu0 0.0
      %3700 = vmatmul.mubr.f32.gmra.mrb[0].mxu0 %v3475
      %v3701 = vpop.f32.mrb[0].mxu0
      %v3702 = vadd.f32 0.0, %v3701
      %v3703 = vpop.f32.mrb[0].mxu0
      %3704 = vdwg.mxu0
      %v3705 = vadd.f32 %v3314, %v3547
      %v3706 = vadd.f32 %v3315, %v3552
      %v3707 = vadd.f32 %v3316, %v3557
      %v3708 = vadd.f32 %v3317, %v3562
      %v3709 = vadd.f32 %v3318, %v3567
      %v3710 = vadd.f32 %v3319, %v3572
      %v3711 = vadd.f32 %v3320, %v3577
      %v3712 = vadd.f32 %v3321, %v3582
      %v3713 = vadd.f32 %v3322, %v3587
      %v3714 = vadd.f32 %v3323, %v3592
      %v3715 = vadd.f32 %v3324, %v3597
      %v3716 = vadd.f32 %v3325, %v3602
      %v3717 = vadd.f32 %v3326, %v3607
      %v3718 = vadd.f32 %v3327, %v3612
      %v3719 = vadd.f32 %v3328, %v3617
      %v3720 = vadd.f32 %v3329, %v3622
      %v3721 = vadd.f32 %v3330, %v3627
      %v3722 = vadd.f32 %v3331, %v3632
      %v3723 = vadd.f32 %v3332, %v3637
      %v3724 = vadd.f32 %v3333, %v3642
      %v3725 = vadd.f32 %v3334, %v3647
      %v3726 = vadd.f32 %v3335, %v3652
      %v3727 = vadd.f32 %v3336, %v3657
      %v3728 = vadd.f32 %v3337, %v3662
      %v3729 = vadd.f32 %v3338, %v3667
      %v3730 = vadd.f32 %v3339, %v3672
      %v3731 = vadd.f32 %v3340, %v3677
      %v3732 = vadd.f32 %v3341, %v3682
      %v3733 = vadd.f32 %v3342, %v3687
      %v3734 = vadd.f32 %v3343, %v3692
      %v3735 = vadd.f32 %v3344, %v3697
      %v3736 = vadd.f32 %v3345, %v3702
      %s3737 = scalar_lea.vmem [#allocation4], 32
      %v3738 = vld [vmem:[%s3737] sm:$0xff]
      %v3739 = vld [vmem:[%s3737 + $0x8] sm:$0xff]
      %v3740 = vld [vmem:[%s3737 + $0x10] sm:$0xff]
      %v3741 = vld [vmem:[%s3737 + $0x18] sm:$0xff]
      %v3742 = vld [vmem:[%s3737 + $0x20] sm:$0xff]
      %v3743 = vld [vmem:[%s3737 + $0x28] sm:$0xff]
      %v3744 = vld [vmem:[%s3737 + $0x30] sm:$0xff]
      %v3745 = vld [vmem:[%s3737 + $0x38] sm:$0xff]
      %v3746 = vld [vmem:[%s3737 + $0x40] sm:$0xff]
      %v3747 = vld [vmem:[%s3737 + $0x48] sm:$0xff]
      %v3748 = vld [vmem:[%s3737 + $0x50] sm:$0xff]
      %v3749 = vld [vmem:[%s3737 + $0x58] sm:$0xff]
      %v3750 = vld [vmem:[%s3737 + $0x60] sm:$0xff]
      %v3751 = vld [vmem:[%s3737 + $0x68] sm:$0xff]
      %v3752 = vld [vmem:[%s3737 + $0x70] sm:$0xff]
      %v3753 = vld [vmem:[%s3737 + $0x78] sm:$0xff]
      %v3754 = vld [vmem:[%s3737 + $0x80] sm:$0xff]
      %v3755 = vld [vmem:[%s3737 + $0x88] sm:$0xff]
      %v3756 = vld [vmem:[%s3737 + $0x90] sm:$0xff]
      %v3757 = vld [vmem:[%s3737 + $0x98] sm:$0xff]
      %v3758 = vld [vmem:[%s3737 + $0xa0] sm:$0xff]
      %v3759 = vld [vmem:[%s3737 + $0xa8] sm:$0xff]
      %v3760 = vld [vmem:[%s3737 + $0xb0] sm:$0xff]
      %v3761 = vld [vmem:[%s3737 + $0xb8] sm:$0xff]
      %v3762 = vld [vmem:[%s3737 + $0xc0] sm:$0xff]
      %v3763 = vld [vmem:[%s3737 + $0xc8] sm:$0xff]
      %v3764 = vld [vmem:[%s3737 + $0xd0] sm:$0xff]
      %v3765 = vld [vmem:[%s3737 + $0xd8] sm:$0xff]
      %v3766 = vld [vmem:[%s3737 + $0xe0] sm:$0xff]
      %v3767 = vld [vmem:[%s3737 + $0xe8] sm:$0xff]
      %v3768 = vld [vmem:[%s3737 + $0xf0] sm:$0xff]
      %v3769 = vld [vmem:[%s3737 + $0xf8] sm:$0xff]
      %s3770 = scalar_lea.vmem %s3, 32
      %v3771 = vld [vmem:[%s3770] sm:$0xf]
      %v3773 = vsel %vm445, %v3738, 0
      %v3776 = vsel %vm445, %v3739, 0
      %v3779 = vsel %vm445, %v3740, 0
      %v3782 = vsel %vm445, %v3741, 0
      %v3785 = vsel %vm445, %v3742, 0
      %v3788 = vsel %vm445, %v3743, 0
      %v3791 = vsel %vm445, %v3744, 0
      %v3794 = vsel %vm445, %v3745, 0
      %v3797 = vsel %vm445, %v3746, 0
      %v3800 = vsel %vm445, %v3747, 0
      %v3803 = vsel %vm445, %v3748, 0
      %v3806 = vsel %vm445, %v3749, 0
      %v3809 = vsel %vm445, %v3750, 0
      %v3812 = vsel %vm445, %v3751, 0
      %v3815 = vsel %vm445, %v3752, 0
      %v3818 = vsel %vm445, %v3753, 0
      %v3821 = vsel %vm445, %v3754, 0
      %v3824 = vsel %vm445, %v3755, 0
      %v3827 = vsel %vm445, %v3756, 0
      %v3830 = vsel %vm445, %v3757, 0
      %v3833 = vsel %vm445, %v3758, 0
      %v3836 = vsel %vm445, %v3759, 0
      %v3839 = vsel %vm445, %v3760, 0
      %v3842 = vsel %vm445, %v3761, 0
      %v3845 = vsel %vm445, %v3762, 0
      %v3848 = vsel %vm445, %v3763, 0
      %v3851 = vsel %vm445, %v3764, 0
      %v3854 = vsel %vm445, %v3765, 0
      %v3857 = vsel %vm445, %v3766, 0
      %v3860 = vsel %vm445, %v3767, 0
      %v3863 = vsel %vm445, %v3768, 0
      %v3866 = vsel %vm445, %v3769, 0
      %v3869 = vsel %vm840, %v3771, 0
      %3871 = vmatprep.subr.mxu0 0.0
      %3872 = vmatpush1.msra.mxu0 %v3869
      %3873 = vmatprep.subr.mxu0 0.0
      %3874 = vmatpush1.msra.mxu0 0.0
      %3875 = vmatprep.subr.mxu0 0.0
      %3876 = vmatpush1.msra.mxu0 0.0
      %3877 = vmatprep.subr.mxu0 0.0
      %3878 = vmatpush1.msra.mxu0 0.0
      %3879 = vmatprep.subr.mxu0 0.0
      %3880 = vmatpush1.msra.mxu0 0.0
      %3881 = vmatprep.subr.mxu0 0.0
      %3882 = vmatpush1.msra.mxu0 0.0
      %3883 = vmatprep.subr.mxu0 0.0
      %3884 = vmatpush1.msra.mxu0 0.0
      %3885 = vmatprep.subr.mxu0 0.0
      %3886 = vmatpush1.msra.mxu0 0.0
      %3887 = vmatprep.subr.mxu0 0.0
      %3888 = vmatpush1.msra.mxu0 0.0
      %3889 = vmatprep.subr.mxu0 0.0
      %3890 = vmatpush1.msra.mxu0 0.0
      %3891 = vmatprep.subr.mxu0 0.0
      %3892 = vmatpush1.msra.mxu0 0.0
      %3893 = vmatprep.subr.mxu0 0.0
      %3894 = vmatpush1.msra.mxu0 0.0
      %3895 = vmatprep.subr.mxu0 0.0
      %3896 = vmatpush1.msra.mxu0 0.0
      %3897 = vmatprep.subr.mxu0 0.0
      %3898 = vmatpush1.msra.mxu0 0.0
      %3899 = vmatprep.subr.mxu0 0.0
      %3900 = vmatpush1.msra.mxu0 0.0
      %3901 = vmatprep.subr.mxu0 0.0
      %3902 = vmatpush1.msra.mxu0 0.0
      %3903 = vmatprep.subr.mxu0 0.0
      %3904 = vmatpush1.msra.mxu0 0.0
      %3905 = vmatprep.subr.mxu0 0.0
      %3906 = vmatpush1.msra.mxu0 0.0
      %3907 = vmatprep.subr.mxu0 0.0
      %3908 = vmatpush1.msra.mxu0 0.0
      %3909 = vmatprep.subr.mxu0 0.0
      %3910 = vmatpush1.msra.mxu0 0.0
      %3911 = vmatprep.subr.mxu0 0.0
      %3912 = vmatpush1.msra.mxu0 0.0
      %3913 = vmatprep.subr.mxu0 0.0
      %3914 = vmatpush1.msra.mxu0 0.0
      %3915 = vmatprep.subr.mxu0 0.0
      %3916 = vmatpush1.msra.mxu0 0.0
      %3917 = vmatprep.subr.mxu0 0.0
      %3918 = vmatpush1.msra.mxu0 0.0
      %3919 = vmatprep.subr.mxu0 0.0
      %3920 = vmatpush1.msra.mxu0 0.0
      %3921 = vmatprep.subr.mxu0 0.0
      %3922 = vmatpush1.msra.mxu0 0.0
      %3923 = vmatprep.subr.mxu0 0.0
      %3924 = vmatpush1.msra.mxu0 0.0
      %3925 = vmatprep.subr.mxu0 0.0
      %3926 = vmatpush1.msra.mxu0 0.0
      %3927 = vmatprep.subr.mxu0 0.0
      %3928 = vmatpush1.msra.mxu0 0.0
      %3929 = vmatprep.subr.mxu0 0.0
      %3930 = vmatpush1.msra.mxu0 0.0
      %3931 = vmatprep.subr.mxu0 0.0
      %3932 = vmatpush1.msra.mxu0 0.0
      %3933 = vmatprep.subr.mxu0 0.0
      %3934 = vmatpush1.msra.mxu0 0.0
      %3935 = vmatprep.mubr.f32.mxu0 0.0
      %3936 = vmatmul.mubr.f32.gmra.mrb[0].mxu0 %v3773
      %v3937 = vpop.f32.mrb[0].mxu0
      %v3938 = vadd.f32 0.0, %v3937
      %v3939 = vpop.f32.mrb[0].mxu0
      %3940 = vmatprep.mubr.f32.mxu0 0.0
      %3941 = vmatmul.mubr.f32.gmra.mrb[0].mxu0 %v3776
      %v3942 = vpop.f32.mrb[0].mxu0
      %v3943 = vadd.f32 0.0, %v3942
      %v3944 = vpop.f32.mrb[0].mxu0
      %3945 = vmatprep.mubr.f32.mxu0 0.0
      %3946 = vmatmul.mubr.f32.gmra.mrb[0].mxu0 %v3779
      %v3947 = vpop.f32.mrb[0].mxu0
      %v3948 = vadd.f32 0.0, %v3947
      %v3949 = vpop.f32.mrb[0].mxu0
      %3950 = vmatprep.mubr.f32.mxu0 0.0
      %3951 = vmatmul.mubr.f32.gmra.mrb[0].mxu0 %v3782
      %v3952 = vpop.f32.mrb[0].mxu0
      %v3953 = vadd.f32 0.0, %v3952
      %v3954 = vpop.f32.mrb[0].mxu0
      %3955 = vmatprep.mubr.f32.mxu0 0.0
      %3956 = vmatmul.mubr.f32.gmra.mrb[0].mxu0 %v3785
      %v3957 = vpop.f32.mrb[0].mxu0
      %v3958 = vadd.f32 0.0, %v3957
      %v3959 = vpop.f32.mrb[0].mxu0
      %3960 = vmatprep.mubr.f32.mxu0 0.0
      %3961 = vmatmul.mubr.f32.gmra.mrb[0].mxu0 %v3788
      %v3962 = vpop.f32.mrb[0].mxu0
      %v3963 = vadd.f32 0.0, %v3962
      %v3964 = vpop.f32.mrb[0].mxu0
      %3965 = vmatprep.mubr.f32.mxu0 0.0
      %3966 = vmatmul.mubr.f32.gmra.mrb[0].mxu0 %v3791
      %v3967 = vpop.f32.mrb[0].mxu0
      %v3968 = vadd.f32 0.0, %v3967
      %v3969 = vpop.f32.mrb[0].mxu0
      %3970 = vmatprep.mubr.f32.mxu0 0.0
      %3971 = vmatmul.mubr.f32.gmra.mrb[0].mxu0 %v3794
      %v3972 = vpop.f32.mrb[0].mxu0
      %v3973 = vadd.f32 0.0, %v3972
      %v3974 = vpop.f32.mrb[0].mxu0
      %3975 = vmatprep.mubr.f32.mxu0 0.0
      %3976 = vmatmul.mubr.f32.gmra.mrb[0].mxu0 %v3797
      %v3977 = vpop.f32.mrb[0].mxu0
      %v3978 = vadd.f32 0.0, %v3977
      %v3979 = vpop.f32.mrb[0].mxu0
      %3980 = vmatprep.mubr.f32.mxu0 0.0
      %3981 = vmatmul.mubr.f32.gmra.mrb[0].mxu0 %v3800
      %v3982 = vpop.f32.mrb[0].mxu0
      %v3983 = vadd.f32 0.0, %v3982
      %v3984 = vpop.f32.mrb[0].mxu0
      %3985 = vmatprep.mubr.f32.mxu0 0.0
      %3986 = vmatmul.mubr.f32.gmra.mrb[0].mxu0 %v3803
      %v3987 = vpop.f32.mrb[0].mxu0
      %v3988 = vadd.f32 0.0, %v3987
      %v3989 = vpop.f32.mrb[0].mxu0
      %3990 = vmatprep.mubr.f32.mxu0 0.0
      %3991 = vmatmul.mubr.f32.gmra.mrb[0].mxu0 %v3806
      %v3992 = vpop.f32.mrb[0].mxu0
      %v3993 = vadd.f32 0.0, %v3992
      %v3994 = vpop.f32.mrb[0].mxu0
      %3995 = vmatprep.mubr.f32.mxu0 0.0
      %3996 = vmatmul.mubr.f32.gmra.mrb[0].mxu0 %v3809
      %v3997 = vpop.f32.mrb[0].mxu0
      %v3998 = vadd.f32 0.0, %v3997
      %v3999 = vpop.f32.mrb[0].mxu0
      %4000 = vmatprep.mubr.f32.mxu0 0.0
      %4001 = vmatmul.mubr.f32.gmra.mrb[0].mxu0 %v3812
      %v4002 = vpop.f32.mrb[0].mxu0
      %v4003 = vadd.f32 0.0, %v4002
      %v4004 = vpop.f32.mrb[0].mxu0
      %4005 = vmatprep.mubr.f32.mxu0 0.0
      %4006 = vmatmul.mubr.f32.gmra.mrb[0].mxu0 %v3815
      %v4007 = vpop.f32.mrb[0].mxu0
      %v4008 = vadd.f32 0.0, %v4007
      %v4009 = vpop.f32.mrb[0].mxu0
      %4010 = vmatprep.mubr.f32.mxu0 0.0
      %4011 = vmatmul.mubr.f32.gmra.mrb[0].mxu0 %v3818
      %v4012 = vpop.f32.mrb[0].mxu0
      %v4013 = vadd.f32 0.0, %v4012
      %v4014 = vpop.f32.mrb[0].mxu0
      %4015 = vmatprep.mubr.f32.mxu0 0.0
      %4016 = vmatmul.mubr.f32.gmra.mrb[0].mxu0 %v3821
      %v4017 = vpop.f32.mrb[0].mxu0
      %v4018 = vadd.f32 0.0, %v4017
      %v4019 = vpop.f32.mrb[0].mxu0
      %4020 = vmatprep.mubr.f32.mxu0 0.0
      %4021 = vmatmul.mubr.f32.gmra.mrb[0].mxu0 %v3824
      %v4022 = vpop.f32.mrb[0].mxu0
      %v4023 = vadd.f32 0.0, %v4022
      %v4024 = vpop.f32.mrb[0].mxu0
      %4025 = vmatprep.mubr.f32.mxu0 0.0
      %4026 = vmatmul.mubr.f32.gmra.mrb[0].mxu0 %v3827
      %v4027 = vpop.f32.mrb[0].mxu0
      %v4028 = vadd.f32 0.0, %v4027
      %v4029 = vpop.f32.mrb[0].mxu0
      %4030 = vmatprep.mubr.f32.mxu0 0.0
      %4031 = vmatmul.mubr.f32.gmra.mrb[0].mxu0 %v3830
      %v4032 = vpop.f32.mrb[0].mxu0
      %v4033 = vadd.f32 0.0, %v4032
      %v4034 = vpop.f32.mrb[0].mxu0
      %4035 = vmatprep.mubr.f32.mxu0 0.0
      %4036 = vmatmul.mubr.f32.gmra.mrb[0].mxu0 %v3833
      %v4037 = vpop.f32.mrb[0].mxu0
      %v4038 = vadd.f32 0.0, %v4037
      %v4039 = vpop.f32.mrb[0].mxu0
      %4040 = vmatprep.mubr.f32.mxu0 0.0
      %4041 = vmatmul.mubr.f32.gmra.mrb[0].mxu0 %v3836
      %v4042 = vpop.f32.mrb[0].mxu0
      %v4043 = vadd.f32 0.0, %v4042
      %v4044 = vpop.f32.mrb[0].mxu0
      %4045 = vmatprep.mubr.f32.mxu0 0.0
      %4046 = vmatmul.mubr.f32.gmra.mrb[0].mxu0 %v3839
      %v4047 = vpop.f32.mrb[0].mxu0
      %v4048 = vadd.f32 0.0, %v4047
      %v4049 = vpop.f32.mrb[0].mxu0
      %4050 = vmatprep.mubr.f32.mxu0 0.0
      %4051 = vmatmul.mubr.f32.gmra.mrb[0].mxu0 %v3842
      %v4052 = vpop.f32.mrb[0].mxu0
      %v4053 = vadd.f32 0.0, %v4052
      %v4054 = vpop.f32.mrb[0].mxu0
      %4055 = vmatprep.mubr.f32.mxu0 0.0
      %4056 = vmatmul.mubr.f32.gmra.mrb[0].mxu0 %v3845
      %v4057 = vpop.f32.mrb[0].mxu0
      %v4058 = vadd.f32 0.0, %v4057
      %v4059 = vpop.f32.mrb[0].mxu0
      %4060 = vmatprep.mubr.f32.mxu0 0.0
      %4061 = vmatmul.mubr.f32.gmra.mrb[0].mxu0 %v3848
      %v4062 = vpop.f32.mrb[0].mxu0
      %v4063 = vadd.f32 0.0, %v4062
      %v4064 = vpop.f32.mrb[0].mxu0
      %4065 = vmatprep.mubr.f32.mxu0 0.0
      %4066 = vmatmul.mubr.f32.gmra.mrb[0].mxu0 %v3851
      %v4067 = vpop.f32.mrb[0].mxu0
      %v4068 = vadd.f32 0.0, %v4067
      %v4069 = vpop.f32.mrb[0].mxu0
      %4070 = vmatprep.mubr.f32.mxu0 0.0
      %4071 = vmatmul.mubr.f32.gmra.mrb[0].mxu0 %v3854
      %v4072 = vpop.f32.mrb[0].mxu0
      %v4073 = vadd.f32 0.0, %v4072
      %v4074 = vpop.f32.mrb[0].mxu0
      %4075 = vmatprep.mubr.f32.mxu0 0.0
      %4076 = vmatmul.mubr.f32.gmra.mrb[0].mxu0 %v3857
      %v4077 = vpop.f32.mrb[0].mxu0
      %v4078 = vadd.f32 0.0, %v4077
      %v4079 = vpop.f32.mrb[0].mxu0
      %4080 = vmatprep.mubr.f32.mxu0 0.0
      %4081 = vmatmul.mubr.f32.gmra.mrb[0].mxu0 %v3860
      %v4082 = vpop.f32.mrb[0].mxu0
      %v4083 = vadd.f32 0.0, %v4082
      %v4084 = vpop.f32.mrb[0].mxu0
      %4085 = vmatprep.mubr.f32.mxu0 0.0
      %4086 = vmatmul.mubr.f32.gmra.mrb[0].mxu0 %v3863
      %v4087 = vpop.f32.mrb[0].mxu0
      %v4088 = vadd.f32 0.0, %v4087
      %v4089 = vpop.f32.mrb[0].mxu0
      %4090 = vmatprep.mubr.f32.mxu0 0.0
      %4091 = vmatmul.mubr.f32.gmra.mrb[0].mxu0 %v3866
      %v4092 = vpop.f32.mrb[0].mxu0
      %v4093 = vadd.f32 0.0, %v4092
      %v4094 = vpop.f32.mrb[0].mxu0
      %4095 = vdwg.mxu0
      %v4096 = vadd.f32 %v3705, %v3938
      %v4097 = vadd.f32 %v3706, %v3943
      %v4098 = vadd.f32 %v3707, %v3948
      %v4099 = vadd.f32 %v3708, %v3953
      %v4100 = vadd.f32 %v3709, %v3958
      %v4101 = vadd.f32 %v3710, %v3963
      %v4102 = vadd.f32 %v3711, %v3968
      %v4103 = vadd.f32 %v3712, %v3973
      %v4104 = vadd.f32 %v3713, %v3978
      %v4105 = vadd.f32 %v3714, %v3983
      %v4106 = vadd.f32 %v3715, %v3988
      %v4107 = vadd.f32 %v3716, %v3993
      %v4108 = vadd.f32 %v3717, %v3998
      %v4109 = vadd.f32 %v3718, %v4003
      %v4110 = vadd.f32 %v3719, %v4008
      %v4111 = vadd.f32 %v3720, %v4013
      %v4112 = vadd.f32 %v3721, %v4018
      %v4113 = vadd.f32 %v3722, %v4023
      %v4114 = vadd.f32 %v3723, %v4028
      %v4115 = vadd.f32 %v3724, %v4033
      %v4116 = vadd.f32 %v3725, %v4038
      %v4117 = vadd.f32 %v3726, %v4043
      %v4118 = vadd.f32 %v3727, %v4048
      %v4119 = vadd.f32 %v3728, %v4053
      %v4120 = vadd.f32 %v3729, %v4058
      %v4121 = vadd.f32 %v3730, %v4063
      %v4122 = vadd.f32 %v3731, %v4068
      %v4123 = vadd.f32 %v3732, %v4073
      %v4124 = vadd.f32 %v3733, %v4078
      %v4125 = vadd.f32 %v3734, %v4083
      %v4126 = vadd.f32 %v3735, %v4088
      %v4127 = vadd.f32 %v3736, %v4093
      %v4128 = vsel %vm445, %v4096, 0.0
      %v4129 = vsel %vm445, %v4097, 0.0
      %v4130 = vadd.f32 %v4128, %v4129
      %v4131 = vsel %vm445, %v4098, 0.0
      %v4132 = vadd.f32 %v4130, %v4131
      %v4133 = vsel %vm445, %v4099, 0.0
      %v4134 = vadd.f32 %v4132, %v4133
      %v4135 = vsel %vm445, %v4100, 0.0
      %v4136 = vadd.f32 %v4134, %v4135
      %v4137 = vsel %vm445, %v4101, 0.0
      %v4138 = vadd.f32 %v4136, %v4137
      %v4139 = vsel %vm445, %v4102, 0.0
      %v4140 = vadd.f32 %v4138, %v4139
      %v4141 = vsel %vm445, %v4103, 0.0
      %v4142 = vadd.f32 %v4140, %v4141
      %v4143 = vsel %vm445, %v4104, 0.0
      %v4144 = vadd.f32 %v4142, %v4143
      %v4145 = vsel %vm445, %v4105, 0.0
      %v4146 = vadd.f32 %v4144, %v4145
      %v4147 = vsel %vm445, %v4106, 0.0
      %v4148 = vadd.f32 %v4146, %v4147
      %v4149 = vsel %vm445, %v4107, 0.0
      %v4150 = vadd.f32 %v4148, %v4149
      %v4151 = vsel %vm445, %v4108, 0.0
      %v4152 = vadd.f32 %v4150, %v4151
      %v4153 = vsel %vm445, %v4109, 0.0
      %v4154 = vadd.f32 %v4152, %v4153
      %v4155 = vsel %vm445, %v4110, 0.0
      %v4156 = vadd.f32 %v4154, %v4155
      %v4157 = vsel %vm445, %v4111, 0.0
      %v4158 = vadd.f32 %v4156, %v4157
      %v4159 = vsel %vm445, %v4112, 0.0
      %v4160 = vadd.f32 %v4158, %v4159
      %v4161 = vsel %vm445, %v4113, 0.0
      %v4162 = vadd.f32 %v4160, %v4161
      %v4163 = vsel %vm445, %v4114, 0.0
      %v4164 = vadd.f32 %v4162, %v4163
      %v4165 = vsel %vm445, %v4115, 0.0
      %v4166 = vadd.f32 %v4164, %v4165
      %v4167 = vsel %vm445, %v4116, 0.0
      %v4168 = vadd.f32 %v4166, %v4167
      %v4169 = vsel %vm445, %v4117, 0.0
      %v4170 = vadd.f32 %v4168, %v4169
      %v4171 = vsel %vm445, %v4118, 0.0
      %v4172 = vadd.f32 %v4170, %v4171
      %v4173 = vsel %vm445, %v4119, 0.0
      %v4174 = vadd.f32 %v4172, %v4173
      %v4175 = vsel %vm445, %v4120, 0.0
      %v4176 = vadd.f32 %v4174, %v4175
      %v4177 = vsel %vm445, %v4121, 0.0
      %v4178 = vadd.f32 %v4176, %v4177
      %v4179 = vsel %vm445, %v4122, 0.0
      %v4180 = vadd.f32 %v4178, %v4179
      %v4181 = vsel %vm445, %v4123, 0.0
      %v4182 = vadd.f32 %v4180, %v4181
      %v4183 = vsel %vm445, %v4124, 0.0
      %v4184 = vadd.f32 %v4182, %v4183
      %v4185 = vsel %vm445, %v4125, 0.0
      %v4186 = vadd.f32 %v4184, %v4185
      %v4187 = vsel %vm445, %v4126, 0.0
      %v4188 = vadd.f32 %v4186, %v4187
      %v4189 = vsel %vm445, %v4127, 0.0
      %v4190 = vadd.f32 %v4188, %v4189
      %v4191 = vrot.slane %v4190, 4
      %v4192 = vadd.f32 %v4190, %v4191
      %v4193 = vrot.slane %v4192, 2
      %v4194 = vadd.f32 %v4192, %v4193
      %v4195 = vrot.slane %v4194, 1
      %v4196 = vadd.f32 %v4194, %v4195
      %v4197 = vmul.f32 %v4096, %v4096
      %v4198 = vmul.f32 %v4097, %v4097
      %v4199 = vmul.f32 %v4098, %v4098
      %v4200 = vmul.f32 %v4099, %v4099
      %v4201 = vmul.f32 %v4100, %v4100
      %v4202 = vmul.f32 %v4101, %v4101
      %v4203 = vmul.f32 %v4102, %v4102
      %v4204 = vmul.f32 %v4103, %v4103
      %v4205 = vmul.f32 %v4104, %v4104
      %v4206 = vmul.f32 %v4105, %v4105
      %v4207 = vmul.f32 %v4106, %v4106
      %v4208 = vmul.f32 %v4107, %v4107
      %v4209 = vmul.f32 %v4108, %v4108
      %v4210 = vmul.f32 %v4109, %v4109
      %v4211 = vmul.f32 %v4110, %v4110
      %v4212 = vmul.f32 %v4111, %v4111
      %v4213 = vmul.f32 %v4112, %v4112
      %v4214 = vmul.f32 %v4113, %v4113
      %v4215 = vmul.f32 %v4114, %v4114
      %v4216 = vmul.f32 %v4115, %v4115
      %v4217 = vmul.f32 %v4116, %v4116
      %v4218 = vmul.f32 %v4117, %v4117
      %v4219 = vmul.f32 %v4118, %v4118
      %v4220 = vmul.f32 %v4119, %v4119
      %v4221 = vmul.f32 %v4120, %v4120
      %v4222 = vmul.f32 %v4121, %v4121
      %v4223 = vmul.f32 %v4122, %v4122
      %v4224 = vmul.f32 %v4123, %v4123
      %v4225 = vmul.f32 %v4124, %v4124
      %v4226 = vmul.f32 %v4125, %v4125
      %v4227 = vmul.f32 %v4126, %v4126
      %v4228 = vmul.f32 %v4127, %v4127
      %v4229 = vsel %vm445, %v4197, 0.0
      %v4230 = vsel %vm445, %v4198, 0.0
      %v4231 = vadd.f32 %v4229, %v4230
      %v4232 = vsel %vm445, %v4199, 0.0
      %v4233 = vadd.f32 %v4231, %v4232
      %v4234 = vsel %vm445, %v4200, 0.0
      %v4235 = vadd.f32 %v4233, %v4234
      %v4236 = vsel %vm445, %v4201, 0.0
      %v4237 = vadd.f32 %v4235, %v4236
      %v4238 = vsel %vm445, %v4202, 0.0
      %v4239 = vadd.f32 %v4237, %v4238
      %v4240 = vsel %vm445, %v4203, 0.0
      %v4241 = vadd.f32 %v4239, %v4240
      %v4242 = vsel %vm445, %v4204, 0.0
      %v4243 = vadd.f32 %v4241, %v4242
      %v4244 = vsel %vm445, %v4205, 0.0
      %v4245 = vadd.f32 %v4243, %v4244
      %v4246 = vsel %vm445, %v4206, 0.0
      %v4247 = vadd.f32 %v4245, %v4246
      %v4248 = vsel %vm445, %v4207, 0.0
      %v4249 = vadd.f32 %v4247, %v4248
      %v4250 = vsel %vm445, %v4208, 0.0
      %v4251 = vadd.f32 %v4249, %v4250
      %v4252 = vsel %vm445, %v4209, 0.0
      %v4253 = vadd.f32 %v4251, %v4252
      %v4254 = vsel %vm445, %v4210, 0.0
      %v4255 = vadd.f32 %v4253, %v4254
      %v4256 = vsel %vm445, %v4211, 0.0
      %v4257 = vadd.f32 %v4255, %v4256
      %v4258 = vsel %vm445, %v4212, 0.0
      %v4259 = vadd.f32 %v4257, %v4258
      %v4260 = vsel %vm445, %v4213, 0.0
      %v4261 = vadd.f32 %v4259, %v4260
      %v4262 = vsel %vm445, %v4214, 0.0
      %v4263 = vadd.f32 %v4261, %v4262
      %v4264 = vsel %vm445, %v4215, 0.0
      %v4265 = vadd.f32 %v4263, %v4264
      %v4266 = vsel %vm445, %v4216, 0.0
      %v4267 = vadd.f32 %v4265, %v4266
      %v4268 = vsel %vm445, %v4217, 0.0
      %v4269 = vadd.f32 %v4267, %v4268
      %v4270 = vsel %vm445, %v4218, 0.0
      %v4271 = vadd.f32 %v4269, %v4270
      %v4272 = vsel %vm445, %v4219, 0.0
      %v4273 = vadd.f32 %v4271, %v4272
      %v4274 = vsel %vm445, %v4220, 0.0
      %v4275 = vadd.f32 %v4273, %v4274
      %v4276 = vsel %vm445, %v4221, 0.0
      %v4277 = vadd.f32 %v4275, %v4276
      %v4278 = vsel %vm445, %v4222, 0.0
      %v4279 = vadd.f32 %v4277, %v4278
      %v4280 = vsel %vm445, %v4223, 0.0
      %v4281 = vadd.f32 %v4279, %v4280
      %v4282 = vsel %vm445, %v4224, 0.0
      %v4283 = vadd.f32 %v4281, %v4282
      %v4284 = vsel %vm445, %v4225, 0.0
      %v4285 = vadd.f32 %v4283, %v4284
      %v4286 = vsel %vm445, %v4226, 0.0
      %v4287 = vadd.f32 %v4285, %v4286
      %v4288 = vsel %vm445, %v4227, 0.0
      %v4289 = vadd.f32 %v4287, %v4288
      %v4290 = vsel %vm445, %v4228, 0.0
      %v4291 = vadd.f32 %v4289, %v4290
      %v4292 = vrot.slane %v4291, 4
      %v4293 = vadd.f32 %v4291, %v4292
      %v4294 = vrot.slane %v4293, 2
      %v4295 = vadd.f32 %v4293, %v4294
      %v4296 = vrot.slane %v4295, 1
      %v4297 = vadd.f32 %v4295, %v4296
      %vm4298 = vcmask 1040384
      %v4299 = vsel %vm4298, %v4196, %v4297
      %vm4300 = vcmask 25600
      %4301 = vst.msk [vmem:[%s411] sm:$0x3] %vm4300, %v4299
      %4302 = vst.msk [vmem:[%s403] sm:$0xff] %vm445, %v4096
      %4303 = vst.msk [vmem:[%s403 + $0x8] sm:$0xff] %vm445, %v4097
      %4304 = vst.msk [vmem:[%s403 + $0x10] sm:$0xff] %vm445, %v4098
      %4305 = vst.msk [vmem:[%s403 + $0x18] sm:$0xff] %vm445, %v4099
      %4306 = vst.msk [vmem:[%s403 + $0x20] sm:$0xff] %vm445, %v4100
      %4307 = vst.msk [vmem:[%s403 + $0x28] sm:$0xff] %vm445, %v4101
      %4308 = vst.msk [vmem:[%s403 + $0x30] sm:$0xff] %vm445, %v4102
      %4309 = vst.msk [vmem:[%s403 + $0x38] sm:$0xff] %vm445, %v4103
      %4310 = vst.msk [vmem:[%s403 + $0x40] sm:$0xff] %vm445, %v4104
      %4311 = vst.msk [vmem:[%s403 + $0x48] sm:$0xff] %vm445, %v4105
      %4312 = vst.msk [vmem:[%s403 + $0x50] sm:$0xff] %vm445, %v4106
      %4313 = vst.msk [vmem:[%s403 + $0x58] sm:$0xff] %vm445, %v4107
      %4314 = vst.msk [vmem:[%s403 + $0x60] sm:$0xff] %vm445, %v4108
      %4315 = vst.msk [vmem:[%s403 + $0x68] sm:$0xff] %vm445, %v4109
      %4316 = vst.msk [vmem:[%s403 + $0x70] sm:$0xff] %vm445, %v4110
      %4317 = vst.msk [vmem:[%s403 + $0x78] sm:$0xff] %vm445, %v4111
      %4318 = vst.msk [vmem:[%s403 + $0x80] sm:$0xff] %vm445, %v4112
      %4319 = vst.msk [vmem:[%s403 + $0x88] sm:$0xff] %vm445, %v4113
      %4320 = vst.msk [vmem:[%s403 + $0x90] sm:$0xff] %vm445, %v4114
      %4321 = vst.msk [vmem:[%s403 + $0x98] sm:$0xff] %vm445, %v4115
      %4322 = vst.msk [vmem:[%s403 + $0xa0] sm:$0xff] %vm445, %v4116
      %4323 = vst.msk [vmem:[%s403 + $0xa8] sm:$0xff] %vm445, %v4117
      %4324 = vst.msk [vmem:[%s403 + $0xb0] sm:$0xff] %vm445, %v4118
      %4325 = vst.msk [vmem:[%s403 + $0xb8] sm:$0xff] %vm445, %v4119
      %4326 = vst.msk [vmem:[%s403 + $0xc0] sm:$0xff] %vm445, %v4120
      %4327 = vst.msk [vmem:[%s403 + $0xc8] sm:$0xff] %vm445, %v4121
      %4328 = vst.msk [vmem:[%s403 + $0xd0] sm:$0xff] %vm445, %v4122
      %4329 = vst.msk [vmem:[%s403 + $0xd8] sm:$0xff] %vm445, %v4123
      %4330 = vst.msk [vmem:[%s403 + $0xe0] sm:$0xff] %vm445, %v4124
      %4331 = vst.msk [vmem:[%s403 + $0xe8] sm:$0xff] %vm445, %v4125
      %4332 = vst.msk [vmem:[%s403 + $0xf0] sm:$0xff] %vm445, %v4126
      %4333 = vst.msk [vmem:[%s403 + $0xf8] sm:$0xff] %vm445, %v4127
      %s4334 = smul.u32 16, %s22
      %p4335 = scmp.lt.s32.totalorder %s21, 1
      %s4336 = scalar_select %p4335, %s21, 1
      %p4337 = scmp.lt.s32.totalorder %s4334, 15
      %s4338 = scalar_select %p4337, %s4334, 15
      %s4339 = smul.addr %s4338, 2
      %s4340 = smul.addr %s4336, 32
      %s4341 = sadd.s32 %s4339, %s4340
      %s4342 = smul.addr %s4341, 8
      %s4343 = scalar_lea.vmem %s4, %s4342
      %p4344 = scmp.lt.s32.totalorder %s21, 1
      %s4345 = scalar_select %p4344, %s21, 1
      %p4346 = scmp.lt.s32.totalorder %s22, 0
      %s4347 = scalar_select %p4346, %s22, 0
      %s4348 = sadd.s32 %s4347, %s4345
      %s4349 = smul.addr %s4348, 2
      %s4350 = scalar_lea.vmem %s5, %s4349
      // Predicated region
      $region41: #{recurrent_block_forward.4} parent=35 // pred_check
        %p4351 = pneg %p170
      $region42: #{recurrent_block_forward.4} parent=35 // pred_check_branch
        %4353 = sbr.rel (%p4351) target = $region44
      $region43: #{recurrent_block_forward.4} parent=35 // pred_region
        %s4354 = smul.u32 16, %s22
      $region44: #{recurrent_block_forward.4} parent=35 // pred_fallthru
        _
      // Predicated region
      $region45: #{recurrent_block_forward.4} parent=35 // pred_check
        %p4355 = pneg %p198
      $region46: #{recurrent_block_forward.4} parent=35 // pred_check_branch
        %4357 = sbr.rel (%p4355) target = $region48
      $region47: #{recurrent_block_forward.4} parent=35 // pred_region
        _
      $region48: #{recurrent_block_forward.4} parent=35 // pred_fallthru
        _
    $region36: #{recurrent_block_forward.4} parent=5 // pred_fallthru
      _
    %p4358 = scmp.le.s32.totalorder 2, %s12
    // Predicated region
    $region49: #{recurrent_block_forward.4} parent=5 // pred_check
      %p4359 = pneg %p4358
    $region50: #{recurrent_block_forward.4} parent=5 // pred_check_branch
      %4361 = sbr.rel (%p4359) target = $region52
    $region51: #{recurrent_block_forward.4} parent=5 // pred_region
      %s4362 = ssub.s32 %s12, 2
      // Predicated region
      $region53: #{recurrent_block_forward.4} parent=51 // pred_check
        %p4363 = pneg %p176
      $region54: #{recurrent_block_forward.4} parent=51 // pred_check_branch
        %4365 = sbr.rel (%p4363) target = $region56
      $region55: #{recurrent_block_forward.4} parent=51 // pred_region
        %s4366 = smul.u32 16, %s24
        %p4367 = scmp.lt.s32.totalorder %s23, 1
        %s4368 = scalar_select %p4367, %s23, 1
        %p4369 = scmp.lt.s32.totalorder %s4366, 15
        %s4370 = scalar_select %p4369, %s4366, 15
        %s4371 = smul.addr %s4370, 2
        %s4372 = smul.addr %s4368, 32
        %s4373 = sadd.s32 %s4371, %s4372
        %s4374 = smul.addr %s4373, 8
        %s4375 = scalar_lea.vmem %s4, %s4374
      $region56: #{recurrent_block_forward.4} parent=51 // pred_fallthru
        _
      // Predicated region
      $region57: #{recurrent_block_forward.4} parent=51 // pred_check
        %p4376 = pneg %p204
      $region58: #{recurrent_block_forward.4} parent=51 // pred_check_branch
        %4378 = sbr.rel (%p4376) target = $region60
      $region59: #{recurrent_block_forward.4} parent=51 // pred_region
        %p4379 = scmp.lt.s32.totalorder %s23, 1
        %s4380 = scalar_select %p4379, %s23, 1
        %p4381 = scmp.lt.s32.totalorder %s24, 0
        %s4382 = scalar_select %p4381, %s24, 0
        %s4383 = sadd.s32 %s4382, %s4380
        %s4384 = smul.addr %s4383, 2
        %s4385 = scalar_lea.vmem %s5, %s4384
      $region60: #{recurrent_block_forward.4} parent=51 // pred_fallthru
        _
    $region52: #{recurrent_block_forward.4} parent=5 // pred_fallthru
      _
  $region6: #{recurrent_block_forward.4} parent=0 // loop_footer
    %s16 = sadd.s32 1, %s12
  $region7: #{recurrent_block_forward.4} parent=0 // loop_footer_branch
    %11 = sbr.rel target = $region3
  $region8: #{recurrent_block_forward.4} parent=0 // loop_exit
    _

// kernel: recurrent_block_forward.5
$region0: #{recurrent_block_forward.5}
  #allocation0 [shape = 'u32[]', space=smem, size = 0x4, offset = 0x4, fixed_abs, tag = 'smem constant byte address 0x4 - core index']
  #allocation1 [shape = 'u32[144,128]{1,0:T(1,128)}', space=vmem, size = 0x12000, scoped, tag = 'internal scratch']
  #allocation2 [shape = 'f32[18,16,4]{2,1,0:T(8,128)}', space=vmem, size = 0x24000, scoped, tag = 'scratch operand']
  #allocation3 [shape = 'f32[18,16,4]{2,1,0:T(8,128)}', space=vmem, size = 0x24000, scoped, tag = 'scratch operand']
  #allocation4 [shape = 'f32[18,16,4]{2,1,0:T(8,128)}', space=vmem, size = 0x24000, scoped, tag = 'scratch operand']
  %s0 = inlined_call_operand.vmem [shape: f32[2,16,16,4], index: 0, kind: input, shape index: {}, may-alias: {0,1,2}]
  %s1 = inlined_call_operand.vmem [shape: f32[2,16,16,4], index: 1, kind: input, shape index: {}, may-alias: {0,1,2}]
  %s2 = inlined_call_operand.vmem [shape: f32[2,16,16,4], index: 2, kind: input, shape index: {}, may-alias: {0,1,2}]
  %s3 = inlined_call_operand.vmem [shape: f32[2,16,16,4], index: 3, kind: input, shape index: {}, may-alias: {3,4,5}]
  %s4 = inlined_call_operand.vmem [shape: f32[2,16,16,4], index: 4, kind: input, shape index: {}, may-alias: {3,4,5}]
  %s5 = inlined_call_operand.vmem [shape: f32[2,16,16,4], index: 5, kind: input, shape index: {}, may-alias: {3,4,5}]
  %s6 = inlined_call_operand.vmem [shape: f32[1,4], index: 6, kind: input, shape index: {}]
  %s7 = inlined_call_operand.vmem [shape: f32[1,4], index: 7, kind: input, shape index: {}]
  %s8 = inlined_call_operand.vmem [shape: f32[9,4,4], index: 8, kind: input, shape index: {}]
  %s9 = inlined_call_operand.vmem [shape: f32[2,16,16,4], index: 9, kind: output, shape index: {0}]
  %s10 = inlined_call_operand.vmem [shape: f32[2,1,2,4], index: 10, kind: output, shape index: {1}]
  %11 = xla_tuple %s9, %s10
  %s12 = sld [smem:[#allocation0]]
  $region81: #{recurrent_block_forward.5} parent=0
    _
  %s14 = ssub.s32 1, %s12
  %s15 = scalar_select 0, %s14, %s12
  loop: start=0, step=1, limit=4
  $region2: #{recurrent_block_forward.5} parent=0 // loop_pre_header
    _
  $region3: #{recurrent_block_forward.5} parent=0 // loop_header
    %s17 = sphi 0, %s21
    %p18 = scmp.ge.s32.totalorder %s17, 4
    %s24 = sphi 0, %s36
    %s25 = sphi 0, %s32
    %s26 = sphi 0, %s24
    %s27 = sphi 0, %s25
    %s28 = sphi 0, %s26
    %s29 = sphi 0, %s27
    %s41 = sphi 0, %s43
    %s44 = sphi 0, %s41
    %s45 = sphi 0, %s44
    %s61 = sphi 0, %s45
    %s77 = sphi 0, %s79
    %s80 = sphi 0, %s77
    %s81 = sphi 0, %s80
    %s97 = sphi 0, %s81
    %s113 = sphi 0, %s115
    %s116 = sphi 0, %s113
    %s117 = sphi 0, %s116
    %s133 = sphi 0, %s117
    %s141 = sphi 0, %s143
    %s144 = sphi 0, %s141
    %s145 = sphi 0, %s144
    %s161 = sphi 0, %s145
    %s177 = sphi 0, %s179
    %s180 = sphi 0, %s177
    %s181 = sphi 0, %s180
    %s197 = sphi 0, %s181
    %s213 = sphi 0, %s215
    %s216 = sphi 0, %s213
    %s217 = sphi 0, %s216
    %s233 = sphi 0, %s217
    %s237 = sphi 0, %s237
    %s239 = sphi 0, %s237
    %s240 = sphi 0, %s239
    %s254 = sphi 0, %s240
    %s258 = sphi 0, %s258
    %s260 = sphi 0, %s258
    %s261 = sphi 0, %s260
    %s275 = sphi 0, %s261
    %s279 = sphi 0, %s279
    %s281 = sphi 0, %s279
    %s282 = sphi 0, %s281
    %s296 = sphi 0, %s282
    %s304 = sphi 0, %s306
    %s307 = sphi 0, %s304
    %s308 = sphi 0, %s307
    %s324 = sphi 0, %s308
    %s332 = sphi 0, %s334
    %s335 = sphi 0, %s332
    %s336 = sphi 0, %s335
    %s352 = sphi 0, %s336
  $region4: #{recurrent_block_forward.5} parent=0 // loop_header_branch
    %20 = sbr.rel (%p18) target = $region8
  $region5: #{recurrent_block_forward.5} parent=0 // loop_body
    %s22 = ssub.s32 %s17, 1
    %s23 = ssub.s32 %s17, 2
    %s30 = sadd.s32 1, %s25
    %p31 = scmp.ge.s32.totalorder %s30, 1
    %s32 = scalar_select %p31, 0, %s30
    %s33 = sadd.s32 1, %s24
    %s34 = scalar_select %p31, %s33, %s24
    %p35 = scmp.ge.s32.totalorder %s34, 2
    %s36 = scalar_select %p35, 0, %s34
    %s37 = ssub.s32 %s24, %s36
    %s38 = ssub.s32 %s25, %s32
    %s39 = sor.u32 %s37, %s38
    %p40 = scmp.eq.s32.totalorder %s39, 0
    %s42 = sadd.s32 %s41, 1
    %s43 = scalar_select %p40, %s41, %s42
    %p46 = pneg %p40
    %p47 = scmp.eq.s32.totalorder %s17, 1
    %p48 = por %p46, %p47
    %p49 = scmp.ne.s32.totalorder %s41, %s44
    %p50 = scmp.eq.s32.totalorder %s17, 0
    %p51 = por %p49, %p50
    %p52 = scmp.ne.s32.totalorder %s41, %s44
    %p53 = scmp.eq.s32.totalorder %s22, 1
    %p54 = por %p52, %p53
    %p55 = scmp.ne.s32.totalorder %s44, %s45
    %p56 = scmp.eq.s32.totalorder %s22, 0
    %p57 = por %p55, %p56
    %p58 = scmp.ne.s32.totalorder %s44, %s45
    %p59 = scmp.eq.s32.totalorder %s23, 1
    %p60 = por %p58, %p59
    %p62 = scmp.ne.s32.totalorder %s45, %s61
    %p63 = scmp.eq.s32.totalorder %s23, 0
    %p64 = por %p62, %p63
    %s65 = smul.u32 %s25, 16
    %s66 = ssub.s32 %s65, 1
    %p67 = scmp.gt.s32.totalorder %s66, 0
    %s68 = scalar_select %p67, %s66, 0
    %s69 = smul.u32 %s32, 16
    %s70 = ssub.s32 %s69, 1
    %p71 = scmp.gt.s32.totalorder %s70, 0
    %s72 = scalar_select %p71, %s70, 0
    %s73 = ssub.s32 %s24, %s36
    %s74 = ssub.s32 %s68, %s72
    %s75 = sor.u32 %s73, %s74
    %p76 = scmp.eq.s32.totalorder %s75, 0
    %s78 = sadd.s32 %s77, 1
    %s79 = scalar_select %p76, %s77, %s78
    %p82 = pneg %p76
    %p83 = scmp.eq.s32.totalorder %s17, 1
    %p84 = por %p82, %p83
    %p85 = scmp.ne.s32.totalorder %s77, %s80
    %p86 = scmp.eq.s32.totalorder %s17, 0
    %p87 = por %p85, %p86
    %p88 = scmp.ne.s32.totalorder %s77, %s80
    %p89 = scmp.eq.s32.totalorder %s22, 1
    %p90 = por %p88, %p89
    %p91 = scmp.ne.s32.totalorder %s80, %s81
    %p92 = scmp.eq.s32.totalorder %s22, 0
    %p93 = por %p91, %p92
    %p94 = scmp.ne.s32.totalorder %s80, %s81
    %p95 = scmp.eq.s32.totalorder %s23, 1
    %p96 = por %p94, %p95
    %p98 = scmp.ne.s32.totalorder %s81, %s97
    %p99 = scmp.eq.s32.totalorder %s23, 0
    %p100 = por %p98, %p99
    %s101 = smul.u32 %s25, 16
    %s102 = sadd.s32 %s101, 16
    %p103 = scmp.lt.s32.totalorder %s102, 15
    %s104 = scalar_select %p103, %s102, 15
    %s105 = smul.u32 %s32, 16
    %s106 = sadd.s32 %s105, 16
    %p107 = scmp.lt.s32.totalorder %s106, 15
    %s108 = scalar_select %p107, %s106, 15
    %s109 = ssub.s32 %s24, %s36
    %s110 = ssub.s32 %s104, %s108
    %s111 = sor.u32 %s109, %s110
    %p112 = scmp.eq.s32.totalorder %s111, 0
    %s114 = sadd.s32 %s113, 1
    %s115 = scalar_select %p112, %s113, %s114
    %p118 = pneg %p112
    %p119 = scmp.eq.s32.totalorder %s17, 1
    %p120 = por %p118, %p119
    %p121 = scmp.ne.s32.totalorder %s113, %s116
    %p122 = scmp.eq.s32.totalorder %s17, 0
    %p123 = por %p121, %p122
    %p124 = scmp.ne.s32.totalorder %s113, %s116
    %p125 = scmp.eq.s32.totalorder %s22, 1
    %p126 = por %p124, %p125
    %p127 = scmp.ne.s32.totalorder %s116, %s117
    %p128 = scmp.eq.s32.totalorder %s22, 0
    %p129 = por %p127, %p128
    %p130 = scmp.ne.s32.totalorder %s116, %s117
    %p131 = scmp.eq.s32.totalorder %s23, 1
    %p132 = por %p130, %p131
    %p134 = scmp.ne.s32.totalorder %s117, %s133
    %p135 = scmp.eq.s32.totalorder %s23, 0
    %p136 = por %p134, %p135
    %s137 = ssub.s32 %s24, %s36
    %s138 = ssub.s32 %s25, %s32
    %s139 = sor.u32 %s137, %s138
    %p140 = scmp.eq.s32.totalorder %s139, 0
    %s142 = sadd.s32 %s141, 1
    %s143 = scalar_select %p140, %s141, %s142
    %p146 = pneg %p140
    %p147 = scmp.eq.s32.totalorder %s17, 1
    %p148 = por %p146, %p147
    %p149 = scmp.ne.s32.totalorder %s141, %s144
    %p150 = scmp.eq.s32.totalorder %s17, 0
    %p151 = por %p149, %p150
    %p152 = scmp.ne.s32.totalorder %s141, %s144
    %p153 = scmp.eq.s32.totalorder %s22, 1
    %p154 = por %p152, %p153
    %p155 = scmp.ne.s32.totalorder %s144, %s145
    %p156 = scmp.eq.s32.totalorder %s22, 0
    %p157 = por %p155, %p156
    %p158 = scmp.ne.s32.totalorder %s144, %s145
    %p159 = scmp.eq.s32.totalorder %s23, 1
    %p160 = por %p158, %p159
    %p162 = scmp.ne.s32.totalorder %s145, %s161
    %p163 = scmp.eq.s32.totalorder %s23, 0
    %p164 = por %p162, %p163
    %s165 = smul.u32 %s25, 16
    %s166 = ssub.s32 %s165, 1
    %p167 = scmp.gt.s32.totalorder %s166, 0
    %s168 = scalar_select %p167, %s166, 0
    %s169 = smul.u32 %s32, 16
    %s170 = ssub.s32 %s169, 1
    %p171 = scmp.gt.s32.totalorder %s170, 0
    %s172 = scalar_select %p171, %s170, 0
    %s173 = ssub.s32 %s24, %s36
    %s174 = ssub.s32 %s168, %s172
    %s175 = sor.u32 %s173, %s174
    %p176 = scmp.eq.s32.totalorder %s175, 0
    %s178 = sadd.s32 %s177, 1
    %s179 = scalar_select %p176, %s177, %s178
    %p182 = pneg %p176
    %p183 = scmp.eq.s32.totalorder %s17, 1
    %p184 = por %p182, %p183
    %p185 = scmp.ne.s32.totalorder %s177, %s180
    %p186 = scmp.eq.s32.totalorder %s17, 0
    %p187 = por %p185, %p186
    %p188 = scmp.ne.s32.totalorder %s177, %s180
    %p189 = scmp.eq.s32.totalorder %s22, 1
    %p190 = por %p188, %p189
    %p191 = scmp.ne.s32.totalorder %s180, %s181
    %p192 = scmp.eq.s32.totalorder %s22, 0
    %p193 = por %p191, %p192
    %p194 = scmp.ne.s32.totalorder %s180, %s181
    %p195 = scmp.eq.s32.totalorder %s23, 1
    %p196 = por %p194, %p195
    %p198 = scmp.ne.s32.totalorder %s181, %s197
    %p199 = scmp.eq.s32.totalorder %s23, 0
    %p200 = por %p198, %p199
    %s201 = smul.u32 %s25, 16
    %s202 = sadd.s32 %s201, 16
    %p203 = scmp.lt.s32.totalorder %s202, 15
    %s204 = scalar_select %p203, %s202, 15
    %s205 = smul.u32 %s32, 16
    %s206 = sadd.s32 %s205, 16
    %p207 = scmp.lt.s32.totalorder %s206, 15
    %s208 = scalar_select %p207, %s206, 15
    %s209 = ssub.s32 %s24, %s36
    %s210 = ssub.s32 %s204, %s208
    %s211 = sor.u32 %s209, %s210
    %p212 = scmp.eq.s32.totalorder %s211, 0
    %s214 = sadd.s32 %s213, 1
    %s215 = scalar_select %p212, %s213, %s214
    %p218 = pneg %p212
    %p219 = scmp.eq.s32.totalorder %s17, 1
    %p220 = por %p218, %p219
    %p221 = scmp.ne.s32.totalorder %s213, %s216
    %p222 = scmp.eq.s32.totalorder %s17, 0
    %p223 = por %p221, %p222
    %p224 = scmp.ne.s32.totalorder %s213, %s216
    %p225 = scmp.eq.s32.totalorder %s22, 1
    %p226 = por %p224, %p225
    %p227 = scmp.ne.s32.totalorder %s216, %s217
    %p228 = scmp.eq.s32.totalorder %s22, 0
    %p229 = por %p227, %p228
    %p230 = scmp.ne.s32.totalorder %s216, %s217
    %p231 = scmp.eq.s32.totalorder %s23, 1
    %p232 = por %p230, %p231
    %p234 = scmp.ne.s32.totalorder %s217, %s233
    %p235 = scmp.eq.s32.totalorder %s23, 0
    %p236 = por %p234, %p235
    %s238 = sadd.s32 %s237, 1
    %p241 = scmp.eq.s32.totalorder %s17, 1
    %p242 = scmp.ne.s32.totalorder %s237, %s239
    %p243 = scmp.eq.s32.totalorder %s17, 0
    %p244 = por %p242, %p243
    %p245 = scmp.ne.s32.totalorder %s237, %s239
    %p246 = scmp.eq.s32.totalorder %s22, 1
    %p247 = por %p245, %p246
    %p248 = scmp.ne.s32.totalorder %s239, %s240
    %p249 = scmp.eq.s32.totalorder %s22, 0
    %p250 = por %p248, %p249
    %p251 = scmp.ne.s32.totalorder %s239, %s240
    %p252 = scmp.eq.s32.totalorder %s23, 1
    %p253 = por %p251, %p252
    %p255 = scmp.ne.s32.totalorder %s240, %s254
    %p256 = scmp.eq.s32.totalorder %s23, 0
    %p257 = por %p255, %p256
    %s259 = sadd.s32 %s258, 1
    %p262 = scmp.eq.s32.totalorder %s17, 1
    %p263 = scmp.ne.s32.totalorder %s258, %s260
    %p264 = scmp.eq.s32.totalorder %s17, 0
    %p265 = por %p263, %p264
    %p266 = scmp.ne.s32.totalorder %s258, %s260
    %p267 = scmp.eq.s32.totalorder %s22, 1
    %p268 = por %p266, %p267
    %p269 = scmp.ne.s32.totalorder %s260, %s261
    %p270 = scmp.eq.s32.totalorder %s22, 0
    %p271 = por %p269, %p270
    %p272 = scmp.ne.s32.totalorder %s260, %s261
    %p273 = scmp.eq.s32.totalorder %s23, 1
    %p274 = por %p272, %p273
    %p276 = scmp.ne.s32.totalorder %s261, %s275
    %p277 = scmp.eq.s32.totalorder %s23, 0
    %p278 = por %p276, %p277
    %s280 = sadd.s32 %s279, 1
    %p283 = scmp.eq.s32.totalorder %s17, 1
    %p284 = scmp.ne.s32.totalorder %s279, %s281
    %p285 = scmp.eq.s32.totalorder %s17, 0
    %p286 = por %p284, %p285
    %p287 = scmp.ne.s32.totalorder %s279, %s281
    %p288 = scmp.eq.s32.totalorder %s22, 1
    %p289 = por %p287, %p288
    %p290 = scmp.ne.s32.totalorder %s281, %s282
    %p291 = scmp.eq.s32.totalorder %s22, 0
    %p292 = por %p290, %p291
    %p293 = scmp.ne.s32.totalorder %s281, %s282
    %p294 = scmp.eq.s32.totalorder %s23, 1
    %p295 = por %p293, %p294
    %p297 = scmp.ne.s32.totalorder %s282, %s296
    %p298 = scmp.eq.s32.totalorder %s23, 0
    %p299 = por %p297, %p298
    %s300 = ssub.s32 %s24, %s36
    %s301 = ssub.s32 %s25, %s32
    %s302 = sor.u32 %s300, %s301
    %p303 = scmp.eq.s32.totalorder %s302, 0
    %s305 = sadd.s32 %s304, 1
    %s306 = scalar_select %p303, %s304, %s305
    %p309 = pneg %p303
    %p310 = scmp.eq.s32.totalorder %s17, 1
    %p311 = por %p309, %p310
    %p312 = scmp.ne.s32.totalorder %s304, %s307
    %p313 = scmp.eq.s32.totalorder %s17, 0
    %p314 = por %p312, %p313
    %p315 = scmp.ne.s32.totalorder %s304, %s307
    %p316 = scmp.eq.s32.totalorder %s22, 1
    %p317 = por %p315, %p316
    %p318 = scmp.ne.s32.totalorder %s307, %s308
    %p319 = scmp.eq.s32.totalorder %s22, 0
    %p320 = por %p318, %p319
    %p321 = scmp.ne.s32.totalorder %s307, %s308
    %p322 = scmp.eq.s32.totalorder %s23, 1
    %p323 = por %p321, %p322
    %p325 = scmp.ne.s32.totalorder %s308, %s324
    %p326 = scmp.eq.s32.totalorder %s23, 0
    %p327 = por %p325, %p326
    %s328 = ssub.s32 %s24, %s36
    %s329 = ssub.s32 %s25, %s32
    %s330 = sor.u32 %s328, %s329
    %p331 = scmp.eq.s32.totalorder %s330, 0
    %s333 = sadd.s32 %s332, 1
    %s334 = scalar_select %p331, %s332, %s333
    %p337 = pneg %p331
    %p338 = scmp.eq.s32.totalorder %s17, 1
    %p339 = por %p337, %p338
    %p340 = scmp.ne.s32.totalorder %s332, %s335
    %p341 = scmp.eq.s32.totalorder %s17, 0
    %p342 = por %p340, %p341
    %p343 = scmp.ne.s32.totalorder %s332, %s335
    %p344 = scmp.eq.s32.totalorder %s22, 1
    %p345 = por %p343, %p344
    %p346 = scmp.ne.s32.totalorder %s335, %s336
    %p347 = scmp.eq.s32.totalorder %s22, 0
    %p348 = por %p346, %p347
    %p349 = scmp.ne.s32.totalorder %s335, %s336
    %p350 = scmp.eq.s32.totalorder %s23, 1
    %p351 = por %p349, %p350
    %p353 = scmp.ne.s32.totalorder %s336, %s352
    %p354 = scmp.eq.s32.totalorder %s23, 0
    %p355 = por %p353, %p354
    %p356 = scmp.le.s32.totalorder 1, %s17
    %p357 = scmp.lt.s32.totalorder %s17, 3
    %p358 = pnand %p356, %p357
    %p359 = pneg %p358
    // Predicated region
    $region9: #{recurrent_block_forward.5} parent=5 // pred_check
      _
    $region10: #{recurrent_block_forward.5} parent=5 // pred_check_branch
      %361 = sbr.rel (%p358) target = $region12
    $region11: #{recurrent_block_forward.5} parent=5 // pred_region
      %s362 = ssub.s32 %s17, 1
      // Predicated region
      $region13: #{recurrent_block_forward.5} parent=11 // pred_check
        %p363 = pneg %p250
      $region14: #{recurrent_block_forward.5} parent=11 // pred_check_branch
        %365 = sbr.rel (%p363) target = $region16
      $region15: #{recurrent_block_forward.5} parent=11 // pred_region
        _
      $region16: #{recurrent_block_forward.5} parent=11 // pred_fallthru
        _
      // Predicated region
      $region17: #{recurrent_block_forward.5} parent=11 // pred_check
        %p366 = pneg %p271
      $region18: #{recurrent_block_forward.5} parent=11 // pred_check_branch
        %368 = sbr.rel (%p366) target = $region20
      $region19: #{recurrent_block_forward.5} parent=11 // pred_region
        _
      $region20: #{recurrent_block_forward.5} parent=11 // pred_fallthru
        _
      // Predicated region
      $region21: #{recurrent_block_forward.5} parent=11 // pred_check
        %p369 = pneg %p292
      $region22: #{recurrent_block_forward.5} parent=11 // pred_check_branch
        %371 = sbr.rel (%p369) target = $region24
      $region23: #{recurrent_block_forward.5} parent=11 // pred_region
        _
      $region24: #{recurrent_block_forward.5} parent=11 // pred_fallthru
        _
    $region12: #{recurrent_block_forward.5} parent=5 // pred_fallthru
      _
    %p372 = scmp.lt.s32.totalorder %s17, 2
    // Predicated region
    $region25: #{recurrent_block_forward.5} parent=5 // pred_check
      %p373 = pneg %p372
    $region26: #{recurrent_block_forward.5} parent=5 // pred_check_branch
      %375 = sbr.rel (%p373) target = $region28
    $region27: #{recurrent_block_forward.5} parent=5 // pred_region
      // Predicated region
      $region29: #{recurrent_block_forward.5} parent=27 // pred_check
        %p376 = pneg %p51
      $region30: #{recurrent_block_forward.5} parent=27 // pred_check_branch
        %378 = sbr.rel (%p376) target = $region32
      $region31: #{recurrent_block_forward.5} parent=27 // pred_region
        %s379 = smul.u32 16, %s25
        %p380 = scmp.lt.s32.totalorder %s24, 1
        %s381 = scalar_select %p380, %s24, 1
        %p382 = scmp.lt.s32.totalorder %s379, 15
        %s383 = scalar_select %p382, %s379, 15
        %s384 = smul.addr %s383, 2
        %s385 = smul.addr %s381, 32
        %s386 = sadd.s32 %s384, %s385
        %s387 = smul.addr %s386, 8
        %s388 = scalar_lea.vmem %s0, %s387
        %s389 = smul.u32 16, %s25
      $region32: #{recurrent_block_forward.5} parent=27 // pred_fallthru
        _
      // Predicated region
      $region33: #{recurrent_block_forward.5} parent=27 // pred_check
        %p390 = pneg %p87
      $region34: #{recurrent_block_forward.5} parent=27 // pred_check_branch
        %392 = sbr.rel (%p390) target = $region36
      $region35: #{recurrent_block_forward.5} parent=27 // pred_region
        %s393 = smul.u32 %s25, 16
        %s394 = ssub.s32 %s393, 1
        %p395 = scmp.gt.s32.totalorder %s394, 0
        %s396 = scalar_select %p395, %s394, 0
        %p397 = scmp.lt.s32.totalorder %s24, 1
        %s398 = scalar_select %p397, %s24, 1
        %p399 = scmp.lt.s32.totalorder %s396, 15
        %s400 = scalar_select %p399, %s396, 15
        %s401 = smul.addr %s400, 2
        %s402 = smul.addr %s398, 32
        %s403 = sadd.s32 %s401, %s402
        %s404 = smul.addr %s403, 8
        %s405 = scalar_lea.vmem %s1, %s404
        %s406 = smul.u32 %s25, 16
        %s407 = ssub.s32 %s406, 1
        %p408 = scmp.gt.s32.totalorder %s407, 0
        %s409 = scalar_select %p408, %s407, 0
      $region36: #{recurrent_block_forward.5} parent=27 // pred_fallthru
        _
      // Predicated region
      $region37: #{recurrent_block_forward.5} parent=27 // pred_check
        %p410 = pneg %p123
      $region38: #{recurrent_block_forward.5} parent=27 // pred_check_branch
        %412 = sbr.rel (%p410) target = $region40
      $region39: #{recurrent_block_forward.5} parent=27 // pred_region
        %s413 = smul.u32 %s25, 16
        %s414 = sadd.s32 %s413, 16
        %p415 = scmp.lt.s32.totalorder %s414, 15
        %s416 = scalar_select %p415, %s414, 15
        %p417 = scmp.lt.s32.totalorder %s24, 1
        %s418 = scalar_select %p417, %s24, 1
        %p419 = scmp.lt.s32.totalorder %s416, 15
        %s420 = scalar_select %p419, %s416, 15
        %s421 = smul.addr %s420, 2
        %s422 = smul.addr %s418, 32
        %s423 = sadd.s32 %s421, %s422
        %s424 = smul.addr %s423, 8
        %s425 = scalar_lea.vmem %s2, %s424
        %s426 = smul.u32 %s25, 16
        %s427 = sadd.s32 %s426, 16
        %p428 = scmp.lt.s32.totalorder %s427, 15
        %s429 = scalar_select %p428, %s427, 15
      $region40: #{recurrent_block_forward.5} parent=27 // pred_fallthru
        _
      // Predicated region
      $region41: #{recurrent_block_forward.5} parent=27 // pred_check
        %p430 = pneg %p151
      $region42: #{recurrent_block_forward.5} parent=27 // pred_check_branch
        %432 = sbr.rel (%p430) target = $region44
      $region43: #{recurrent_block_forward.5} parent=27 // pred_region
        %s433 = smul.u32 16, %s25
        %p434 = scmp.lt.s32.totalorder %s24, 1
        %s435 = scalar_select %p434, %s24, 1
        %p436 = scmp.lt.s32.totalorder %s433, 15
        %s437 = scalar_select %p436, %s433, 15
        %s438 = smul.addr %s437, 2
        %s439 = smul.addr %s435, 32
        %s440 = sadd.s32 %s438, %s439
        %s441 = smul.addr %s440, 8
        %s442 = scalar_lea.vmem %s3, %s441
        %s443 = smul.u32 16, %s25
      $region44: #{recurrent_block_forward.5} parent=27 // pred_fallthru
        _
      // Predicated region
      $region45: #{recurrent_block_forward.5} parent=27 // pred_check
        %p444 = pneg %p187
      $region46: #{recurrent_block_forward.5} parent=27 // pred_check_branch
        %446 = sbr.rel (%p444) target = $region48
      $region47: #{recurrent_block_forward.5} parent=27 // pred_region
        %s447 = smul.u32 %s25, 16
        %s448 = ssub.s32 %s447, 1
        %p449 = scmp.gt.s32.totalorder %s448, 0
        %s450 = scalar_select %p449, %s448, 0
        %p451 = scmp.lt.s32.totalorder %s24, 1
        %s452 = scalar_select %p451, %s24, 1
        %p453 = scmp.lt.s32.totalorder %s450, 15
        %s454 = scalar_select %p453, %s450, 15
        %s455 = smul.addr %s454, 2
        %s456 = smul.addr %s452, 32
        %s457 = sadd.s32 %s455, %s456
        %s458 = smul.addr %s457, 8
        %s459 = scalar_lea.vmem %s4, %s458
        %s460 = smul.u32 %s25, 16
        %s461 = ssub.s32 %s460, 1
        %p462 = scmp.gt.s32.totalorder %s461, 0
        %s463 = scalar_select %p462, %s461, 0
      $region48: #{recurrent_block_forward.5} parent=27 // pred_fallthru
        _
      // Predicated region
      $region49: #{recurrent_block_forward.5} parent=27 // pred_check
        %p464 = pneg %p223
      $region50: #{recurrent_block_forward.5} parent=27 // pred_check_branch
        %466 = sbr.rel (%p464) target = $region52
      $region51: #{recurrent_block_forward.5} parent=27 // pred_region
        %s467 = smul.u32 %s25, 16
        %s468 = sadd.s32 %s467, 16
        %p469 = scmp.lt.s32.totalorder %s468, 15
        %s470 = scalar_select %p469, %s468, 15
        %p471 = scmp.lt.s32.totalorder %s24, 1
        %s472 = scalar_select %p471, %s24, 1
        %p473 = scmp.lt.s32.totalorder %s470, 15
        %s474 = scalar_select %p473, %s470, 15
        %s475 = smul.addr %s474, 2
        %s476 = smul.addr %s472, 32
        %s477 = sadd.s32 %s475, %s476
        %s478 = smul.addr %s477, 8
        %s479 = scalar_lea.vmem %s5, %s478
        %s480 = smul.u32 %s25, 16
        %s481 = sadd.s32 %s480, 16
        %p482 = scmp.lt.s32.totalorder %s481, 15
        %s483 = scalar_select %p482, %s481, 15
      $region52: #{recurrent_block_forward.5} parent=27 // pred_fallthru
        _
    $region28: #{recurrent_block_forward.5} parent=5 // pred_fallthru
      _
    %p484 = scmp.le.s32.totalorder 1, %s17
    %p485 = scmp.lt.s32.totalorder %s17, 3
    %p486 = pnand %p484, %p485
    %p487 = pneg %p486
    // Predicated region
    $region53: #{recurrent_block_forward.5} parent=5 // pred_check
      _
    $region54: #{recurrent_block_forward.5} parent=5 // pred_check_branch
      %489 = sbr.rel (%p486) target = $region56
    $region55: #{recurrent_block_forward.5} parent=5 // pred_region
      %s490 = ssub.s32 %s17, 1
      %s491 = smul.u32 16, %s27
      %p492 = scmp.lt.s32.totalorder %s26, 1
      %s493 = scalar_select %p492, %s26, 1
      %p494 = scmp.lt.s32.totalorder %s491, 15
      %s495 = scalar_select %p494, %s491, 15
      %s496 = smul.addr %s495, 2
      %s497 = smul.addr %s493, 32
      %s498 = sadd.s32 %s496, %s497
      %s499 = smul.addr %s498, 8
      %s500 = scalar_lea.vmem %s0, %s499
      %p501 = pneg %p57
      %p502 = pneg %p54
      %s503 = smul.u32 %s27, 16
      %s504 = ssub.s32 %s503, 1
      %p505 = scmp.gt.s32.totalorder %s504, 0
      %s506 = scalar_select %p505, %s504, 0
      %p507 = scmp.lt.s32.totalorder %s26, 1
      %s508 = scalar_select %p507, %s26, 1
      %p509 = scmp.lt.s32.totalorder %s506, 15
      %s510 = scalar_select %p509, %s506, 15
      %s511 = smul.addr %s510, 2
      %s512 = smul.addr %s508, 32
      %s513 = sadd.s32 %s511, %s512
      %s514 = smul.addr %s513, 8
      %s515 = scalar_lea.vmem %s1, %s514
      %p516 = pneg %p93
      %p517 = pneg %p90
      %s518 = smul.u32 %s27, 16
      %s519 = sadd.s32 %s518, 16
      %p520 = scmp.lt.s32.totalorder %s519, 15
      %s521 = scalar_select %p520, %s519, 15
      %p522 = scmp.lt.s32.totalorder %s26, 1
      %s523 = scalar_select %p522, %s26, 1
      %p524 = scmp.lt.s32.totalorder %s521, 15
      %s525 = scalar_select %p524, %s521, 15
      %s526 = smul.addr %s525, 2
      %s527 = smul.addr %s523, 32
      %s528 = sadd.s32 %s526, %s527
      %s529 = smul.addr %s528, 8
      %s530 = scalar_lea.vmem %s2, %s529
      %p531 = pneg %p129
      %p532 = pneg %p126
      %s533 = smul.u32 16, %s27
      %p534 = scmp.lt.s32.totalorder %s26, 1
      %s535 = scalar_select %p534, %s26, 1
      %p536 = scmp.lt.s32.totalorder %s533, 15
      %s537 = scalar_select %p536, %s533, 15
      %s538 = smul.addr %s537, 2
      %s539 = smul.addr %s535, 32
      %s540 = sadd.s32 %s538, %s539
      %s541 = smul.addr %s540, 8
      %s542 = scalar_lea.vmem %s3, %s541
      %p543 = pneg %p157
      %p544 = pneg %p154
      %s545 = smul.u32 %s27, 16
      %s546 = ssub.s32 %s545, 1
      %p547 = scmp.gt.s32.totalorder %s546, 0
      %s548 = scalar_select %p547, %s546, 0
      %p549 = scmp.lt.s32.totalorder %s26, 1
      %s550 = scalar_select %p549, %s26, 1
      %p551 = scmp.lt.s32.totalorder %s548, 15
      %s552 = scalar_select %p551, %s548, 15
      %s553 = smul.addr %s552, 2
      %s554 = smul.addr %s550, 32
      %s555 = sadd.s32 %s553, %s554
      %s556 = smul.addr %s555, 8
      %s557 = scalar_lea.vmem %s4, %s556
      %p558 = pneg %p193
      %p559 = pneg %p190
      %s560 = smul.u32 %s27, 16
      %s561 = sadd.s32 %s560, 16
      %p562 = scmp.lt.s32.totalorder %s561, 15
      %s563 = scalar_select %p562, %s561, 15
      %p564 = scmp.lt.s32.totalorder %s26, 1
      %s565 = scalar_select %p564, %s26, 1
      %p566 = scmp.lt.s32.totalorder %s563, 15
      %s567 = scalar_select %p566, %s563, 15
      %s568 = smul.addr %s567, 2
      %s569 = smul.addr %s565, 32
      %s570 = sadd.s32 %s568, %s569
      %s571 = smul.addr %s570, 8
      %s572 = scalar_lea.vmem %s5, %s571
      %p573 = pneg %p229
      %p574 = pneg %p226
      %p575 = pneg %p250
      %p576 = pneg %p247
      %p577 = pneg %p271
      %p578 = pneg %p268
      %p579 = pneg %p292
      %p580 = pneg %p289
      %p581 = pneg %p320
      %p582 = pneg %p317
      %s583 = smul.u32 16, %s27
      %p584 = scmp.lt.s32.totalorder %s26, 1
      %s585 = scalar_select %p584, %s26, 1
      %p586 = scmp.lt.s32.totalorder %s583, 15
      %s587 = scalar_select %p586, %s583, 15
      %s588 = smul.addr %s587, 2
      %s589 = smul.addr %s585, 32
      %s590 = sadd.s32 %s588, %s589
      %s591 = smul.addr %s590, 8
      %s592 = scalar_lea.vmem %s9, %s591
      %p593 = pneg %p348
      %p594 = pneg %p345
      %p595 = scmp.lt.s32.totalorder %s26, 1
      %s596 = scalar_select %p595, %s26, 1
      %p597 = scmp.lt.s32.totalorder %s27, 0
      %s598 = scalar_select %p597, %s27, 0
      %s599 = sadd.s32 %s598, %s596
      %s600 = smul.addr %s599, 2
      %s601 = scalar_lea.vmem %s10, %s600
      %s602 = smul.u32 16, %s27
      %p603 = scmp.lt.s32.totalorder %s26, 1
      %s604 = scalar_select %p603, %s26, 1
      %p605 = scmp.lt.s32.totalorder %s602, 15
      %s606 = scalar_select %p605, %s602, 15
      %s607 = smul.addr %s606, 2
      %s608 = smul.addr %s604, 32
      %s609 = sadd.s32 %s607, %s608
      %s610 = smul.addr %s609, 8
      %s611 = scalar_lea.vmem %s0, %s610
      %s612 = smul.u32 16, %s27
      %s613 = smul.u32 %s27, 16
      %s614 = ssub.s32 %s613, 1
      %p615 = scmp.gt.s32.totalorder %s614, 0
      %s616 = scalar_select %p615, %s614, 0
      %p617 = scmp.lt.s32.totalorder %s26, 1
      %s618 = scalar_select %p617, %s26, 1
      %p619 = scmp.lt.s32.totalorder %s616, 15
      %s620 = scalar_select %p619, %s616, 15
      %s621 = smul.addr %s620, 2
      %s622 = smul.addr %s618, 32
      %s623 = sadd.s32 %s621, %s622
      %s624 = smul.addr %s623, 8
      %s625 = scalar_lea.vmem %s1, %s624
      %s626 = smul.u32 %s27, 16
      %s627 = ssub.s32 %s626, 1
      %p628 = scmp.gt.s32.totalorder %s627, 0
      %s629 = scalar_select %p628, %s627, 0
      %s630 = smul.u32 %s27, 16
      %s631 = sadd.s32 %s630, 16
      %p632 = scmp.lt.s32.totalorder %s631, 15
      %s633 = scalar_select %p632, %s631, 15
      %p634 = scmp.lt.s32.totalorder %s26, 1
      %s635 = scalar_select %p634, %s26, 1
      %p636 = scmp.lt.s32.totalorder %s633, 15
      %s637 = scalar_select %p636, %s633, 15
      %s638 = smul.addr %s637, 2
      %s639 = smul.addr %s635, 32
      %s640 = sadd.s32 %s638, %s639
      %s641 = smul.addr %s640, 8
      %s642 = scalar_lea.vmem %s2, %s641
      %s643 = smul.u32 %s27, 16
      %s644 = sadd.s32 %s643, 16
      %p645 = scmp.lt.s32.totalorder %s644, 15
      %s646 = scalar_select %p645, %s644, 15
      %s647 = smul.u32 16, %s27
      %p648 = scmp.lt.s32.totalorder %s26, 1
      %s649 = scalar_select %p648, %s26, 1
      %p650 = scmp.lt.s32.totalorder %s647, 15
      %s651 = scalar_select %p650, %s647, 15
      %s652 = smul.addr %s651, 2
      %s653 = smul.addr %s649, 32
      %s654 = sadd.s32 %s652, %s653
      %s655 = smul.addr %s654, 8
      %s656 = scalar_lea.vmem %s3, %s655
      %s657 = smul.u32 16, %s27
      %s658 = smul.u32 %s27, 16
      %s659 = ssub.s32 %s658, 1
      %p660 = scmp.gt.s32.totalorder %s659, 0
      %s661 = scalar_select %p660, %s659, 0
      %p662 = scmp.lt.s32.totalorder %s26, 1
      %s663 = scalar_select %p662, %s26, 1
      %p664 = scmp.lt.s32.totalorder %s661, 15
      %s665 = scalar_select %p664, %s661, 15
      %s666 = smul.addr %s665, 2
      %s667 = smul.addr %s663, 32
      %s668 = sadd.s32 %s666, %s667
      %s669 = smul.addr %s668, 8
      %s670 = scalar_lea.vmem %s4, %s669
      %s671 = smul.u32 %s27, 16
      %s672 = ssub.s32 %s671, 1
      %p673 = scmp.gt.s32.totalorder %s672, 0
      %s674 = scalar_select %p673, %s672, 0
      %s675 = smul.u32 %s27, 16
      %s676 = sadd.s32 %s675, 16
      %p677 = scmp.lt.s32.totalorder %s676, 15
      %s678 = scalar_select %p677, %s676, 15
      %p679 = scmp.lt.s32.totalorder %s26, 1
      %s680 = scalar_select %p679, %s26, 1
      %p681 = scmp.lt.s32.totalorder %s678, 15
      %s682 = scalar_select %p681, %s678, 15
      %s683 = smul.addr %s682, 2
      %s684 = smul.addr %s680, 32
      %s685 = sadd.s32 %s683, %s684
      %s686 = smul.addr %s685, 8
      %s687 = scalar_lea.vmem %s5, %s686
      %s688 = smul.u32 %s27, 16
      %s689 = sadd.s32 %s688, 16
      %p690 = scmp.lt.s32.totalorder %s689, 15
      %s691 = scalar_select %p690, %s689, 15
      %s692 = smul.u32 16, %s27
      %p693 = scmp.lt.s32.totalorder %s26, 1
      %s694 = scalar_select %p693, %s26, 1
      %p695 = scmp.lt.s32.totalorder %s692, 15
      %s696 = scalar_select %p695, %s692, 15
      %s697 = smul.addr %s696, 2
      %s698 = smul.addr %s694, 32
      %s699 = sadd.s32 %s697, %s698
      %s700 = smul.addr %s699, 8
      %s701 = scalar_lea.vmem %s9, %s700
      %s702 = smul.u32 16, %s27
      %p703 = scmp.lt.s32.totalorder %s26, 1
      %s704 = scalar_select %p703, %s26, 1
      %p705 = scmp.lt.s32.totalorder %s27, 0
      %s706 = scalar_select %p705, %s27, 0
      %s707 = sadd.s32 %s706, %s704
      %s708 = smul.addr %s707, 2
      %s709 = scalar_lea.vmem %s10, %s708
      %v710 = vld [vmem:[%s611] sm:$0xff]
      %v711 = vld [vmem:[%s611 + $0x8] sm:$0xff]
      %v712 = vld [vmem:[%s611 + $0x10] sm:$0xff]
      %v713 = vld [vmem:[%s611 + $0x18] sm:$0xff]
      %v714 = vld [vmem:[%s611 + $0x20] sm:$0xff]
      %v715 = vld [vmem:[%s611 + $0x28] sm:$0xff]
      %v716 = vld [vmem:[%s611 + $0x30] sm:$0xff]
      %v717 = vld [vmem:[%s611 + $0x38] sm:$0xff]
      %v718 = vld [vmem:[%s611 + $0x40] sm:$0xff]
      %v719 = vld [vmem:[%s611 + $0x48] sm:$0xff]
      %v720 = vld [vmem:[%s611 + $0x50] sm:$0xff]
      %v721 = vld [vmem:[%s611 + $0x58] sm:$0xff]
      %v722 = vld [vmem:[%s611 + $0x60] sm:$0xff]
      %v723 = vld [vmem:[%s611 + $0x68] sm:$0xff]
      %v724 = vld [vmem:[%s611 + $0x70] sm:$0xff]
      %v725 = vld [vmem:[%s611 + $0x78] sm:$0xff]
      %v726 = vld [vmem:[%s611 + $0x80] sm:$0xff]
      %v727 = vld [vmem:[%s611 + $0x88] sm:$0xff]
      %v728 = vld [vmem:[%s611 + $0x90] sm:$0xff]
      %v729 = vld [vmem:[%s611 + $0x98] sm:$0xff]
      %v730 = vld [vmem:[%s611 + $0xa0] sm:$0xff]
      %v731 = vld [vmem:[%s611 + $0xa8] sm:$0xff]
      %v732 = vld [vmem:[%s611 + $0xb0] sm:$0xff]
      %v733 = vld [vmem:[%s611 + $0xb8] sm:$0xff]
      %v734 = vld [vmem:[%s611 + $0xc0] sm:$0xff]
      %v735 = vld [vmem:[%s611 + $0xc8] sm:$0xff]
      %v736 = vld [vmem:[%s611 + $0xd0] sm:$0xff]
      %v737 = vld [vmem:[%s611 + $0xd8] sm:$0xff]
      %v738 = vld [vmem:[%s611 + $0xe0] sm:$0xff]
      %v739 = vld [vmem:[%s611 + $0xe8] sm:$0xff]
      %v740 = vld [vmem:[%s611 + $0xf0] sm:$0xff]
      %v741 = vld [vmem:[%s611 + $0xf8] sm:$0xff]
      %v742 = vld [vmem:[%s656] sm:$0xff]
      %v743 = vld [vmem:[%s656 + $0x8] sm:$0xff]
      %v744 = vld [vmem:[%s656 + $0x10] sm:$0xff]
      %v745 = vld [vmem:[%s656 + $0x18] sm:$0xff]
      %v746 = vld [vmem:[%s656 + $0x20] sm:$0xff]
      %v747 = vld [vmem:[%s656 + $0x28] sm:$0xff]
      %v748 = vld [vmem:[%s656 + $0x30] sm:$0xff]
      %v749 = vld [vmem:[%s656 + $0x38] sm:$0xff]
      %v750 = vld [vmem:[%s656 + $0x40] sm:$0xff]
      %v751 = vld [vmem:[%s656 + $0x48] sm:$0xff]
      %v752 = vld [vmem:[%s656 + $0x50] sm:$0xff]
      %v753 = vld [vmem:[%s656 + $0x58] sm:$0xff]
      %v754 = vld [vmem:[%s656 + $0x60] sm:$0xff]
      %v755 = vld [vmem:[%s656 + $0x68] sm:$0xff]
      %v756 = vld [vmem:[%s656 + $0x70] sm:$0xff]
      %v757 = vld [vmem:[%s656 + $0x78] sm:$0xff]
      %v758 = vld [vmem:[%s656 + $0x80] sm:$0xff]
      %v759 = vld [vmem:[%s656 + $0x88] sm:$0xff]
      %v760 = vld [vmem:[%s656 + $0x90] sm:$0xff]
      %v761 = vld [vmem:[%s656 + $0x98] sm:$0xff]
      %v762 = vld [vmem:[%s656 + $0xa0] sm:$0xff]
      %v763 = vld [vmem:[%s656 + $0xa8] sm:$0xff]
      %v764 = vld [vmem:[%s656 + $0xb0] sm:$0xff]
      %v765 = vld [vmem:[%s656 + $0xb8] sm:$0xff]
      %v766 = vld [vmem:[%s656 + $0xc0] sm:$0xff]
      %v767 = vld [vmem:[%s656 + $0xc8] sm:$0xff]
      %v768 = vld [vmem:[%s656 + $0xd0] sm:$0xff]
      %v769 = vld [vmem:[%s656 + $0xd8] sm:$0xff]
      %v770 = vld [vmem:[%s656 + $0xe0] sm:$0xff]
      %v771 = vld [vmem:[%s656 + $0xe8] sm:$0xff]
      %v772 = vld [vmem:[%s656 + $0xf0] sm:$0xff]
      %v773 = vld [vmem:[%s656 + $0xf8] sm:$0xff]
      %v774 = vld [vmem:[%s6] sm:$0x1]
      %v776 = vlaneseq
      %v777 = vshrl.u32 %v776, 7
      %v778 = vsub.s32 0, %v777
      %v779 = vrot.slane %v774, %v778
      %v781 = vmul.f32 %v742, %v779
      %v782 = vmul.f32 %v743, %v779
      %v783 = vmul.f32 %v744, %v779
      %v784 = vmul.f32 %v745, %v779
      %v785 = vmul.f32 %v746, %v779
      %v786 = vmul.f32 %v747, %v779
      %v787 = vmul.f32 %v748, %v779
      %v788 = vmul.f32 %v749, %v779
      %v789 = vmul.f32 %v750, %v779
      %v790 = vmul.f32 %v751, %v779
      %v791 = vmul.f32 %v752, %v779
      %v792 = vmul.f32 %v753, %v779
      %v793 = vmul.f32 %v754, %v779
      %v794 = vmul.f32 %v755, %v779
      %v795 = vmul.f32 %v756, %v779
      %v796 = vmul.f32 %v757, %v779
      %v797 = vmul.f32 %v758, %v779
      %v798 = vmul.f32 %v759, %v779
      %v799 = vmul.f32 %v760, %v779
      %v800 = vmul.f32 %v761, %v779
      %v801 = vmul.f32 %v762, %v779
      %v802 = vmul.f32 %v763, %v779
      %v803 = vmul.f32 %v764, %v779
      %v804 = vmul.f32 %v765, %v779
      %v805 = vmul.f32 %v766, %v779
      %v806 = vmul.f32 %v767, %v779
      %v807 = vmul.f32 %v768, %v779
      %v808 = vmul.f32 %v769, %v779
      %v809 = vmul.f32 %v770, %v779
      %v810 = vmul.f32 %v771, %v779
      %v811 = vmul.f32 %v772, %v779
      %v812 = vmul.f32 %v773, %v779
      %v813 = vld [vmem:[%s7] sm:$0x1]
      %v815 = vlaneseq
      %v816 = vshrl.u32 %v815, 7
      %v817 = vsub.s32 0, %v816
      %v818 = vrot.slane %v813, %v817
      %v820 = vadd.f32 %v781, %v818
      %v821 = vadd.f32 %v782, %v818
      %v822 = vadd.f32 %v783, %v818
      %v823 = vadd.f32 %v784, %v818
      %v824 = vadd.f32 %v785, %v818
      %v825 = vadd.f32 %v786, %v818
      %v826 = vadd.f32 %v787, %v818
      %v827 = vadd.f32 %v788, %v818
      %v828 = vadd.f32 %v789, %v818
      %v829 = vadd.f32 %v790, %v818
      %v830 = vadd.f32 %v791, %v818
      %v831 = vadd.f32 %v792, %v818
      %v832 = vadd.f32 %v793, %v818
      %v833 = vadd.f32 %v794, %v818
      %v834 = vadd.f32 %v795, %v818
      %v835 = vadd.f32 %v796, %v818
      %v836 = vadd.f32 %v797, %v818
      %v837 = vadd.f32 %v798, %v818
      %v838 = vadd.f32 %v799, %v818
      %v839 = vadd.f32 %v800, %v818
      %v840 = vadd.f32 %v801, %v818
      %v841 = vadd.f32 %v802, %v818
      %v842 = vadd.f32 %v803, %v818
      %v843 = vadd.f32 %v804, %v818
      %v844 = vadd.f32 %v805, %v818
      %v845 = vadd.f32 %v806, %v818
      %v846 = vadd.f32 %v807, %v818
      %v847 = vadd.f32 %v808, %v818
      %v848 = vadd.f32 %v809, %v818
      %v849 = vadd.f32 %v810, %v818
      %v850 = vadd.f32 %v811, %v818
      %v851 = vadd.f32 %v812, %v818
      %v852 = vmax.f32 %v820, 0.0
      %v853 = vmax.f32 %v821, 0.0
      %v854 = vmax.f32 %v822, 0.0
      %v855 = vmax.f32 %v823, 0.0
      %v856 = vmax.f32 %v824, 0.0
      %v857 = vmax.f32 %v825, 0.0
      %v858 = vmax.f32 %v826, 0.0
      %v859 = vmax.f32 %v827, 0.0
      %v860 = vmax.f32 %v828, 0.0
      %v861 = vmax.f32 %v829, 0.0
      %v862 = vmax.f32 %v830, 0.0
      %v863 = vmax.f32 %v831, 0.0
      %v864 = vmax.f32 %v832, 0.0
      %v865 = vmax.f32 %v833, 0.0
      %v866 = vmax.f32 %v834, 0.0
      %v867 = vmax.f32 %v835, 0.0
      %v868 = vmax.f32 %v836, 0.0
      %v869 = vmax.f32 %v837, 0.0
      %v870 = vmax.f32 %v838, 0.0
      %v871 = vmax.f32 %v839, 0.0
      %v872 = vmax.f32 %v840, 0.0
      %v873 = vmax.f32 %v841, 0.0
      %v874 = vmax.f32 %v842, 0.0
      %v875 = vmax.f32 %v843, 0.0
      %v876 = vmax.f32 %v844, 0.0
      %v877 = vmax.f32 %v845, 0.0
      %v878 = vmax.f32 %v846, 0.0
      %v879 = vmax.f32 %v847, 0.0
      %v880 = vmax.f32 %v848, 0.0
      %v881 = vmax.f32 %v849, 0.0
      %v882 = vmax.f32 %v850, 0.0
      %v883 = vmax.f32 %v851, 0.0
      %v884 = vadd.f32 %v710, %v852
      %v885 = vadd.f32 %v711, %v853
      %v886 = vadd.f32 %v712, %v854
      %v887 = vadd.f32 %v713, %v855
      %v888 = vadd.f32 %v714, %v856
      %v889 = vadd.f32 %v715, %v857
      %v890 = vadd.f32 %v716, %v858
      %v891 = vadd.f32 %v717, %v859
      %v892 = vadd.f32 %v718, %v860
      %v893 = vadd.f32 %v719, %v861
      %v894 = vadd.f32 %v720, %v862
      %v895 = vadd.f32 %v721, %v863
      %v896 = vadd.f32 %v722, %v864
      %v897 = vadd.f32 %v723, %v865
      %v898 = vadd.f32 %v724, %v866
      %v899 = vadd.f32 %v725, %v867
      %v900 = vadd.f32 %v726, %v868
      %v901 = vadd.f32 %v727, %v869
      %v902 = vadd.f32 %v728, %v870
      %v903 = vadd.f32 %v729, %v871
      %v904 = vadd.f32 %v730, %v872
      %v905 = vadd.f32 %v731, %v873
      %v906 = vadd.f32 %v732, %v874
      %v907 = vadd.f32 %v733, %v875
      %v908 = vadd.f32 %v734, %v876
      %v909 = vadd.f32 %v735, %v877
      %v910 = vadd.f32 %v736, %v878
      %v911 = vadd.f32 %v737, %v879
      %v912 = vadd.f32 %v738, %v880
      %v913 = vadd.f32 %v739, %v881
      %v914 = vadd.f32 %v740, %v882
      %v915 = vadd.f32 %v741, %v883
      %s916 = scalar_lea.vmem [#allocation2], 16
      %vm917 = vcmask 31744
      %918 = vst.msk [vmem:[%s916] sm:$0xff] %vm917, %v884
      %919 = vst.msk [vmem:[%s916 + $0x8] sm:$0xff] %vm917, %v885
      %920 = vst.msk [vmem:[%s916 + $0x10] sm:$0xff] %vm917, %v886
      %921 = vst.msk [vmem:[%s916 + $0x18] sm:$0xff] %vm917, %v887
      %922 = vst.msk [vmem:[%s916 + $0x20] sm:$0xff] %vm917, %v888
      %923 = vst.msk [vmem:[%s916 + $0x28] sm:$0xff] %vm917, %v889
      %924 = vst.msk [vmem:[%s916 + $0x30] sm:$0xff] %vm917, %v890
      %925 = vst.msk [vmem:[%s916 + $0x38] sm:$0xff] %vm917, %v891
      %926 = vst.msk [vmem:[%s916 + $0x40] sm:$0xff] %vm917, %v892
      %927 = vst.msk [vmem:[%s916 + $0x48] sm:$0xff] %vm917, %v893
      %928 = vst.msk [vmem:[%s916 + $0x50] sm:$0xff] %vm917, %v894
      %929 = vst.msk [vmem:[%s916 + $0x58] sm:$0xff] %vm917, %v895
      %930 = vst.msk [vmem:[%s916 + $0x60] sm:$0xff] %vm917, %v896
      %931 = vst.msk [vmem:[%s916 + $0x68] sm:$0xff] %vm917, %v897
      %932 = vst.msk [vmem:[%s916 + $0x70] sm:$0xff] %vm917, %v898
      %933 = vst.msk [vmem:[%s916 + $0x78] sm:$0xff] %vm917, %v899
      %934 = vst.msk [vmem:[%s916 + $0x80] sm:$0xff] %vm917, %v900
      %935 = vst.msk [vmem:[%s916 + $0x88] sm:$0xff] %vm917, %v901
      %936 = vst.msk [vmem:[%s916 + $0x90] sm:$0xff] %vm917, %v902
      %937 = vst.msk [vmem:[%s916 + $0x98] sm:$0xff] %vm917, %v903
      %938 = vst.msk [vmem:[%s916 + $0xa0] sm:$0xff] %vm917, %v904
      %939 = vst.msk [vmem:[%s916 + $0xa8] sm:$0xff] %vm917, %v905
      %940 = vst.msk [vmem:[%s916 + $0xb0] sm:$0xff] %vm917, %v906
      %941 = vst.msk [vmem:[%s916 + $0xb8] sm:$0xff] %vm917, %v907
      %942 = vst.msk [vmem:[%s916 + $0xc0] sm:$0xff] %vm917, %v908
      %943 = vst.msk [vmem:[%s916 + $0xc8] sm:$0xff] %vm917, %v909
      %944 = vst.msk [vmem:[%s916 + $0xd0] sm:$0xff] %vm917, %v910
      %945 = vst.msk [vmem:[%s916 + $0xd8] sm:$0xff] %vm917, %v911
      %946 = vst.msk [vmem:[%s916 + $0xe0] sm:$0xff] %vm917, %v912
      %947 = vst.msk [vmem:[%s916 + $0xe8] sm:$0xff] %vm917, %v913
      %948 = vst.msk [vmem:[%s916 + $0xf0] sm:$0xff] %vm917, %v914
      %949 = vst.msk [vmem:[%s916 + $0xf8] sm:$0xff] %vm917, %v915
      %v950 = vld [vmem:[%s625] sm:$0xff]
      %v951 = vld [vmem:[%s625 + $0x8] sm:$0xff]
      %v952 = vld [vmem:[%s670] sm:$0xff]
      %v953 = vld [vmem:[%s670 + $0x8] sm:$0xff]
      %v954 = vld [vmem:[%s6] sm:$0x1]
      %v956 = vlaneseq
      %v957 = vshrl.u32 %v956, 7
      %v958 = vsub.s32 0, %v957
      %v959 = vrot.slane %v954, %v958
      %v961 = vmul.f32 %v952, %v959
      %v962 = vmul.f32 %v953, %v959
      %v963 = vld [vmem:[%s7] sm:$0x1]
      %v965 = vlaneseq
      %v966 = vshrl.u32 %v965, 7
      %v967 = vsub.s32 0, %v966
      %v968 = vrot.slane %v963, %v967
      %v970 = vadd.f32 %v961, %v968
      %v971 = vadd.f32 %v962, %v968
      %v972 = vmax.f32 %v970, 0.0
      %v973 = vmax.f32 %v971, 0.0
      %v974 = vadd.f32 %v950, %v972
      %v975 = vadd.f32 %v951, %v973
      %976 = vst.msk [vmem:[#allocation2] sm:$0xff] %vm917, %v974
      %977 = vst.msk [vmem:[#allocation2 + $0x8] sm:$0xff] %vm917, %v975
      %v978 = vld [vmem:[%s642] sm:$0xff]
      %v979 = vld [vmem:[%s642 + $0x8] sm:$0xff]
      %v980 = vld [vmem:[%s687] sm:$0xff]
      %v981 = vld [vmem:[%s687 + $0x8] sm:$0xff]
      %v982 = vld [vmem:[%s6] sm:$0x1]
      %v984 = vlaneseq
      %v985 = vshrl.u32 %v984, 7
      %v986 = vsub.s32 0, %v985
      %v987 = vrot.slane %v982, %v986
      %v989 = vmul.f32 %v980, %v987
      %v990 = vmul.f32 %v981, %v987
      %v991 = vld [vmem:[%s7] sm:$0x1]
      %v993 = vlaneseq
      %v994 = vshrl.u32 %v993, 7
      %v995 = vsub.s32 0, %v994
      %v996 = vrot.slane %v991, %v995
      %v998 = vadd.f32 %v989, %v996
      %v999 = vadd.f32 %v990, %v996
      %v1000 = vmax.f32 %v998, 0.0
      %v1001 = vmax.f32 %v999, 0.0
      %v1002 = vadd.f32 %v978, %v1000
      %v1003 = vadd.f32 %v979, %v1001
      %s1004 = scalar_lea.vmem [#allocation2], 272
      %1005 = vst.msk [vmem:[%s1004] sm:$0xff] %vm917, %v1002
      %1006 = vst.msk [vmem:[%s1004 + $0x8] sm:$0xff] %vm917, %v1003
      %p1007 = scmp.eq.s32.totalorder %s27, 0
      // Predicated region
      $region57: #{recurrent_block_forward.5} parent=55 // pred_check
        %p1008 = pneg %p1007
      $region58: #{recurrent_block_forward.5} parent=55 // pred_check_branch
        %1010 = sbr.rel (%p1008) target = $region60
      $region59: #{recurrent_block_forward.5} parent=55 // pred_region
        %1011 = vst.msk [vmem:[#allocation2] sm:$0xff] %vm917, 0.0
        %1012 = vst.msk [vmem:[#allocation2 + $0x8] sm:$0xff] %vm917, 0.0
        %1013 = vst.msk [vmem:[%s1004] sm:$0xff] %vm917, 0.0
        %1014 = vst.msk [vmem:[%s1004 + $0x8] sm:$0xff] %vm917, 0.0
      $region60: #{recurrent_block_forward.5} parent=55 // pred_fallthru
        _
      %v1015 = vld [vmem:[#allocation2] sm:$0xff]
      %v1016 = vld [vmem:[#allocation2 + $0x8] sm:$0x7f]
      %v1017 = vld [vmem:[#allocation2 + $0x10] sm:$0xff]
      %v1018 = vld [vmem:[#allocation2 + $0x18] sm:$0x7f]
      %v1019 = vld [vmem:[#allocation2 + $0x20] sm:$0xff]
      %v1020 = vld [vmem:[#allocation2 + $0x28] sm:$0x7f]
      %v1021 = vld [vmem:[#allocation2 + $0x30] sm:$0xff]
      %v1022 = vld [vmem:[#allocation2 + $0x38] sm:$0x7f]
      %v1023 = vld [vmem:[#allocation2 + $0x40] sm:$0xff]
      %v1024 = vld [vmem:[#allocation2 + $0x48] sm:$0x7f]
      %v1025 = vld [vmem:[#allocation2 + $0x50] sm:$0xff]
      %v1026 = vld [vmem:[#allocation2 + $0x58] sm:$0x7f]
      %v1027 = vld [vmem:[#allocation2 + $0x60] sm:$0xff]
      %v1028 = vld [vmem:[#allocation2 + $0x68] sm:$0x7f]
      %v1029 = vld [vmem:[#allocation2 + $0x70] sm:$0xff]
      %v1030 = vld [vmem:[#allocation2 + $0x78] sm:$0x7f]
      %v1031 = vld [vmem:[#allocation2 + $0x80] sm:$0xff]
      %v1032 = vld [vmem:[#allocation2 + $0x88] sm:$0x7f]
      %v1033 = vld [vmem:[#allocation2 + $0x90] sm:$0xff]
      %v1034 = vld [vmem:[#allocation2 + $0x98] sm:$0x7f]
      %v1035 = vld [vmem:[#allocation2 + $0xa0] sm:$0xff]
      %v1036 = vld [vmem:[#allocation2 + $0xa8] sm:$0x7f]
      %v1037 = vld [vmem:[#allocation2 + $0xb0] sm:$0xff]
      %v1038 = vld [vmem:[#allocation2 + $0xb8] sm:$0x7f]
      %v1039 = vld [vmem:[#allocation2 + $0xc0] sm:$0xff]
      %v1040 = vld [vmem:[#allocation2 + $0xc8] sm:$0x7f]
      %v1041 = vld [vmem:[#allocation2 + $0xd0] sm:$0xff]
      %v1042 = vld [vmem:[#allocation2 + $0xd8] sm:$0x7f]
      %v1043 = vld [vmem:[#allocation2 + $0xe0] sm:$0xff]
      %v1044 = vld [vmem:[#allocation2 + $0xe8] sm:$0x7f]
      %v1045 = vld [vmem:[#allocation2 + $0xf0] sm:$0xff]
      %v1046 = vld [vmem:[#allocation2 + $0xf8] sm:$0x7f]
      %v1047 = vld [vmem:[#allocation2 + $0x100] sm:$0xff]
      %v1048 = vld [vmem:[#allocation2 + $0x108] sm:$0x7f]
      %v1049 = vld [vmem:[#allocation2 + $0x110] sm:$0xff]
      %v1050 = vld [vmem:[#allocation2 + $0x118] sm:$0x7f]
      %1051 = vst.msk [vmem:[#allocation3 + $0x1] sm:$0xff] %vm917, %v1015
      %vm1052 = vcmask 30720
      %1053 = vst.msk [vmem:[#allocation3 + $0x9] sm:$0x7f] %vm1052, %v1016
      %1054 = vst.msk [vmem:[#allocation3 + $0x11] sm:$0xff] %vm917, %v1017
      %1055 = vst.msk [vmem:[#allocation3 + $0x19] sm:$0x7f] %vm1052, %v1018
      %1056 = vst.msk [vmem:[#allocation3 + $0x21] sm:$0xff] %vm917, %v1019
      %1057 = vst.msk [vmem:[#allocation3 + $0x29] sm:$0x7f] %vm1052, %v1020
      %1058 = vst.msk [vmem:[#allocation3 + $0x31] sm:$0xff] %vm917, %v1021
      %1059 = vst.msk [vmem:[#allocation3 + $0x39] sm:$0x7f] %vm1052, %v1022
      %1060 = vst.msk [vmem:[#allocation3 + $0x41] sm:$0xff] %vm917, %v1023
      %1061 = vst.msk [vmem:[#allocation3 + $0x49] sm:$0x7f] %vm1052, %v1024
      %1062 = vst.msk [vmem:[#allocation3 + $0x51] sm:$0xff] %vm917, %v1025
      %1063 = vst.msk [vmem:[#allocation3 + $0x59] sm:$0x7f] %vm1052, %v1026
      %1064 = vst.msk [vmem:[#allocation3 + $0x61] sm:$0xff] %vm917, %v1027
      %1065 = vst.msk [vmem:[#allocation3 + $0x69] sm:$0x7f] %vm1052, %v1028
      %1066 = vst.msk [vmem:[#allocation3 + $0x71] sm:$0xff] %vm917, %v1029
      %1067 = vst.msk [vmem:[#allocation3 + $0x79] sm:$0x7f] %vm1052, %v1030
      %1068 = vst.msk [vmem:[#allocation3 + $0x81] sm:$0xff] %vm917, %v1031
      %1069 = vst.msk [vmem:[#allocation3 + $0x89] sm:$0x7f] %vm1052, %v1032
      %1070 = vst.msk [vmem:[#allocation3 + $0x91] sm:$0xff] %vm917, %v1033
      %1071 = vst.msk [vmem:[#allocation3 + $0x99] sm:$0x7f] %vm1052, %v1034
      %1072 = vst.msk [vmem:[#allocation3 + $0xa1] sm:$0xff] %vm917, %v1035
      %1073 = vst.msk [vmem:[#allocation3 + $0xa9] sm:$0x7f] %vm1052, %v1036
      %1074 = vst.msk [vmem:[#allocation3 + $0xb1] sm:$0xff] %vm917, %v1037
      %1075 = vst.msk [vmem:[#allocation3 + $0xb9] sm:$0x7f] %vm1052, %v1038
      %1076 = vst.msk [vmem:[#allocation3 + $0xc1] sm:$0xff] %vm917, %v1039
      %1077 = vst.msk [vmem:[#allocation3 + $0xc9] sm:$0x7f] %vm1052, %v1040
      %1078 = vst.msk [vmem:[#allocation3 + $0xd1] sm:$0xff] %vm917, %v1041
      %1079 = vst.msk [vmem:[#allocation3 + $0xd9] sm:$0x7f] %vm1052, %v1042
      %1080 = vst.msk [vmem:[#allocation3 + $0xe1] sm:$0xff] %vm917, %v1043
      %1081 = vst.msk [vmem:[#allocation3 + $0xe9] sm:$0x7f] %vm1052, %v1044
      %1082 = vst.msk [vmem:[#allocation3 + $0xf1] sm:$0xff] %vm917, %v1045
      %1083 = vst.msk [vmem:[#allocation3 + $0xf9] sm:$0x7f] %vm1052, %v1046
      %1084 = vst.msk [vmem:[#allocation3 + $0x101] sm:$0xff] %vm917, %v1047
      %1085 = vst.msk [vmem:[#allocation3 + $0x109] sm:$0x7f] %vm1052, %v1048
      %1086 = vst.msk [vmem:[#allocation3 + $0x111] sm:$0xff] %vm917, %v1049
      %1087 = vst.msk [vmem:[#allocation3 + $0x119] sm:$0x7f] %vm1052, %v1050
      %vm1088 = vcmask 24576
      %1089 = vst.msk [vmem:[#allocation3] sm:$0x1] %vm1088, 0.0
      %1090 = vst.msk [vmem:[#allocation3 + $0x10] sm:$0x1] %vm1088, 0.0
      %1091 = vst.msk [vmem:[#allocation3 + $0x20] sm:$0x1] %vm1088, 0.0
      %1092 = vst.msk [vmem:[#allocation3 + $0x30] sm:$0x1] %vm1088, 0.0
      %1093 = vst.msk [vmem:[#allocation3 + $0x40] sm:$0x1] %vm1088, 0.0
      %1094 = vst.msk [vmem:[#allocation3 + $0x50] sm:$0x1] %vm1088, 0.0
      %1095 = vst.msk [vmem:[#allocation3 + $0x60] sm:$0x1] %vm1088, 0.0
      %1096 = vst.msk [vmem:[#allocation3 + $0x70] sm:$0x1] %vm1088, 0.0
      %1097 = vst.msk [vmem:[#allocation3 + $0x80] sm:$0x1] %vm1088, 0.0
      %1098 = vst.msk [vmem:[#allocation3 + $0x90] sm:$0x1] %vm1088, 0.0
      %1099 = vst.msk [vmem:[#allocation3 + $0xa0] sm:$0x1] %vm1088, 0.0
      %1100 = vst.msk [vmem:[#allocation3 + $0xb0] sm:$0x1] %vm1088, 0.0
      %1101 = vst.msk [vmem:[#allocation3 + $0xc0] sm:$0x1] %vm1088, 0.0
      %1102 = vst.msk [vmem:[#allocation3 + $0xd0] sm:$0x1] %vm1088, 0.0
      %1103 = vst.msk [vmem:[#allocation3 + $0xe0] sm:$0x1] %vm1088, 0.0
      %1104 = vst.msk [vmem:[#allocation3 + $0xf0] sm:$0x1] %vm1088, 0.0
      %1105 = vst.msk [vmem:[#allocation3 + $0x100] sm:$0x1] %vm1088, 0.0
      %1106 = vst.msk [vmem:[#allocation3 + $0x110] sm:$0x1] %vm1088, 0.0
      %v1107 = vld [vmem:[#allocation2 + $0x1] sm:$0xff]
      %v1108 = vld [vmem:[#allocation2 + $0x9] sm:$0x7f]
      %v1109 = vld [vmem:[#allocation2 + $0x11] sm:$0xff]
      %v1110 = vld [vmem:[#allocation2 + $0x19] sm:$0x7f]
      %v1111 = vld [vmem:[#allocation2 + $0x21] sm:$0xff]
      %v1112 = vld [vmem:[#allocation2 + $0x29] sm:$0x7f]
      %v1113 = vld [vmem:[#allocation2 + $0x31] sm:$0xff]
      %v1114 = vld [vmem:[#allocation2 + $0x39] sm:$0x7f]
      %v1115 = vld [vmem:[#allocation2 + $0x41] sm:$0xff]
      %v1116 = vld [vmem:[#allocation2 + $0x49] sm:$0x7f]
      %v1117 = vld [vmem:[#allocation2 + $0x51] sm:$0xff]
      %v1118 = vld [vmem:[#allocation2 + $0x59] sm:$0x7f]
      %v1119 = vld [vmem:[#allocation2 + $0x61] sm:$0xff]
      %v1120 = vld [vmem:[#allocation2 + $0x69] sm:$0x7f]
      %v1121 = vld [vmem:[#allocation2 + $0x71] sm:$0xff]
      %v1122 = vld [vmem:[#allocation2 + $0x79] sm:$0x7f]
      %v1123 = vld [vmem:[#allocation2 + $0x81] sm:$0xff]
      %v1124 = vld [vmem:[#allocation2 + $0x89] sm:$0x7f]
      %v1125 = vld [vmem:[#allocation2 + $0x91] sm:$0xff]
      %v1126 = vld [vmem:[#allocation2 + $0x99] sm:$0x7f]
      %v1127 = vld [vmem:[#allocation2 + $0xa1] sm:$0xff]
      %v1128 = vld [vmem:[#allocation2 + $0xa9] sm:$0x7f]
      %v1129 = vld [vmem:[#allocation2 + $0xb1] sm:$0xff]
      %v1130 = vld [vmem:[#allocation2 + $0xb9] sm:$0x7f]
      %v1131 = vld [vmem:[#allocation2 + $0xc1] sm:$0xff]
      %v1132 = vld [vmem:[#allocation2 + $0xc9] sm:$0x7f]
      %v1133 = vld [vmem:[#allocation2 + $0xd1] sm:$0xff]
      %v1134 = vld [vmem:[#allocation2 + $0xd9] sm:$0x7f]
      %v1135 = vld [vmem:[#allocation2 + $0xe1] sm:$0xff]
      %v1136 = vld [vmem:[#allocation2 + $0xe9] sm:$0x7f]
      %v1137 = vld [vmem:[#allocation2 + $0xf1] sm:$0xff]
      %v1138 = vld [vmem:[#allocation2 + $0xf9] sm:$0x7f]
      %v1139 = vld [vmem:[#allocation2 + $0x101] sm:$0xff]
      %v1140 = vld [vmem:[#allocation2 + $0x109] sm:$0x7f]
      %v1141 = vld [vmem:[#allocation2 + $0x111] sm:$0xff]
      %v1142 = vld [vmem:[#allocation2 + $0x119] sm:$0x7f]
      %1143 = vst.msk [vmem:[#allocation4] sm:$0xff] %vm917, %v1107
      %1144 = vst.msk [vmem:[#allocation4 + $0x8] sm:$0x7f] %vm1052, %v1108
      %1145 = vst.msk [vmem:[#allocation4 + $0x10] sm:$0xff] %vm917, %v1109
      %1146 = vst.msk [vmem:[#allocation4 + $0x18] sm:$0x7f] %vm1052, %v1110
      %1147 = vst.msk [vmem:[#allocation4 + $0x20] sm:$0xff] %vm917, %v1111
      %1148 = vst.msk [vmem:[#allocation4 + $0x28] sm:$0x7f] %vm1052, %v1112
      %1149 = vst.msk [vmem:[#allocation4 + $0x30] sm:$0xff] %vm917, %v1113
      %1150 = vst.msk [vmem:[#allocation4 + $0x38] sm:$0x7f] %vm1052, %v1114
      %1151 = vst.msk [vmem:[#allocation4 + $0x40] sm:$0xff] %vm917, %v1115
      %1152 = vst.msk [vmem:[#allocation4 + $0x48] sm:$0x7f] %vm1052, %v1116
      %1153 = vst.msk [vmem:[#allocation4 + $0x50] sm:$0xff] %vm917, %v1117
      %1154 = vst.msk [vmem:[#allocation4 + $0x58] sm:$0x7f] %vm1052, %v1118
      %1155 = vst.msk [vmem:[#allocation4 + $0x60] sm:$0xff] %vm917, %v1119
      %1156 = vst.msk [vmem:[#allocation4 + $0x68] sm:$0x7f] %vm1052, %v1120
      %1157 = vst.msk [vmem:[#allocation4 + $0x70] sm:$0xff] %vm917, %v1121
      %1158 = vst.msk [vmem:[#allocation4 + $0x78] sm:$0x7f] %vm1052, %v1122
      %1159 = vst.msk [vmem:[#allocation4 + $0x80] sm:$0xff] %vm917, %v1123
      %1160 = vst.msk [vmem:[#allocation4 + $0x88] sm:$0x7f] %vm1052, %v1124
      %1161 = vst.msk [vmem:[#allocation4 + $0x90] sm:$0xff] %vm917, %v1125
      %1162 = vst.msk [vmem:[#allocation4 + $0x98] sm:$0x7f] %vm1052, %v1126
      %1163 = vst.msk [vmem:[#allocation4 + $0xa0] sm:$0xff] %vm917, %v1127
      %1164 = vst.msk [vmem:[#allocation4 + $0xa8] sm:$0x7f] %vm1052, %v1128
      %1165 = vst.msk [vmem:[#allocation4 + $0xb0] sm:$0xff] %vm917, %v1129
      %1166 = vst.msk [vmem:[#allocation4 + $0xb8] sm:$0x7f] %vm1052, %v1130
      %1167 = vst.msk [vmem:[#allocation4 + $0xc0] sm:$0xff] %vm917, %v1131
      %1168 = vst.msk [vmem:[#allocation4 + $0xc8] sm:$0x7f] %vm1052, %v1132
      %1169 = vst.msk [vmem:[#allocation4 + $0xd0] sm:$0xff] %vm917, %v1133
      %1170 = vst.msk [vmem:[#allocation4 + $0xd8] sm:$0x7f] %vm1052, %v1134
      %1171 = vst.msk [vmem:[#allocation4 + $0xe0] sm:$0xff] %vm917, %v1135
      %1172 = vst.msk [vmem:[#allocation4 + $0xe8] sm:$0x7f] %vm1052, %v1136
      %1173 = vst.msk [vmem:[#allocation4 + $0xf0] sm:$0xff] %vm917, %v1137
      %1174 = vst.msk [vmem:[#allocation4 + $0xf8] sm:$0x7f] %vm1052, %v1138
      %1175 = vst.msk [vmem:[#allocation4 + $0x100] sm:$0xff] %vm917, %v1139
      %1176 = vst.msk [vmem:[#allocation4 + $0x108] sm:$0x7f] %vm1052, %v1140
      %1177 = vst.msk [vmem:[#allocation4 + $0x110] sm:$0xff] %vm917, %v1141
      %1178 = vst.msk [vmem:[#allocation4 + $0x118] sm:$0x7f] %vm1052, %v1142
      %1179 = vst.msk [vmem:[#allocation4 + $0xf] sm:$0x1] %vm1088, 0.0
      %1180 = vst.msk [vmem:[#allocation4 + $0x1f] sm:$0x1] %vm1088, 0.0
      %1181 = vst.msk [vmem:[#allocation4 + $0x2f] sm:$0x1] %vm1088, 0.0
      %1182 = vst.msk [vmem:[#allocation4 + $0x3f] sm:$0x1] %vm1088, 0.0
      %1183 = vst.msk [vmem:[#allocation4 + $0x4f] sm:$0x1] %vm1088, 0.0
      %1184 = vst.msk [vmem:[#allocation4 + $0x5f] sm:$0x1] %vm1088, 0.0
      %1185 = vst.msk [vmem:[#allocation4 + $0x6f] sm:$0x1] %vm1088, 0.0
      %1186 = vst.msk [vmem:[#allocation4 + $0x7f] sm:$0x1] %vm1088, 0.0
      %1187 = vst.msk [vmem:[#allocation4 + $0x8f] sm:$0x1] %vm1088, 0.0
      %1188 = vst.msk [vmem:[#allocation4 + $0x9f] sm:$0x1] %vm1088, 0.0
      %1189 = vst.msk [vmem:[#allocation4 + $0xaf] sm:$0x1] %vm1088, 0.0
      %1190 = vst.msk [vmem:[#allocation4 + $0xbf] sm:$0x1] %vm1088, 0.0
      %1191 = vst.msk [vmem:[#allocation4 + $0xcf] sm:$0x1] %vm1088, 0.0
      %1192 = vst.msk [vmem:[#allocation4 + $0xdf] sm:$0x1] %vm1088, 0.0
      %1193 = vst.msk [vmem:[#allocation4 + $0xef] sm:$0x1] %vm1088, 0.0
      %1194 = vst.msk [vmem:[#allocation4 + $0xff] sm:$0x1] %vm1088, 0.0
      %1195 = vst.msk [vmem:[#allocation4 + $0x10f] sm:$0x1] %vm1088, 0.0
      %1196 = vst.msk [vmem:[#allocation4 + $0x11f] sm:$0x1] %vm1088, 0.0
      %v1197 = vld [vmem:[#allocation3] sm:$0xff]
      %v1198 = vld [vmem:[#allocation3 + $0x8] sm:$0xff]
      %v1199 = vld [vmem:[#allocation3 + $0x10] sm:$0xff]
      %v1200 = vld [vmem:[#allocation3 + $0x18] sm:$0xff]
      %v1201 = vld [vmem:[#allocation3 + $0x20] sm:$0xff]
      %v1202 = vld [vmem:[#allocation3 + $0x28] sm:$0xff]
      %v1203 = vld [vmem:[#allocation3 + $0x30] sm:$0xff]
      %v1204 = vld [vmem:[#allocation3 + $0x38] sm:$0xff]
      %v1205 = vld [vmem:[#allocation3 + $0x40] sm:$0xff]
      %v1206 = vld [vmem:[#allocation3 + $0x48] sm:$0xff]
      %v1207 = vld [vmem:[#allocation3 + $0x50] sm:$0xff]
      %v1208 = vld [vmem:[#allocation3 + $0x58] sm:$0xff]
      %v1209 = vld [vmem:[#allocation3 + $0x60] sm:$0xff]
      %v1210 = vld [vmem:[#allocation3 + $0x68] sm:$0xff]
      %v1211 = vld [vmem:[#allocation3 + $0x70] sm:$0xff]
      %v1212 = vld [vmem:[#allocation3 + $0x78] sm:$0xff]
      %v1213 = vld [vmem:[#allocation3 + $0x80] sm:$0xff]
      %v1214 = vld [vmem:[#allocation3 + $0x88] sm:$0xff]
      %v1215 = vld [vmem:[#allocation3 + $0x90] sm:$0xff]
      %v1216 = vld [vmem:[#allocation3 + $0x98] sm:$0xff]
      %v1217 = vld [vmem:[#allocation3 + $0xa0] sm:$0xff]
      %v1218 = vld [vmem:[#allocation3 + $0xa8] sm:$0xff]
      %v1219 = vld [vmem:[#allocation3 + $0xb0] sm:$0xff]
      %v1220 = vld [vmem:[#allocation3 + $0xb8] sm:$0xff]
      %v1221 = vld [vmem:[#allocation3 + $0xc0] sm:$0xff]
      %v1222 = vld [vmem:[#allocation3 + $0xc8] sm:$0xff]
      %v1223 = vld [vmem:[#allocation3 + $0xd0] sm:$0xff]
      %v1224 = vld [vmem:[#allocation3 + $0xd8] sm:$0xff]
      %v1225 = vld [vmem:[#allocation3 + $0xe0] sm:$0xff]
      %v1226 = vld [vmem:[#allocation3 + $0xe8] sm:$0xff]
      %v1227 = vld [vmem:[#allocation3 + $0xf0] sm:$0xff]
      %v1228 = vld [vmem:[#allocation3 + $0xf8] sm:$0xff]
      %v1229 = vld [vmem:[%s8] sm:$0xf]
      %v1230 = vld [vmem:[#allocation2] sm:$0xff]
      %v1231 = vld [vmem:[#allocation2 + $0x8] sm:$0xff]
      %v1232 = vld [vmem:[#allocation2 + $0x10] sm:$0xff]
      %v1233 = vld [vmem:[#allocation2 + $0x18] sm:$0xff]
      %v1234 = vld [vmem:[#allocation2 + $0x20] sm:$0xff]
      %v1235 = vld [vmem:[#allocation2 + $0x28] sm:$0xff]
      %v1236 = vld [vmem:[#allocation2 + $0x30] sm:$0xff]
      %v1237 = vld [vmem:[#allocation2 + $0x38] sm:$0xff]
      %v1238 = vld [vmem:[#allocation2 + $0x40] sm:$0xff]
      %v1239 = vld [vmem:[#allocation2 + $0x48] sm:$0xff]
      %v1240 = vld [vmem:[#allocation2 + $0x50] sm:$0xff]
      %v1241 = vld [vmem:[#allocation2 + $0x58] sm:$0xff]
      %v1242 = vld [vmem:[#allocation2 + $0x60] sm:$0xff]
      %v1243 = vld [vmem:[#allocation2 + $0x68] sm:$0xff]
      %v1244 = vld [vmem:[#allocation2 + $0x70] sm:$0xff]
      %v1245 = vld [vmem:[#allocation2 + $0x78] sm:$0xff]
      %v1246 = vld [vmem:[#allocation2 + $0x80] sm:$0xff]
      %v1247 = vld [vmem:[#allocation2 + $0x88] sm:$0xff]
      %v1248 = vld [vmem:[#allocation2 + $0x90] sm:$0xff]
      %v1249 = vld [vmem:[#allocation2 + $0x98] sm:$0xff]
      %v1250 = vld [vmem:[#allocation2 + $0xa0] sm:$0xff]
      %v1251 = vld [vmem:[#allocation2 + $0xa8] sm:$0xff]
      %v1252 = vld [vmem:[#allocation2 + $0xb0] sm:$0xff]
      %v1253 = vld [vmem:[#allocation2 + $0xb8] sm:$0xff]
      %v1254 = vld [vmem:[#allocation2 + $0xc0] sm:$0xff]
      %v1255 = vld [vmem:[#allocation2 + $0xc8] sm:$0xff]
      %v1256 = vld [vmem:[#allocation2 + $0xd0] sm:$0xff]
      %v1257 = vld [vmem:[#allocation2 + $0xd8] sm:$0xff]
      %v1258 = vld [vmem:[#allocation2 + $0xe0] sm:$0xff]
      %v1259 = vld [vmem:[#allocation2 + $0xe8] sm:$0xff]
      %v1260 = vld [vmem:[#allocation2 + $0xf0] sm:$0xff]
      %v1261 = vld [vmem:[#allocation2 + $0xf8] sm:$0xff]
      %s1262 = scalar_lea.vmem %s8, 4
      %v1263 = vld [vmem:[%s1262] sm:$0xf]
      %v1265 = vsel %vm917, %v1230, 0
      %v1268 = vsel %vm917, %v1231, 0
      %v1271 = vsel %vm917, %v1232, 0
      %v1274 = vsel %vm917, %v1233, 0
      %v1277 = vsel %vm917, %v1234, 0
      %v1280 = vsel %vm917, %v1235, 0
      %v1283 = vsel %vm917, %v1236, 0
      %v1286 = vsel %vm917, %v1237, 0
      %v1289 = vsel %vm917, %v1238, 0
      %v1292 = vsel %vm917, %v1239, 0
      %v1295 = vsel %vm917, %v1240, 0
      %v1298 = vsel %vm917, %v1241, 0
      %v1301 = vsel %vm917, %v1242, 0
      %v1304 = vsel %vm917, %v1243, 0
      %v1307 = vsel %vm917, %v1244, 0
      %v1310 = vsel %vm917, %v1245, 0
      %v1313 = vsel %vm917, %v1246, 0
      %v1316 = vsel %vm917, %v1247, 0
      %v1319 = vsel %vm917, %v1248, 0
      %v1322 = vsel %vm917, %v1249, 0
      %v1325 = vsel %vm917, %v1250, 0
      %v1328 = vsel %vm917, %v1251, 0
      %v1331 = vsel %vm917, %v1252, 0
      %v1334 = vsel %vm917, %v1253, 0
      %v1337 = vsel %vm917, %v1254, 0
      %v1340 = vsel %vm917, %v1255, 0
      %v1343 = vsel %vm917, %v1256, 0
      %v1346 = vsel %vm917, %v1257, 0
      %v1349 = vsel %vm917, %v1258, 0
      %v1352 = vsel %vm917, %v1259, 0
      %v1355 = vsel %vm917, %v1260, 0
      %v1358 = vsel %vm917, %v1261, 0
      %vm1360 = vcmask 1043456
      %v1362 = vsel %vm1360, %v1263, 0
      %1364 = vmatprep.subr.mxu0 0.0
      %1365 = vmatpush1.msra.mxu0 %v1362
      %1366 = vmatprep.subr.mxu0 0.0
      %1367 = vmatpush1.msra.mxu0 0.0
      %1368 = vmatprep.subr.mxu0 0.0
      %1369 = vmatpush1.msra.mxu0 0.0
      %1370 = vmatprep.subr.mxu0 0.0
      %1371 = vmatpush1.msra.mxu0 0.0
      %1372 = vmatprep.subr.mxu0 0.0
      %1373 = vmatpush1.msra.mxu0 0.0
      %1374 = vmatprep.subr.mxu0 0.0
      %1375 = vmatpush1.msra.mxu0 0.0
      %1376 = vmatprep.subr.mxu0 0.0
      %1377 = vmatpush1.msra.mxu0 0.0
      %1378 = vmatprep.subr.mxu0 0.0
      %1379 = vmatpush1.msra.mxu0 0.0
      %1380 = vmatprep.subr.mxu0 0.0
      %1381 = vmatpush1.msra.mxu0 0.0
      %1382 = vmatprep.subr.mxu0 0.0
      %1383 = vmatpush1.msra.mxu0 0.0
      %1384 = vmatprep.subr.mxu0 0.0
      %1385 = vmatpush1.msra.mxu0 0.0
      %1386 = vmatprep.subr.mxu0 0.0
      %1387 = vmatpush1.msra.mxu0 0.0
      %1388 = vmatprep.subr.mxu0 0.0
      %1389 = vmatpush1.msra.mxu0 0.0
      %1390 = vmatprep.subr.mxu0 0.0
      %1391 = vmatpush1.msra.mxu0 0.0
      %1392 = vmatprep.subr.mxu0 0.0
      %1393 = vmatpush1.msra.mxu0 0.0
      %1394 = vmatprep.subr.mxu0 0.0
      %1395 = vmatpush1.msra.mxu0 0.0
      %1396 = vmatprep.subr.mxu0 0.0
      %1397 = vmatpush1.msra.mxu0 0.0
      %1398 = vmatprep.subr.mxu0 0.0
      %1399 = vmatpush1.msra.mxu0 0.0
      %1400 = vmatprep.subr.mxu0 0.0
      %1401 = vmatpush1.msra.mxu0 0.0
      %1402 = vmatprep.subr.mxu0 0.0
      %1403 = vmatpush1.msra.mxu0 0.0
      %1404 = vmatprep.subr.mxu0 0.0
      %1405 = vmatpush1.msra.mxu0 0.0
      %1406 = vmatprep.subr.mxu0 0.0
      %1407 = vmatpush1.msra.mxu0 0.0
      %1408 = vmatprep.subr.mxu0 0.0
      %1409 = vmatpush1.msra.mxu0 0.0
      %1410 = vmatprep.subr.mxu0 0.0
      %1411 = vmatpush1.msra.mxu0 0.0
      %1412 = vmatprep.subr.mxu0 0.0
      %1413 = vmatpush1.msra.mxu0 0.0
      %1414 = vmatprep.subr.mxu0 0.0
      %1415 = vmatpush1.msra.mxu0 0.0
      %1416 = vmatprep.subr.mxu0 0.0
      %1417 = vmatpush1.msra.mxu0 0.0
      %1418 = vmatprep.subr.mxu0 0.0
      %1419 = vmatpush1.msra.mxu0 0.0
      %1420 = vmatprep.subr.mxu0 0.0
      %1421 = vmatpush1.msra.mxu0 0.0
      %1422 = vmatprep.subr.mxu0 0.0
      %1423 = vmatpush1.msra.mxu0 0.0
      %1424 = vmatprep.subr.mxu0 0.0
      %1425 = vmatpush1.msra.mxu0 0.0
      %1426 = vmatprep.subr.mxu0 0.0
      %1427 = vmatpush1.msra.mxu0 0.0
      %1428 = vmatprep.mubr.f32.mxu0 0.0
      %1429 = vmatmul.mubr.f32.gmra.mrb[0].mxu0 %v1265
      %v1430 = vpop.f32.mrb[0].mxu0
      %v1431 = vadd.f32 0.0, %v1430
      %v1432 = vpop.f32.mrb[0].mxu0
      %1433 = vmatprep.mubr.f32.mxu0 0.0
      %1434 = vmatmul.mubr.f32.gmra.mrb[0].mxu0 %v1268
      %v1435 = vpop.f32.mrb[0].mxu0
      %v1436 = vadd.f32 0.0, %v1435
      %v1437 = vpop.f32.mrb[0].mxu0
      %1438 = vmatprep.mubr.f32.mxu0 0.0
      %1439 = vmatmul.mubr.f32.gmra.mrb[0].mxu0 %v1271
      %v1440 = vpop.f32.mrb[0].mxu0
      %v1441 = vadd.f32 0.0, %v1440
      %v1442 = vpop.f32.mrb[0].mxu0
      %1443 = vmatprep.mubr.f32.mxu0 0.0
      %1444 = vmatmul.mubr.f32.gmra.mrb[0].mxu0 %v1274
      %v1445 = vpop.f32.mrb[0].mxu0
      %v1446 = vadd.f32 0.0, %v1445
      %v1447 = vpop.f32.mrb[0].mxu0
      %1448 = vmatprep.mubr.f32.mxu0 0.0
      %1449 = vmatmul.mubr.f32.gmra.mrb[0].mxu0 %v1277
      %v1450 = vpop.f32.mrb[0].mxu0
      %v1451 = vadd.f32 0.0, %v1450
      %v1452 = vpop.f32.mrb[0].mxu0
      %1453 = vmatprep.mubr.f32.mxu0 0.0
      %1454 = vmatmul.mubr.f32.gmra.mrb[0].mxu0 %v1280
      %v1455 = vpop.f32.mrb[0].mxu0
      %v1456 = vadd.f32 0.0, %v1455
      %v1457 = vpop.f32.mrb[0].mxu0
      %1458 = vmatprep.mubr.f32.mxu0 0.0
      %1459 = vmatmul.mubr.f32.gmra.mrb[0].mxu0 %v1283
      %v1460 = vpop.f32.mrb[0].mxu0
      %v1461 = vadd.f32 0.0, %v1460
      %v1462 = vpop.f32.mrb[0].mxu0
      %1463 = vmatprep.mubr.f32.mxu0 0.0
      %1464 = vmatmul.mubr.f32.gmra.mrb[0].mxu0 %v1286
      %v1465 = vpop.f32.mrb[0].mxu0
      %v1466 = vadd.f32 0.0, %v1465
      %v1467 = vpop.f32.mrb[0].mxu0
      %1468 = vmatprep.mubr.f32.mxu0 0.0
      %1469 = vmatmul.mubr.f32.gmra.mrb[0].mxu0 %v1289
      %v1470 = vpop.f32.mrb[0].mxu0
      %v1471 = vadd.f32 0.0, %v1470
      %v1472 = vpop.f32.mrb[0].mxu0
      %1473 = vmatprep.mubr.f32.mxu0 0.0
      %1474 = vmatmul.mubr.f32.gmra.mrb[0].mxu0 %v1292
      %v1475 = vpop.f32.mrb[0].mxu0
      %v1476 = vadd.f32 0.0, %v1475
      %v1477 = vpop.f32.mrb[0].mxu0
      %1478 = vmatprep.mubr.f32.mxu0 0.0
      %1479 = vmatmul.mubr.f32.gmra.mrb[0].mxu0 %v1295
      %v1480 = vpop.f32.mrb[0].mxu0
      %v1481 = vadd.f32 0.0, %v1480
      %v1482 = vpop.f32.mrb[0].mxu0
      %1483 = vmatprep.mubr.f32.mxu0 0.0
      %1484 = vmatmul.mubr.f32.gmra.mrb[0].mxu0 %v1298
      %v1485 = vpop.f32.mrb[0].mxu0
      %v1486 = vadd.f32 0.0, %v1485
      %v1487 = vpop.f32.mrb[0].mxu0
      %1488 = vmatprep.mubr.f32.mxu0 0.0
      %1489 = vmatmul.mubr.f32.gmra.mrb[0].mxu0 %v1301
      %v1490 = vpop.f32.mrb[0].mxu0
      %v1491 = vadd.f32 0.0, %v1490
      %v1492 = vpop.f32.mrb[0].mxu0
      %1493 = vmatprep.mubr.f32.mxu0 0.0
      %1494 = vmatmul.mubr.f32.gmra.mrb[0].mxu0 %v1304
      %v1495 = vpop.f32.mrb[0].mxu0
      %v1496 = vadd.f32 0.0, %v1495
      %v1497 = vpop.f32.mrb[0].mxu0
      %1498 = vmatprep.mubr.f32.mxu0 0.0
      %1499 = vmatmul.mubr.f32.gmra.mrb[0].mxu0 %v1307
      %v1500 = vpop.f32.mrb[0].mxu0
      %v1501 = vadd.f32 0.0, %v1500
      %v1502 = vpop.f32.mrb[0].mxu0
      %1503 = vmatprep.mubr.f32.mxu0 0.0
      %1504 = vmatmul.mubr.f32.gmra.mrb[0].mxu0 %v1310
      %v1505 = vpop.f32.mrb[0].mxu0
      %v1506 = vadd.f32 0.0, %v1505
      %v1507 = vpop.f32.mrb[0].mxu0
      %1508 = vmatprep.mubr.f32.mxu0 0.0
      %1509 = vmatmul.mubr.f32.gmra.mrb[0].mxu0 %v1313
      %v1510 = vpop.f32.mrb[0].mxu0
      %v1511 = vadd.f32 0.0, %v1510
      %v1512 = vpop.f32.mrb[0].mxu0
      %1513 = vmatprep.mubr.f32.mxu0 0.0
      %1514 = vmatmul.mubr.f32.gmra.mrb[0].mxu0 %v1316
      %v1515 = vpop.f32.mrb[0].mxu0
      %v1516 = vadd.f32 0.0, %v1515
      %v1517 = vpop.f32.mrb[0].mxu0
      %1518 = vmatprep.mubr.f32.mxu0 0.0
      %1519 = vmatmul.mubr.f32.gmra.mrb[0].mxu0 %v1319
      %v1520 = vpop.f32.mrb[0].mxu0
      %v1521 = vadd.f32 0.0, %v1520
      %v1522 = vpop.f32.mrb[0].mxu0
      %1523 = vmatprep.mubr.f32.mxu0 0.0
      %1524 = vmatmul.mubr.f32.gmra.mrb[0].mxu0 %v1322
      %v1525 = vpop.f32.mrb[0].mxu0
      %v1526 = vadd.f32 0.0, %v1525
      %v1527 = vpop.f32.mrb[0].mxu0
      %1528 = vmatprep.mubr.f32.mxu0 0.0
      %1529 = vmatmul.mubr.f32.gmra.mrb[0].mxu0 %v1325
      %v1530 = vpop.f32.mrb[0].mxu0
      %v1531 = vadd.f32 0.0, %v1530
      %v1532 = vpop.f32.mrb[0].mxu0
      %1533 = vmatprep.mubr.f32.mxu0 0.0
      %1534 = vmatmul.mubr.f32.gmra.mrb[0].mxu0 %v1328
      %v1535 = vpop.f32.mrb[0].mxu0
      %v1536 = vadd.f32 0.0, %v1535
      %v1537 = vpop.f32.mrb[0].mxu0
      %1538 = vmatprep.mubr.f32.mxu0 0.0
      %1539 = vmatmul.mubr.f32.gmra.mrb[0].mxu0 %v1331
      %v1540 = vpop.f32.mrb[0].mxu0
      %v1541 = vadd.f32 0.0, %v1540
      %v1542 = vpop.f32.mrb[0].mxu0
      %1543 = vmatprep.mubr.f32.mxu0 0.0
      %1544 = vmatmul.mubr.f32.gmra.mrb[0].mxu0 %v1334
      %v1545 = vpop.f32.mrb[0].mxu0
      %v1546 = vadd.f32 0.0, %v1545
      %v1547 = vpop.f32.mrb[0].mxu0
      %1548 = vmatprep.mubr.f32.mxu0 0.0
      %1549 = vmatmul.mubr.f32.gmra.mrb[0].mxu0 %v1337
      %v1550 = vpop.f32.mrb[0].mxu0
      %v1551 = vadd.f32 0.0, %v1550
      %v1552 = vpop.f32.mrb[0].mxu0
      %1553 = vmatprep.mubr.f32.mxu0 0.0
      %1554 = vmatmul.mubr.f32.gmra.mrb[0].mxu0 %v1340
      %v1555 = vpop.f32.mrb[0].mxu0
      %v1556 = vadd.f32 0.0, %v1555
      %v1557 = vpop.f32.mrb[0].mxu0
      %1558 = vmatprep.mubr.f32.mxu0 0.0
      %1559 = vmatmul.mubr.f32.gmra.mrb[0].mxu0 %v1343
      %v1560 = vpop.f32.mrb[0].mxu0
      %v1561 = vadd.f32 0.0, %v1560
      %v1562 = vpop.f32.mrb[0].mxu0
      %1563 = vmatprep.mubr.f32.mxu0 0.0
      %1564 = vmatmul.mubr.f32.gmra.mrb[0].mxu0 %v1346
      %v1565 = vpop.f32.mrb[0].mxu0
      %v1566 = vadd.f32 0.0, %v1565
      %v1567 = vpop.f32.mrb[0].mxu0
      %1568 = vmatprep.mubr.f32.mxu0 0.0
      %1569 = vmatmul.mubr.f32.gmra.mrb[0].mxu0 %v1349
      %v1570 = vpop.f32.mrb[0].mxu0
      %v1571 = vadd.f32 0.0, %v1570
      %v1572 = vpop.f32.mrb[0].mxu0
      %1573 = vmatprep.mubr.f32.mxu0 0.0
      %1574 = vmatmul.mubr.f32.gmra.mrb[0].mxu0 %v1352
      %v1575 = vpop.f32.mrb[0].mxu0
      %v1576 = vadd.f32 0.0, %v1575
      %v1577 = vpop.f32.mrb[0].mxu0
      %1578 = vmatprep.mubr.f32.mxu0 0.0
      %1579 = vmatmul.mubr.f32.gmra.mrb[0].mxu0 %v1355
      %v1580 = vpop.f32.mrb[0].mxu0
      %v1581 = vadd.f32 0.0, %v1580
      %v1582 = vpop.f32.mrb[0].mxu0
      %1583 = vmatprep.mubr.f32.mxu0 0.0
      %1584 = vmatmul.mubr.f32.gmra.mrb[0].mxu0 %v1358
      %v1585 = vpop.f32.mrb[0].mxu0
      %v1586 = vadd.f32 0.0, %v1585
      %v1587 = vpop.f32.mrb[0].mxu0
      %1588 = vdwg.mxu0
      %v1590 = vsel %vm917, %v1197, 0
      %v1593 = vsel %vm917, %v1198, 0
      %v1596 = vsel %vm917, %v1199, 0
      %v1599 = vsel %vm917, %v1200, 0
      %v1602 = vsel %vm917, %v1201, 0
      %v1605 = vsel %vm917, %v1202, 0
      %v1608 = vsel %vm917, %v1203, 0
      %v1611 = vsel %vm917, %v1204, 0
      %v1614 = vsel %vm917, %v1205, 0
      %v1617 = vsel %vm917, %v1206, 0
      %v1620 = vsel %vm917, %v1207, 0
      %v1623 = vsel %vm917, %v1208, 0
      %v1626 = vsel %vm917, %v1209, 0
      %v1629 = vsel %vm917, %v1210, 0
      %v1632 = vsel %vm917, %v1211, 0
      %v1635 = vsel %vm917, %v1212, 0
      %v1638 = vsel %vm917, %v1213, 0
      %v1641 = vsel %vm917, %v1214, 0
      %v1644 = vsel %vm917, %v1215, 0
      %v1647 = vsel %vm917, %v1216, 0
      %v1650 = vsel %vm917, %v1217, 0
      %v1653 = vsel %vm917, %v1218, 0
      %v1656 = vsel %vm917, %v1219, 0
      %v1659 = vsel %vm917, %v1220, 0
      %v1662 = vsel %vm917, %v1221, 0
      %v1665 = vsel %vm917, %v1222, 0
      %v1668 = vsel %vm917, %v1223, 0
      %v1671 = vsel %vm917, %v1224, 0
      %v1674 = vsel %vm917, %v1225, 0
      %v1677 = vsel %vm917, %v1226, 0
      %v1680 = vsel %vm917, %v1227, 0
      %v1683 = vsel %vm917, %v1228, 0
      %v1686 = vsel %vm1360, %v1229, 0
      %1688 = vmatprep.subr.mxu0 0.0
      %1689 = vmatpush1.msra.mxu0 %v1686
      %1690 = vmatprep.subr.mxu0 0.0
      %1691 = vmatpush1.msra.mxu0 0.0
      %1692 = vmatprep.subr.mxu0 0.0
      %1693 = vmatpush1.msra.mxu0 0.0
      %1694 = vmatprep.subr.mxu0 0.0
      %1695 = vmatpush1.msra.mxu0 0.0
      %1696 = vmatprep.subr.mxu0 0.0
      %1697 = vmatpush1.msra.mxu0 0.0
      %1698 = vmatprep.subr.mxu0 0.0
      %1699 = vmatpush1.msra.mxu0 0.0
      %1700 = vmatprep.subr.mxu0 0.0
      %1701 = vmatpush1.msra.mxu0 0.0
      %1702 = vmatprep.subr.mxu0 0.0
      %1703 = vmatpush1.msra.mxu0 0.0
      %1704 = vmatprep.subr.mxu0 0.0
      %1705 = vmatpush1.msra.mxu0 0.0
      %1706 = vmatprep.subr.mxu0 0.0
      %1707 = vmatpush1.msra.mxu0 0.0
      %1708 = vmatprep.subr.mxu0 0.0
      %1709 = vmatpush1.msra.mxu0 0.0
      %1710 = vmatprep.subr.mxu0 0.0
      %1711 = vmatpush1.msra.mxu0 0.0
      %1712 = vmatprep.subr.mxu0 0.0
      %1713 = vmatpush1.msra.mxu0 0.0
      %1714 = vmatprep.subr.mxu0 0.0
      %1715 = vmatpush1.msra.mxu0 0.0
      %1716 = vmatprep.subr.mxu0 0.0
      %1717 = vmatpush1.msra.mxu0 0.0
      %1718 = vmatprep.subr.mxu0 0.0
      %1719 = vmatpush1.msra.mxu0 0.0
      %1720 = vmatprep.subr.mxu0 0.0
      %1721 = vmatpush1.msra.mxu0 0.0
      %1722 = vmatprep.subr.mxu0 0.0
      %1723 = vmatpush1.msra.mxu0 0.0
      %1724 = vmatprep.subr.mxu0 0.0
      %1725 = vmatpush1.msra.mxu0 0.0
      %1726 = vmatprep.subr.mxu0 0.0
      %1727 = vmatpush1.msra.mxu0 0.0
      %1728 = vmatprep.subr.mxu0 0.0
      %1729 = vmatpush1.msra.mxu0 0.0
      %1730 = vmatprep.subr.mxu0 0.0
      %1731 = vmatpush1.msra.mxu0 0.0
      %1732 = vmatprep.subr.mxu0 0.0
      %1733 = vmatpush1.msra.mxu0 0.0
      %1734 = vmatprep.subr.mxu0 0.0
      %1735 = vmatpush1.msra.mxu0 0.0
      %1736 = vmatprep.subr.mxu0 0.0
      %1737 = vmatpush1.msra.mxu0 0.0
      %1738 = vmatprep.subr.mxu0 0.0
      %1739 = vmatpush1.msra.mxu0 0.0
      %1740 = vmatprep.subr.mxu0 0.0
      %1741 = vmatpush1.msra.mxu0 0.0
      %1742 = vmatprep.subr.mxu0 0.0
      %1743 = vmatpush1.msra.mxu0 0.0
      %1744 = vmatprep.subr.mxu0 0.0
      %1745 = vmatpush1.msra.mxu0 0.0
      %1746 = vmatprep.subr.mxu0 0.0
      %1747 = vmatpush1.msra.mxu0 0.0
      %1748 = vmatprep.subr.mxu0 0.0
      %1749 = vmatpush1.msra.mxu0 0.0
      %1750 = vmatprep.subr.mxu0 0.0
      %1751 = vmatpush1.msra.mxu0 0.0
      %1752 = vmatprep.mubr.f32.mxu0 0.0
      %1753 = vmatmul.mubr.f32.gmra.mrb[0].mxu0 %v1590
      %v1754 = vpop.f32.mrb[0].mxu0
      %v1755 = vadd.f32 %v1431, %v1754
      %v1756 = vpop.f32.mrb[0].mxu0
      %1757 = vmatprep.mubr.f32.mxu0 0.0
      %1758 = vmatmul.mubr.f32.gmra.mrb[0].mxu0 %v1593
      %v1759 = vpop.f32.mrb[0].mxu0
      %v1760 = vadd.f32 %v1436, %v1759
      %v1761 = vpop.f32.mrb[0].mxu0
      %1762 = vmatprep.mubr.f32.mxu0 0.0
      %1763 = vmatmul.mubr.f32.gmra.mrb[0].mxu0 %v1596
      %v1764 = vpop.f32.mrb[0].mxu0
      %v1765 = vadd.f32 %v1441, %v1764
      %v1766 = vpop.f32.mrb[0].mxu0
      %1767 = vmatprep.mubr.f32.mxu0 0.0
      %1768 = vmatmul.mubr.f32.gmra.mrb[0].mxu0 %v1599
      %v1769 = vpop.f32.mrb[0].mxu0
      %v1770 = vadd.f32 %v1446, %v1769
      %v1771 = vpop.f32.mrb[0].mxu0
      %1772 = vmatprep.mubr.f32.mxu0 0.0
      %1773 = vmatmul.mubr.f32.gmra.mrb[0].mxu0 %v1602
      %v1774 = vpop.f32.mrb[0].mxu0
      %v1775 = vadd.f32 %v1451, %v1774
      %v1776 = vpop.f32.mrb[0].mxu0
      %1777 = vmatprep.mubr.f32.mxu0 0.0
      %1778 = vmatmul.mubr.f32.gmra.mrb[0].mxu0 %v1605
      %v1779 = vpop.f32.mrb[0].mxu0
      %v1780 = vadd.f32 %v1456, %v1779
      %v1781 = vpop.f32.mrb[0].mxu0
      %1782 = vmatprep.mubr.f32.mxu0 0.0
      %1783 = vmatmul.mubr.f32.gmra.mrb[0].mxu0 %v1608
      %v1784 = vpop.f32.mrb[0].mxu0
      %v1785 = vadd.f32 %v1461, %v1784
      %v1786 = vpop.f32.mrb[0].mxu0
      %1787 = vmatprep.mubr.f32.mxu0 0.0
      %1788 = vmatmul.mubr.f32.gmra.mrb[0].mxu0 %v1611
      %v1789 = vpop.f32.mrb[0].mxu0
      %v1790 = vadd.f32 %v1466, %v1789
      %v1791 = vpop.f32.mrb[0].mxu0
      %1792 = vmatprep.mubr.f32.mxu0 0.0
      %1793 = vmatmul.mubr.f32.gmra.mrb[0].mxu0 %v1614
      %v1794 = vpop.f32.mrb[0].mxu0
      %v1795 = vadd.f32 %v1471, %v1794
      %v1796 = vpop.f32.mrb[0].mxu0
      %1797 = vmatprep.mubr.f32.mxu0 0.0
      %1798 = vmatmul.mubr.f32.gmra.mrb[0].mxu0 %v1617
      %v1799 = vpop.f32.mrb[0].mxu0
      %v1800 = vadd.f32 %v1476, %v1799
      %v1801 = vpop.f32.mrb[0].mxu0
      %1802 = vmatprep.mubr.f32.mxu0 0.0
      %1803 = vmatmul.mubr.f32.gmra.mrb[0].mxu0 %v1620
      %v1804 = vpop.f32.mrb[0].mxu0
      %v1805 = vadd.f32 %v1481, %v1804
      %v1806 = vpop.f32.mrb[0].mxu0
      %1807 = vmatprep.mubr.f32.mxu0 0.0
      %1808 = vmatmul.mubr.f32.gmra.mrb[0].mxu0 %v1623
      %v1809 = vpop.f32.mrb[0].mxu0
      %v1810 = vadd.f32 %v1486, %v1809
      %v1811 = vpop.f32.mrb[0].mxu0
      %1812 = vmatprep.mubr.f32.mxu0 0.0
      %1813 = vmatmul.mubr.f32.gmra.mrb[0].mxu0 %v1626
      %v1814 = vpop.f32.mrb[0].mxu0
      %v1815 = vadd.f32 %v1491, %v1814
      %v1816 = vpop.f32.mrb[0].mxu0
      %1817 = vmatprep.mubr.f32.mxu0 0.0
      %1818 = vmatmul.mubr.f32.gmra.mrb[0].mxu0 %v1629
      %v1819 = vpop.f32.mrb[0].mxu0
      %v1820 = vadd.f32 %v1496, %v1819
      %v1821 = vpop.f32.mrb[0].mxu0
      %1822 = vmatprep.mubr.f32.mxu0 0.0
      %1823 = vmatmul.mubr.f32.gmra.mrb[0].mxu0 %v1632
      %v1824 = vpop.f32.mrb[0].mxu0
      %v1825 = vadd.f32 %v1501, %v1824
      %v1826 = vpop.f32.mrb[0].mxu0
      %1827 = vmatprep.mubr.f32.mxu0 0.0
      %1828 = vmatmul.mubr.f32.gmra.mrb[0].mxu0 %v1635
      %v1829 = vpop.f32.mrb[0].mxu0
      %v1830 = vadd.f32 %v1506, %v1829
      %v1831 = vpop.f32.mrb[0].mxu0
      %1832 = vmatprep.mubr.f32.mxu0 0.0
      %1833 = vmatmul.mubr.f32.gmra.mrb[0].mxu0 %v1638
      %v1834 = vpop.f32.mrb[0].mxu0
      %v1835 = vadd.f32 %v1511, %v1834
      %v1836 = vpop.f32.mrb[0].mxu0
      %1837 = vmatprep.mubr.f32.mxu0 0.0
      %1838 = vmatmul.mubr.f32.gmra.mrb[0].mxu0 %v1641
      %v1839 = vpop.f32.mrb[0].mxu0
      %v1840 = vadd.f32 %v1516, %v1839
      %v1841 = vpop.f32.mrb[0].mxu0
      %1842 = vmatprep.mubr.f32.mxu0 0.0
      %1843 = vmatmul.mubr.f32.gmra.mrb[0].mxu0 %v1644
      %v1844 = vpop.f32.mrb[0].mxu0
      %v1845 = vadd.f32 %v1521, %v1844
      %v1846 = vpop.f32.mrb[0].mxu0
      %1847 = vmatprep.mubr.f32.mxu0 0.0
      %1848 = vmatmul.mubr.f32.gmra.mrb[0].mxu0 %v1647
      %v1849 = vpop.f32.mrb[0].mxu0
      %v1850 = vadd.f32 %v1526, %v1849
      %v1851 = vpop.f32.mrb[0].mxu0
      %1852 = vmatprep.mubr.f32.mxu0 0.0
      %1853 = vmatmul.mubr.f32.gmra.mrb[0].mxu0 %v1650
      %v1854 = vpop.f32.mrb[0].mxu0
      %v1855 = vadd.f32 %v1531, %v1854
      %v1856 = vpop.f32.mrb[0].mxu0
      %1857 = vmatprep.mubr.f32.mxu0 0.0
      %1858 = vmatmul.mubr.f32.gmra.mrb[0].mxu0 %v1653
      %v1859 = vpop.f32.mrb[0].mxu0
      %v1860 = vadd.f32 %v1536, %v1859
      %v1861 = vpop.f32.mrb[0].mxu0
      %1862 = vmatprep.mubr.f32.mxu0 0.0
      %1863 = vmatmul.mubr.f32.gmra.mrb[0].mxu0 %v1656
      %v1864 = vpop.f32.mrb[0].mxu0
      %v1865 = vadd.f32 %v1541, %v1864
      %v1866 = vpop.f32.mrb[0].mxu0
      %1867 = vmatprep.mubr.f32.mxu0 0.0
      %1868 = vmatmul.mubr.f32.gmra.mrb[0].mxu0 %v1659
      %v1869 = vpop.f32.mrb[0].mxu0
      %v1870 = vadd.f32 %v1546, %v1869
      %v1871 = vpop.f32.mrb[0].mxu0
      %1872 = vmatprep.mubr.f32.mxu0 0.0
      %1873 = vmatmul.mubr.f32.gmra.mrb[0].mxu0 %v1662
      %v1874 = vpop.f32.mrb[0].mxu0
      %v1875 = vadd.f32 %v1551, %v1874
      %v1876 = vpop.f32.mrb[0].mxu0
      %1877 = vmatprep.mubr.f32.mxu0 0.0
      %1878 = vmatmul.mubr.f32.gmra.mrb[0].mxu0 %v1665
      %v1879 = vpop.f32.mrb[0].mxu0
      %v1880 = vadd.f32 %v1556, %v1879
      %v1881 = vpop.f32.mrb[0].mxu0
      %1882 = vmatprep.mubr.f32.mxu0 0.0
      %1883 = vmatmul.mubr.f32.gmra.mrb[0].mxu0 %v1668
      %v1884 = vpop.f32.mrb[0].mxu0
      %v1885 = vadd.f32 %v1561, %v1884
      %v1886 = vpop.f32.mrb[0].mxu0
      %1887 = vmatprep.mubr.f32.mxu0 0.0
      %1888 = vmatmul.mubr.f32.gmra.mrb[0].mxu0 %v1671
      %v1889 = vpop.f32.mrb[0].mxu0
      %v1890 = vadd.f32 %v1566, %v1889
      %v1891 = vpop.f32.mrb[0].mxu0
      %1892 = vmatprep.mubr.f32.mxu0 0.0
      %1893 = vmatmul.mubr.f32.gmra.mrb[0].mxu0 %v1674
      %v1894 = vpop.f32.mrb[0].mxu0
      %v1895 = vadd.f32 %v1571, %v1894
      %v1896 = vpop.f32.mrb[0].mxu0
      %1897 = vmatprep.mubr.f32.mxu0 0.0
      %1898 = vmatmul.mubr.f32.gmra.mrb[0].mxu0 %v1677
      %v1899 = vpop.f32.mrb[0].mxu0
      %v1900 = vadd.f32 %v1576, %v1899
      %v1901 = vpop.f32.mrb[0].mxu0
      %1902 = vmatprep.mubr.f32.mxu0 0.0
      %1903 = vmatmul.mubr.f32.gmra.mrb[0].mxu0 %v1680
      %v1904 = vpop.f32.mrb[0].mxu0
      %v1905 = vadd.f32 %v1581, %v1904
      %v1906 = vpop.f32.mrb[0].mxu0
      %1907 = vmatprep.mubr.f32.mxu0 0.0
      %1908 = vmatmul.mubr.f32.gmra.mrb[0].mxu0 %v1683
      %v1909 = vpop.f32.mrb[0].mxu0
      %v1910 = vadd.f32 %v1586, %v1909
      %v1911 = vpop.f32.mrb[0].mxu0
      %1912 = vdwg.mxu0
      %v1913 = vld [vmem:[#allocation4] sm:$0xff]
      %v1914 = vld [vmem:[#allocation4 + $0x8] sm:$0xff]
      %v1915 = vld [vmem:[#allocation4 + $0x10] sm:$0xff]
      %v1916 = vld [vmem:[#allocation4 + $0x18] sm:$0xff]
      %v1917 = vld [vmem:[#allocation4 + $0x20] sm:$0xff]
      %v1918 = vld [vmem:[#allocation4 + $0x28] sm:$0xff]
      %v1919 = vld [vmem:[#allocation4 + $0x30] sm:$0xff]
      %v1920 = vld [vmem:[#allocation4 + $0x38] sm:$0xff]
      %v1921 = vld [vmem:[#allocation4 + $0x40] sm:$0xff]
      %v1922 = vld [vmem:[#allocation4 + $0x48] sm:$0xff]
      %v1923 = vld [vmem:[#allocation4 + $0x50] sm:$0xff]
      %v1924 = vld [vmem:[#allocation4 + $0x58] sm:$0xff]
      %v1925 = vld [vmem:[#allocation4 + $0x60] sm:$0xff]
      %v1926 = vld [vmem:[#allocation4 + $0x68] sm:$0xff]
      %v1927 = vld [vmem:[#allocation4 + $0x70] sm:$0xff]
      %v1928 = vld [vmem:[#allocation4 + $0x78] sm:$0xff]
      %v1929 = vld [vmem:[#allocation4 + $0x80] sm:$0xff]
      %v1930 = vld [vmem:[#allocation4 + $0x88] sm:$0xff]
      %v1931 = vld [vmem:[#allocation4 + $0x90] sm:$0xff]
      %v1932 = vld [vmem:[#allocation4 + $0x98] sm:$0xff]
      %v1933 = vld [vmem:[#allocation4 + $0xa0] sm:$0xff]
      %v1934 = vld [vmem:[#allocation4 + $0xa8] sm:$0xff]
      %v1935 = vld [vmem:[#allocation4 + $0xb0] sm:$0xff]
      %v1936 = vld [vmem:[#allocation4 + $0xb8] sm:$0xff]
      %v1937 = vld [vmem:[#allocation4 + $0xc0] sm:$0xff]
      %v1938 = vld [vmem:[#allocation4 + $0xc8] sm:$0xff]
      %v1939 = vld [vmem:[#allocation4 + $0xd0] sm:$0xff]
      %v1940 = vld [vmem:[#allocation4 + $0xd8] sm:$0xff]
      %v1941 = vld [vmem:[#allocation4 + $0xe0] sm:$0xff]
      %v1942 = vld [vmem:[#allocation4 + $0xe8] sm:$0xff]
      %v1943 = vld [vmem:[#allocation4 + $0xf0] sm:$0xff]
      %v1944 = vld [vmem:[#allocation4 + $0xf8] sm:$0xff]
      %s1945 = scalar_lea.vmem %s8, 8
      %v1946 = vld [vmem:[%s1945] sm:$0xf]
      %v1948 = vsel %vm917, %v1913, 0
      %v1951 = vsel %vm917, %v1914, 0
      %v1954 = vsel %vm917, %v1915, 0
      %v1957 = vsel %vm917, %v1916, 0
      %v1960 = vsel %vm917, %v1917, 0
      %v1963 = vsel %vm917, %v1918, 0
      %v1966 = vsel %vm917, %v1919, 0
      %v1969 = vsel %vm917, %v1920, 0
      %v1972 = vsel %vm917, %v1921, 0
      %v1975 = vsel %vm917, %v1922, 0
      %v1978 = vsel %vm917, %v1923, 0
      %v1981 = vsel %vm917, %v1924, 0
      %v1984 = vsel %vm917, %v1925, 0
      %v1987 = vsel %vm917, %v1926, 0
      %v1990 = vsel %vm917, %v1927, 0
      %v1993 = vsel %vm917, %v1928, 0
      %v1996 = vsel %vm917, %v1929, 0
      %v1999 = vsel %vm917, %v1930, 0
      %v2002 = vsel %vm917, %v1931, 0
      %v2005 = vsel %vm917, %v1932, 0
      %v2008 = vsel %vm917, %v1933, 0
      %v2011 = vsel %vm917, %v1934, 0
      %v2014 = vsel %vm917, %v1935, 0
      %v2017 = vsel %vm917, %v1936, 0
      %v2020 = vsel %vm917, %v1937, 0
      %v2023 = vsel %vm917, %v1938, 0
      %v2026 = vsel %vm917, %v1939, 0
      %v2029 = vsel %vm917, %v1940, 0
      %v2032 = vsel %vm917, %v1941, 0
      %v2035 = vsel %vm917, %v1942, 0
      %v2038 = vsel %vm917, %v1943, 0
      %v2041 = vsel %vm917, %v1944, 0
      %v2044 = vsel %vm1360, %v1946, 0
      %2046 = vmatprep.subr.mxu0 0.0
      %2047 = vmatpush1.msra.mxu0 %v2044
      %2048 = vmatprep.subr.mxu0 0.0
      %2049 = vmatpush1.msra.mxu0 0.0
      %2050 = vmatprep.subr.mxu0 0.0
      %2051 = vmatpush1.msra.mxu0 0.0
      %2052 = vmatprep.subr.mxu0 0.0
      %2053 = vmatpush1.msra.mxu0 0.0
      %2054 = vmatprep.subr.mxu0 0.0
      %2055 = vmatpush1.msra.mxu0 0.0
      %2056 = vmatprep.subr.mxu0 0.0
      %2057 = vmatpush1.msra.mxu0 0.0
      %2058 = vmatprep.subr.mxu0 0.0
      %2059 = vmatpush1.msra.mxu0 0.0
      %2060 = vmatprep.subr.mxu0 0.0
      %2061 = vmatpush1.msra.mxu0 0.0
      %2062 = vmatprep.subr.mxu0 0.0
      %2063 = vmatpush1.msra.mxu0 0.0
      %2064 = vmatprep.subr.mxu0 0.0
      %2065 = vmatpush1.msra.mxu0 0.0
      %2066 = vmatprep.subr.mxu0 0.0
      %2067 = vmatpush1.msra.mxu0 0.0
      %2068 = vmatprep.subr.mxu0 0.0
      %2069 = vmatpush1.msra.mxu0 0.0
      %2070 = vmatprep.subr.mxu0 0.0
      %2071 = vmatpush1.msra.mxu0 0.0
      %2072 = vmatprep.subr.mxu0 0.0
      %2073 = vmatpush1.msra.mxu0 0.0
      %2074 = vmatprep.subr.mxu0 0.0
      %2075 = vmatpush1.msra.mxu0 0.0
      %2076 = vmatprep.subr.mxu0 0.0
      %2077 = vmatpush1.msra.mxu0 0.0
      %2078 = vmatprep.subr.mxu0 0.0
      %2079 = vmatpush1.msra.mxu0 0.0
      %2080 = vmatprep.subr.mxu0 0.0
      %2081 = vmatpush1.msra.mxu0 0.0
      %2082 = vmatprep.subr.mxu0 0.0
      %2083 = vmatpush1.msra.mxu0 0.0
      %2084 = vmatprep.subr.mxu0 0.0
      %2085 = vmatpush1.msra.mxu0 0.0
      %2086 = vmatprep.subr.mxu0 0.0
      %2087 = vmatpush1.msra.mxu0 0.0
      %2088 = vmatprep.subr.mxu0 0.0
      %2089 = vmatpush1.msra.mxu0 0.0
      %2090 = vmatprep.subr.mxu0 0.0
      %2091 = vmatpush1.msra.mxu0 0.0
      %2092 = vmatprep.subr.mxu0 0.0
      %2093 = vmatpush1.msra.mxu0 0.0
      %2094 = vmatprep.subr.mxu0 0.0
      %2095 = vmatpush1.msra.mxu0 0.0
      %2096 = vmatprep.subr.mxu0 0.0
      %2097 = vmatpush1.msra.mxu0 0.0
      %2098 = vmatprep.subr.mxu0 0.0
      %2099 = vmatpush1.msra.mxu0 0.0
      %2100 = vmatprep.subr.mxu0 0.0
      %2101 = vmatpush1.msra.mxu0 0.0
      %2102 = vmatprep.subr.mxu0 0.0
      %2103 = vmatpush1.msra.mxu0 0.0
      %2104 = vmatprep.subr.mxu0 0.0
      %2105 = vmatpush1.msra.mxu0 0.0
      %2106 = vmatprep.subr.mxu0 0.0
      %2107 = vmatpush1.msra.mxu0 0.0
      %2108 = vmatprep.subr.mxu0 0.0
      %2109 = vmatpush1.msra.mxu0 0.0
      %2110 = vmatprep.mubr.f32.mxu0 0.0
      %2111 = vmatmul.mubr.f32.gmra.mrb[0].mxu0 %v1948
      %v2112 = vpop.f32.mrb[0].mxu0
      %v2113 = vadd.f32 0.0, %v2112
      %v2114 = vpop.f32.mrb[0].mxu0
      %2115 = vmatprep.mubr.f32.mxu0 0.0
      %2116 = vmatmul.mubr.f32.gmra.mrb[0].mxu0 %v1951
      %v2117 = vpop.f32.mrb[0].mxu0
      %v2118 = vadd.f32 0.0, %v2117
      %v2119 = vpop.f32.mrb[0].mxu0
      %2120 = vmatprep.mubr.f32.mxu0 0.0
      %2121 = vmatmul.mubr.f32.gmra.mrb[0].mxu0 %v1954
      %v2122 = vpop.f32.mrb[0].mxu0
      %v2123 = vadd.f32 0.0, %v2122
      %v2124 = vpop.f32.mrb[0].mxu0
      %2125 = vmatprep.mubr.f32.mxu0 0.0
      %2126 = vmatmul.mubr.f32.gmra.mrb[0].mxu0 %v1957
      %v2127 = vpop.f32.mrb[0].mxu0
      %v2128 = vadd.f32 0.0, %v2127
      %v2129 = vpop.f32.mrb[0].mxu0
      %2130 = vmatprep.mubr.f32.mxu0 0.0
      %2131 = vmatmul.mubr.f32.gmra.mrb[0].mxu0 %v1960
      %v2132 = vpop.f32.mrb[0].mxu0
      %v2133 = vadd.f32 0.0, %v2132
      %v2134 = vpop.f32.mrb[0].mxu0
      %2135 = vmatprep.mubr.f32.mxu0 0.0
      %2136 = vmatmul.mubr.f32.gmra.mrb[0].mxu0 %v1963
      %v2137 = vpop.f32.mrb[0].mxu0
      %v2138 = vadd.f32 0.0, %v2137
      %v2139 = vpop.f32.mrb[0].mxu0
      %2140 = vmatprep.mubr.f32.mxu0 0.0
      %2141 = vmatmul.mubr.f32.gmra.mrb[0].mxu0 %v1966
      %v2142 = vpop.f32.mrb[0].mxu0
      %v2143 = vadd.f32 0.0, %v2142
      %v2144 = vpop.f32.mrb[0].mxu0
      %2145 = vmatprep.mubr.f32.mxu0 0.0
      %2146 = vmatmul.mubr.f32.gmra.mrb[0].mxu0 %v1969
      %v2147 = vpop.f32.mrb[0].mxu0
      %v2148 = vadd.f32 0.0, %v2147
      %v2149 = vpop.f32.mrb[0].mxu0
      %2150 = vmatprep.mubr.f32.mxu0 0.0
      %2151 = vmatmul.mubr.f32.gmra.mrb[0].mxu0 %v1972
      %v2152 = vpop.f32.mrb[0].mxu0
      %v2153 = vadd.f32 0.0, %v2152
      %v2154 = vpop.f32.mrb[0].mxu0
      %2155 = vmatprep.mubr.f32.mxu0 0.0
      %2156 = vmatmul.mubr.f32.gmra.mrb[0].mxu0 %v1975
      %v2157 = vpop.f32.mrb[0].mxu0
      %v2158 = vadd.f32 0.0, %v2157
      %v2159 = vpop.f32.mrb[0].mxu0
      %2160 = vmatprep.mubr.f32.mxu0 0.0
      %2161 = vmatmul.mubr.f32.gmra.mrb[0].mxu0 %v1978
      %v2162 = vpop.f32.mrb[0].mxu0
      %v2163 = vadd.f32 0.0, %v2162
      %v2164 = vpop.f32.mrb[0].mxu0
      %2165 = vmatprep.mubr.f32.mxu0 0.0
      %2166 = vmatmul.mubr.f32.gmra.mrb[0].mxu0 %v1981
      %v2167 = vpop.f32.mrb[0].mxu0
      %v2168 = vadd.f32 0.0, %v2167
      %v2169 = vpop.f32.mrb[0].mxu0
      %2170 = vmatprep.mubr.f32.mxu0 0.0
      %2171 = vmatmul.mubr.f32.gmra.mrb[0].mxu0 %v1984
      %v2172 = vpop.f32.mrb[0].mxu0
      %v2173 = vadd.f32 0.0, %v2172
      %v2174 = vpop.f32.mrb[0].mxu0
      %2175 = vmatprep.mubr.f32.mxu0 0.0
      %2176 = vmatmul.mubr.f32.gmra.mrb[0].mxu0 %v1987
      %v2177 = vpop.f32.mrb[0].mxu0
      %v2178 = vadd.f32 0.0, %v2177
      %v2179 = vpop.f32.mrb[0].mxu0
      %2180 = vmatprep.mubr.f32.mxu0 0.0
      %2181 = vmatmul.mubr.f32.gmra.mrb[0].mxu0 %v1990
      %v2182 = vpop.f32.mrb[0].mxu0
      %v2183 = vadd.f32 0.0, %v2182
      %v2184 = vpop.f32.mrb[0].mxu0
      %2185 = vmatprep.mubr.f32.mxu0 0.0
      %2186 = vmatmul.mubr.f32.gmra.mrb[0].mxu0 %v1993
      %v2187 = vpop.f32.mrb[0].mxu0
      %v2188 = vadd.f32 0.0, %v2187
      %v2189 = vpop.f32.mrb[0].mxu0
      %2190 = vmatprep.mubr.f32.mxu0 0.0
      %2191 = vmatmul.mubr.f32.gmra.mrb[0].mxu0 %v1996
      %v2192 = vpop.f32.mrb[0].mxu0
      %v2193 = vadd.f32 0.0, %v2192
      %v2194 = vpop.f32.mrb[0].mxu0
      %2195 = vmatprep.mubr.f32.mxu0 0.0
      %2196 = vmatmul.mubr.f32.gmra.mrb[0].mxu0 %v1999
      %v2197 = vpop.f32.mrb[0].mxu0
      %v2198 = vadd.f32 0.0, %v2197
      %v2199 = vpop.f32.mrb[0].mxu0
      %2200 = vmatprep.mubr.f32.mxu0 0.0
      %2201 = vmatmul.mubr.f32.gmra.mrb[0].mxu0 %v2002
      %v2202 = vpop.f32.mrb[0].mxu0
      %v2203 = vadd.f32 0.0, %v2202
      %v2204 = vpop.f32.mrb[0].mxu0
      %2205 = vmatprep.mubr.f32.mxu0 0.0
      %2206 = vmatmul.mubr.f32.gmra.mrb[0].mxu0 %v2005
      %v2207 = vpop.f32.mrb[0].mxu0
      %v2208 = vadd.f32 0.0, %v2207
      %v2209 = vpop.f32.mrb[0].mxu0
      %2210 = vmatprep.mubr.f32.mxu0 0.0
      %2211 = vmatmul.mubr.f32.gmra.mrb[0].mxu0 %v2008
      %v2212 = vpop.f32.mrb[0].mxu0
      %v2213 = vadd.f32 0.0, %v2212
      %v2214 = vpop.f32.mrb[0].mxu0
      %2215 = vmatprep.mubr.f32.mxu0 0.0
      %2216 = vmatmul.mubr.f32.gmra.mrb[0].mxu0 %v2011
      %v2217 = vpop.f32.mrb[0].mxu0
      %v2218 = vadd.f32 0.0, %v2217
      %v2219 = vpop.f32.mrb[0].mxu0
      %2220 = vmatprep.mubr.f32.mxu0 0.0
      %2221 = vmatmul.mubr.f32.gmra.mrb[0].mxu0 %v2014
      %v2222 = vpop.f32.mrb[0].mxu0
      %v2223 = vadd.f32 0.0, %v2222
      %v2224 = vpop.f32.mrb[0].mxu0
      %2225 = vmatprep.mubr.f32.mxu0 0.0
      %2226 = vmatmul.mubr.f32.gmra.mrb[0].mxu0 %v2017
      %v2227 = vpop.f32.mrb[0].mxu0
      %v2228 = vadd.f32 0.0, %v2227
      %v2229 = vpop.f32.mrb[0].mxu0
      %2230 = vmatprep.mubr.f32.mxu0 0.0
      %2231 = vmatmul.mubr.f32.gmra.mrb[0].mxu0 %v2020
      %v2232 = vpop.f32.mrb[0].mxu0
      %v2233 = vadd.f32 0.0, %v2232
      %v2234 = vpop.f32.mrb[0].mxu0
      %2235 = vmatprep.mubr.f32.mxu0 0.0
      %2236 = vmatmul.mubr.f32.gmra.mrb[0].mxu0 %v2023
      %v2237 = vpop.f32.mrb[0].mxu0
      %v2238 = vadd.f32 0.0, %v2237
      %v2239 = vpop.f32.mrb[0].mxu0
      %2240 = vmatprep.mubr.f32.mxu0 0.0
      %2241 = vmatmul.mubr.f32.gmra.mrb[0].mxu0 %v2026
      %v2242 = vpop.f32.mrb[0].mxu0
      %v2243 = vadd.f32 0.0, %v2242
      %v2244 = vpop.f32.mrb[0].mxu0
      %2245 = vmatprep.mubr.f32.mxu0 0.0
      %2246 = vmatmul.mubr.f32.gmra.mrb[0].mxu0 %v2029
      %v2247 = vpop.f32.mrb[0].mxu0
      %v2248 = vadd.f32 0.0, %v2247
      %v2249 = vpop.f32.mrb[0].mxu0
      %2250 = vmatprep.mubr.f32.mxu0 0.0
      %2251 = vmatmul.mubr.f32.gmra.mrb[0].mxu0 %v2032
      %v2252 = vpop.f32.mrb[0].mxu0
      %v2253 = vadd.f32 0.0, %v2252
      %v2254 = vpop.f32.mrb[0].mxu0
      %2255 = vmatprep.mubr.f32.mxu0 0.0
      %2256 = vmatmul.mubr.f32.gmra.mrb[0].mxu0 %v2035
      %v2257 = vpop.f32.mrb[0].mxu0
      %v2258 = vadd.f32 0.0, %v2257
      %v2259 = vpop.f32.mrb[0].mxu0
      %2260 = vmatprep.mubr.f32.mxu0 0.0
      %2261 = vmatmul.mubr.f32.gmra.mrb[0].mxu0 %v2038
      %v2262 = vpop.f32.mrb[0].mxu0
      %v2263 = vadd.f32 0.0, %v2262
      %v2264 = vpop.f32.mrb[0].mxu0
      %2265 = vmatprep.mubr.f32.mxu0 0.0
      %2266 = vmatmul.mubr.f32.gmra.mrb[0].mxu0 %v2041
      %v2267 = vpop.f32.mrb[0].mxu0
      %v2268 = vadd.f32 0.0, %v2267
      %v2269 = vpop.f32.mrb[0].mxu0
      %2270 = vdwg.mxu0
      %v2271 = vadd.f32 %v1755, %v2113
      %v2272 = vadd.f32 %v1760, %v2118
      %v2273 = vadd.f32 %v1765, %v2123
      %v2274 = vadd.f32 %v1770, %v2128
      %v2275 = vadd.f32 %v1775, %v2133
      %v2276 = vadd.f32 %v1780, %v2138
      %v2277 = vadd.f32 %v1785, %v2143
      %v2278 = vadd.f32 %v1790, %v2148
      %v2279 = vadd.f32 %v1795, %v2153
      %v2280 = vadd.f32 %v1800, %v2158
      %v2281 = vadd.f32 %v1805, %v2163
      %v2282 = vadd.f32 %v1810, %v2168
      %v2283 = vadd.f32 %v1815, %v2173
      %v2284 = vadd.f32 %v1820, %v2178
      %v2285 = vadd.f32 %v1825, %v2183
      %v2286 = vadd.f32 %v1830, %v2188
      %v2287 = vadd.f32 %v1835, %v2193
      %v2288 = vadd.f32 %v1840, %v2198
      %v2289 = vadd.f32 %v1845, %v2203
      %v2290 = vadd.f32 %v1850, %v2208
      %v2291 = vadd.f32 %v1855, %v2213
      %v2292 = vadd.f32 %v1860, %v2218
      %v2293 = vadd.f32 %v1865, %v2223
      %v2294 = vadd.f32 %v1870, %v2228
      %v2295 = vadd.f32 %v1875, %v2233
      %v2296 = vadd.f32 %v1880, %v2238
      %v2297 = vadd.f32 %v1885, %v2243
      %v2298 = vadd.f32 %v1890, %v2248
      %v2299 = vadd.f32 %v1895, %v2253
      %v2300 = vadd.f32 %v1900, %v2258
      %v2301 = vadd.f32 %v1905, %v2263
      %v2302 = vadd.f32 %v1910, %v2268
      %s2303 = scalar_lea.vmem [#allocation3], 16
      %v2304 = vld [vmem:[%s2303] sm:$0xff]
      %v2305 = vld [vmem:[%s2303 + $0x8] sm:$0xff]
      %v2306 = vld [vmem:[%s2303 + $0x10] sm:$0xff]
      %v2307 = vld [vmem:[%s2303 + $0x18] sm:$0xff]
      %v2308 = vld [vmem:[%s2303 + $0x20] sm:$0xff]
      %v2309 = vld [vmem:[%s2303 + $0x28] sm:$0xff]
      %v2310 = vld [vmem:[%s2303 + $0x30] sm:$0xff]
      %v2311 = vld [vmem:[%s2303 + $0x38] sm:$0xff]
      %v2312 = vld [vmem:[%s2303 + $0x40] sm:$0xff]
      %v2313 = vld [vmem:[%s2303 + $0x48] sm:$0xff]
      %v2314 = vld [vmem:[%s2303 + $0x50] sm:$0xff]
      %v2315 = vld [vmem:[%s2303 + $0x58] sm:$0xff]
      %v2316 = vld [vmem:[%s2303 + $0x60] sm:$0xff]
      %v2317 = vld [vmem:[%s2303 + $0x68] sm:$0xff]
      %v2318 = vld [vmem:[%s2303 + $0x70] sm:$0xff]
      %v2319 = vld [vmem:[%s2303 + $0x78] sm:$0xff]
      %v2320 = vld [vmem:[%s2303 + $0x80] sm:$0xff]
      %v2321 = vld [vmem:[%s2303 + $0x88] sm:$0xff]
      %v2322 = vld [vmem:[%s2303 + $0x90] sm:$0xff]
      %v2323 = vld [vmem:[%s2303 + $0x98] sm:$0xff]
      %v2324 = vld [vmem:[%s2303 + $0xa0] sm:$0xff]
      %v2325 = vld [vmem:[%s2303 + $0xa8] sm:$0xff]
      %v2326 = vld [vmem:[%s2303 + $0xb0] sm:$0xff]
      %v2327 = vld [vmem:[%s2303 + $0xb8] sm:$0xff]
      %v2328 = vld [vmem:[%s2303 + $0xc0] sm:$0xff]
      %v2329 = vld [vmem:[%s2303 + $0xc8] sm:$0xff]
      %v2330 = vld [vmem:[%s2303 + $0xd0] sm:$0xff]
      %v2331 = vld [vmem:[%s2303 + $0xd8] sm:$0xff]
      %v2332 = vld [vmem:[%s2303 + $0xe0] sm:$0xff]
      %v2333 = vld [vmem:[%s2303 + $0xe8] sm:$0xff]
      %v2334 = vld [vmem:[%s2303 + $0xf0] sm:$0xff]
      %v2335 = vld [vmem:[%s2303 + $0xf8] sm:$0xff]
      %s2336 = scalar_lea.vmem %s8, 12
      %v2337 = vld [vmem:[%s2336] sm:$0xf]
      %v2339 = vsel %vm917, %v2304, 0
      %v2342 = vsel %vm917, %v2305, 0
      %v2345 = vsel %vm917, %v2306, 0
      %v2348 = vsel %vm917, %v2307, 0
      %v2351 = vsel %vm917, %v2308, 0
      %v2354 = vsel %vm917, %v2309, 0
      %v2357 = vsel %vm917, %v2310, 0
      %v2360 = vsel %vm917, %v2311, 0
      %v2363 = vsel %vm917, %v2312, 0
      %v2366 = vsel %vm917, %v2313, 0
      %v2369 = vsel %vm917, %v2314, 0
      %v2372 = vsel %vm917, %v2315, 0
      %v2375 = vsel %vm917, %v2316, 0
      %v2378 = vsel %vm917, %v2317, 0
      %v2381 = vsel %vm917, %v2318, 0
      %v2384 = vsel %vm917, %v2319, 0
      %v2387 = vsel %vm917, %v2320, 0
      %v2390 = vsel %vm917, %v2321, 0
      %v2393 = vsel %vm917, %v2322, 0
      %v2396 = vsel %vm917, %v2323, 0
      %v2399 = vsel %vm917, %v2324, 0
      %v2402 = vsel %vm917, %v2325, 0
      %v2405 = vsel %vm917, %v2326, 0
      %v2408 = vsel %vm917, %v2327, 0
      %v2411 = vsel %vm917, %v2328, 0
      %v2414 = vsel %vm917, %v2329, 0
      %v2417 = vsel %vm917, %v2330, 0
      %v2420 = vsel %vm917, %v2331, 0
      %v2423 = vsel %vm917, %v2332, 0
      %v2426 = vsel %vm917, %v2333, 0
      %v2429 = vsel %vm917, %v2334, 0
      %v2432 = vsel %vm917, %v2335, 0
      %v2435 = vsel %vm1360, %v2337, 0
      %2437 = vmatprep.subr.mxu0 0.0
      %2438 = vmatpush1.msra.mxu0 %v2435
      %2439 = vmatprep.subr.mxu0 0.0
      %2440 = vmatpush1.msra.mxu0 0.0
      %2441 = vmatprep.subr.mxu0 0.0
      %2442 = vmatpush1.msra.mxu0 0.0
      %2443 = vmatprep.subr.mxu0 0.0
      %2444 = vmatpush1.msra.mxu0 0.0
      %2445 = vmatprep.subr.mxu0 0.0
      %2446 = vmatpush1.msra.mxu0 0.0
      %2447 = vmatprep.subr.mxu0 0.0
      %2448 = vmatpush1.msra.mxu0 0.0
      %2449 = vmatprep.subr.mxu0 0.0
      %2450 = vmatpush1.msra.mxu0 0.0
      %2451 = vmatprep.subr.mxu0 0.0
      %2452 = vmatpush1.msra.mxu0 0.0
      %2453 = vmatprep.subr.mxu0 0.0
      %2454 = vmatpush1.msra.mxu0 0.0
      %2455 = vmatprep.subr.mxu0 0.0
      %2456 = vmatpush1.msra.mxu0 0.0
      %2457 = vmatprep.subr.mxu0 0.0
      %2458 = vmatpush1.msra.mxu0 0.0
      %2459 = vmatprep.subr.mxu0 0.0
      %2460 = vmatpush1.msra.mxu0 0.0
      %2461 = vmatprep.subr.mxu0 0.0
      %2462 = vmatpush1.msra.mxu0 0.0
      %2463 = vmatprep.subr.mxu0 0.0
      %2464 = vmatpush1.msra.mxu0 0.0
      %2465 = vmatprep.subr.mxu0 0.0
      %2466 = vmatpush1.msra.mxu0 0.0
      %2467 = vmatprep.subr.mxu0 0.0
      %2468 = vmatpush1.msra.mxu0 0.0
      %2469 = vmatprep.subr.mxu0 0.0
      %2470 = vmatpush1.msra.mxu0 0.0
      %2471 = vmatprep.subr.mxu0 0.0
      %2472 = vmatpush1.msra.mxu0 0.0
      %2473 = vmatprep.subr.mxu0 0.0
      %2474 = vmatpush1.msra.mxu0 0.0
      %2475 = vmatprep.subr.mxu0 0.0
      %2476 = vmatpush1.msra.mxu0 0.0
      %2477 = vmatprep.subr.mxu0 0.0
      %2478 = vmatpush1.msra.mxu0 0.0
      %2479 = vmatprep.subr.mxu0 0.0
      %2480 = vmatpush1.msra.mxu0 0.0
      %2481 = vmatprep.subr.mxu0 0.0
      %2482 = vmatpush1.msra.mxu0 0.0
      %2483 = vmatprep.subr.mxu0 0.0
      %2484 = vmatpush1.msra.mxu0 0.0
      %2485 = vmatprep.subr.mxu0 0.0
      %2486 = vmatpush1.msra.mxu0 0.0
      %2487 = vmatprep.subr.mxu0 0.0
      %2488 = vmatpush1.msra.mxu0 0.0
      %2489 = vmatprep.subr.mxu0 0.0
      %2490 = vmatpush1.msra.mxu0 0.0
      %2491 = vmatprep.subr.mxu0 0.0
      %2492 = vmatpush1.msra.mxu0 0.0
      %2493 = vmatprep.subr.mxu0 0.0
      %2494 = vmatpush1.msra.mxu0 0.0
      %2495 = vmatprep.subr.mxu0 0.0
      %2496 = vmatpush1.msra.mxu0 0.0
      %2497 = vmatprep.subr.mxu0 0.0
      %2498 = vmatpush1.msra.mxu0 0.0
      %2499 = vmatprep.subr.mxu0 0.0
      %2500 = vmatpush1.msra.mxu0 0.0
      %2501 = vmatprep.mubr.f32.mxu0 0.0
      %2502 = vmatmul.mubr.f32.gmra.mrb[0].mxu0 %v2339
      %v2503 = vpop.f32.mrb[0].mxu0
      %v2504 = vadd.f32 0.0, %v2503
      %v2505 = vpop.f32.mrb[0].mxu0
      %2506 = vmatprep.mubr.f32.mxu0 0.0
      %2507 = vmatmul.mubr.f32.gmra.mrb[0].mxu0 %v2342
      %v2508 = vpop.f32.mrb[0].mxu0
      %v2509 = vadd.f32 0.0, %v2508
      %v2510 = vpop.f32.mrb[0].mxu0
      %2511 = vmatprep.mubr.f32.mxu0 0.0
      %2512 = vmatmul.mubr.f32.gmra.mrb[0].mxu0 %v2345
      %v2513 = vpop.f32.mrb[0].mxu0
      %v2514 = vadd.f32 0.0, %v2513
      %v2515 = vpop.f32.mrb[0].mxu0
      %2516 = vmatprep.mubr.f32.mxu0 0.0
      %2517 = vmatmul.mubr.f32.gmra.mrb[0].mxu0 %v2348
      %v2518 = vpop.f32.mrb[0].mxu0
      %v2519 = vadd.f32 0.0, %v2518
      %v2520 = vpop.f32.mrb[0].mxu0
      %2521 = vmatprep.mubr.f32.mxu0 0.0
      %2522 = vmatmul.mubr.f32.gmra.mrb[0].mxu0 %v2351
      %v2523 = vpop.f32.mrb[0].mxu0
      %v2524 = vadd.f32 0.0, %v2523
      %v2525 = vpop.f32.mrb[0].mxu0
      %2526 = vmatprep.mubr.f32.mxu0 0.0
      %2527 = vmatmul.mubr.f32.gmra.mrb[0].mxu0 %v2354
      %v2528 = vpop.f32.mrb[0].mxu0
      %v2529 = vadd.f32 0.0, %v2528
      %v2530 = vpop.f32.mrb[0].mxu0
      %2531 = vmatprep.mubr.f32.mxu0 0.0
      %2532 = vmatmul.mubr.f32.gmra.mrb[0].mxu0 %v2357
      %v2533 = vpop.f32.mrb[0].mxu0
      %v2534 = vadd.f32 0.0, %v2533
      %v2535 = vpop.f32.mrb[0].mxu0
      %2536 = vmatprep.mubr.f32.mxu0 0.0
      %2537 = vmatmul.mubr.f32.gmra.mrb[0].mxu0 %v2360
      %v2538 = vpop.f32.mrb[0].mxu0
      %v2539 = vadd.f32 0.0, %v2538
      %v2540 = vpop.f32.mrb[0].mxu0
      %2541 = vmatprep.mubr.f32.mxu0 0.0
      %2542 = vmatmul.mubr.f32.gmra.mrb[0].mxu0 %v2363
      %v2543 = vpop.f32.mrb[0].mxu0
      %v2544 = vadd.f32 0.0, %v2543
      %v2545 = vpop.f32.mrb[0].mxu0
      %2546 = vmatprep.mubr.f32.mxu0 0.0
      %2547 = vmatmul.mubr.f32.gmra.mrb[0].mxu0 %v2366
      %v2548 = vpop.f32.mrb[0].mxu0
      %v2549 = vadd.f32 0.0, %v2548
      %v2550 = vpop.f32.mrb[0].mxu0
      %2551 = vmatprep.mubr.f32.mxu0 0.0
      %2552 = vmatmul.mubr.f32.gmra.mrb[0].mxu0 %v2369
      %v2553 = vpop.f32.mrb[0].mxu0
      %v2554 = vadd.f32 0.0, %v2553
      %v2555 = vpop.f32.mrb[0].mxu0
      %2556 = vmatprep.mubr.f32.mxu0 0.0
      %2557 = vmatmul.mubr.f32.gmra.mrb[0].mxu0 %v2372
      %v2558 = vpop.f32.mrb[0].mxu0
      %v2559 = vadd.f32 0.0, %v2558
      %v2560 = vpop.f32.mrb[0].mxu0
      %2561 = vmatprep.mubr.f32.mxu0 0.0
      %2562 = vmatmul.mubr.f32.gmra.mrb[0].mxu0 %v2375
      %v2563 = vpop.f32.mrb[0].mxu0
      %v2564 = vadd.f32 0.0, %v2563
      %v2565 = vpop.f32.mrb[0].mxu0
      %2566 = vmatprep.mubr.f32.mxu0 0.0
      %2567 = vmatmul.mubr.f32.gmra.mrb[0].mxu0 %v2378
      %v2568 = vpop.f32.mrb[0].mxu0
      %v2569 = vadd.f32 0.0, %v2568
      %v2570 = vpop.f32.mrb[0].mxu0
      %2571 = vmatprep.mubr.f32.mxu0 0.0
      %2572 = vmatmul.mubr.f32.gmra.mrb[0].mxu0 %v2381
      %v2573 = vpop.f32.mrb[0].mxu0
      %v2574 = vadd.f32 0.0, %v2573
      %v2575 = vpop.f32.mrb[0].mxu0
      %2576 = vmatprep.mubr.f32.mxu0 0.0
      %2577 = vmatmul.mubr.f32.gmra.mrb[0].mxu0 %v2384
      %v2578 = vpop.f32.mrb[0].mxu0
      %v2579 = vadd.f32 0.0, %v2578
      %v2580 = vpop.f32.mrb[0].mxu0
      %2581 = vmatprep.mubr.f32.mxu0 0.0
      %2582 = vmatmul.mubr.f32.gmra.mrb[0].mxu0 %v2387
      %v2583 = vpop.f32.mrb[0].mxu0
      %v2584 = vadd.f32 0.0, %v2583
      %v2585 = vpop.f32.mrb[0].mxu0
      %2586 = vmatprep.mubr.f32.mxu0 0.0
      %2587 = vmatmul.mubr.f32.gmra.mrb[0].mxu0 %v2390
      %v2588 = vpop.f32.mrb[0].mxu0
      %v2589 = vadd.f32 0.0, %v2588
      %v2590 = vpop.f32.mrb[0].mxu0
      %2591 = vmatprep.mubr.f32.mxu0 0.0
      %2592 = vmatmul.mubr.f32.gmra.mrb[0].mxu0 %v2393
      %v2593 = vpop.f32.mrb[0].mxu0
      %v2594 = vadd.f32 0.0, %v2593
      %v2595 = vpop.f32.mrb[0].mxu0
      %2596 = vmatprep.mubr.f32.mxu0 0.0
      %2597 = vmatmul.mubr.f32.gmra.mrb[0].mxu0 %v2396
      %v2598 = vpop.f32.mrb[0].mxu0
      %v2599 = vadd.f32 0.0, %v2598
      %v2600 = vpop.f32.mrb[0].mxu0
      %2601 = vmatprep.mubr.f32.mxu0 0.0
      %2602 = vmatmul.mubr.f32.gmra.mrb[0].mxu0 %v2399
      %v2603 = vpop.f32.mrb[0].mxu0
      %v2604 = vadd.f32 0.0, %v2603
      %v2605 = vpop.f32.mrb[0].mxu0
      %2606 = vmatprep.mubr.f32.mxu0 0.0
      %2607 = vmatmul.mubr.f32.gmra.mrb[0].mxu0 %v2402
      %v2608 = vpop.f32.mrb[0].mxu0
      %v2609 = vadd.f32 0.0, %v2608
      %v2610 = vpop.f32.mrb[0].mxu0
      %2611 = vmatprep.mubr.f32.mxu0 0.0
      %2612 = vmatmul.mubr.f32.gmra.mrb[0].mxu0 %v2405
      %v2613 = vpop.f32.mrb[0].mxu0
      %v2614 = vadd.f32 0.0, %v2613
      %v2615 = vpop.f32.mrb[0].mxu0
      %2616 = vmatprep.mubr.f32.mxu0 0.0
      %2617 = vmatmul.mubr.f32.gmra.mrb[0].mxu0 %v2408
      %v2618 = vpop.f32.mrb[0].mxu0
      %v2619 = vadd.f32 0.0, %v2618
      %v2620 = vpop.f32.mrb[0].mxu0
      %2621 = vmatprep.mubr.f32.mxu0 0.0
      %2622 = vmatmul.mubr.f32.gmra.mrb[0].mxu0 %v2411
      %v2623 = vpop.f32.mrb[0].mxu0
      %v2624 = vadd.f32 0.0, %v2623
      %v2625 = vpop.f32.mrb[0].mxu0
      %2626 = vmatprep.mubr.f32.mxu0 0.0
      %2627 = vmatmul.mubr.f32.gmra.mrb[0].mxu0 %v2414
      %v2628 = vpop.f32.mrb[0].mxu0
      %v2629 = vadd.f32 0.0, %v2628
      %v2630 = vpop.f32.mrb[0].mxu0
      %2631 = vmatprep.mubr.f32.mxu0 0.0
      %2632 = vmatmul.mubr.f32.gmra.mrb[0].mxu0 %v2417
      %v2633 = vpop.f32.mrb[0].mxu0
      %v2634 = vadd.f32 0.0, %v2633
      %v2635 = vpop.f32.mrb[0].mxu0
      %2636 = vmatprep.mubr.f32.mxu0 0.0
      %2637 = vmatmul.mubr.f32.gmra.mrb[0].mxu0 %v2420
      %v2638 = vpop.f32.mrb[0].mxu0
      %v2639 = vadd.f32 0.0, %v2638
      %v2640 = vpop.f32.mrb[0].mxu0
      %2641 = vmatprep.mubr.f32.mxu0 0.0
      %2642 = vmatmul.mubr.f32.gmra.mrb[0].mxu0 %v2423
      %v2643 = vpop.f32.mrb[0].mxu0
      %v2644 = vadd.f32 0.0, %v2643
      %v2645 = vpop.f32.mrb[0].mxu0
      %2646 = vmatprep.mubr.f32.mxu0 0.0
      %2647 = vmatmul.mubr.f32.gmra.mrb[0].mxu0 %v2426
      %v2648 = vpop.f32.mrb[0].mxu0
      %v2649 = vadd.f32 0.0, %v2648
      %v2650 = vpop.f32.mrb[0].mxu0
      %2651 = vmatprep.mubr.f32.mxu0 0.0
      %2652 = vmatmul.mubr.f32.gmra.mrb[0].mxu0 %v2429
      %v2653 = vpop.f32.mrb[0].mxu0
      %v2654 = vadd.f32 0.0, %v2653
      %v2655 = vpop.f32.mrb[0].mxu0
      %2656 = vmatprep.mubr.f32.mxu0 0.0
      %2657 = vmatmul.mubr.f32.gmra.mrb[0].mxu0 %v2432
      %v2658 = vpop.f32.mrb[0].mxu0
      %v2659 = vadd.f32 0.0, %v2658
      %v2660 = vpop.f32.mrb[0].mxu0
      %2661 = vdwg.mxu0
      %v2662 = vadd.f32 %v2271, %v2504
      %v2663 = vadd.f32 %v2272, %v2509
      %v2664 = vadd.f32 %v2273, %v2514
      %v2665 = vadd.f32 %v2274, %v2519
      %v2666 = vadd.f32 %v2275, %v2524
      %v2667 = vadd.f32 %v2276, %v2529
      %v2668 = vadd.f32 %v2277, %v2534
      %v2669 = vadd.f32 %v2278, %v2539
      %v2670 = vadd.f32 %v2279, %v2544
      %v2671 = vadd.f32 %v2280, %v2549
      %v2672 = vadd.f32 %v2281, %v2554
      %v2673 = vadd.f32 %v2282, %v2559
      %v2674 = vadd.f32 %v2283, %v2564
      %v2675 = vadd.f32 %v2284, %v2569
      %v2676 = vadd.f32 %v2285, %v2574
      %v2677 = vadd.f32 %v2286, %v2579
      %v2678 = vadd.f32 %v2287, %v2584
      %v2679 = vadd.f32 %v2288, %v2589
      %v2680 = vadd.f32 %v2289, %v2594
      %v2681 = vadd.f32 %v2290, %v2599
      %v2682 = vadd.f32 %v2291, %v2604
      %v2683 = vadd.f32 %v2292, %v2609
      %v2684 = vadd.f32 %v2293, %v2614
      %v2685 = vadd.f32 %v2294, %v2619
      %v2686 = vadd.f32 %v2295, %v2624
      %v2687 = vadd.f32 %v2296, %v2629
      %v2688 = vadd.f32 %v2297, %v2634
      %v2689 = vadd.f32 %v2298, %v2639
      %v2690 = vadd.f32 %v2299, %v2644
      %v2691 = vadd.f32 %v2300, %v2649
      %v2692 = vadd.f32 %v2301, %v2654
      %v2693 = vadd.f32 %v2302, %v2659
      %v2694 = vld [vmem:[%s916] sm:$0xff]
      %v2695 = vld [vmem:[%s916 + $0x8] sm:$0xff]
      %v2696 = vld [vmem:[%s916 + $0x10] sm:$0xff]
      %v2697 = vld [vmem:[%s916 + $0x18] sm:$0xff]
      %v2698 = vld [vmem:[%s916 + $0x20] sm:$0xff]
      %v2699 = vld [vmem:[%s916 + $0x28] sm:$0xff]
      %v2700 = vld [vmem:[%s916 + $0x30] sm:$0xff]
      %v2701 = vld [vmem:[%s916 + $0x38] sm:$0xff]
      %v2702 = vld [vmem:[%s916 + $0x40] sm:$0xff]
      %v2703 = vld [vmem:[%s916 + $0x48] sm:$0xff]
      %v2704 = vld [vmem:[%s916 + $0x50] sm:$0xff]
      %v2705 = vld [vmem:[%s916 + $0x58] sm:$0xff]
      %v2706 = vld [vmem:[%s916 + $0x60] sm:$0xff]
      %v2707 = vld [vmem:[%s916 + $0x68] sm:$0xff]
      %v2708 = vld [vmem:[%s916 + $0x70] sm:$0xff]
      %v2709 = vld [vmem:[%s916 + $0x78] sm:$0xff]
      %v2710 = vld [vmem:[%s916 + $0x80] sm:$0xff]
      %v2711 = vld [vmem:[%s916 + $0x88] sm:$0xff]
      %v2712 = vld [vmem:[%s916 + $0x90] sm:$0xff]
      %v2713 = vld [vmem:[%s916 + $0x98] sm:$0xff]
      %v2714 = vld [vmem:[%s916 + $0xa0] sm:$0xff]
      %v2715 = vld [vmem:[%s916 + $0xa8] sm:$0xff]
      %v2716 = vld [vmem:[%s916 + $0xb0] sm:$0xff]
      %v2717 = vld [vmem:[%s916 + $0xb8] sm:$0xff]
      %v2718 = vld [vmem:[%s916 + $0xc0] sm:$0xff]
      %v2719 = vld [vmem:[%s916 + $0xc8] sm:$0xff]
      %v2720 = vld [vmem:[%s916 + $0xd0] sm:$0xff]
      %v2721 = vld [vmem:[%s916 + $0xd8] sm:$0xff]
      %v2722 = vld [vmem:[%s916 + $0xe0] sm:$0xff]
      %v2723 = vld [vmem:[%s916 + $0xe8] sm:$0xff]
      %v2724 = vld [vmem:[%s916 + $0xf0] sm:$0xff]
      %v2725 = vld [vmem:[%s916 + $0xf8] sm:$0xff]
      %s2726 = scalar_lea.vmem %s8, 16
      %v2727 = vld [vmem:[%s2726] sm:$0xf]
      %v2729 = vsel %vm917, %v2694, 0
      %v2732 = vsel %vm917, %v2695, 0
      %v2735 = vsel %vm917, %v2696, 0
      %v2738 = vsel %vm917, %v2697, 0
      %v2741 = vsel %vm917, %v2698, 0
      %v2744 = vsel %vm917, %v2699, 0
      %v2747 = vsel %vm917, %v2700, 0
      %v2750 = vsel %vm917, %v2701, 0
      %v2753 = vsel %vm917, %v2702, 0
      %v2756 = vsel %vm917, %v2703, 0
      %v2759 = vsel %vm917, %v2704, 0
      %v2762 = vsel %vm917, %v2705, 0
      %v2765 = vsel %vm917, %v2706, 0
      %v2768 = vsel %vm917, %v2707, 0
      %v2771 = vsel %vm917, %v2708, 0
      %v2774 = vsel %vm917, %v2709, 0
      %v2777 = vsel %vm917, %v2710, 0
      %v2780 = vsel %vm917, %v2711, 0
      %v2783 = vsel %vm917, %v2712, 0
      %v2786 = vsel %vm917, %v2713, 0
      %v2789 = vsel %vm917, %v2714, 0
      %v2792 = vsel %vm917, %v2715, 0
      %v2795 = vsel %vm917, %v2716, 0
      %v2798 = vsel %vm917, %v2717, 0
      %v2801 = vsel %vm917, %v2718, 0
      %v2804 = vsel %vm917, %v2719, 0
      %v2807 = vsel %vm917, %v2720, 0
      %v2810 = vsel %vm917, %v2721, 0
      %v2813 = vsel %vm917, %v2722, 0
      %v2816 = vsel %vm917, %v2723, 0
      %v2819 = vsel %vm917, %v2724, 0
      %v2822 = vsel %vm917, %v2725, 0
      %v2825 = vsel %vm1360, %v2727, 0
      %2827 = vmatprep.subr.mxu0 0.0
      %2828 = vmatpush1.msra.mxu0 %v2825
      %2829 = vmatprep.subr.mxu0 0.0
      %2830 = vmatpush1.msra.mxu0 0.0
      %2831 = vmatprep.subr.mxu0 0.0
      %2832 = vmatpush1.msra.mxu0 0.0
      %2833 = vmatprep.subr.mxu0 0.0
      %2834 = vmatpush1.msra.mxu0 0.0
      %2835 = vmatprep.subr.mxu0 0.0
      %2836 = vmatpush1.msra.mxu0 0.0
      %2837 = vmatprep.subr.mxu0 0.0
      %2838 = vmatpush1.msra.mxu0 0.0
      %2839 = vmatprep.subr.mxu0 0.0
      %2840 = vmatpush1.msra.mxu0 0.0
      %2841 = vmatprep.subr.mxu0 0.0
      %2842 = vmatpush1.msra.mxu0 0.0
      %2843 = vmatprep.subr.mxu0 0.0
      %2844 = vmatpush1.msra.mxu0 0.0
      %2845 = vmatprep.subr.mxu0 0.0
      %2846 = vmatpush1.msra.mxu0 0.0
      %2847 = vmatprep.subr.mxu0 0.0
      %2848 = vmatpush1.msra.mxu0 0.0
      %2849 = vmatprep.subr.mxu0 0.0
      %2850 = vmatpush1.msra.mxu0 0.0
      %2851 = vmatprep.subr.mxu0 0.0
      %2852 = vmatpush1.msra.mxu0 0.0
      %2853 = vmatprep.subr.mxu0 0.0
      %2854 = vmatpush1.msra.mxu0 0.0
      %2855 = vmatprep.subr.mxu0 0.0
      %2856 = vmatpush1.msra.mxu0 0.0
      %2857 = vmatprep.subr.mxu0 0.0
      %2858 = vmatpush1.msra.mxu0 0.0
      %2859 = vmatprep.subr.mxu0 0.0
      %2860 = vmatpush1.msra.mxu0 0.0
      %2861 = vmatprep.subr.mxu0 0.0
      %2862 = vmatpush1.msra.mxu0 0.0
      %2863 = vmatprep.subr.mxu0 0.0
      %2864 = vmatpush1.msra.mxu0 0.0
      %2865 = vmatprep.subr.mxu0 0.0
      %2866 = vmatpush1.msra.mxu0 0.0
      %2867 = vmatprep.subr.mxu0 0.0
      %2868 = vmatpush1.msra.mxu0 0.0
      %2869 = vmatprep.subr.mxu0 0.0
      %2870 = vmatpush1.msra.mxu0 0.0
      %2871 = vmatprep.subr.mxu0 0.0
      %2872 = vmatpush1.msra.mxu0 0.0
      %2873 = vmatprep.subr.mxu0 0.0
      %2874 = vmatpush1.msra.mxu0 0.0
      %2875 = vmatprep.subr.mxu0 0.0
      %2876 = vmatpush1.msra.mxu0 0.0
      %2877 = vmatprep.subr.mxu0 0.0
      %2878 = vmatpush1.msra.mxu0 0.0
      %2879 = vmatprep.subr.mxu0 0.0
      %2880 = vmatpush1.msra.mxu0 0.0
      %2881 = vmatprep.subr.mxu0 0.0
      %2882 = vmatpush1.msra.mxu0 0.0
      %2883 = vmatprep.subr.mxu0 0.0
      %2884 = vmatpush1.msra.mxu0 0.0
      %2885 = vmatprep.subr.mxu0 0.0
      %2886 = vmatpush1.msra.mxu0 0.0
      %2887 = vmatprep.subr.mxu0 0.0
      %2888 = vmatpush1.msra.mxu0 0.0
      %2889 = vmatprep.subr.mxu0 0.0
      %2890 = vmatpush1.msra.mxu0 0.0
      %2891 = vmatprep.mubr.f32.mxu0 0.0
      %2892 = vmatmul.mubr.f32.gmra.mrb[0].mxu0 %v2729
      %v2893 = vpop.f32.mrb[0].mxu0
      %v2894 = vadd.f32 0.0, %v2893
      %v2895 = vpop.f32.mrb[0].mxu0
      %2896 = vmatprep.mubr.f32.mxu0 0.0
      %2897 = vmatmul.mubr.f32.gmra.mrb[0].mxu0 %v2732
      %v2898 = vpop.f32.mrb[0].mxu0
      %v2899 = vadd.f32 0.0, %v2898
      %v2900 = vpop.f32.mrb[0].mxu0
      %2901 = vmatprep.mubr.f32.mxu0 0.0
      %2902 = vmatmul.mubr.f32.gmra.mrb[0].mxu0 %v2735
      %v2903 = vpop.f32.mrb[0].mxu0
      %v2904 = vadd.f32 0.0, %v2903
      %v2905 = vpop.f32.mrb[0].mxu0
      %2906 = vmatprep.mubr.f32.mxu0 0.0
      %2907 = vmatmul.mubr.f32.gmra.mrb[0].mxu0 %v2738
      %v2908 = vpop.f32.mrb[0].mxu0
      %v2909 = vadd.f32 0.0, %v2908
      %v2910 = vpop.f32.mrb[0].mxu0
      %2911 = vmatprep.mubr.f32.mxu0 0.0
      %2912 = vmatmul.mubr.f32.gmra.mrb[0].mxu0 %v2741
      %v2913 = vpop.f32.mrb[0].mxu0
      %v2914 = vadd.f32 0.0, %v2913
      %v2915 = vpop.f32.mrb[0].mxu0
      %2916 = vmatprep.mubr.f32.mxu0 0.0
      %2917 = vmatmul.mubr.f32.gmra.mrb[0].mxu0 %v2744
      %v2918 = vpop.f32.mrb[0].mxu0
      %v2919 = vadd.f32 0.0, %v2918
      %v2920 = vpop.f32.mrb[0].mxu0
      %2921 = vmatprep.mubr.f32.mxu0 0.0
      %2922 = vmatmul.mubr.f32.gmra.mrb[0].mxu0 %v2747
      %v2923 = vpop.f32.mrb[0].mxu0
      %v2924 = vadd.f32 0.0, %v2923
      %v2925 = vpop.f32.mrb[0].mxu0
      %2926 = vmatprep.mubr.f32.mxu0 0.0
      %2927 = vmatmul.mubr.f32.gmra.mrb[0].mxu0 %v2750
      %v2928 = vpop.f32.mrb[0].mxu0
      %v2929 = vadd.f32 0.0, %v2928
      %v2930 = vpop.f32.mrb[0].mxu0
      %2931 = vmatprep.mubr.f32.mxu0 0.0
      %2932 = vmatmul.mubr.f32.gmra.mrb[0].mxu0 %v2753
      %v2933 = vpop.f32.mrb[0].mxu0
      %v2934 = vadd.f32 0.0, %v2933
      %v2935 = vpop.f32.mrb[0].mxu0
      %2936 = vmatprep.mubr.f32.mxu0 0.0
      %2937 = vmatmul.mubr.f32.gmra.mrb[0].mxu0 %v2756
      %v2938 = vpop.f32.mrb[0].mxu0
      %v2939 = vadd.f32 0.0, %v2938
      %v2940 = vpop.f32.mrb[0].mxu0
      %2941 = vmatprep.mubr.f32.mxu0 0.0
      %2942 = vmatmul.mubr.f32.gmra.mrb[0].mxu0 %v2759
      %v2943 = vpop.f32.mrb[0].mxu0
      %v2944 = vadd.f32 0.0, %v2943
      %v2945 = vpop.f32.mrb[0].mxu0
      %2946 = vmatprep.mubr.f32.mxu0 0.0
      %2947 = vmatmul.mubr.f32.gmra.mrb[0].mxu0 %v2762
      %v2948 = vpop.f32.mrb[0].mxu0
      %v2949 = vadd.f32 0.0, %v2948
      %v2950 = vpop.f32.mrb[0].mxu0
      %2951 = vmatprep.mubr.f32.mxu0 0.0
      %2952 = vmatmul.mubr.f32.gmra.mrb[0].mxu0 %v2765
      %v2953 = vpop.f32.mrb[0].mxu0
      %v2954 = vadd.f32 0.0, %v2953
      %v2955 = vpop.f32.mrb[0].mxu0
      %2956 = vmatprep.mubr.f32.mxu0 0.0
      %2957 = vmatmul.mubr.f32.gmra.mrb[0].mxu0 %v2768
      %v2958 = vpop.f32.mrb[0].mxu0
      %v2959 = vadd.f32 0.0, %v2958
      %v2960 = vpop.f32.mrb[0].mxu0
      %2961 = vmatprep.mubr.f32.mxu0 0.0
      %2962 = vmatmul.mubr.f32.gmra.mrb[0].mxu0 %v2771
      %v2963 = vpop.f32.mrb[0].mxu0
      %v2964 = vadd.f32 0.0, %v2963
      %v2965 = vpop.f32.mrb[0].mxu0
      %2966 = vmatprep.mubr.f32.mxu0 0.0
      %2967 = vmatmul.mubr.f32.gmra.mrb[0].mxu0 %v2774
      %v2968 = vpop.f32.mrb[0].mxu0
      %v2969 = vadd.f32 0.0, %v2968
      %v2970 = vpop.f32.mrb[0].mxu0
      %2971 = vmatprep.mubr.f32.mxu0 0.0
      %2972 = vmatmul.mubr.f32.gmra.mrb[0].mxu0 %v2777
      %v2973 = vpop.f32.mrb[0].mxu0
      %v2974 = vadd.f32 0.0, %v2973
      %v2975 = vpop.f32.mrb[0].mxu0
      %2976 = vmatprep.mubr.f32.mxu0 0.0
      %2977 = vmatmul.mubr.f32.gmra.mrb[0].mxu0 %v2780
      %v2978 = vpop.f32.mrb[0].mxu0
      %v2979 = vadd.f32 0.0, %v2978
      %v2980 = vpop.f32.mrb[0].mxu0
      %2981 = vmatprep.mubr.f32.mxu0 0.0
      %2982 = vmatmul.mubr.f32.gmra.mrb[0].mxu0 %v2783
      %v2983 = vpop.f32.mrb[0].mxu0
      %v2984 = vadd.f32 0.0, %v2983
      %v2985 = vpop.f32.mrb[0].mxu0
      %2986 = vmatprep.mubr.f32.mxu0 0.0
      %2987 = vmatmul.mubr.f32.gmra.mrb[0].mxu0 %v2786
      %v2988 = vpop.f32.mrb[0].mxu0
      %v2989 = vadd.f32 0.0, %v2988
      %v2990 = vpop.f32.mrb[0].mxu0
      %2991 = vmatprep.mubr.f32.mxu0 0.0
      %2992 = vmatmul.mubr.f32.gmra.mrb[0].mxu0 %v2789
      %v2993 = vpop.f32.mrb[0].mxu0
      %v2994 = vadd.f32 0.0, %v2993
      %v2995 = vpop.f32.mrb[0].mxu0
      %2996 = vmatprep.mubr.f32.mxu0 0.0
      %2997 = vmatmul.mubr.f32.gmra.mrb[0].mxu0 %v2792
      %v2998 = vpop.f32.mrb[0].mxu0
      %v2999 = vadd.f32 0.0, %v2998
      %v3000 = vpop.f32.mrb[0].mxu0
      %3001 = vmatprep.mubr.f32.mxu0 0.0
      %3002 = vmatmul.mubr.f32.gmra.mrb[0].mxu0 %v2795
      %v3003 = vpop.f32.mrb[0].mxu0
      %v3004 = vadd.f32 0.0, %v3003
      %v3005 = vpop.f32.mrb[0].mxu0
      %3006 = vmatprep.mubr.f32.mxu0 0.0
      %3007 = vmatmul.mubr.f32.gmra.mrb[0].mxu0 %v2798
      %v3008 = vpop.f32.mrb[0].mxu0
      %v3009 = vadd.f32 0.0, %v3008
      %v3010 = vpop.f32.mrb[0].mxu0
      %3011 = vmatprep.mubr.f32.mxu0 0.0
      %3012 = vmatmul.mubr.f32.gmra.mrb[0].mxu0 %v2801
      %v3013 = vpop.f32.mrb[0].mxu0
      %v3014 = vadd.f32 0.0, %v3013
      %v3015 = vpop.f32.mrb[0].mxu0
      %3016 = vmatprep.mubr.f32.mxu0 0.0
      %3017 = vmatmul.mubr.f32.gmra.mrb[0].mxu0 %v2804
      %v3018 = vpop.f32.mrb[0].mxu0
      %v3019 = vadd.f32 0.0, %v3018
      %v3020 = vpop.f32.mrb[0].mxu0
      %3021 = vmatprep.mubr.f32.mxu0 0.0
      %3022 = vmatmul.mubr.f32.gmra.mrb[0].mxu0 %v2807
      %v3023 = vpop.f32.mrb[0].mxu0
      %v3024 = vadd.f32 0.0, %v3023
      %v3025 = vpop.f32.mrb[0].mxu0
      %3026 = vmatprep.mubr.f32.mxu0 0.0
      %3027 = vmatmul.mubr.f32.gmra.mrb[0].mxu0 %v2810
      %v3028 = vpop.f32.mrb[0].mxu0
      %v3029 = vadd.f32 0.0, %v3028
      %v3030 = vpop.f32.mrb[0].mxu0
      %3031 = vmatprep.mubr.f32.mxu0 0.0
      %3032 = vmatmul.mubr.f32.gmra.mrb[0].mxu0 %v2813
      %v3033 = vpop.f32.mrb[0].mxu0
      %v3034 = vadd.f32 0.0, %v3033
      %v3035 = vpop.f32.mrb[0].mxu0
      %3036 = vmatprep.mubr.f32.mxu0 0.0
      %3037 = vmatmul.mubr.f32.gmra.mrb[0].mxu0 %v2816
      %v3038 = vpop.f32.mrb[0].mxu0
      %v3039 = vadd.f32 0.0, %v3038
      %v3040 = vpop.f32.mrb[0].mxu0
      %3041 = vmatprep.mubr.f32.mxu0 0.0
      %3042 = vmatmul.mubr.f32.gmra.mrb[0].mxu0 %v2819
      %v3043 = vpop.f32.mrb[0].mxu0
      %v3044 = vadd.f32 0.0, %v3043
      %v3045 = vpop.f32.mrb[0].mxu0
      %3046 = vmatprep.mubr.f32.mxu0 0.0
      %3047 = vmatmul.mubr.f32.gmra.mrb[0].mxu0 %v2822
      %v3048 = vpop.f32.mrb[0].mxu0
      %v3049 = vadd.f32 0.0, %v3048
      %v3050 = vpop.f32.mrb[0].mxu0
      %3051 = vdwg.mxu0
      %v3052 = vadd.f32 %v2662, %v2894
      %v3053 = vadd.f32 %v2663, %v2899
      %v3054 = vadd.f32 %v2664, %v2904
      %v3055 = vadd.f32 %v2665, %v2909
      %v3056 = vadd.f32 %v2666, %v2914
      %v3057 = vadd.f32 %v2667, %v2919
      %v3058 = vadd.f32 %v2668, %v2924
      %v3059 = vadd.f32 %v2669, %v2929
      %v3060 = vadd.f32 %v2670, %v2934
      %v3061 = vadd.f32 %v2671, %v2939
      %v3062 = vadd.f32 %v2672, %v2944
      %v3063 = vadd.f32 %v2673, %v2949
      %v3064 = vadd.f32 %v2674, %v2954
      %v3065 = vadd.f32 %v2675, %v2959
      %v3066 = vadd.f32 %v2676, %v2964
      %v3067 = vadd.f32 %v2677, %v2969
      %v3068 = vadd.f32 %v2678, %v2974
      %v3069 = vadd.f32 %v2679, %v2979
      %v3070 = vadd.f32 %v2680, %v2984
      %v3071 = vadd.f32 %v2681, %v2989
      %v3072 = vadd.f32 %v2682, %v2994
      %v3073 = vadd.f32 %v2683, %v2999
      %v3074 = vadd.f32 %v2684, %v3004
      %v3075 = vadd.f32 %v2685, %v3009
      %v3076 = vadd.f32 %v2686, %v3014
      %v3077 = vadd.f32 %v2687, %v3019
      %v3078 = vadd.f32 %v2688, %v3024
      %v3079 = vadd.f32 %v2689, %v3029
      %v3080 = vadd.f32 %v2690, %v3034
      %v3081 = vadd.f32 %v2691, %v3039
      %v3082 = vadd.f32 %v2692, %v3044
      %v3083 = vadd.f32 %v2693, %v3049
      %s3084 = scalar_lea.vmem [#allocation4], 16
      %v3085 = vld [vmem:[%s3084] sm:$0xff]
      %v3086 = vld [vmem:[%s3084 + $0x8] sm:$0xff]
      %v3087 = vld [vmem:[%s3084 + $0x10] sm:$0xff]
      %v3088 = vld [vmem:[%s3084 + $0x18] sm:$0xff]
      %v3089 = vld [vmem:[%s3084 + $0x20] sm:$0xff]
      %v3090 = vld [vmem:[%s3084 + $0x28] sm:$0xff]
      %v3091 = vld [vmem:[%s3084 + $0x30] sm:$0xff]
      %v3092 = vld [vmem:[%s3084 + $0x38] sm:$0xff]
      %v3093 = vld [vmem:[%s3084 + $0x40] sm:$0xff]
      %v3094 = vld [vmem:[%s3084 + $0x48] sm:$0xff]
      %v3095 = vld [vmem:[%s3084 + $0x50] sm:$0xff]
      %v3096 = vld [vmem:[%s3084 + $0x58] sm:$0xff]
      %v3097 = vld [vmem:[%s3084 + $0x60] sm:$0xff]
      %v3098 = vld [vmem:[%s3084 + $0x68] sm:$0xff]
      %v3099 = vld [vmem:[%s3084 + $0x70] sm:$0xff]
      %v3100 = vld [vmem:[%s3084 + $0x78] sm:$0xff]
      %v3101 = vld [vmem:[%s3084 + $0x80] sm:$0xff]
      %v3102 = vld [vmem:[%s3084 + $0x88] sm:$0xff]
      %v3103 = vld [vmem:[%s3084 + $0x90] sm:$0xff]
      %v3104 = vld [vmem:[%s3084 + $0x98] sm:$0xff]
      %v3105 = vld [vmem:[%s3084 + $0xa0] sm:$0xff]
      %v3106 = vld [vmem:[%s3084 + $0xa8] sm:$0xff]
      %v3107 = vld [vmem:[%s3084 + $0xb0] sm:$0xff]
      %v3108 = vld [vmem:[%s3084 + $0xb8] sm:$0xff]
      %v3109 = vld [vmem:[%s3084 + $0xc0] sm:$0xff]
      %v3110 = vld [vmem:[%s3084 + $0xc8] sm:$0xff]
      %v3111 = vld [vmem:[%s3084 + $0xd0] sm:$0xff]
      %v3112 = vld [vmem:[%s3084 + $0xd8] sm:$0xff]
      %v3113 = vld [vmem:[%s3084 + $0xe0] sm:$0xff]
      %v3114 = vld [vmem:[%s3084 + $0xe8] sm:$0xff]
      %v3115 = vld [vmem:[%s3084 + $0xf0] sm:$0xff]
      %v3116 = vld [vmem:[%s3084 + $0xf8] sm:$0xff]
      %s3117 = scalar_lea.vmem %s8, 20
      %v3118 = vld [vmem:[%s3117] sm:$0xf]
      %v3120 = vsel %vm917, %v3085, 0
      %v3123 = vsel %vm917, %v3086, 0
      %v3126 = vsel %vm917, %v3087, 0
      %v3129 = vsel %vm917, %v3088, 0
      %v3132 = vsel %vm917, %v3089, 0
      %v3135 = vsel %vm917, %v3090, 0
      %v3138 = vsel %vm917, %v3091, 0
      %v3141 = vsel %vm917, %v3092, 0
      %v3144 = vsel %vm917, %v3093, 0
      %v3147 = vsel %vm917, %v3094, 0
      %v3150 = vsel %vm917, %v3095, 0
      %v3153 = vsel %vm917, %v3096, 0
      %v3156 = vsel %vm917, %v3097, 0
      %v3159 = vsel %vm917, %v3098, 0
      %v3162 = vsel %vm917, %v3099, 0
      %v3165 = vsel %vm917, %v3100, 0
      %v3168 = vsel %vm917, %v3101, 0
      %v3171 = vsel %vm917, %v3102, 0
      %v3174 = vsel %vm917, %v3103, 0
      %v3177 = vsel %vm917, %v3104, 0
      %v3180 = vsel %vm917, %v3105, 0
      %v3183 = vsel %vm917, %v3106, 0
      %v3186 = vsel %vm917, %v3107, 0
      %v3189 = vsel %vm917, %v3108, 0
      %v3192 = vsel %vm917, %v3109, 0
      %v3195 = vsel %vm917, %v3110, 0
      %v3198 = vsel %vm917, %v3111, 0
      %v3201 = vsel %vm917, %v3112, 0
      %v3204 = vsel %vm917, %v3113, 0
      %v3207 = vsel %vm917, %v3114, 0
      %v3210 = vsel %vm917, %v3115, 0
      %v3213 = vsel %vm917, %v3116, 0
      %v3216 = vsel %vm1360, %v3118, 0
      %3218 = vmatprep.subr.mxu0 0.0
      %3219 = vmatpush1.msra.mxu0 %v3216
      %3220 = vmatprep.subr.mxu0 0.0
      %3221 = vmatpush1.msra.mxu0 0.0
      %3222 = vmatprep.subr.mxu0 0.0
      %3223 = vmatpush1.msra.mxu0 0.0
      %3224 = vmatprep.subr.mxu0 0.0
      %3225 = vmatpush1.msra.mxu0 0.0
      %3226 = vmatprep.subr.mxu0 0.0
      %3227 = vmatpush1.msra.mxu0 0.0
      %3228 = vmatprep.subr.mxu0 0.0
      %3229 = vmatpush1.msra.mxu0 0.0
      %3230 = vmatprep.subr.mxu0 0.0
      %3231 = vmatpush1.msra.mxu0 0.0
      %3232 = vmatprep.subr.mxu0 0.0
      %3233 = vmatpush1.msra.mxu0 0.0
      %3234 = vmatprep.subr.mxu0 0.0
      %3235 = vmatpush1.msra.mxu0 0.0
      %3236 = vmatprep.subr.mxu0 0.0
      %3237 = vmatpush1.msra.mxu0 0.0
      %3238 = vmatprep.subr.mxu0 0.0
      %3239 = vmatpush1.msra.mxu0 0.0
      %3240 = vmatprep.subr.mxu0 0.0
      %3241 = vmatpush1.msra.mxu0 0.0
      %3242 = vmatprep.subr.mxu0 0.0
      %3243 = vmatpush1.msra.mxu0 0.0
      %3244 = vmatprep.subr.mxu0 0.0
      %3245 = vmatpush1.msra.mxu0 0.0
      %3246 = vmatprep.subr.mxu0 0.0
      %3247 = vmatpush1.msra.mxu0 0.0
      %3248 = vmatprep.subr.mxu0 0.0
      %3249 = vmatpush1.msra.mxu0 0.0
      %3250 = vmatprep.subr.mxu0 0.0
      %3251 = vmatpush1.msra.mxu0 0.0
      %3252 = vmatprep.subr.mxu0 0.0
      %3253 = vmatpush1.msra.mxu0 0.0
      %3254 = vmatprep.subr.mxu0 0.0
      %3255 = vmatpush1.msra.mxu0 0.0
      %3256 = vmatprep.subr.mxu0 0.0
      %3257 = vmatpush1.msra.mxu0 0.0
      %3258 = vmatprep.subr.mxu0 0.0
      %3259 = vmatpush1.msra.mxu0 0.0
      %3260 = vmatprep.subr.mxu0 0.0
      %3261 = vmatpush1.msra.mxu0 0.0
      %3262 = vmatprep.subr.mxu0 0.0
      %3263 = vmatpush1.msra.mxu0 0.0
      %3264 = vmatprep.subr.mxu0 0.0
      %3265 = vmatpush1.msra.mxu0 0.0
      %3266 = vmatprep.subr.mxu0 0.0
      %3267 = vmatpush1.msra.mxu0 0.0
      %3268 = vmatprep.subr.mxu0 0.0
      %3269 = vmatpush1.msra.mxu0 0.0
      %3270 = vmatprep.subr.mxu0 0.0
      %3271 = vmatpush1.msra.mxu0 0.0
      %3272 = vmatprep.subr.mxu0 0.0
      %3273 = vmatpush1.msra.mxu0 0.0
      %3274 = vmatprep.subr.mxu0 0.0
      %3275 = vmatpush1.msra.mxu0 0.0
      %3276 = vmatprep.subr.mxu0 0.0
      %3277 = vmatpush1.msra.mxu0 0.0
      %3278 = vmatprep.subr.mxu0 0.0
      %3279 = vmatpush1.msra.mxu0 0.0
      %3280 = vmatprep.subr.mxu0 0.0
      %3281 = vmatpush1.msra.mxu0 0.0
      %3282 = vmatprep.mubr.f32.mxu0 0.0
      %3283 = vmatmul.mubr.f32.gmra.mrb[0].mxu0 %v3120
      %v3284 = vpop.f32.mrb[0].mxu0
      %v3285 = vadd.f32 0.0, %v3284
      %v3286 = vpop.f32.mrb[0].mxu0
      %3287 = vmatprep.mubr.f32.mxu0 0.0
      %3288 = vmatmul.mubr.f32.gmra.mrb[0].mxu0 %v3123
      %v3289 = vpop.f32.mrb[0].mxu0
      %v3290 = vadd.f32 0.0, %v3289
      %v3291 = vpop.f32.mrb[0].mxu0
      %3292 = vmatprep.mubr.f32.mxu0 0.0
      %3293 = vmatmul.mubr.f32.gmra.mrb[0].mxu0 %v3126
      %v3294 = vpop.f32.mrb[0].mxu0
      %v3295 = vadd.f32 0.0, %v3294
      %v3296 = vpop.f32.mrb[0].mxu0
      %3297 = vmatprep.mubr.f32.mxu0 0.0
      %3298 = vmatmul.mubr.f32.gmra.mrb[0].mxu0 %v3129
      %v3299 = vpop.f32.mrb[0].mxu0
      %v3300 = vadd.f32 0.0, %v3299
      %v3301 = vpop.f32.mrb[0].mxu0
      %3302 = vmatprep.mubr.f32.mxu0 0.0
      %3303 = vmatmul.mubr.f32.gmra.mrb[0].mxu0 %v3132
      %v3304 = vpop.f32.mrb[0].mxu0
      %v3305 = vadd.f32 0.0, %v3304
      %v3306 = vpop.f32.mrb[0].mxu0
      %3307 = vmatprep.mubr.f32.mxu0 0.0
      %3308 = vmatmul.mubr.f32.gmra.mrb[0].mxu0 %v3135
      %v3309 = vpop.f32.mrb[0].mxu0
      %v3310 = vadd.f32 0.0, %v3309
      %v3311 = vpop.f32.mrb[0].mxu0
      %3312 = vmatprep.mubr.f32.mxu0 0.0
      %3313 = vmatmul.mubr.f32.gmra.mrb[0].mxu0 %v3138
      %v3314 = vpop.f32.mrb[0].mxu0
      %v3315 = vadd.f32 0.0, %v3314
      %v3316 = vpop.f32.mrb[0].mxu0
      %3317 = vmatprep.mubr.f32.mxu0 0.0
      %3318 = vmatmul.mubr.f32.gmra.mrb[0].mxu0 %v3141
      %v3319 = vpop.f32.mrb[0].mxu0
      %v3320 = vadd.f32 0.0, %v3319
      %v3321 = vpop.f32.mrb[0].mxu0
      %3322 = vmatprep.mubr.f32.mxu0 0.0
      %3323 = vmatmul.mubr.f32.gmra.mrb[0].mxu0 %v3144
      %v3324 = vpop.f32.mrb[0].mxu0
      %v3325 = vadd.f32 0.0, %v3324
      %v3326 = vpop.f32.mrb[0].mxu0
      %3327 = vmatprep.mubr.f32.mxu0 0.0
      %3328 = vmatmul.mubr.f32.gmra.mrb[0].mxu0 %v3147
      %v3329 = vpop.f32.mrb[0].mxu0
      %v3330 = vadd.f32 0.0, %v3329
      %v3331 = vpop.f32.mrb[0].mxu0
      %3332 = vmatprep.mubr.f32.mxu0 0.0
      %3333 = vmatmul.mubr.f32.gmra.mrb[0].mxu0 %v3150
      %v3334 = vpop.f32.mrb[0].mxu0
      %v3335 = vadd.f32 0.0, %v3334
      %v3336 = vpop.f32.mrb[0].mxu0
      %3337 = vmatprep.mubr.f32.mxu0 0.0
      %3338 = vmatmul.mubr.f32.gmra.mrb[0].mxu0 %v3153
      %v3339 = vpop.f32.mrb[0].mxu0
      %v3340 = vadd.f32 0.0, %v3339
      %v3341 = vpop.f32.mrb[0].mxu0
      %3342 = vmatprep.mubr.f32.mxu0 0.0
      %3343 = vmatmul.mubr.f32.gmra.mrb[0].mxu0 %v3156
      %v3344 = vpop.f32.mrb[0].mxu0
      %v3345 = vadd.f32 0.0, %v3344
      %v3346 = vpop.f32.mrb[0].mxu0
      %3347 = vmatprep.mubr.f32.mxu0 0.0
      %3348 = vmatmul.mubr.f32.gmra.mrb[0].mxu0 %v3159
      %v3349 = vpop.f32.mrb[0].mxu0
      %v3350 = vadd.f32 0.0, %v3349
      %v3351 = vpop.f32.mrb[0].mxu0
      %3352 = vmatprep.mubr.f32.mxu0 0.0
      %3353 = vmatmul.mubr.f32.gmra.mrb[0].mxu0 %v3162
      %v3354 = vpop.f32.mrb[0].mxu0
      %v3355 = vadd.f32 0.0, %v3354
      %v3356 = vpop.f32.mrb[0].mxu0
      %3357 = vmatprep.mubr.f32.mxu0 0.0
      %3358 = vmatmul.mubr.f32.gmra.mrb[0].mxu0 %v3165
      %v3359 = vpop.f32.mrb[0].mxu0
      %v3360 = vadd.f32 0.0, %v3359
      %v3361 = vpop.f32.mrb[0].mxu0
      %3362 = vmatprep.mubr.f32.mxu0 0.0
      %3363 = vmatmul.mubr.f32.gmra.mrb[0].mxu0 %v3168
      %v3364 = vpop.f32.mrb[0].mxu0
      %v3365 = vadd.f32 0.0, %v3364
      %v3366 = vpop.f32.mrb[0].mxu0
      %3367 = vmatprep.mubr.f32.mxu0 0.0
      %3368 = vmatmul.mubr.f32.gmra.mrb[0].mxu0 %v3171
      %v3369 = vpop.f32.mrb[0].mxu0
      %v3370 = vadd.f32 0.0, %v3369
      %v3371 = vpop.f32.mrb[0].mxu0
      %3372 = vmatprep.mubr.f32.mxu0 0.0
      %3373 = vmatmul.mubr.f32.gmra.mrb[0].mxu0 %v3174
      %v3374 = vpop.f32.mrb[0].mxu0
      %v3375 = vadd.f32 0.0, %v3374
      %v3376 = vpop.f32.mrb[0].mxu0
      %3377 = vmatprep.mubr.f32.mxu0 0.0
      %3378 = vmatmul.mubr.f32.gmra.mrb[0].mxu0 %v3177
      %v3379 = vpop.f32.mrb[0].mxu0
      %v3380 = vadd.f32 0.0, %v3379
      %v3381 = vpop.f32.mrb[0].mxu0
      %3382 = vmatprep.mubr.f32.mxu0 0.0
      %3383 = vmatmul.mubr.f32.gmra.mrb[0].mxu0 %v3180
      %v3384 = vpop.f32.mrb[0].mxu0
      %v3385 = vadd.f32 0.0, %v3384
      %v3386 = vpop.f32.mrb[0].mxu0
      %3387 = vmatprep.mubr.f32.mxu0 0.0
      %3388 = vmatmul.mubr.f32.gmra.mrb[0].mxu0 %v3183
      %v3389 = vpop.f32.mrb[0].mxu0
      %v3390 = vadd.f32 0.0, %v3389
      %v3391 = vpop.f32.mrb[0].mxu0
      %3392 = vmatprep.mubr.f32.mxu0 0.0
      %3393 = vmatmul.mubr.f32.gmra.mrb[0].mxu0 %v3186
      %v3394 = vpop.f32.mrb[0].mxu0
      %v3395 = vadd.f32 0.0, %v3394
      %v3396 = vpop.f32.mrb[0].mxu0
      %3397 = vmatprep.mubr.f32.mxu0 0.0
      %3398 = vmatmul.mubr.f32.gmra.mrb[0].mxu0 %v3189
      %v3399 = vpop.f32.mrb[0].mxu0
      %v3400 = vadd.f32 0.0, %v3399
      %v3401 = vpop.f32.mrb[0].mxu0
      %3402 = vmatprep.mubr.f32.mxu0 0.0
      %3403 = vmatmul.mubr.f32.gmra.mrb[0].mxu0 %v3192
      %v3404 = vpop.f32.mrb[0].mxu0
      %v3405 = vadd.f32 0.0, %v3404
      %v3406 = vpop.f32.mrb[0].mxu0
      %3407 = vmatprep.mubr.f32.mxu0 0.0
      %3408 = vmatmul.mubr.f32.gmra.mrb[0].mxu0 %v3195
      %v3409 = vpop.f32.mrb[0].mxu0
      %v3410 = vadd.f32 0.0, %v3409
      %v3411 = vpop.f32.mrb[0].mxu0
      %3412 = vmatprep.mubr.f32.mxu0 0.0
      %3413 = vmatmul.mubr.f32.gmra.mrb[0].mxu0 %v3198
      %v3414 = vpop.f32.mrb[0].mxu0
      %v3415 = vadd.f32 0.0, %v3414
      %v3416 = vpop.f32.mrb[0].mxu0
      %3417 = vmatprep.mubr.f32.mxu0 0.0
      %3418 = vmatmul.mubr.f32.gmra.mrb[0].mxu0 %v3201
      %v3419 = vpop.f32.mrb[0].mxu0
      %v3420 = vadd.f32 0.0, %v3419
      %v3421 = vpop.f32.mrb[0].mxu0
      %3422 = vmatprep.mubr.f32.mxu0 0.0
      %3423 = vmatmul.mubr.f32.gmra.mrb[0].mxu0 %v3204
      %v3424 = vpop.f32.mrb[0].mxu0
      %v3425 = vadd.f32 0.0, %v3424
      %v3426 = vpop.f32.mrb[0].mxu0
      %3427 = vmatprep.mubr.f32.mxu0 0.0
      %3428 = vmatmul.mubr.f32.gmra.mrb[0].mxu0 %v3207
      %v3429 = vpop.f32.mrb[0].mxu0
      %v3430 = vadd.f32 0.0, %v3429
      %v3431 = vpop.f32.mrb[0].mxu0
      %3432 = vmatprep.mubr.f32.mxu0 0.0
      %3433 = vmatmul.mubr.f32.gmra.mrb[0].mxu0 %v3210
      %v3434 = vpop.f32.mrb[0].mxu0
      %v3435 = vadd.f32 0.0, %v3434
      %v3436 = vpop.f32.mrb[0].mxu0
      %3437 = vmatprep.mubr.f32.mxu0 0.0
      %3438 = vmatmul.mubr.f32.gmra.mrb[0].mxu0 %v3213
      %v3439 = vpop.f32.mrb[0].mxu0
      %v3440 = vadd.f32 0.0, %v3439
      %v3441 = vpop.f32.mrb[0].mxu0
      %3442 = vdwg.mxu0
      %v3443 = vadd.f32 %v3052, %v3285
      %v3444 = vadd.f32 %v3053, %v3290
      %v3445 = vadd.f32 %v3054, %v3295
      %v3446 = vadd.f32 %v3055, %v3300
      %v3447 = vadd.f32 %v3056, %v3305
      %v3448 = vadd.f32 %v3057, %v3310
      %v3449 = vadd.f32 %v3058, %v3315
      %v3450 = vadd.f32 %v3059, %v3320
      %v3451 = vadd.f32 %v3060, %v3325
      %v3452 = vadd.f32 %v3061, %v3330
      %v3453 = vadd.f32 %v3062, %v3335
      %v3454 = vadd.f32 %v3063, %v3340
      %v3455 = vadd.f32 %v3064, %v3345
      %v3456 = vadd.f32 %v3065, %v3350
      %v3457 = vadd.f32 %v3066, %v3355
      %v3458 = vadd.f32 %v3067, %v3360
      %v3459 = vadd.f32 %v3068, %v3365
      %v3460 = vadd.f32 %v3069, %v3370
      %v3461 = vadd.f32 %v3070, %v3375
      %v3462 = vadd.f32 %v3071, %v3380
      %v3463 = vadd.f32 %v3072, %v3385
      %v3464 = vadd.f32 %v3073, %v3390
      %v3465 = vadd.f32 %v3074, %v3395
      %v3466 = vadd.f32 %v3075, %v3400
      %v3467 = vadd.f32 %v3076, %v3405
      %v3468 = vadd.f32 %v3077, %v3410
      %v3469 = vadd.f32 %v3078, %v3415
      %v3470 = vadd.f32 %v3079, %v3420
      %v3471 = vadd.f32 %v3080, %v3425
      %v3472 = vadd.f32 %v3081, %v3430
      %v3473 = vadd.f32 %v3082, %v3435
      %v3474 = vadd.f32 %v3083, %v3440
      %s3475 = scalar_lea.vmem [#allocation3], 32
      %v3476 = vld [vmem:[%s3475] sm:$0xff]
      %v3477 = vld [vmem:[%s3475 + $0x8] sm:$0xff]
      %v3478 = vld [vmem:[%s3475 + $0x10] sm:$0xff]
      %v3479 = vld [vmem:[%s3475 + $0x18] sm:$0xff]
      %v3480 = vld [vmem:[%s3475 + $0x20] sm:$0xff]
      %v3481 = vld [vmem:[%s3475 + $0x28] sm:$0xff]
      %v3482 = vld [vmem:[%s3475 + $0x30] sm:$0xff]
      %v3483 = vld [vmem:[%s3475 + $0x38] sm:$0xff]
      %v3484 = vld [vmem:[%s3475 + $0x40] sm:$0xff]
      %v3485 = vld [vmem:[%s3475 + $0x48] sm:$0xff]
      %v3486 = vld [vmem:[%s3475 + $0x50] sm:$0xff]
      %v3487 = vld [vmem:[%s3475 + $0x58] sm:$0xff]
      %v3488 = vld [vmem:[%s3475 + $0x60] sm:$0xff]
      %v3489 = vld [vmem:[%s3475 + $0x68] sm:$0xff]
      %v3490 = vld [vmem:[%s3475 + $0x70] sm:$0xff]
      %v3491 = vld [vmem:[%s3475 + $0x78] sm:$0xff]
      %v3492 = vld [vmem:[%s3475 + $0x80] sm:$0xff]
      %v3493 = vld [vmem:[%s3475 + $0x88] sm:$0xff]
      %v3494 = vld [vmem:[%s3475 + $0x90] sm:$0xff]
      %v3495 = vld [vmem:[%s3475 + $0x98] sm:$0xff]
      %v3496 = vld [vmem:[%s3475 + $0xa0] sm:$0xff]
      %v3497 = vld [vmem:[%s3475 + $0xa8] sm:$0xff]
      %v3498 = vld [vmem:[%s3475 + $0xb0] sm:$0xff]
      %v3499 = vld [vmem:[%s3475 + $0xb8] sm:$0xff]
      %v3500 = vld [vmem:[%s3475 + $0xc0] sm:$0xff]
      %v3501 = vld [vmem:[%s3475 + $0xc8] sm:$0xff]
      %v3502 = vld [vmem:[%s3475 + $0xd0] sm:$0xff]
      %v3503 = vld [vmem:[%s3475 + $0xd8] sm:$0xff]
      %v3504 = vld [vmem:[%s3475 + $0xe0] sm:$0xff]
      %v3505 = vld [vmem:[%s3475 + $0xe8] sm:$0xff]
      %v3506 = vld [vmem:[%s3475 + $0xf0] sm:$0xff]
      %v3507 = vld [vmem:[%s3475 + $0xf8] sm:$0xff]
      %s3508 = scalar_lea.vmem %s8, 24
      %v3509 = vld [vmem:[%s3508] sm:$0xf]
      %v3511 = vsel %vm917, %v3476, 0
      %v3514 = vsel %vm917, %v3477, 0
      %v3517 = vsel %vm917, %v3478, 0
      %v3520 = vsel %vm917, %v3479, 0
      %v3523 = vsel %vm917, %v3480, 0
      %v3526 = vsel %vm917, %v3481, 0
      %v3529 = vsel %vm917, %v3482, 0
      %v3532 = vsel %vm917, %v3483, 0
      %v3535 = vsel %vm917, %v3484, 0
      %v3538 = vsel %vm917, %v3485, 0
      %v3541 = vsel %vm917, %v3486, 0
      %v3544 = vsel %vm917, %v3487, 0
      %v3547 = vsel %vm917, %v3488, 0
      %v3550 = vsel %vm917, %v3489, 0
      %v3553 = vsel %vm917, %v3490, 0
      %v3556 = vsel %vm917, %v3491, 0
      %v3559 = vsel %vm917, %v3492, 0
      %v3562 = vsel %vm917, %v3493, 0
      %v3565 = vsel %vm917, %v3494, 0
      %v3568 = vsel %vm917, %v3495, 0
      %v3571 = vsel %vm917, %v3496, 0
      %v3574 = vsel %vm917, %v3497, 0
      %v3577 = vsel %vm917, %v3498, 0
      %v3580 = vsel %vm917, %v3499, 0
      %v3583 = vsel %vm917, %v3500, 0
      %v3586 = vsel %vm917, %v3501, 0
      %v3589 = vsel %vm917, %v3502, 0
      %v3592 = vsel %vm917, %v3503, 0
      %v3595 = vsel %vm917, %v3504, 0
      %v3598 = vsel %vm917, %v3505, 0
      %v3601 = vsel %vm917, %v3506, 0
      %v3604 = vsel %vm917, %v3507, 0
      %v3607 = vsel %vm1360, %v3509, 0
      %3609 = vmatprep.subr.mxu0 0.0
      %3610 = vmatpush1.msra.mxu0 %v3607
      %3611 = vmatprep.subr.mxu0 0.0
      %3612 = vmatpush1.msra.mxu0 0.0
      %3613 = vmatprep.subr.mxu0 0.0
      %3614 = vmatpush1.msra.mxu0 0.0
      %3615 = vmatprep.subr.mxu0 0.0
      %3616 = vmatpush1.msra.mxu0 0.0
      %3617 = vmatprep.subr.mxu0 0.0
      %3618 = vmatpush1.msra.mxu0 0.0
      %3619 = vmatprep.subr.mxu0 0.0
      %3620 = vmatpush1.msra.mxu0 0.0
      %3621 = vmatprep.subr.mxu0 0.0
      %3622 = vmatpush1.msra.mxu0 0.0
      %3623 = vmatprep.subr.mxu0 0.0
      %3624 = vmatpush1.msra.mxu0 0.0
      %3625 = vmatprep.subr.mxu0 0.0
      %3626 = vmatpush1.msra.mxu0 0.0
      %3627 = vmatprep.subr.mxu0 0.0
      %3628 = vmatpush1.msra.mxu0 0.0
      %3629 = vmatprep.subr.mxu0 0.0
      %3630 = vmatpush1.msra.mxu0 0.0
      %3631 = vmatprep.subr.mxu0 0.0
      %3632 = vmatpush1.msra.mxu0 0.0
      %3633 = vmatprep.subr.mxu0 0.0
      %3634 = vmatpush1.msra.mxu0 0.0
      %3635 = vmatprep.subr.mxu0 0.0
      %3636 = vmatpush1.msra.mxu0 0.0
      %3637 = vmatprep.subr.mxu0 0.0
      %3638 = vmatpush1.msra.mxu0 0.0
      %3639 = vmatprep.subr.mxu0 0.0
      %3640 = vmatpush1.msra.mxu0 0.0
      %3641 = vmatprep.subr.mxu0 0.0
      %3642 = vmatpush1.msra.mxu0 0.0
      %3643 = vmatprep.subr.mxu0 0.0
      %3644 = vmatpush1.msra.mxu0 0.0
      %3645 = vmatprep.subr.mxu0 0.0
      %3646 = vmatpush1.msra.mxu0 0.0
      %3647 = vmatprep.subr.mxu0 0.0
      %3648 = vmatpush1.msra.mxu0 0.0
      %3649 = vmatprep.subr.mxu0 0.0
      %3650 = vmatpush1.msra.mxu0 0.0
      %3651 = vmatprep.subr.mxu0 0.0
      %3652 = vmatpush1.msra.mxu0 0.0
      %3653 = vmatprep.subr.mxu0 0.0
      %3654 = vmatpush1.msra.mxu0 0.0
      %3655 = vmatprep.subr.mxu0 0.0
      %3656 = vmatpush1.msra.mxu0 0.0
      %3657 = vmatprep.subr.mxu0 0.0
      %3658 = vmatpush1.msra.mxu0 0.0
      %3659 = vmatprep.subr.mxu0 0.0
      %3660 = vmatpush1.msra.mxu0 0.0
      %3661 = vmatprep.subr.mxu0 0.0
      %3662 = vmatpush1.msra.mxu0 0.0
      %3663 = vmatprep.subr.mxu0 0.0
      %3664 = vmatpush1.msra.mxu0 0.0
      %3665 = vmatprep.subr.mxu0 0.0
      %3666 = vmatpush1.msra.mxu0 0.0
      %3667 = vmatprep.subr.mxu0 0.0
      %3668 = vmatpush1.msra.mxu0 0.0
      %3669 = vmatprep.subr.mxu0 0.0
      %3670 = vmatpush1.msra.mxu0 0.0
      %3671 = vmatprep.subr.mxu0 0.0
      %3672 = vmatpush1.msra.mxu0 0.0
      %3673 = vmatprep.mubr.f32.mxu0 0.0
      %3674 = vmatmul.mubr.f32.gmra.mrb[0].mxu0 %v3511
      %v3675 = vpop.f32.mrb[0].mxu0
      %v3676 = vadd.f32 0.0, %v3675
      %v3677 = vpop.f32.mrb[0].mxu0
      %3678 = vmatprep.mubr.f32.mxu0 0.0
      %3679 = vmatmul.mubr.f32.gmra.mrb[0].mxu0 %v3514
      %v3680 = vpop.f32.mrb[0].mxu0
      %v3681 = vadd.f32 0.0, %v3680
      %v3682 = vpop.f32.mrb[0].mxu0
      %3683 = vmatprep.mubr.f32.mxu0 0.0
      %3684 = vmatmul.mubr.f32.gmra.mrb[0].mxu0 %v3517
      %v3685 = vpop.f32.mrb[0].mxu0
      %v3686 = vadd.f32 0.0, %v3685
      %v3687 = vpop.f32.mrb[0].mxu0
      %3688 = vmatprep.mubr.f32.mxu0 0.0
      %3689 = vmatmul.mubr.f32.gmra.mrb[0].mxu0 %v3520
      %v3690 = vpop.f32.mrb[0].mxu0
      %v3691 = vadd.f32 0.0, %v3690
      %v3692 = vpop.f32.mrb[0].mxu0
      %3693 = vmatprep.mubr.f32.mxu0 0.0
      %3694 = vmatmul.mubr.f32.gmra.mrb[0].mxu0 %v3523
      %v3695 = vpop.f32.mrb[0].mxu0
      %v3696 = vadd.f32 0.0, %v3695
      %v3697 = vpop.f32.mrb[0].mxu0
      %3698 = vmatprep.mubr.f32.mxu0 0.0
      %3699 = vmatmul.mubr.f32.gmra.mrb[0].mxu0 %v3526
      %v3700 = vpop.f32.mrb[0].mxu0
      %v3701 = vadd.f32 0.0, %v3700
      %v3702 = vpop.f32.mrb[0].mxu0
      %3703 = vmatprep.mubr.f32.mxu0 0.0
      %3704 = vmatmul.mubr.f32.gmra.mrb[0].mxu0 %v3529
      %v3705 = vpop.f32.mrb[0].mxu0
      %v3706 = vadd.f32 0.0, %v3705
      %v3707 = vpop.f32.mrb[0].mxu0
      %3708 = vmatprep.mubr.f32.mxu0 0.0
      %3709 = vmatmul.mubr.f32.gmra.mrb[0].mxu0 %v3532
      %v3710 = vpop.f32.mrb[0].mxu0
      %v3711 = vadd.f32 0.0, %v3710
      %v3712 = vpop.f32.mrb[0].mxu0
      %3713 = vmatprep.mubr.f32.mxu0 0.0
      %3714 = vmatmul.mubr.f32.gmra.mrb[0].mxu0 %v3535
      %v3715 = vpop.f32.mrb[0].mxu0
      %v3716 = vadd.f32 0.0, %v3715
      %v3717 = vpop.f32.mrb[0].mxu0
      %3718 = vmatprep.mubr.f32.mxu0 0.0
      %3719 = vmatmul.mubr.f32.gmra.mrb[0].mxu0 %v3538
      %v3720 = vpop.f32.mrb[0].mxu0
      %v3721 = vadd.f32 0.0, %v3720
      %v3722 = vpop.f32.mrb[0].mxu0
      %3723 = vmatprep.mubr.f32.mxu0 0.0
      %3724 = vmatmul.mubr.f32.gmra.mrb[0].mxu0 %v3541
      %v3725 = vpop.f32.mrb[0].mxu0
      %v3726 = vadd.f32 0.0, %v3725
      %v3727 = vpop.f32.mrb[0].mxu0
      %3728 = vmatprep.mubr.f32.mxu0 0.0
      %3729 = vmatmul.mubr.f32.gmra.mrb[0].mxu0 %v3544
      %v3730 = vpop.f32.mrb[0].mxu0
      %v3731 = vadd.f32 0.0, %v3730
      %v3732 = vpop.f32.mrb[0].mxu0
      %3733 = vmatprep.mubr.f32.mxu0 0.0
      %3734 = vmatmul.mubr.f32.gmra.mrb[0].mxu0 %v3547
      %v3735 = vpop.f32.mrb[0].mxu0
      %v3736 = vadd.f32 0.0, %v3735
      %v3737 = vpop.f32.mrb[0].mxu0
      %3738 = vmatprep.mubr.f32.mxu0 0.0
      %3739 = vmatmul.mubr.f32.gmra.mrb[0].mxu0 %v3550
      %v3740 = vpop.f32.mrb[0].mxu0
      %v3741 = vadd.f32 0.0, %v3740
      %v3742 = vpop.f32.mrb[0].mxu0
      %3743 = vmatprep.mubr.f32.mxu0 0.0
      %3744 = vmatmul.mubr.f32.gmra.mrb[0].mxu0 %v3553
      %v3745 = vpop.f32.mrb[0].mxu0
      %v3746 = vadd.f32 0.0, %v3745
      %v3747 = vpop.f32.mrb[0].mxu0
      %3748 = vmatprep.mubr.f32.mxu0 0.0
      %3749 = vmatmul.mubr.f32.gmra.mrb[0].mxu0 %v3556
      %v3750 = vpop.f32.mrb[0].mxu0
      %v3751 = vadd.f32 0.0, %v3750
      %v3752 = vpop.f32.mrb[0].mxu0
      %3753 = vmatprep.mubr.f32.mxu0 0.0
      %3754 = vmatmul.mubr.f32.gmra.mrb[0].mxu0 %v3559
      %v3755 = vpop.f32.mrb[0].mxu0
      %v3756 = vadd.f32 0.0, %v3755
      %v3757 = vpop.f32.mrb[0].mxu0
      %3758 = vmatprep.mubr.f32.mxu0 0.0
      %3759 = vmatmul.mubr.f32.gmra.mrb[0].mxu0 %v3562
      %v3760 = vpop.f32.mrb[0].mxu0
      %v3761 = vadd.f32 0.0, %v3760
      %v3762 = vpop.f32.mrb[0].mxu0
      %3763 = vmatprep.mubr.f32.mxu0 0.0
      %3764 = vmatmul.mubr.f32.gmra.mrb[0].mxu0 %v3565
      %v3765 = vpop.f32.mrb[0].mxu0
      %v3766 = vadd.f32 0.0, %v3765
      %v3767 = vpop.f32.mrb[0].mxu0
      %3768 = vmatprep.mubr.f32.mxu0 0.0
      %3769 = vmatmul.mubr.f32.gmra.mrb[0].mxu0 %v3568
      %v3770 = vpop.f32.mrb[0].mxu0
      %v3771 = vadd.f32 0.0, %v3770
      %v3772 = vpop.f32.mrb[0].mxu0
      %3773 = vmatprep.mubr.f32.mxu0 0.0
      %3774 = vmatmul.mubr.f32.gmra.mrb[0].mxu0 %v3571
      %v3775 = vpop.f32.mrb[0].mxu0
      %v3776 = vadd.f32 0.0, %v3775
      %v3777 = vpop.f32.mrb[0].mxu0
      %3778 = vmatprep.mubr.f32.mxu0 0.0
      %3779 = vmatmul.mubr.f32.gmra.mrb[0].mxu0 %v3574
      %v3780 = vpop.f32.mrb[0].mxu0
      %v3781 = vadd.f32 0.0, %v3780
      %v3782 = vpop.f32.mrb[0].mxu0
      %3783 = vmatprep.mubr.f32.mxu0 0.0
      %3784 = vmatmul.mubr.f32.gmra.mrb[0].mxu0 %v3577
      %v3785 = vpop.f32.mrb[0].mxu0
      %v3786 = vadd.f32 0.0, %v3785
      %v3787 = vpop.f32.mrb[0].mxu0
      %3788 = vmatprep.mubr.f32.mxu0 0.0
      %3789 = vmatmul.mubr.f32.gmra.mrb[0].mxu0 %v3580
      %v3790 = vpop.f32.mrb[0].mxu0
      %v3791 = vadd.f32 0.0, %v3790
      %v3792 = vpop.f32.mrb[0].mxu0
      %3793 = vmatprep.mubr.f32.mxu0 0.0
      %3794 = vmatmul.mubr.f32.gmra.mrb[0].mxu0 %v3583
      %v3795 = vpop.f32.mrb[0].mxu0
      %v3796 = vadd.f32 0.0, %v3795
      %v3797 = vpop.f32.mrb[0].mxu0
      %3798 = vmatprep.mubr.f32.mxu0 0.0
      %3799 = vmatmul.mubr.f32.gmra.mrb[0].mxu0 %v3586
      %v3800 = vpop.f32.mrb[0].mxu0
      %v3801 = vadd.f32 0.0, %v3800
      %v3802 = vpop.f32.mrb[0].mxu0
      %3803 = vmatprep.mubr.f32.mxu0 0.0
      %3804 = vmatmul.mubr.f32.gmra.mrb[0].mxu0 %v3589
      %v3805 = vpop.f32.mrb[0].mxu0
      %v3806 = vadd.f32 0.0, %v3805
      %v3807 = vpop.f32.mrb[0].mxu0
      %3808 = vmatprep.mubr.f32.mxu0 0.0
      %3809 = vmatmul.mubr.f32.gmra.mrb[0].mxu0 %v3592
      %v3810 = vpop.f32.mrb[0].mxu0
      %v3811 = vadd.f32 0.0, %v3810
      %v3812 = vpop.f32.mrb[0].mxu0
      %3813 = vmatprep.mubr.f32.mxu0 0.0
      %3814 = vmatmul.mubr.f32.gmra.mrb[0].mxu0 %v3595
      %v3815 = vpop.f32.mrb[0].mxu0
      %v3816 = vadd.f32 0.0, %v3815
      %v3817 = vpop.f32.mrb[0].mxu0
      %3818 = vmatprep.mubr.f32.mxu0 0.0
      %3819 = vmatmul.mubr.f32.gmra.mrb[0].mxu0 %v3598
      %v3820 = vpop.f32.mrb[0].mxu0
      %v3821 = vadd.f32 0.0, %v3820
      %v3822 = vpop.f32.mrb[0].mxu0
      %3823 = vmatprep.mubr.f32.mxu0 0.0
      %3824 = vmatmul.mubr.f32.gmra.mrb[0].mxu0 %v3601
      %v3825 = vpop.f32.mrb[0].mxu0
      %v3826 = vadd.f32 0.0, %v3825
      %v3827 = vpop.f32.mrb[0].mxu0
      %3828 = vmatprep.mubr.f32.mxu0 0.0
      %3829 = vmatmul.mubr.f32.gmra.mrb[0].mxu0 %v3604
      %v3830 = vpop.f32.mrb[0].mxu0
      %v3831 = vadd.f32 0.0, %v3830
      %v3832 = vpop.f32.mrb[0].mxu0
      %3833 = vdwg.mxu0
      %v3834 = vadd.f32 %v3443, %v3676
      %v3835 = vadd.f32 %v3444, %v3681
      %v3836 = vadd.f32 %v3445, %v3686
      %v3837 = vadd.f32 %v3446, %v3691
      %v3838 = vadd.f32 %v3447, %v3696
      %v3839 = vadd.f32 %v3448, %v3701
      %v3840 = vadd.f32 %v3449, %v3706
      %v3841 = vadd.f32 %v3450, %v3711
      %v3842 = vadd.f32 %v3451, %v3716
      %v3843 = vadd.f32 %v3452, %v3721
      %v3844 = vadd.f32 %v3453, %v3726
      %v3845 = vadd.f32 %v3454, %v3731
      %v3846 = vadd.f32 %v3455, %v3736
      %v3847 = vadd.f32 %v3456, %v3741
      %v3848 = vadd.f32 %v3457, %v3746
      %v3849 = vadd.f32 %v3458, %v3751
      %v3850 = vadd.f32 %v3459, %v3756
      %v3851 = vadd.f32 %v3460, %v3761
      %v3852 = vadd.f32 %v3461, %v3766
      %v3853 = vadd.f32 %v3462, %v3771
      %v3854 = vadd.f32 %v3463, %v3776
      %v3855 = vadd.f32 %v3464, %v3781
      %v3856 = vadd.f32 %v3465, %v3786
      %v3857 = vadd.f32 %v3466, %v3791
      %v3858 = vadd.f32 %v3467, %v3796
      %v3859 = vadd.f32 %v3468, %v3801
      %v3860 = vadd.f32 %v3469, %v3806
      %v3861 = vadd.f32 %v3470, %v3811
      %v3862 = vadd.f32 %v3471, %v3816
      %v3863 = vadd.f32 %v3472, %v3821
      %v3864 = vadd.f32 %v3473, %v3826
      %v3865 = vadd.f32 %v3474, %v3831
      %s3866 = scalar_lea.vmem [#allocation2], 32
      %v3867 = vld [vmem:[%s3866] sm:$0xff]
      %v3868 = vld [vmem:[%s3866 + $0x8] sm:$0xff]
      %v3869 = vld [vmem:[%s3866 + $0x10] sm:$0xff]
      %v3870 = vld [vmem:[%s3866 + $0x18] sm:$0xff]
      %v3871 = vld [vmem:[%s3866 + $0x20] sm:$0xff]
      %v3872 = vld [vmem:[%s3866 + $0x28] sm:$0xff]
      %v3873 = vld [vmem:[%s3866 + $0x30] sm:$0xff]
      %v3874 = vld [vmem:[%s3866 + $0x38] sm:$0xff]
      %v3875 = vld [vmem:[%s3866 + $0x40] sm:$0xff]
      %v3876 = vld [vmem:[%s3866 + $0x48] sm:$0xff]
      %v3877 = vld [vmem:[%s3866 + $0x50] sm:$0xff]
      %v3878 = vld [vmem:[%s3866 + $0x58] sm:$0xff]
      %v3879 = vld [vmem:[%s3866 + $0x60] sm:$0xff]
      %v3880 = vld [vmem:[%s3866 + $0x68] sm:$0xff]
      %v3881 = vld [vmem:[%s3866 + $0x70] sm:$0xff]
      %v3882 = vld [vmem:[%s3866 + $0x78] sm:$0xff]
      %v3883 = vld [vmem:[%s3866 + $0x80] sm:$0xff]
      %v3884 = vld [vmem:[%s3866 + $0x88] sm:$0xff]
      %v3885 = vld [vmem:[%s3866 + $0x90] sm:$0xff]
      %v3886 = vld [vmem:[%s3866 + $0x98] sm:$0xff]
      %v3887 = vld [vmem:[%s3866 + $0xa0] sm:$0xff]
      %v3888 = vld [vmem:[%s3866 + $0xa8] sm:$0xff]
      %v3889 = vld [vmem:[%s3866 + $0xb0] sm:$0xff]
      %v3890 = vld [vmem:[%s3866 + $0xb8] sm:$0xff]
      %v3891 = vld [vmem:[%s3866 + $0xc0] sm:$0xff]
      %v3892 = vld [vmem:[%s3866 + $0xc8] sm:$0xff]
      %v3893 = vld [vmem:[%s3866 + $0xd0] sm:$0xff]
      %v3894 = vld [vmem:[%s3866 + $0xd8] sm:$0xff]
      %v3895 = vld [vmem:[%s3866 + $0xe0] sm:$0xff]
      %v3896 = vld [vmem:[%s3866 + $0xe8] sm:$0xff]
      %v3897 = vld [vmem:[%s3866 + $0xf0] sm:$0xff]
      %v3898 = vld [vmem:[%s3866 + $0xf8] sm:$0xff]
      %s3899 = scalar_lea.vmem %s8, 28
      %v3900 = vld [vmem:[%s3899] sm:$0xf]
      %v3902 = vsel %vm917, %v3867, 0
      %v3905 = vsel %vm917, %v3868, 0
      %v3908 = vsel %vm917, %v3869, 0
      %v3911 = vsel %vm917, %v3870, 0
      %v3914 = vsel %vm917, %v3871, 0
      %v3917 = vsel %vm917, %v3872, 0
      %v3920 = vsel %vm917, %v3873, 0
      %v3923 = vsel %vm917, %v3874, 0
      %v3926 = vsel %vm917, %v3875, 0
      %v3929 = vsel %vm917, %v3876, 0
      %v3932 = vsel %vm917, %v3877, 0
      %v3935 = vsel %vm917, %v3878, 0
      %v3938 = vsel %vm917, %v3879, 0
      %v3941 = vsel %vm917, %v3880, 0
      %v3944 = vsel %vm917, %v3881, 0
      %v3947 = vsel %vm917, %v3882, 0
      %v3950 = vsel %vm917, %v3883, 0
      %v3953 = vsel %vm917, %v3884, 0
      %v3956 = vsel %vm917, %v3885, 0
      %v3959 = vsel %vm917, %v3886, 0
      %v3962 = vsel %vm917, %v3887, 0
      %v3965 = vsel %vm917, %v3888, 0
      %v3968 = vsel %vm917, %v3889, 0
      %v3971 = vsel %vm917, %v3890, 0
      %v3974 = vsel %vm917, %v3891, 0
      %v3977 = vsel %vm917, %v3892, 0
      %v3980 = vsel %vm917, %v3893, 0
      %v3983 = vsel %vm917, %v3894, 0
      %v3986 = vsel %vm917, %v3895, 0
      %v3989 = vsel %vm917, %v3896, 0
      %v3992 = vsel %vm917, %v3897, 0
      %v3995 = vsel %vm917, %v3898, 0
      %v3998 = vsel %vm1360, %v3900, 0
      %4000 = vmatprep.subr.mxu0 0.0
      %4001 = vmatpush1.msra.mxu0 %v3998
      %4002 = vmatprep.subr.mxu0 0.0
      %4003 = vmatpush1.msra.mxu0 0.0
      %4004 = vmatprep.subr.mxu0 0.0
      %4005 = vmatpush1.msra.mxu0 0.0
      %4006 = vmatprep.subr.mxu0 0.0
      %4007 = vmatpush1.msra.mxu0 0.0
      %4008 = vmatprep.subr.mxu0 0.0
      %4009 = vmatpush1.msra.mxu0 0.0
      %4010 = vmatprep.subr.mxu0 0.0
      %4011 = vmatpush1.msra.mxu0 0.0
      %4012 = vmatprep.subr.mxu0 0.0
      %4013 = vmatpush1.msra.mxu0 0.0
      %4014 = vmatprep.subr.mxu0 0.0
      %4015 = vmatpush1.msra.mxu0 0.0
      %4016 = vmatprep.subr.mxu0 0.0
      %4017 = vmatpush1.msra.mxu0 0.0
      %4018 = vmatprep.subr.mxu0 0.0
      %4019 = vmatpush1.msra.mxu0 0.0
      %4020 = vmatprep.subr.mxu0 0.0
      %4021 = vmatpush1.msra.mxu0 0.0
      %4022 = vmatprep.subr.mxu0 0.0
      %4023 = vmatpush1.msra.mxu0 0.0
      %4024 = vmatprep.subr.mxu0 0.0
      %4025 = vmatpush1.msra.mxu0 0.0
      %4026 = vmatprep.subr.mxu0 0.0
      %4027 = vmatpush1.msra.mxu0 0.0
      %4028 = vmatprep.subr.mxu0 0.0
      %4029 = vmatpush1.msra.mxu0 0.0
      %4030 = vmatprep.subr.mxu0 0.0
      %4031 = vmatpush1.msra.mxu0 0.0
      %4032 = vmatprep.subr.mxu0 0.0
      %4033 = vmatpush1.msra.mxu0 0.0
      %4034 = vmatprep.subr.mxu0 0.0
      %4035 = vmatpush1.msra.mxu0 0.0
      %4036 = vmatprep.subr.mxu0 0.0
      %4037 = vmatpush1.msra.mxu0 0.0
      %4038 = vmatprep.subr.mxu0 0.0
      %4039 = vmatpush1.msra.mxu0 0.0
      %4040 = vmatprep.subr.mxu0 0.0
      %4041 = vmatpush1.msra.mxu0 0.0
      %4042 = vmatprep.subr.mxu0 0.0
      %4043 = vmatpush1.msra.mxu0 0.0
      %4044 = vmatprep.subr.mxu0 0.0
      %4045 = vmatpush1.msra.mxu0 0.0
      %4046 = vmatprep.subr.mxu0 0.0
      %4047 = vmatpush1.msra.mxu0 0.0
      %4048 = vmatprep.subr.mxu0 0.0
      %4049 = vmatpush1.msra.mxu0 0.0
      %4050 = vmatprep.subr.mxu0 0.0
      %4051 = vmatpush1.msra.mxu0 0.0
      %4052 = vmatprep.subr.mxu0 0.0
      %4053 = vmatpush1.msra.mxu0 0.0
      %4054 = vmatprep.subr.mxu0 0.0
      %4055 = vmatpush1.msra.mxu0 0.0
      %4056 = vmatprep.subr.mxu0 0.0
      %4057 = vmatpush1.msra.mxu0 0.0
      %4058 = vmatprep.subr.mxu0 0.0
      %4059 = vmatpush1.msra.mxu0 0.0
      %4060 = vmatprep.subr.mxu0 0.0
      %4061 = vmatpush1.msra.mxu0 0.0
      %4062 = vmatprep.subr.mxu0 0.0
      %4063 = vmatpush1.msra.mxu0 0.0
      %4064 = vmatprep.mubr.f32.mxu0 0.0
      %4065 = vmatmul.mubr.f32.gmra.mrb[0].mxu0 %v3902
      %v4066 = vpop.f32.mrb[0].mxu0
      %v4067 = vadd.f32 0.0, %v4066
      %v4068 = vpop.f32.mrb[0].mxu0
      %4069 = vmatprep.mubr.f32.mxu0 0.0
      %4070 = vmatmul.mubr.f32.gmra.mrb[0].mxu0 %v3905
      %v4071 = vpop.f32.mrb[0].mxu0
      %v4072 = vadd.f32 0.0, %v4071
      %v4073 = vpop.f32.mrb[0].mxu0
      %4074 = vmatprep.mubr.f32.mxu0 0.0
      %4075 = vmatmul.mubr.f32.gmra.mrb[0].mxu0 %v3908
      %v4076 = vpop.f32.mrb[0].mxu0
      %v4077 = vadd.f32 0.0, %v4076
      %v4078 = vpop.f32.mrb[0].mxu0
      %4079 = vmatprep.mubr.f32.mxu0 0.0
      %4080 = vmatmul.mubr.f32.gmra.mrb[0].mxu0 %v3911
      %v4081 = vpop.f32.mrb[0].mxu0
      %v4082 = vadd.f32 0.0, %v4081
      %v4083 = vpop.f32.mrb[0].mxu0
      %4084 = vmatprep.mubr.f32.mxu0 0.0
      %4085 = vmatmul.mubr.f32.gmra.mrb[0].mxu0 %v3914
      %v4086 = vpop.f32.mrb[0].mxu0
      %v4087 = vadd.f32 0.0, %v4086
      %v4088 = vpop.f32.mrb[0].mxu0
      %4089 = vmatprep.mubr.f32.mxu0 0.0
      %4090 = vmatmul.mubr.f32.gmra.mrb[0].mxu0 %v3917
      %v4091 = vpop.f32.mrb[0].mxu0
      %v4092 = vadd.f32 0.0, %v4091
      %v4093 = vpop.f32.mrb[0].mxu0
      %4094 = vmatprep.mubr.f32.mxu0 0.0
      %4095 = vmatmul.mubr.f32.gmra.mrb[0].mxu0 %v3920
      %v4096 = vpop.f32.mrb[0].mxu0
      %v4097 = vadd.f32 0.0, %v4096
      %v4098 = vpop.f32.mrb[0].mxu0
      %4099 = vmatprep.mubr.f32.mxu0 0.0
      %4100 = vmatmul.mubr.f32.gmra.mrb[0].mxu0 %v3923
      %v4101 = vpop.f32.mrb[0].mxu0
      %v4102 = vadd.f32 0.0, %v4101
      %v4103 = vpop.f32.mrb[0].mxu0
      %4104 = vmatprep.mubr.f32.mxu0 0.0
      %4105 = vmatmul.mubr.f32.gmra.mrb[0].mxu0 %v3926
      %v4106 = vpop.f32.mrb[0].mxu0
      %v4107 = vadd.f32 0.0, %v4106
      %v4108 = vpop.f32.mrb[0].mxu0
      %4109 = vmatprep.mubr.f32.mxu0 0.0
      %4110 = vmatmul.mubr.f32.gmra.mrb[0].mxu0 %v3929
      %v4111 = vpop.f32.mrb[0].mxu0
      %v4112 = vadd.f32 0.0, %v4111
      %v4113 = vpop.f32.mrb[0].mxu0
      %4114 = vmatprep.mubr.f32.mxu0 0.0
      %4115 = vmatmul.mubr.f32.gmra.mrb[0].mxu0 %v3932
      %v4116 = vpop.f32.mrb[0].mxu0
      %v4117 = vadd.f32 0.0, %v4116
      %v4118 = vpop.f32.mrb[0].mxu0
      %4119 = vmatprep.mubr.f32.mxu0 0.0
      %4120 = vmatmul.mubr.f32.gmra.mrb[0].mxu0 %v3935
      %v4121 = vpop.f32.mrb[0].mxu0
      %v4122 = vadd.f32 0.0, %v4121
      %v4123 = vpop.f32.mrb[0].mxu0
      %4124 = vmatprep.mubr.f32.mxu0 0.0
      %4125 = vmatmul.mubr.f32.gmra.mrb[0].mxu0 %v3938
      %v4126 = vpop.f32.mrb[0].mxu0
      %v4127 = vadd.f32 0.0, %v4126
      %v4128 = vpop.f32.mrb[0].mxu0
      %4129 = vmatprep.mubr.f32.mxu0 0.0
      %4130 = vmatmul.mubr.f32.gmra.mrb[0].mxu0 %v3941
      %v4131 = vpop.f32.mrb[0].mxu0
      %v4132 = vadd.f32 0.0, %v4131
      %v4133 = vpop.f32.mrb[0].mxu0
      %4134 = vmatprep.mubr.f32.mxu0 0.0
      %4135 = vmatmul.mubr.f32.gmra.mrb[0].mxu0 %v3944
      %v4136 = vpop.f32.mrb[0].mxu0
      %v4137 = vadd.f32 0.0, %v4136
      %v4138 = vpop.f32.mrb[0].mxu0
      %4139 = vmatprep.mubr.f32.mxu0 0.0
      %4140 = vmatmul.mubr.f32.gmra.mrb[0].mxu0 %v3947
      %v4141 = vpop.f32.mrb[0].mxu0
      %v4142 = vadd.f32 0.0, %v4141
      %v4143 = vpop.f32.mrb[0].mxu0
      %4144 = vmatprep.mubr.f32.mxu0 0.0
      %4145 = vmatmul.mubr.f32.gmra.mrb[0].mxu0 %v3950
      %v4146 = vpop.f32.mrb[0].mxu0
      %v4147 = vadd.f32 0.0, %v4146
      %v4148 = vpop.f32.mrb[0].mxu0
      %4149 = vmatprep.mubr.f32.mxu0 0.0
      %4150 = vmatmul.mubr.f32.gmra.mrb[0].mxu0 %v3953
      %v4151 = vpop.f32.mrb[0].mxu0
      %v4152 = vadd.f32 0.0, %v4151
      %v4153 = vpop.f32.mrb[0].mxu0
      %4154 = vmatprep.mubr.f32.mxu0 0.0
      %4155 = vmatmul.mubr.f32.gmra.mrb[0].mxu0 %v3956
      %v4156 = vpop.f32.mrb[0].mxu0
      %v4157 = vadd.f32 0.0, %v4156
      %v4158 = vpop.f32.mrb[0].mxu0
      %4159 = vmatprep.mubr.f32.mxu0 0.0
      %4160 = vmatmul.mubr.f32.gmra.mrb[0].mxu0 %v3959
      %v4161 = vpop.f32.mrb[0].mxu0
      %v4162 = vadd.f32 0.0, %v4161
      %v4163 = vpop.f32.mrb[0].mxu0
      %4164 = vmatprep.mubr.f32.mxu0 0.0
      %4165 = vmatmul.mubr.f32.gmra.mrb[0].mxu0 %v3962
      %v4166 = vpop.f32.mrb[0].mxu0
      %v4167 = vadd.f32 0.0, %v4166
      %v4168 = vpop.f32.mrb[0].mxu0
      %4169 = vmatprep.mubr.f32.mxu0 0.0
      %4170 = vmatmul.mubr.f32.gmra.mrb[0].mxu0 %v3965
      %v4171 = vpop.f32.mrb[0].mxu0
      %v4172 = vadd.f32 0.0, %v4171
      %v4173 = vpop.f32.mrb[0].mxu0
      %4174 = vmatprep.mubr.f32.mxu0 0.0
      %4175 = vmatmul.mubr.f32.gmra.mrb[0].mxu0 %v3968
      %v4176 = vpop.f32.mrb[0].mxu0
      %v4177 = vadd.f32 0.0, %v4176
      %v4178 = vpop.f32.mrb[0].mxu0
      %4179 = vmatprep.mubr.f32.mxu0 0.0
      %4180 = vmatmul.mubr.f32.gmra.mrb[0].mxu0 %v3971
      %v4181 = vpop.f32.mrb[0].mxu0
      %v4182 = vadd.f32 0.0, %v4181
      %v4183 = vpop.f32.mrb[0].mxu0
      %4184 = vmatprep.mubr.f32.mxu0 0.0
      %4185 = vmatmul.mubr.f32.gmra.mrb[0].mxu0 %v3974
      %v4186 = vpop.f32.mrb[0].mxu0
      %v4187 = vadd.f32 0.0, %v4186
      %v4188 = vpop.f32.mrb[0].mxu0
      %4189 = vmatprep.mubr.f32.mxu0 0.0
      %4190 = vmatmul.mubr.f32.gmra.mrb[0].mxu0 %v3977
      %v4191 = vpop.f32.mrb[0].mxu0
      %v4192 = vadd.f32 0.0, %v4191
      %v4193 = vpop.f32.mrb[0].mxu0
      %4194 = vmatprep.mubr.f32.mxu0 0.0
      %4195 = vmatmul.mubr.f32.gmra.mrb[0].mxu0 %v3980
      %v4196 = vpop.f32.mrb[0].mxu0
      %v4197 = vadd.f32 0.0, %v4196
      %v4198 = vpop.f32.mrb[0].mxu0
      %4199 = vmatprep.mubr.f32.mxu0 0.0
      %4200 = vmatmul.mubr.f32.gmra.mrb[0].mxu0 %v3983
      %v4201 = vpop.f32.mrb[0].mxu0
      %v4202 = vadd.f32 0.0, %v4201
      %v4203 = vpop.f32.mrb[0].mxu0
      %4204 = vmatprep.mubr.f32.mxu0 0.0
      %4205 = vmatmul.mubr.f32.gmra.mrb[0].mxu0 %v3986
      %v4206 = vpop.f32.mrb[0].mxu0
      %v4207 = vadd.f32 0.0, %v4206
      %v4208 = vpop.f32.mrb[0].mxu0
      %4209 = vmatprep.mubr.f32.mxu0 0.0
      %4210 = vmatmul.mubr.f32.gmra.mrb[0].mxu0 %v3989
      %v4211 = vpop.f32.mrb[0].mxu0
      %v4212 = vadd.f32 0.0, %v4211
      %v4213 = vpop.f32.mrb[0].mxu0
      %4214 = vmatprep.mubr.f32.mxu0 0.0
      %4215 = vmatmul.mubr.f32.gmra.mrb[0].mxu0 %v3992
      %v4216 = vpop.f32.mrb[0].mxu0
      %v4217 = vadd.f32 0.0, %v4216
      %v4218 = vpop.f32.mrb[0].mxu0
      %4219 = vmatprep.mubr.f32.mxu0 0.0
      %4220 = vmatmul.mubr.f32.gmra.mrb[0].mxu0 %v3995
      %v4221 = vpop.f32.mrb[0].mxu0
      %v4222 = vadd.f32 0.0, %v4221
      %v4223 = vpop.f32.mrb[0].mxu0
      %4224 = vdwg.mxu0
      %v4225 = vadd.f32 %v3834, %v4067
      %v4226 = vadd.f32 %v3835, %v4072
      %v4227 = vadd.f32 %v3836, %v4077
      %v4228 = vadd.f32 %v3837, %v4082
      %v4229 = vadd.f32 %v3838, %v4087
      %v4230 = vadd.f32 %v3839, %v4092
      %v4231 = vadd.f32 %v3840, %v4097
      %v4232 = vadd.f32 %v3841, %v4102
      %v4233 = vadd.f32 %v3842, %v4107
      %v4234 = vadd.f32 %v3843, %v4112
      %v4235 = vadd.f32 %v3844, %v4117
      %v4236 = vadd.f32 %v3845, %v4122
      %v4237 = vadd.f32 %v3846, %v4127
      %v4238 = vadd.f32 %v3847, %v4132
      %v4239 = vadd.f32 %v3848, %v4137
      %v4240 = vadd.f32 %v3849, %v4142
      %v4241 = vadd.f32 %v3850, %v4147
      %v4242 = vadd.f32 %v3851, %v4152
      %v4243 = vadd.f32 %v3852, %v4157
      %v4244 = vadd.f32 %v3853, %v4162
      %v4245 = vadd.f32 %v3854, %v4167
      %v4246 = vadd.f32 %v3855, %v4172
      %v4247 = vadd.f32 %v3856, %v4177
      %v4248 = vadd.f32 %v3857, %v4182
      %v4249 = vadd.f32 %v3858, %v4187
      %v4250 = vadd.f32 %v3859, %v4192
      %v4251 = vadd.f32 %v3860, %v4197
      %v4252 = vadd.f32 %v3861, %v4202
      %v4253 = vadd.f32 %v3862, %v4207
      %v4254 = vadd.f32 %v3863, %v4212
      %v4255 = vadd.f32 %v3864, %v4217
      %v4256 = vadd.f32 %v3865, %v4222
      %s4257 = scalar_lea.vmem [#allocation4], 32
      %v4258 = vld [vmem:[%s4257] sm:$0xff]
      %v4259 = vld [vmem:[%s4257 + $0x8] sm:$0xff]
      %v4260 = vld [vmem:[%s4257 + $0x10] sm:$0xff]
      %v4261 = vld [vmem:[%s4257 + $0x18] sm:$0xff]
      %v4262 = vld [vmem:[%s4257 + $0x20] sm:$0xff]
      %v4263 = vld [vmem:[%s4257 + $0x28] sm:$0xff]
      %v4264 = vld [vmem:[%s4257 + $0x30] sm:$0xff]
      %v4265 = vld [vmem:[%s4257 + $0x38] sm:$0xff]
      %v4266 = vld [vmem:[%s4257 + $0x40] sm:$0xff]
      %v4267 = vld [vmem:[%s4257 + $0x48] sm:$0xff]
      %v4268 = vld [vmem:[%s4257 + $0x50] sm:$0xff]
      %v4269 = vld [vmem:[%s4257 + $0x58] sm:$0xff]
      %v4270 = vld [vmem:[%s4257 + $0x60] sm:$0xff]
      %v4271 = vld [vmem:[%s4257 + $0x68] sm:$0xff]
      %v4272 = vld [vmem:[%s4257 + $0x70] sm:$0xff]
      %v4273 = vld [vmem:[%s4257 + $0x78] sm:$0xff]
      %v4274 = vld [vmem:[%s4257 + $0x80] sm:$0xff]
      %v4275 = vld [vmem:[%s4257 + $0x88] sm:$0xff]
      %v4276 = vld [vmem:[%s4257 + $0x90] sm:$0xff]
      %v4277 = vld [vmem:[%s4257 + $0x98] sm:$0xff]
      %v4278 = vld [vmem:[%s4257 + $0xa0] sm:$0xff]
      %v4279 = vld [vmem:[%s4257 + $0xa8] sm:$0xff]
      %v4280 = vld [vmem:[%s4257 + $0xb0] sm:$0xff]
      %v4281 = vld [vmem:[%s4257 + $0xb8] sm:$0xff]
      %v4282 = vld [vmem:[%s4257 + $0xc0] sm:$0xff]
      %v4283 = vld [vmem:[%s4257 + $0xc8] sm:$0xff]
      %v4284 = vld [vmem:[%s4257 + $0xd0] sm:$0xff]
      %v4285 = vld [vmem:[%s4257 + $0xd8] sm:$0xff]
      %v4286 = vld [vmem:[%s4257 + $0xe0] sm:$0xff]
      %v4287 = vld [vmem:[%s4257 + $0xe8] sm:$0xff]
      %v4288 = vld [vmem:[%s4257 + $0xf0] sm:$0xff]
      %v4289 = vld [vmem:[%s4257 + $0xf8] sm:$0xff]
      %s4290 = scalar_lea.vmem %s8, 32
      %v4291 = vld [vmem:[%s4290] sm:$0xf]
      %v4293 = vsel %vm917, %v4258, 0
      %v4296 = vsel %vm917, %v4259, 0
      %v4299 = vsel %vm917, %v4260, 0
      %v4302 = vsel %vm917, %v4261, 0
      %v4305 = vsel %vm917, %v4262, 0
      %v4308 = vsel %vm917, %v4263, 0
      %v4311 = vsel %vm917, %v4264, 0
      %v4314 = vsel %vm917, %v4265, 0
      %v4317 = vsel %vm917, %v4266, 0
      %v4320 = vsel %vm917, %v4267, 0
      %v4323 = vsel %vm917, %v4268, 0
      %v4326 = vsel %vm917, %v4269, 0
      %v4329 = vsel %vm917, %v4270, 0
      %v4332 = vsel %vm917, %v4271, 0
      %v4335 = vsel %vm917, %v4272, 0
      %v4338 = vsel %vm917, %v4273, 0
      %v4341 = vsel %vm917, %v4274, 0
      %v4344 = vsel %vm917, %v4275, 0
      %v4347 = vsel %vm917, %v4276, 0
      %v4350 = vsel %vm917, %v4277, 0
      %v4353 = vsel %vm917, %v4278, 0
      %v4356 = vsel %vm917, %v4279, 0
      %v4359 = vsel %vm917, %v4280, 0
      %v4362 = vsel %vm917, %v4281, 0
      %v4365 = vsel %vm917, %v4282, 0
      %v4368 = vsel %vm917, %v4283, 0
      %v4371 = vsel %vm917, %v4284, 0
      %v4374 = vsel %vm917, %v4285, 0
      %v4377 = vsel %vm917, %v4286, 0
      %v4380 = vsel %vm917, %v4287, 0
      %v4383 = vsel %vm917, %v4288, 0
      %v4386 = vsel %vm917, %v4289, 0
      %v4389 = vsel %vm1360, %v4291, 0
      %4391 = vmatprep.subr.mxu0 0.0
      %4392 = vmatpush1.msra.mxu0 %v4389
      %4393 = vmatprep.subr.mxu0 0.0
      %4394 = vmatpush1.msra.mxu0 0.0
      %4395 = vmatprep.subr.mxu0 0.0
      %4396 = vmatpush1.msra.mxu0 0.0
      %4397 = vmatprep.subr.mxu0 0.0
      %4398 = vmatpush1.msra.mxu0 0.0
      %4399 = vmatprep.subr.mxu0 0.0
      %4400 = vmatpush1.msra.mxu0 0.0
      %4401 = vmatprep.subr.mxu0 0.0
      %4402 = vmatpush1.msra.mxu0 0.0
      %4403 = vmatprep.subr.mxu0 0.0
      %4404 = vmatpush1.msra.mxu0 0.0
      %4405 = vmatprep.subr.mxu0 0.0
      %4406 = vmatpush1.msra.mxu0 0.0
      %4407 = vmatprep.subr.mxu0 0.0
      %4408 = vmatpush1.msra.mxu0 0.0
      %4409 = vmatprep.subr.mxu0 0.0
      %4410 = vmatpush1.msra.mxu0 0.0
      %4411 = vmatprep.subr.mxu0 0.0
      %4412 = vmatpush1.msra.mxu0 0.0
      %4413 = vmatprep.subr.mxu0 0.0
      %4414 = vmatpush1.msra.mxu0 0.0
      %4415 = vmatprep.subr.mxu0 0.0
      %4416 = vmatpush1.msra.mxu0 0.0
      %4417 = vmatprep.subr.mxu0 0.0
      %4418 = vmatpush1.msra.mxu0 0.0
      %4419 = vmatprep.subr.mxu0 0.0
      %4420 = vmatpush1.msra.mxu0 0.0
      %4421 = vmatprep.subr.mxu0 0.0
      %4422 = vmatpush1.msra.mxu0 0.0
      %4423 = vmatprep.subr.mxu0 0.0
      %4424 = vmatpush1.msra.mxu0 0.0
      %4425 = vmatprep.subr.mxu0 0.0
      %4426 = vmatpush1.msra.mxu0 0.0
      %4427 = vmatprep.subr.mxu0 0.0
      %4428 = vmatpush1.msra.mxu0 0.0
      %4429 = vmatprep.subr.mxu0 0.0
      %4430 = vmatpush1.msra.mxu0 0.0
      %4431 = vmatprep.subr.mxu0 0.0
      %4432 = vmatpush1.msra.mxu0 0.0
      %4433 = vmatprep.subr.mxu0 0.0
      %4434 = vmatpush1.msra.mxu0 0.0
      %4435 = vmatprep.subr.mxu0 0.0
      %4436 = vmatpush1.msra.mxu0 0.0
      %4437 = vmatprep.subr.mxu0 0.0
      %4438 = vmatpush1.msra.mxu0 0.0
      %4439 = vmatprep.subr.mxu0 0.0
      %4440 = vmatpush1.msra.mxu0 0.0
      %4441 = vmatprep.subr.mxu0 0.0
      %4442 = vmatpush1.msra.mxu0 0.0
      %4443 = vmatprep.subr.mxu0 0.0
      %4444 = vmatpush1.msra.mxu0 0.0
      %4445 = vmatprep.subr.mxu0 0.0
      %4446 = vmatpush1.msra.mxu0 0.0
      %4447 = vmatprep.subr.mxu0 0.0
      %4448 = vmatpush1.msra.mxu0 0.0
      %4449 = vmatprep.subr.mxu0 0.0
      %4450 = vmatpush1.msra.mxu0 0.0
      %4451 = vmatprep.subr.mxu0 0.0
      %4452 = vmatpush1.msra.mxu0 0.0
      %4453 = vmatprep.subr.mxu0 0.0
      %4454 = vmatpush1.msra.mxu0 0.0
      %4455 = vmatprep.mubr.f32.mxu0 0.0
      %4456 = vmatmul.mubr.f32.gmra.mrb[0].mxu0 %v4293
      %v4457 = vpop.f32.mrb[0].mxu0
      %v4458 = vadd.f32 0.0, %v4457
      %v4459 = vpop.f32.mrb[0].mxu0
      %4460 = vmatprep.mubr.f32.mxu0 0.0
      %4461 = vmatmul.mubr.f32.gmra.mrb[0].mxu0 %v4296
      %v4462 = vpop.f32.mrb[0].mxu0
      %v4463 = vadd.f32 0.0, %v4462
      %v4464 = vpop.f32.mrb[0].mxu0
      %4465 = vmatprep.mubr.f32.mxu0 0.0
      %4466 = vmatmul.mubr.f32.gmra.mrb[0].mxu0 %v4299
      %v4467 = vpop.f32.mrb[0].mxu0
      %v4468 = vadd.f32 0.0, %v4467
      %v4469 = vpop.f32.mrb[0].mxu0
      %4470 = vmatprep.mubr.f32.mxu0 0.0
      %4471 = vmatmul.mubr.f32.gmra.mrb[0].mxu0 %v4302
      %v4472 = vpop.f32.mrb[0].mxu0
      %v4473 = vadd.f32 0.0, %v4472
      %v4474 = vpop.f32.mrb[0].mxu0
      %4475 = vmatprep.mubr.f32.mxu0 0.0
      %4476 = vmatmul.mubr.f32.gmra.mrb[0].mxu0 %v4305
      %v4477 = vpop.f32.mrb[0].mxu0
      %v4478 = vadd.f32 0.0, %v4477
      %v4479 = vpop.f32.mrb[0].mxu0
      %4480 = vmatprep.mubr.f32.mxu0 0.0
      %4481 = vmatmul.mubr.f32.gmra.mrb[0].mxu0 %v4308
      %v4482 = vpop.f32.mrb[0].mxu0
      %v4483 = vadd.f32 0.0, %v4482
      %v4484 = vpop.f32.mrb[0].mxu0
      %4485 = vmatprep.mubr.f32.mxu0 0.0
      %4486 = vmatmul.mubr.f32.gmra.mrb[0].mxu0 %v4311
      %v4487 = vpop.f32.mrb[0].mxu0
      %v4488 = vadd.f32 0.0, %v4487
      %v4489 = vpop.f32.mrb[0].mxu0
      %4490 = vmatprep.mubr.f32.mxu0 0.0
      %4491 = vmatmul.mubr.f32.gmra.mrb[0].mxu0 %v4314
      %v4492 = vpop.f32.mrb[0].mxu0
      %v4493 = vadd.f32 0.0, %v4492
      %v4494 = vpop.f32.mrb[0].mxu0
      %4495 = vmatprep.mubr.f32.mxu0 0.0
      %4496 = vmatmul.mubr.f32.gmra.mrb[0].mxu0 %v4317
      %v4497 = vpop.f32.mrb[0].mxu0
      %v4498 = vadd.f32 0.0, %v4497
      %v4499 = vpop.f32.mrb[0].mxu0
      %4500 = vmatprep.mubr.f32.mxu0 0.0
      %4501 = vmatmul.mubr.f32.gmra.mrb[0].mxu0 %v4320
      %v4502 = vpop.f32.mrb[0].mxu0
      %v4503 = vadd.f32 0.0, %v4502
      %v4504 = vpop.f32.mrb[0].mxu0
      %4505 = vmatprep.mubr.f32.mxu0 0.0
      %4506 = vmatmul.mubr.f32.gmra.mrb[0].mxu0 %v4323
      %v4507 = vpop.f32.mrb[0].mxu0
      %v4508 = vadd.f32 0.0, %v4507
      %v4509 = vpop.f32.mrb[0].mxu0
      %4510 = vmatprep.mubr.f32.mxu0 0.0
      %4511 = vmatmul.mubr.f32.gmra.mrb[0].mxu0 %v4326
      %v4512 = vpop.f32.mrb[0].mxu0
      %v4513 = vadd.f32 0.0, %v4512
      %v4514 = vpop.f32.mrb[0].mxu0
      %4515 = vmatprep.mubr.f32.mxu0 0.0
      %4516 = vmatmul.mubr.f32.gmra.mrb[0].mxu0 %v4329
      %v4517 = vpop.f32.mrb[0].mxu0
      %v4518 = vadd.f32 0.0, %v4517
      %v4519 = vpop.f32.mrb[0].mxu0
      %4520 = vmatprep.mubr.f32.mxu0 0.0
      %4521 = vmatmul.mubr.f32.gmra.mrb[0].mxu0 %v4332
      %v4522 = vpop.f32.mrb[0].mxu0
      %v4523 = vadd.f32 0.0, %v4522
      %v4524 = vpop.f32.mrb[0].mxu0
      %4525 = vmatprep.mubr.f32.mxu0 0.0
      %4526 = vmatmul.mubr.f32.gmra.mrb[0].mxu0 %v4335
      %v4527 = vpop.f32.mrb[0].mxu0
      %v4528 = vadd.f32 0.0, %v4527
      %v4529 = vpop.f32.mrb[0].mxu0
      %4530 = vmatprep.mubr.f32.mxu0 0.0
      %4531 = vmatmul.mubr.f32.gmra.mrb[0].mxu0 %v4338
      %v4532 = vpop.f32.mrb[0].mxu0
      %v4533 = vadd.f32 0.0, %v4532
      %v4534 = vpop.f32.mrb[0].mxu0
      %4535 = vmatprep.mubr.f32.mxu0 0.0
      %4536 = vmatmul.mubr.f32.gmra.mrb[0].mxu0 %v4341
      %v4537 = vpop.f32.mrb[0].mxu0
      %v4538 = vadd.f32 0.0, %v4537
      %v4539 = vpop.f32.mrb[0].mxu0
      %4540 = vmatprep.mubr.f32.mxu0 0.0
      %4541 = vmatmul.mubr.f32.gmra.mrb[0].mxu0 %v4344
      %v4542 = vpop.f32.mrb[0].mxu0
      %v4543 = vadd.f32 0.0, %v4542
      %v4544 = vpop.f32.mrb[0].mxu0
      %4545 = vmatprep.mubr.f32.mxu0 0.0
      %4546 = vmatmul.mubr.f32.gmra.mrb[0].mxu0 %v4347
      %v4547 = vpop.f32.mrb[0].mxu0
      %v4548 = vadd.f32 0.0, %v4547
      %v4549 = vpop.f32.mrb[0].mxu0
      %4550 = vmatprep.mubr.f32.mxu0 0.0
      %4551 = vmatmul.mubr.f32.gmra.mrb[0].mxu0 %v4350
      %v4552 = vpop.f32.mrb[0].mxu0
      %v4553 = vadd.f32 0.0, %v4552
      %v4554 = vpop.f32.mrb[0].mxu0
      %4555 = vmatprep.mubr.f32.mxu0 0.0
      %4556 = vmatmul.mubr.f32.gmra.mrb[0].mxu0 %v4353
      %v4557 = vpop.f32.mrb[0].mxu0
      %v4558 = vadd.f32 0.0, %v4557
      %v4559 = vpop.f32.mrb[0].mxu0
      %4560 = vmatprep.mubr.f32.mxu0 0.0
      %4561 = vmatmul.mubr.f32.gmra.mrb[0].mxu0 %v4356
      %v4562 = vpop.f32.mrb[0].mxu0
      %v4563 = vadd.f32 0.0, %v4562
      %v4564 = vpop.f32.mrb[0].mxu0
      %4565 = vmatprep.mubr.f32.mxu0 0.0
      %4566 = vmatmul.mubr.f32.gmra.mrb[0].mxu0 %v4359
      %v4567 = vpop.f32.mrb[0].mxu0
      %v4568 = vadd.f32 0.0, %v4567
      %v4569 = vpop.f32.mrb[0].mxu0
      %4570 = vmatprep.mubr.f32.mxu0 0.0
      %4571 = vmatmul.mubr.f32.gmra.mrb[0].mxu0 %v4362
      %v4572 = vpop.f32.mrb[0].mxu0
      %v4573 = vadd.f32 0.0, %v4572
      %v4574 = vpop.f32.mrb[0].mxu0
      %4575 = vmatprep.mubr.f32.mxu0 0.0
      %4576 = vmatmul.mubr.f32.gmra.mrb[0].mxu0 %v4365
      %v4577 = vpop.f32.mrb[0].mxu0
      %v4578 = vadd.f32 0.0, %v4577
      %v4579 = vpop.f32.mrb[0].mxu0
      %4580 = vmatprep.mubr.f32.mxu0 0.0
      %4581 = vmatmul.mubr.f32.gmra.mrb[0].mxu0 %v4368
      %v4582 = vpop.f32.mrb[0].mxu0
      %v4583 = vadd.f32 0.0, %v4582
      %v4584 = vpop.f32.mrb[0].mxu0
      %4585 = vmatprep.mubr.f32.mxu0 0.0
      %4586 = vmatmul.mubr.f32.gmra.mrb[0].mxu0 %v4371
      %v4587 = vpop.f32.mrb[0].mxu0
      %v4588 = vadd.f32 0.0, %v4587
      %v4589 = vpop.f32.mrb[0].mxu0
      %4590 = vmatprep.mubr.f32.mxu0 0.0
      %4591 = vmatmul.mubr.f32.gmra.mrb[0].mxu0 %v4374
      %v4592 = vpop.f32.mrb[0].mxu0
      %v4593 = vadd.f32 0.0, %v4592
      %v4594 = vpop.f32.mrb[0].mxu0
      %4595 = vmatprep.mubr.f32.mxu0 0.0
      %4596 = vmatmul.mubr.f32.gmra.mrb[0].mxu0 %v4377
      %v4597 = vpop.f32.mrb[0].mxu0
      %v4598 = vadd.f32 0.0, %v4597
      %v4599 = vpop.f32.mrb[0].mxu0
      %4600 = vmatprep.mubr.f32.mxu0 0.0
      %4601 = vmatmul.mubr.f32.gmra.mrb[0].mxu0 %v4380
      %v4602 = vpop.f32.mrb[0].mxu0
      %v4603 = vadd.f32 0.0, %v4602
      %v4604 = vpop.f32.mrb[0].mxu0
      %4605 = vmatprep.mubr.f32.mxu0 0.0
      %4606 = vmatmul.mubr.f32.gmra.mrb[0].mxu0 %v4383
      %v4607 = vpop.f32.mrb[0].mxu0
      %v4608 = vadd.f32 0.0, %v4607
      %v4609 = vpop.f32.mrb[0].mxu0
      %4610 = vmatprep.mubr.f32.mxu0 0.0
      %4611 = vmatmul.mubr.f32.gmra.mrb[0].mxu0 %v4386
      %v4612 = vpop.f32.mrb[0].mxu0
      %v4613 = vadd.f32 0.0, %v4612
      %v4614 = vpop.f32.mrb[0].mxu0
      %4615 = vdwg.mxu0
      %v4616 = vadd.f32 %v4225, %v4458
      %v4617 = vadd.f32 %v4226, %v4463
      %v4618 = vadd.f32 %v4227, %v4468
      %v4619 = vadd.f32 %v4228, %v4473
      %v4620 = vadd.f32 %v4229, %v4478
      %v4621 = vadd.f32 %v4230, %v4483
      %v4622 = vadd.f32 %v4231, %v4488
      %v4623 = vadd.f32 %v4232, %v4493
      %v4624 = vadd.f32 %v4233, %v4498
      %v4625 = vadd.f32 %v4234, %v4503
      %v4626 = vadd.f32 %v4235, %v4508
      %v4627 = vadd.f32 %v4236, %v4513
      %v4628 = vadd.f32 %v4237, %v4518
      %v4629 = vadd.f32 %v4238, %v4523
      %v4630 = vadd.f32 %v4239, %v4528
      %v4631 = vadd.f32 %v4240, %v4533
      %v4632 = vadd.f32 %v4241, %v4538
      %v4633 = vadd.f32 %v4242, %v4543
      %v4634 = vadd.f32 %v4243, %v4548
      %v4635 = vadd.f32 %v4244, %v4553
      %v4636 = vadd.f32 %v4245, %v4558
      %v4637 = vadd.f32 %v4246, %v4563
      %v4638 = vadd.f32 %v4247, %v4568
      %v4639 = vadd.f32 %v4248, %v4573
      %v4640 = vadd.f32 %v4249, %v4578
      %v4641 = vadd.f32 %v4250, %v4583
      %v4642 = vadd.f32 %v4251, %v4588
      %v4643 = vadd.f32 %v4252, %v4593
      %v4644 = vadd.f32 %v4253, %v4598
      %v4645 = vadd.f32 %v4254, %v4603
      %v4646 = vadd.f32 %v4255, %v4608
      %v4647 = vadd.f32 %v4256, %v4613
      %v4648 = vsel %vm917, %v4616, 0.0
      %v4649 = vsel %vm917, %v4617, 0.0
      %v4650 = vadd.f32 %v4648, %v4649
      %v4651 = vsel %vm917, %v4618, 0.0
      %v4652 = vadd.f32 %v4650, %v4651
      %v4653 = vsel %vm917, %v4619, 0.0
      %v4654 = vadd.f32 %v4652, %v4653
      %v4655 = vsel %vm917, %v4620, 0.0
      %v4656 = vadd.f32 %v4654, %v4655
      %v4657 = vsel %vm917, %v4621, 0.0
      %v4658 = vadd.f32 %v4656, %v4657
      %v4659 = vsel %vm917, %v4622, 0.0
      %v4660 = vadd.f32 %v4658, %v4659
      %v4661 = vsel %vm917, %v4623, 0.0
      %v4662 = vadd.f32 %v4660, %v4661
      %v4663 = vsel %vm917, %v4624, 0.0
      %v4664 = vadd.f32 %v4662, %v4663
      %v4665 = vsel %vm917, %v4625, 0.0
      %v4666 = vadd.f32 %v4664, %v4665
      %v4667 = vsel %vm917, %v4626, 0.0
      %v4668 = vadd.f32 %v4666, %v4667
      %v4669 = vsel %vm917, %v4627, 0.0
      %v4670 = vadd.f32 %v4668, %v4669
      %v4671 = vsel %vm917, %v4628, 0.0
      %v4672 = vadd.f32 %v4670, %v4671
      %v4673 = vsel %vm917, %v4629, 0.0
      %v4674 = vadd.f32 %v4672, %v4673
      %v4675 = vsel %vm917, %v4630, 0.0
      %v4676 = vadd.f32 %v4674, %v4675
      %v4677 = vsel %vm917, %v4631, 0.0
      %v4678 = vadd.f32 %v4676, %v4677
      %v4679 = vsel %vm917, %v4632, 0.0
      %v4680 = vadd.f32 %v4678, %v4679
      %v4681 = vsel %vm917, %v4633, 0.0
      %v4682 = vadd.f32 %v4680, %v4681
      %v4683 = vsel %vm917, %v4634, 0.0
      %v4684 = vadd.f32 %v4682, %v4683
      %v4685 = vsel %vm917, %v4635, 0.0
      %v4686 = vadd.f32 %v4684, %v4685
      %v4687 = vsel %vm917, %v4636, 0.0
      %v4688 = vadd.f32 %v4686, %v4687
      %v4689 = vsel %vm917, %v4637, 0.0
      %v4690 = vadd.f32 %v4688, %v4689
      %v4691 = vsel %vm917, %v4638, 0.0
      %v4692 = vadd.f32 %v4690, %v4691
      %v4693 = vsel %vm917, %v4639, 0.0
      %v4694 = vadd.f32 %v4692, %v4693
      %v4695 = vsel %vm917, %v4640, 0.0
      %v4696 = vadd.f32 %v4694, %v4695
      %v4697 = vsel %vm917, %v4641, 0.0
      %v4698 = vadd.f32 %v4696, %v4697
      %v4699 = vsel %vm917, %v4642, 0.0
      %v4700 = vadd.f32 %v4698, %v4699
      %v4701 = vsel %vm917, %v4643, 0.0
      %v4702 = vadd.f32 %v4700, %v4701
      %v4703 = vsel %vm917, %v4644, 0.0
      %v4704 = vadd.f32 %v4702, %v4703
      %v4705 = vsel %vm917, %v4645, 0.0
      %v4706 = vadd.f32 %v4704, %v4705
      %v4707 = vsel %vm917, %v4646, 0.0
      %v4708 = vadd.f32 %v4706, %v4707
      %v4709 = vsel %vm917, %v4647, 0.0
      %v4710 = vadd.f32 %v4708, %v4709
      %v4711 = vrot.slane %v4710, 4
      %v4712 = vadd.f32 %v4710, %v4711
      %v4713 = vrot.slane %v4712, 2
      %v4714 = vadd.f32 %v4712, %v4713
      %v4715 = vrot.slane %v4714, 1
      %v4716 = vadd.f32 %v4714, %v4715
      %v4717 = vmul.f32 %v4616, %v4616
      %v4718 = vmul.f32 %v4617, %v4617
      %v4719 = vmul.f32 %v4618, %v4618
      %v4720 = vmul.f32 %v4619, %v4619
      %v4721 = vmul.f32 %v4620, %v4620
      %v4722 = vmul.f32 %v4621, %v4621
      %v4723 = vmul.f32 %v4622, %v4622
      %v4724 = vmul.f32 %v4623, %v4623
      %v4725 = vmul.f32 %v4624, %v4624
      %v4726 = vmul.f32 %v4625, %v4625
      %v4727 = vmul.f32 %v4626, %v4626
      %v4728 = vmul.f32 %v4627, %v4627
      %v4729 = vmul.f32 %v4628, %v4628
      %v4730 = vmul.f32 %v4629, %v4629
      %v4731 = vmul.f32 %v4630, %v4630
      %v4732 = vmul.f32 %v4631, %v4631
      %v4733 = vmul.f32 %v4632, %v4632
      %v4734 = vmul.f32 %v4633, %v4633
      %v4735 = vmul.f32 %v4634, %v4634
      %v4736 = vmul.f32 %v4635, %v4635
      %v4737 = vmul.f32 %v4636, %v4636
      %v4738 = vmul.f32 %v4637, %v4637
      %v4739 = vmul.f32 %v4638, %v4638
      %v4740 = vmul.f32 %v4639, %v4639
      %v4741 = vmul.f32 %v4640, %v4640
      %v4742 = vmul.f32 %v4641, %v4641
      %v4743 = vmul.f32 %v4642, %v4642
      %v4744 = vmul.f32 %v4643, %v4643
      %v4745 = vmul.f32 %v4644, %v4644
      %v4746 = vmul.f32 %v4645, %v4645
      %v4747 = vmul.f32 %v4646, %v4646
      %v4748 = vmul.f32 %v4647, %v4647
      %v4749 = vsel %vm917, %v4717, 0.0
      %v4750 = vsel %vm917, %v4718, 0.0
      %v4751 = vadd.f32 %v4749, %v4750
      %v4752 = vsel %vm917, %v4719, 0.0
      %v4753 = vadd.f32 %v4751, %v4752
      %v4754 = vsel %vm917, %v4720, 0.0
      %v4755 = vadd.f32 %v4753, %v4754
      %v4756 = vsel %vm917, %v4721, 0.0
      %v4757 = vadd.f32 %v4755, %v4756
      %v4758 = vsel %vm917, %v4722, 0.0
      %v4759 = vadd.f32 %v4757, %v4758
      %v4760 = vsel %vm917, %v4723, 0.0
      %v4761 = vadd.f32 %v4759, %v4760
      %v4762 = vsel %vm917, %v4724, 0.0
      %v4763 = vadd.f32 %v4761, %v4762
      %v4764 = vsel %vm917, %v4725, 0.0
      %v4765 = vadd.f32 %v4763, %v4764
      %v4766 = vsel %vm917, %v4726, 0.0
      %v4767 = vadd.f32 %v4765, %v4766
      %v4768 = vsel %vm917, %v4727, 0.0
      %v4769 = vadd.f32 %v4767, %v4768
      %v4770 = vsel %vm917, %v4728, 0.0
      %v4771 = vadd.f32 %v4769, %v4770
      %v4772 = vsel %vm917, %v4729, 0.0
      %v4773 = vadd.f32 %v4771, %v4772
      %v4774 = vsel %vm917, %v4730, 0.0
      %v4775 = vadd.f32 %v4773, %v4774
      %v4776 = vsel %vm917, %v4731, 0.0
      %v4777 = vadd.f32 %v4775, %v4776
      %v4778 = vsel %vm917, %v4732, 0.0
      %v4779 = vadd.f32 %v4777, %v4778
      %v4780 = vsel %vm917, %v4733, 0.0
      %v4781 = vadd.f32 %v4779, %v4780
      %v4782 = vsel %vm917, %v4734, 0.0
      %v4783 = vadd.f32 %v4781, %v4782
      %v4784 = vsel %vm917, %v4735, 0.0
      %v4785 = vadd.f32 %v4783, %v4784
      %v4786 = vsel %vm917, %v4736, 0.0
      %v4787 = vadd.f32 %v4785, %v4786
      %v4788 = vsel %vm917, %v4737, 0.0
      %v4789 = vadd.f32 %v4787, %v4788
      %v4790 = vsel %vm917, %v4738, 0.0
      %v4791 = vadd.f32 %v4789, %v4790
      %v4792 = vsel %vm917, %v4739, 0.0
      %v4793 = vadd.f32 %v4791, %v4792
      %v4794 = vsel %vm917, %v4740, 0.0
      %v4795 = vadd.f32 %v4793, %v4794
      %v4796 = vsel %vm917, %v4741, 0.0
      %v4797 = vadd.f32 %v4795, %v4796
      %v4798 = vsel %vm917, %v4742, 0.0
      %v4799 = vadd.f32 %v4797, %v4798
      %v4800 = vsel %vm917, %v4743, 0.0
      %v4801 = vadd.f32 %v4799, %v4800
      %v4802 = vsel %vm917, %v4744, 0.0
      %v4803 = vadd.f32 %v4801, %v4802
      %v4804 = vsel %vm917, %v4745, 0.0
      %v4805 = vadd.f32 %v4803, %v4804
      %v4806 = vsel %vm917, %v4746, 0.0
      %v4807 = vadd.f32 %v4805, %v4806
      %v4808 = vsel %vm917, %v4747, 0.0
      %v4809 = vadd.f32 %v4807, %v4808
      %v4810 = vsel %vm917, %v4748, 0.0
      %v4811 = vadd.f32 %v4809, %v4810
      %v4812 = vrot.slane %v4811, 4
      %v4813 = vadd.f32 %v4811, %v4812
      %v4814 = vrot.slane %v4813, 2
      %v4815 = vadd.f32 %v4813, %v4814
      %v4816 = vrot.slane %v4815, 1
      %v4817 = vadd.f32 %v4815, %v4816
      %vm4818 = vcmask 1040384
      %v4819 = vsel %vm4818, %v4716, %v4817
      %vm4820 = vcmask 25600
      %4821 = vst.msk [vmem:[%s709] sm:$0x3] %vm4820, %v4819
      %4822 = vst.msk [vmem:[%s701] sm:$0xff] %vm917, %v4616
      %4823 = vst.msk [vmem:[%s701 + $0x8] sm:$0xff] %vm917, %v4617
      %4824 = vst.msk [vmem:[%s701 + $0x10] sm:$0xff] %vm917, %v4618
      %4825 = vst.msk [vmem:[%s701 + $0x18] sm:$0xff] %vm917, %v4619
      %4826 = vst.msk [vmem:[%s701 + $0x20] sm:$0xff] %vm917, %v4620
      %4827 = vst.msk [vmem:[%s701 + $0x28] sm:$0xff] %vm917, %v4621
      %4828 = vst.msk [vmem:[%s701 + $0x30] sm:$0xff] %vm917, %v4622
      %4829 = vst.msk [vmem:[%s701 + $0x38] sm:$0xff] %vm917, %v4623
      %4830 = vst.msk [vmem:[%s701 + $0x40] sm:$0xff] %vm917, %v4624
      %4831 = vst.msk [vmem:[%s701 + $0x48] sm:$0xff] %vm917, %v4625
      %4832 = vst.msk [vmem:[%s701 + $0x50] sm:$0xff] %vm917, %v4626
      %4833 = vst.msk [vmem:[%s701 + $0x58] sm:$0xff] %vm917, %v4627
      %4834 = vst.msk [vmem:[%s701 + $0x60] sm:$0xff] %vm917, %v4628
      %4835 = vst.msk [vmem:[%s701 + $0x68] sm:$0xff] %vm917, %v4629
      %4836 = vst.msk [vmem:[%s701 + $0x70] sm:$0xff] %vm917, %v4630
      %4837 = vst.msk [vmem:[%s701 + $0x78] sm:$0xff] %vm917, %v4631
      %4838 = vst.msk [vmem:[%s701 + $0x80] sm:$0xff] %vm917, %v4632
      %4839 = vst.msk [vmem:[%s701 + $0x88] sm:$0xff] %vm917, %v4633
      %4840 = vst.msk [vmem:[%s701 + $0x90] sm:$0xff] %vm917, %v4634
      %4841 = vst.msk [vmem:[%s701 + $0x98] sm:$0xff] %vm917, %v4635
      %4842 = vst.msk [vmem:[%s701 + $0xa0] sm:$0xff] %vm917, %v4636
      %4843 = vst.msk [vmem:[%s701 + $0xa8] sm:$0xff] %vm917, %v4637
      %4844 = vst.msk [vmem:[%s701 + $0xb0] sm:$0xff] %vm917, %v4638
      %4845 = vst.msk [vmem:[%s701 + $0xb8] sm:$0xff] %vm917, %v4639
      %4846 = vst.msk [vmem:[%s701 + $0xc0] sm:$0xff] %vm917, %v4640
      %4847 = vst.msk [vmem:[%s701 + $0xc8] sm:$0xff] %vm917, %v4641
      %4848 = vst.msk [vmem:[%s701 + $0xd0] sm:$0xff] %vm917, %v4642
      %4849 = vst.msk [vmem:[%s701 + $0xd8] sm:$0xff] %vm917, %v4643
      %4850 = vst.msk [vmem:[%s701 + $0xe0] sm:$0xff] %vm917, %v4644
      %4851 = vst.msk [vmem:[%s701 + $0xe8] sm:$0xff] %vm917, %v4645
      %4852 = vst.msk [vmem:[%s701 + $0xf0] sm:$0xff] %vm917, %v4646
      %4853 = vst.msk [vmem:[%s701 + $0xf8] sm:$0xff] %vm917, %v4647
      %s4854 = smul.u32 16, %s27
      %p4855 = scmp.lt.s32.totalorder %s26, 1
      %s4856 = scalar_select %p4855, %s26, 1
      %p4857 = scmp.lt.s32.totalorder %s4854, 15
      %s4858 = scalar_select %p4857, %s4854, 15
      %s4859 = smul.addr %s4858, 2
      %s4860 = smul.addr %s4856, 32
      %s4861 = sadd.s32 %s4859, %s4860
      %s4862 = smul.addr %s4861, 8
      %s4863 = scalar_lea.vmem %s9, %s4862
      %p4864 = scmp.lt.s32.totalorder %s26, 1
      %s4865 = scalar_select %p4864, %s26, 1
      %p4866 = scmp.lt.s32.totalorder %s27, 0
      %s4867 = scalar_select %p4866, %s27, 0
      %s4868 = sadd.s32 %s4867, %s4865
      %s4869 = smul.addr %s4868, 2
      %s4870 = scalar_lea.vmem %s10, %s4869
      // Predicated region
      $region61: #{recurrent_block_forward.5} parent=55 // pred_check
        %p4871 = pneg %p317
      $region62: #{recurrent_block_forward.5} parent=55 // pred_check_branch
        %4873 = sbr.rel (%p4871) target = $region64
      $region63: #{recurrent_block_forward.5} parent=55 // pred_region
        %s4874 = smul.u32 16, %s27
      $region64: #{recurrent_block_forward.5} parent=55 // pred_fallthru
        _
      // Predicated region
      $region65: #{recurrent_block_forward.5} parent=55 // pred_check
        %p4875 = pneg %p345
      $region66: #{recurrent_block_forward.5} parent=55 // pred_check_branch
        %4877 = sbr.rel (%p4875) target = $region68
      $region67: #{recurrent_block_forward.5} parent=55 // pred_region
        _
      $region68: #{recurrent_block_forward.5} parent=55 // pred_fallthru
        _
    $region56: #{recurrent_block_forward.5} parent=5 // pred_fallthru
      _
    %p4878 = scmp.le.s32.totalorder 2, %s17
    // Predicated region
    $region69: #{recurrent_block_forward.5} parent=5 // pred_check
      %p4879 = pneg %p4878
    $region70: #{recurrent_block_forward.5} parent=5 // pred_check_branch
      %4881 = sbr.rel (%p4879) target = $region72
    $region71: #{recurrent_block_forward.5} parent=5 // pred_region
      %s4882 = ssub.s32 %s17, 2
      // Predicated region
      $region73: #{recurrent_block_forward.5} parent=71 // pred_check
        %p4883 = pneg %p323
      $region74: #{recurrent_block_forward.5} parent=71 // pred_check_branch
        %4885 = sbr.rel (%p4883) target = $region76
      $region75: #{recurrent_block_forward.5} parent=71 // pred_region
        %s4886 = smul.u32 16, %s29
        %p4887 = scmp.lt.s32.totalorder %s28, 1
        %s4888 = scalar_select %p4887, %s28, 1
        %p4889 = scmp.lt.s32.totalorder %s4886, 15
        %s4890 = scalar_select %p4889, %s4886, 15
        %s4891 = smul.addr %s4890, 2
        %s4892 = smul.addr %s4888, 32
        %s4893 = sadd.s32 %s4891, %s4892
        %s4894 = smul.addr %s4893, 8
        %s4895 = scalar_lea.vmem %s9, %s4894
      $region76: #{recurrent_block_forward.5} parent=71 // pred_fallthru
        _
      // Predicated region
      $region77: #{recurrent_block_forward.5} parent=71 // pred_check
        %p4896 = pneg %p351
      $region78: #{recurrent_block_forward.5} parent=71 // pred_check_branch
        %4898 = sbr.rel (%p4896) target = $region80
      $region79: #{recurrent_block_forward.5} parent=71 // pred_region
        %p4899 = scmp.lt.s32.totalorder %s28, 1
        %s4900 = scalar_select %p4899, %s28, 1
        %p4901 = scmp.lt.s32.totalorder %s29, 0
        %s4902 = scalar_select %p4901, %s29, 0
        %s4903 = sadd.s32 %s4902, %s4900
        %s4904 = smul.addr %s4903, 2
        %s4905 = scalar_lea.vmem %s10, %s4904
      $region80: #{recurrent_block_forward.5} parent=71 // pred_fallthru
        _
    $region72: #{recurrent_block_forward.5} parent=5 // pred_fallthru
      _
  $region6: #{recurrent_block_forward.5} parent=0 // loop_footer
    %s21 = sadd.s32 1, %s17
  $region7: #{recurrent_block_forward.5} parent=0 // loop_footer_branch
    %16 = sbr.rel target = $region3
  $region8: #{recurrent_block_forward.5} parent=0 // loop_exit
    _

</llo_original>
